<compile_context>
chip_gen: v6e
topology: v6e:2x2x1
jax: 0.10.0
libtpu: 0.0.40
codegen_flags: <defaults>
</compile_context>

<pallas_src>
import functools

import jax
import jax.numpy as jnp
from jax import lax
from jax.experimental import pallas as pl
from jax.experimental.pallas import tpu as pltpu

PRIMITIVES = [
    'none', 'max_pool_3x3', 'avg_pool_3x3', 'skip_connect',
    'sep_conv_3x3', 'sep_conv_5x5', 'dil_conv_3x3', 'dil_conv_5x5',
]

# Shared im2col window for every conv primitive of a mixed op (sep 3x3/5x5,
# dil 3x3/5x5, stride-2 factorized-reduce skip): 9x9 taps, pad 4.
WIN = 9
WIN_PAD = 4
# (name, kernel, dilation, torch padding)
_CONV_PRIMS = (('sep_conv_3x3', 3, 1, 1), ('sep_conv_5x5', 5, 1, 2),
               ('dil_conv_3x3', 3, 2, 2), ('dil_conv_5x5', 5, 2, 4))


def _rnd(x, m):
    return ((x + m - 1) // m) * m


def _pick_tm(M, cap=512):
    """Row-tile size: large blocks (amortize per-grid-step overhead) while
    keeping an EVEN block count >= 2 whenever M > 16 so both v7x TensorCores
    get balanced work on the single 'parallel' grid axis."""
    if M <= 16:
        return M                       # single full-extent block (always legal)
    nblk = 2
    while (M + nblk - 1) // nblk > cap:
        nblk += 2
    return _rnd((M + nblk - 1) // nblk, 8)


# ----------------------------------------------------------------------------
# Pallas kernel: matmul with optional fused ReLU on the activation tile.
# ----------------------------------------------------------------------------
def _matmul_kernel(a_ref, b_ref, o_ref, *, apply_relu):
    # a_ref: (tm, K) bf16, b_ref: (K, N) bf16 full-extent, o_ref: (tm, N) f32
    a = a_ref[...]
    if apply_relu:
        a = jnp.maximum(a, 0)
    o_ref[...] = jnp.dot(a, b_ref[...], preferred_element_type=jnp.float32)


def pallas_matmul(a, b, apply_relu=False):
    """a: (M, K), b: (K, N) -> (M, N) f32.  bf16 MXU inputs, f32 accumulate.
    K / N are carried as full-extent blocks (no host-side padding); only M is
    tiled and the last block may be partial."""
    M, K = a.shape
    K2, N = b.shape
    assert K == K2
    a = a.astype(jnp.bfloat16)
    b = b.astype(jnp.bfloat16)
    tm = _pick_tm(M)
    return pl.pallas_call(
        functools.partial(_matmul_kernel, apply_relu=apply_relu),
        out_shape=jax.ShapeDtypeStruct((M, N), jnp.float32),
        grid_spec=pltpu.PrefetchScalarGridSpec(
            num_scalar_prefetch=0,
            grid=(pl.cdiv(M, tm),),
            in_specs=[pl.BlockSpec((tm, K), lambda i: (i, 0)),
                      pl.BlockSpec((K, N), lambda i: (0, 0))],
            out_specs=pl.BlockSpec((tm, N), lambda i: (i, 0))),
        compiler_params=pltpu.CompilerParams(
            dimension_semantics=("parallel",)),
    )(a, b)


# ----------------------------------------------------------------------------
# Plain-JAX glue (layout plumbing, pooling, BN statistics)
# ----------------------------------------------------------------------------
def batchnorm(x, eps=1e-5):
    # train-mode BatchNorm2d with gamma=1, beta=0 (PyTorch default init /
    # affine=False).  Per-channel -> BN of a channel concat == concat of BNs.
    mean = jnp.mean(x, axis=(0, 1, 2), keepdims=True)
    var = jnp.mean((x - mean) ** 2, axis=(0, 1, 2), keepdims=True)
    return (x - mean) / jnp.sqrt(var + eps)


def extract_patches(x, k, stride, pad):
    """x: (B,H,W,C) -> (B,Ho,Wo,k*k,C), zero padded."""
    B, H, W, C = x.shape
    xp = jnp.pad(x, ((0, 0), (pad, pad), (pad, pad), (0, 0)))
    Ho = (H + 2 * pad - k) // stride + 1
    Wo = (W + 2 * pad - k) // stride + 1
    pieces = [xp[:, i:i + stride * Ho:stride, j:j + stride * Wo:stride, :]
              for i in range(k) for j in range(k)]
    return jnp.stack(pieces, axis=3)


def conv2d(x, w_flat, k, stride, pad, apply_relu=False):
    """Standard conv via bf16 im2col + Pallas MXU matmul.
    w_flat: (k*k*Cin, Cout).  Optional ReLU on the input is fused in-kernel."""
    patches = extract_patches(x.astype(jnp.bfloat16), k, stride, pad)
    B, Ho, Wo, KK, Cin = patches.shape
    y = pallas_matmul(patches.reshape(B * Ho * Wo, KK * Cin), w_flat,
                      apply_relu=apply_relu)
    return y.reshape(B, Ho, Wo, -1)


def max_pool3(x, stride):
    # MaxPool2d(3, stride, padding=1)
    return lax.reduce_window(x, -jnp.inf, lax.max, (1, 3, 3, 1),
                             (1, stride, stride, 1),
                             [(0, 0), (1, 1), (1, 1), (0, 0)])


def avg_pool3(x, stride):
    # AvgPool2d(3, stride, padding=1, count_include_pad=False)
    pads = [(0, 0), (1, 1), (1, 1), (0, 0)]
    s = lax.reduce_window(x, 0.0, lax.add, (1, 3, 3, 1),
                          (1, stride, stride, 1), pads)
    cnt = lax.reduce_window(jnp.ones(x.shape[:3] + (1,), x.dtype), 0.0,
                            lax.add, (1, 3, 3, 1),
                            (1, stride, stride, 1), pads)
    return s / cnt


def max_pool2(x):
    # MaxPool2d(2, 2)
    return lax.reduce_window(x, -jnp.inf, lax.max, (1, 2, 2, 1),
                             (1, 2, 2, 1), 'VALID')


def channel_shuffle(x, groups):
    B, H, W, C = x.shape
    cpg = C // groups
    x = x.reshape(B, H, W, groups, cpg)
    x = jnp.transpose(x, (0, 1, 2, 4, 3))
    return x.reshape(B, H, W, C)


# ----------------------------------------------------------------------------
# Init-time weight folding (depthwise*pointwise fusion, tap embedding into the
# shared 9x9 window, per-group N-concatenation / block-diagonal batching).
# ----------------------------------------------------------------------------
def _combined_dwpw(dw, pw):
    # dw: (kk, Ch), pw: (Ch, N) -> (kk, Ch, N): dw[t,c]*pw[c,n]
    return dw[:, :, None] * pw[None, :, :]


def _expand_taps(w, k, dilation, pad):
    """Embed a (k*k, Ch, N) tap-indexed weight into the shared WINxWIN window
    (zeros on unused taps) -> (WIN*WIN*Ch, N).  Exact: output spatial size and
    receptive-field alignment match the original padding/dilation."""
    kk, Ch, N = w.shape
    shift = WIN_PAD - pad
    idx = [(a * dilation + shift) * WIN + (b * dilation + shift)
           for a in range(k) for b in range(k)]
    out = jnp.zeros((WIN * WIN, Ch, N), jnp.float32)
    out = out.at[jnp.array(idx)].set(w)
    return out.reshape(WIN * WIN * Ch, N)


def _build_stage1_weight(edge_prims, Ch, stride):
    """One wide weight for: stage-1 of sep3/sep5, full dil3/dil5, and (stride 2)
    the factorized-reduce skip -- for every edge of the group.  Columns per
    edge: [sep3 | sep5 | dil3 | dil5 | (fr)] each Ch wide (fr = Ch)."""
    cols = []
    for p in edge_prims:
        for name, k, dil, pad in _CONV_PRIMS:
            rp = p[name]
            if name.startswith('sep'):
                cw = _combined_dwpw(rp['dw1'], rp['pw1'])
            else:
                cw = _combined_dwpw(rp['dw'], rp['pw'])
            cols.append(_expand_taps(cw, k, dil, pad))
        if stride == 2:
            fr = p['skip_connect']
            w = jnp.zeros((WIN * WIN, Ch, Ch), jnp.float32)
            # conv_1 reads x[2i,2j]     -> window tap (4,4)
            # conv_2 reads x[2i+1,2j+1] -> window tap (5,5); never touches pad.
            w = w.at[WIN_PAD * WIN + WIN_PAD, :, :Ch // 2].set(fr['w1'])
            w = w.at[(WIN_PAD + 1) * WIN + WIN_PAD + 1, :, Ch // 2:].set(fr['w2'])
            cols.append(w.reshape(WIN * WIN * Ch, Ch))
    return jnp.concatenate(cols, axis=1).astype(jnp.bfloat16)


def _build_stage2_weight(edge_prims, Ch):
    """Block-diagonal weight for the sep_conv second stages of all edges of a
    group.  Rows: [3x3 patches of concat_e mid3_e | 5x5 patches of concat_e
    mid5_e]; cols per edge: [sep3_out | sep5_out]."""
    E = len(edge_prims)
    N = 2 * E * Ch
    w3 = jnp.zeros((9, E * Ch, N), jnp.float32)
    w5 = jnp.zeros((25, E * Ch, N), jnp.float32)
    for e, p in enumerate(edge_prims):
        c3 = _combined_dwpw(p['sep_conv_3x3']['dw2'], p['sep_conv_3x3']['pw2'])
        c5 = _combined_dwpw(p['sep_conv_5x5']['dw2'], p['sep_conv_5x5']['pw2'])
        w3 = w3.at[:, e * Ch:(e + 1) * Ch, 2 * e * Ch:2 * e * Ch + Ch].set(c3)
        w5 = w5.at[:, e * Ch:(e + 1) * Ch,
                   2 * e * Ch + Ch:2 * (e + 1) * Ch].set(c5)
    return jnp.concatenate([w3.reshape(9 * E * Ch, N),
                            w5.reshape(25 * E * Ch, N)],
                           axis=0).astype(jnp.bfloat16)


def _edge_groups(steps):
    """Group cell edges by the input state they consume (all edges of a group
    share the same stride)."""
    offsets, off = [], 0
    for i in range(steps):
        offsets.append(off)
        off += 2 + i
    groups = []
    for j in range(2 + steps):
        edges = [(offsets[i] + j, i) for i in range(max(0, j - 1), steps)]
        if edges:
            groups.append({'state': j, 'edges': edges})
    return groups


# ----------------------------------------------------------------------------
# Forward passes
# ----------------------------------------------------------------------------
def preprocess_rcb(x, w):
    # ReLUConvBN(1x1), ReLU fused into the matmul kernel.
    B, H, W, Cin = x.shape
    y = pallas_matmul(x.reshape(B * H * W, Cin).astype(jnp.bfloat16), w,
                      apply_relu=True)
    return batchnorm(y.reshape(B, H, W, -1))


def preprocess_fr(x, w):
    # FactorizedReduce: both 1x1/stride-2 convs in ONE block-diagonal matmul;
    # output columns are already [conv1 | conv2] so no extra concat is needed.
    x = x.astype(jnp.bfloat16)
    a1 = x[:, ::2, ::2, :]
    a2 = x[:, 1::2, 1::2, :]
    B, Ho, Wo, Cin = a1.shape
    a = jnp.concatenate([a1.reshape(B * Ho * Wo, Cin),
                         a2.reshape(B * Ho * Wo, Cin)], axis=1)
    y = pallas_matmul(a, w, apply_relu=True)
    return batchnorm(y.reshape(B, Ho, Wo, -1))


def mixed_group_forward(h, g, alphas, C):
    """All mixed-op edges of one cell that consume state `h` (same stride):
    two batched Pallas matmuls + shared pooling glue.  Returns one mixed-op
    output (post concat + channel_shuffle) per edge."""
    Ch = C // 2
    stride = g['stride']
    E = g['E']
    xt, xt2 = h[..., :Ch], h[..., Ch:]

    # Edge-independent primitives, computed once and reused by every edge.
    mp_out = batchnorm(max_pool3(xt, stride))
    ap_out = batchnorm(avg_pool3(xt, stride))
    x2_path = xt2 if stride == 1 else max_pool2(xt2)

    # Stage 1: one wide matmul -> sep3/sep5 mids, dil3/dil5 outputs and the
    # stride-2 skip (factorized reduce) for all edges.  ReLU fused in-kernel.
    patches = extract_patches(xt.astype(jnp.bfloat16), WIN, stride, WIN_PAD)
    B, Ho, Wo, KK, _ = patches.shape
    y1 = pallas_matmul(patches.reshape(B * Ho * Wo, KK * Ch), g['w1'],
                       apply_relu=True).reshape(B, Ho, Wo, -1)
    y1 = batchnorm(y1)          # per-channel BN == per-primitive BN

    per_edge = 5 * Ch if stride == 2 else 4 * Ch
    sep3_mid = [y1[..., e * per_edge:e * per_edge + Ch] for e in range(E)]
    sep5_mid = [y1[..., e * per_edge + Ch:e * per_edge + 2 * Ch]
                for e in range(E)]

    # Stage 2: one block-diagonal matmul for every edge's two sep second
    # stages (ReLU fused in-kernel).
    m3 = jnp.concatenate(sep3_mid, axis=-1).astype(jnp.bfloat16)
    m5 = jnp.concatenate(sep5_mid, axis=-1).astype(jnp.bfloat16)
    M2 = B * Ho * Wo
    p3 = extract_patches(m3, 3, 1, 1).reshape(M2, 9 * E * Ch)
    p5 = extract_patches(m5, 5, 1, 2).reshape(M2, 25 * E * Ch)
    y2 = pallas_matmul(jnp.concatenate([p3, p5], axis=1), g['w2'],
                       apply_relu=True).reshape(B, Ho, Wo, 2 * E * Ch)
    y2 = batchnorm(y2)

    outs = []
    for e in range(E):
        base = e * per_edge
        wrow = alphas[g['edges'][e]]
        skip_out = xt if stride == 1 else y1[..., base + 4 * Ch:base + 5 * Ch]
        # 'none' (index 0) contributes exactly zero and is skipped.
        temp1 = (wrow[1] * mp_out + wrow[2] * ap_out + wrow[3] * skip_out
                 + wrow[4] * y2[..., 2 * e * Ch:2 * e * Ch + Ch]
                 + wrow[5] * y2[..., 2 * e * Ch + Ch:2 * (e + 1) * Ch]
                 + wrow[6] * y1[..., base + 2 * Ch:base + 3 * Ch]
                 + wrow[7] * y1[..., base + 3 * Ch:base + 4 * Ch])
        ans = jnp.concatenate([temp1, x2_path], axis=-1)
        outs.append(channel_shuffle(ans, 2))
    return outs


def cell_forward(s0, s1, cell, alphas, weights2):
    if cell['pre0']['type'] == 'fr':
        s0 = preprocess_fr(s0, cell['pre0']['w'])
    else:
        s0 = preprocess_rcb(s0, cell['pre0']['w'])
    s1 = preprocess_rcb(s1, cell['pre1']['w'])
    states = [s0, s1]
    steps = cell['steps']
    acc = [None] * steps
    for g in cell['groups']:            # groups ordered by input-state index
        while len(states) <= g['state']:
            states.append(acc[len(states) - 2])   # finalize next new state
        outs = mixed_group_forward(states[g['state']], g, alphas, cell['C'])
        for ans, eidx, tgt in zip(outs, g['edges'], g['targets']):
            contrib = weights2[eidx] * ans
            acc[tgt] = contrib if acc[tgt] is None else acc[tgt] + contrib
    while len(states) < 2 + steps:
        states.append(acc[len(states) - 2])
    return jnp.concatenate(states[-cell['multiplier']:], axis=-1)


def network_forward(x_nchw, params):
    steps = params['steps']
    x = jnp.transpose(x_nchw, (0, 2, 3, 1)).astype(jnp.float32)  # NCHW -> NHWC
    # stem0: Conv-BN-ReLU-Conv-BN  (ReLU fused into the 2nd conv's kernel)
    y = conv2d(x, params['stem0_conv1'], 3, 2, 1)
    y = batchnorm(y)
    y = conv2d(y, params['stem0_conv2'], 3, 2, 1, apply_relu=True)
    s0 = batchnorm(y)
    # stem1: ReLU-Conv-BN  (ReLU fused)
    y = conv2d(s0, params['stem1_conv'], 3, 2, 1, apply_relu=True)
    s1 = batchnorm(y)
    for cell in params['cells']:
        if cell['reduction']:
            al, be = params['alphas_reduce'], params['betas_reduce']
        else:
            al, be = params['alphas_normal'], params['betas_normal']
        alphas = jax.nn.softmax(al, axis=-1)
        n, start = 3, 2
        weights2 = jax.nn.softmax(be[0:2], axis=-1)
        for _ in range(steps - 1):
            end = start + n
            tw2 = jax.nn.softmax(be[start:end], axis=-1)
            start = end
            n += 1
            weights2 = jnp.concatenate([weights2, tw2], axis=0)
        s0, s1 = s1, cell_forward(s0, s1, cell, alphas, weights2)
    out = jnp.mean(s1, axis=(1, 2))          # AdaptiveAvgPool2d(1) + flatten
    logits = pallas_matmul(out, params['classifier_w']) + params['classifier_b']
    return logits


# ----------------------------------------------------------------------------
# Parameter initialization (deterministic, synthetic) + init-time folding
# ----------------------------------------------------------------------------
class ParamGen:
    def __init__(self, key):
        self.key = key
        self.i = 0

    def take(self, shape, scale=0.1):
        self.i += 1
        k = jax.random.fold_in(self.key, self.i)
        return (scale * jax.random.normal(k, shape)).astype(jnp.float32)


def init_edge(pg, C, stride):
    Ch = C // 2
    prims = {}
    for prim in PRIMITIVES:
        if prim == 'skip_connect' and stride != 1:
            prims[prim] = {'w1': pg.take((Ch, Ch // 2)),
                           'w2': pg.take((Ch, Ch // 2))}
        elif prim.startswith('sep_conv'):
            k = 3 if '3x3' in prim else 5
            prims[prim] = {'dw1': pg.take((k * k, Ch)), 'pw1': pg.take((Ch, Ch)),
                           'dw2': pg.take((k * k, Ch)), 'pw2': pg.take((Ch, Ch))}
        elif prim.startswith('dil_conv'):
            k = 3 if '3x3' in prim else 5
            prims[prim] = {'dw': pg.take((k * k, Ch)), 'pw': pg.take((Ch, Ch))}
        else:
            prims[prim] = None
    return prims


def init_cell(pg, steps, multiplier, C_pp, C_p, C, reduction, reduction_prev):
    cell = {'reduction': reduction, 'steps': steps, 'multiplier': multiplier,
            'C': C}
    if reduction_prev:
        w1 = pg.take((C_pp, C // 2))
        w2 = pg.take((C_pp, C // 2))
        wfr = jnp.zeros((2 * C_pp, C), jnp.float32)
        wfr = wfr.at[:C_pp, :C // 2].set(w1).at[C_pp:, C // 2:].set(w2)
        cell['pre0'] = {'type': 'fr', 'w': wfr.astype(jnp.bfloat16)}
    else:
        cell['pre0'] = {'type': 'rcb',
                        'w': pg.take((C_pp, C)).astype(jnp.bfloat16)}
    cell['pre1'] = {'w': pg.take((C_p, C)).astype(jnp.bfloat16)}
    # Raw per-edge params in PyTorch edge order, then fold into per-group
    # batched weights (dw*pw fusion + 9x9 tap embedding + N concatenation).
    strides, edge_raw = [], []
    for i in range(steps):
        for j in range(2 + i):
            stride = 2 if reduction and j < 2 else 1
            strides.append(stride)
            edge_raw.append(init_edge(pg, C, stride))
    Ch = C // 2
    groups = []
    for g in _edge_groups(steps):
        eidx = [e for e, _ in g['edges']]
        stride = strides[eidx[0]]
        eprims = [edge_raw[e] for e in eidx]
        groups.append({'state': g['state'], 'stride': stride, 'E': len(eidx),
                       'edges': eidx, 'targets': [t for _, t in g['edges']],
                       'w1': _build_stage1_weight(eprims, Ch, stride),
                       'w2': _build_stage2_weight(eprims, Ch)})
    cell['groups'] = groups
    return cell


def init_network(key, C, num_classes, layers, steps, multiplier,
                 stem_multiplier):
    pg = ParamGen(key)
    C_curr = stem_multiplier * C
    params = {
        'stem0_conv1': pg.take((3 * 3 * 3, C_curr // 2)).astype(jnp.bfloat16),
        'stem0_conv2': pg.take((3 * 3 * (C_curr // 2),
                                C_curr)).astype(jnp.bfloat16),
        'stem1_conv': pg.take((3 * 3 * C_curr, C_curr)).astype(jnp.bfloat16),
    }
    C_pp, C_p, Cc = C_curr, C_curr, C
    cells = []
    reduction_prev = True
    for i in range(layers):
        if i in [layers // 3, 2 * layers // 3]:
            Cc *= 2
            reduction = True
        else:
            reduction = False
        cells.append(init_cell(pg, steps, multiplier, C_pp, C_p, Cc,
                               reduction, reduction_prev))
        reduction_prev = reduction
        C_pp, C_p = C_p, multiplier * Cc
    params['cells'] = cells
    params['classifier_w'] = pg.take((C_p, num_classes)).astype(jnp.bfloat16)
    params['classifier_b'] = pg.take((num_classes,))
    k_edges = sum(1 for i in range(steps) for _ in range(2 + i))
    params['alphas_normal'] = pg.take((k_edges, len(PRIMITIVES)), scale=0.001)
    params['alphas_reduce'] = pg.take((k_edges, len(PRIMITIVES)), scale=0.001)
    params['betas_normal'] = pg.take((k_edges,), scale=0.001)
    params['betas_reduce'] = pg.take((k_edges,), scale=0.001)
    params['steps'] = steps
    return params


if __name__ == "__main__":
    key = jax.random.PRNGKey(0)
    # Small search network: C=8, 3 layers (1 normal + 2 reduction cells),
    # steps=2, multiplier=2, stem_multiplier=3, 10 classes.
    params = init_network(key, C=8, num_classes=10, layers=3,
                          steps=2, multiplier=2, stem_multiplier=3)
    x = jax.random.normal(jax.random.fold_in(key, 12345), (2, 3, 64, 64),
                          dtype=jnp.float32)
    fwd = jax.jit(lambda inp: network_forward(inp, params))
    logits = jax.block_until_ready(fwd(x))
    assert logits.shape == (2, 10)
    assert bool(jnp.all(jnp.isfinite(logits)))
    print("KERNEL_OK")
</pallas_src>

<mosaic_0001>
module attributes {stable_mosaic.version = 11 : i64} {
  func.func @_matmul_kernel(%arg0: i32, %arg1: memref<512x27xbf16, #tpu.memory_space<vmem>>, %arg2: memref<27x12xbf16, #tpu.memory_space<vmem>>, %arg3: memref<512x12xf32, #tpu.memory_space<vmem>>) attributes {dimension_semantics = [#tpu.dimension_semantics<parallel>], iteration_bounds = array<i64: 4>, scalar_prefetch = 0 : i64, scratch_operands = 0 : i64, tpu.core_type = #tpu.core_type<tc>, window_params = [{transform_indices = @transform_0, window_bounds = array<i64: 512, 27>}, {pipeline_mode = #tpu.pipeline_mode<synchronous>, transform_indices = @transform_1, window_bounds = array<i64: 27, 12>}, {transform_indices = @transform_2, window_bounds = array<i64: 512, 12>}]} {
    %c0 = arith.constant 0 : index
    %c0_0 = arith.constant 0 : index
    %0 = vector.load %arg1[%c0, %c0_0] : memref<512x27xbf16, #tpu.memory_space<vmem>>, vector<512x27xbf16>
    %c0_1 = arith.constant 0 : index
    %c0_2 = arith.constant 0 : index
    %1 = vector.load %arg2[%c0_1, %c0_2] : memref<27x12xbf16, #tpu.memory_space<vmem>>, vector<27x12xbf16>
    %cst = arith.constant dense<0.000000e+00> : vector<512x12xf32>
    %2 = tpu.matmul %0, %1, %cst {dimension_numbers = #tpu.dot_dimension_numbers<[1], [0], [0], [1], [0, 0, 1, 1], [], []>} : vector<512x27xbf16>, vector<27x12xbf16>, vector<512x12xf32> -> vector<512x12xf32>
    %c0_3 = arith.constant 0 : index
    %c0_4 = arith.constant 0 : index
    %3 = vector.load %arg3[%c0_3, %c0_4] : memref<512x12xf32, #tpu.memory_space<vmem>>, vector<512x12xf32>
    tpu.vector_store %arg3[%c0_3, %c0_4], %2 {strides = array<i32>} : memref<512x12xf32, #tpu.memory_space<vmem>>, vector<512x12xf32>,
    return
  }
  func.func @transform_0(%arg0: i32) -> (i32, i32) {
    %c0_i32 = arith.constant 0 : i32
    %c0_i32_0 = arith.constant 0 : i32
    return %arg0, %c0_i32 : i32, i32
  }
  func.func @transform_1(%arg0: i32) -> (i32, i32) {
    %c0_i32 = arith.constant 0 : i32
    %c0_i32_0 = arith.constant 0 : i32
    %c0_i32_1 = arith.constant 0 : i32
    return %c0_i32, %c0_i32_0 : i32, i32
  }
  func.func @transform_2(%arg0: i32) -> (i32, i32) {
    %c0_i32 = arith.constant 0 : i32
    %c0_i32_0 = arith.constant 0 : i32
    return %arg0, %c0_i32 : i32, i32
  }
}

module attributes {stable_mosaic.version = 11 : i64} {
  func.func @_matmul_kernel(%arg0: i32, %arg1: memref<256x108xbf16, #tpu.memory_space<vmem>>, %arg2: memref<108x24xbf16, #tpu.memory_space<vmem>>, %arg3: memref<256x24xf32, #tpu.memory_space<vmem>>) attributes {dimension_semantics = [#tpu.dimension_semantics<parallel>], iteration_bounds = array<i64: 2>, scalar_prefetch = 0 : i64, scratch_operands = 0 : i64, tpu.core_type = #tpu.core_type<tc>, window_params = [{transform_indices = @transform_0, window_bounds = array<i64: 256, 108>}, {pipeline_mode = #tpu.pipeline_mode<synchronous>, transform_indices = @transform_1, window_bounds = array<i64: 108, 24>}, {transform_indices = @transform_2, window_bounds = array<i64: 256, 24>}]} {
    %c0 = arith.constant 0 : index
    %c0_0 = arith.constant 0 : index
    %0 = vector.load %arg1[%c0, %c0_0] : memref<256x108xbf16, #tpu.memory_space<vmem>>, vector<256x108xbf16>
    %cst = arith.constant 0.000000e+00 : bf16
    %1 = vector.broadcast %cst : bf16 to vector<256x108xbf16>
    %2 = arith.maximumf %0, %1 : vector<256x108xbf16>
    %c0_1 = arith.constant 0 : index
    %c0_2 = arith.constant 0 : index
    %3 = vector.load %arg2[%c0_1, %c0_2] : memref<108x24xbf16, #tpu.memory_space<vmem>>, vector<108x24xbf16>
    %cst_3 = arith.constant dense<0.000000e+00> : vector<256x24xf32>
    %4 = tpu.matmul %2, %3, %cst_3 {dimension_numbers = #tpu.dot_dimension_numbers<[1], [0], [0], [1], [0, 0, 1, 1], [], []>} : vector<256x108xbf16>, vector<108x24xbf16>, vector<256x24xf32> -> vector<256x24xf32>
    %c0_4 = arith.constant 0 : index
    %c0_5 = arith.constant 0 : index
    %5 = vector.load %arg3[%c0_4, %c0_5] : memref<256x24xf32, #tpu.memory_space<vmem>>, vector<256x24xf32>
    tpu.vector_store %arg3[%c0_4, %c0_5], %4 {strides = array<i32>} : memref<256x24xf32, #tpu.memory_space<vmem>>, vector<256x24xf32>,
    return
  }
  func.func @transform_0(%arg0: i32) -> (i32, i32) {
    %c0_i32 = arith.constant 0 : i32
    %c0_i32_0 = arith.constant 0 : i32
    return %arg0, %c0_i32 : i32, i32
  }
  func.func @transform_1(%arg0: i32) -> (i32, i32) {
    %c0_i32 = arith.constant 0 : i32
    %c0_i32_0 = arith.constant 0 : i32
    %c0_i32_1 = arith.constant 0 : i32
    return %c0_i32, %c0_i32_0 : i32, i32
  }
  func.func @transform_2(%arg0: i32) -> (i32, i32) {
    %c0_i32 = arith.constant 0 : i32
    %c0_i32_0 = arith.constant 0 : i32
    return %arg0, %c0_i32 : i32, i32
  }
}

module attributes {stable_mosaic.version = 11 : i64} {
  func.func @_matmul_kernel(%arg0: i32, %arg1: memref<64x48xbf16, #tpu.memory_space<vmem>>, %arg2: memref<48x8xbf16, #tpu.memory_space<vmem>>, %arg3: memref<64x8xf32, #tpu.memory_space<vmem>>) attributes {dimension_semantics = [#tpu.dimension_semantics<parallel>], iteration_bounds = array<i64: 2>, scalar_prefetch = 0 : i64, scratch_operands = 0 : i64, tpu.core_type = #tpu.core_type<tc>, window_params = [{transform_indices = @transform_0, window_bounds = array<i64: 64, 48>}, {pipeline_mode = #tpu.pipeline_mode<synchronous>, transform_indices = @transform_1, window_bounds = array<i64: 48, 8>}, {transform_indices = @transform_2, window_bounds = array<i64: 64, 8>}]} {
    %c0 = arith.constant 0 : index
    %c0_0 = arith.constant 0 : index
    %0 = vector.load %arg1[%c0, %c0_0] : memref<64x48xbf16, #tpu.memory_space<vmem>>, vector<64x48xbf16>
    %cst = arith.constant 0.000000e+00 : bf16
    %1 = vector.broadcast %cst : bf16 to vector<64x48xbf16>
    %2 = arith.maximumf %0, %1 : vector<64x48xbf16>
    %c0_1 = arith.constant 0 : index
    %c0_2 = arith.constant 0 : index
    %3 = vector.load %arg2[%c0_1, %c0_2] : memref<48x8xbf16, #tpu.memory_space<vmem>>, vector<48x8xbf16>
    %cst_3 = arith.constant dense<0.000000e+00> : vector<64x8xf32>
    %4 = tpu.matmul %2, %3, %cst_3 {dimension_numbers = #tpu.dot_dimension_numbers<[1], [0], [0], [1], [0, 0, 1, 1], [], []>} : vector<64x48xbf16>, vector<48x8xbf16>, vector<64x8xf32> -> vector<64x8xf32>
    %c0_4 = arith.constant 0 : index
    %c0_5 = arith.constant 0 : index
    %5 = vector.load %arg3[%c0_4, %c0_5] : memref<64x8xf32, #tpu.memory_space<vmem>>, vector<64x8xf32>
    tpu.vector_store %arg3[%c0_4, %c0_5], %4 {strides = array<i32>} : memref<64x8xf32, #tpu.memory_space<vmem>>, vector<64x8xf32>,
    return
  }
  func.func @transform_0(%arg0: i32) -> (i32, i32) {
    %c0_i32 = arith.constant 0 : i32
    %c0_i32_0 = arith.constant 0 : i32
    return %arg0, %c0_i32 : i32, i32
  }
  func.func @transform_1(%arg0: i32) -> (i32, i32) {
    %c0_i32 = arith.constant 0 : i32
    %c0_i32_0 = arith.constant 0 : i32
    %c0_i32_1 = arith.constant 0 : i32
    return %c0_i32, %c0_i32_0 : i32, i32
  }
  func.func @transform_2(%arg0: i32) -> (i32, i32) {
    %c0_i32 = arith.constant 0 : i32
    %c0_i32_0 = arith.constant 0 : i32
    return %arg0, %c0_i32 : i32, i32
  }
}

module attributes {stable_mosaic.version = 11 : i64} {
  func.func @_matmul_kernel(%arg0: i32, %arg1: memref<64x324xbf16, #tpu.memory_space<vmem>>, %arg2: memref<324x32xbf16, #tpu.memory_space<vmem>>, %arg3: memref<64x32xf32, #tpu.memory_space<vmem>>) attributes {dimension_semantics = [#tpu.dimension_semantics<parallel>], iteration_bounds = array<i64: 2>, scalar_prefetch = 0 : i64, scratch_operands = 0 : i64, tpu.core_type = #tpu.core_type<tc>, window_params = [{transform_indices = @transform_0, window_bounds = array<i64: 64, 324>}, {pipeline_mode = #tpu.pipeline_mode<synchronous>, transform_indices = @transform_1, window_bounds = array<i64: 324, 32>}, {transform_indices = @transform_2, window_bounds = array<i64: 64, 32>}]} {
    %c0 = arith.constant 0 : index
    %c0_0 = arith.constant 0 : index
    %0 = vector.load %arg1[%c0, %c0_0] : memref<64x324xbf16, #tpu.memory_space<vmem>>, vector<64x324xbf16>
    %cst = arith.constant 0.000000e+00 : bf16
    %1 = vector.broadcast %cst : bf16 to vector<64x324xbf16>
    %2 = arith.maximumf %0, %1 : vector<64x324xbf16>
    %c0_1 = arith.constant 0 : index
    %c0_2 = arith.constant 0 : index
    %3 = vector.load %arg2[%c0_1, %c0_2] : memref<324x32xbf16, #tpu.memory_space<vmem>>, vector<324x32xbf16>
    %cst_3 = arith.constant dense<0.000000e+00> : vector<64x32xf32>
    %4 = tpu.matmul %2, %3, %cst_3 {dimension_numbers = #tpu.dot_dimension_numbers<[1], [0], [0], [1], [0, 0, 1, 1], [], []>} : vector<64x324xbf16>, vector<324x32xbf16>, vector<64x32xf32> -> vector<64x32xf32>
    %c0_4 = arith.constant 0 : index
    %c0_5 = arith.constant 0 : index
    %5 = vector.load %arg3[%c0_4, %c0_5] : memref<64x32xf32, #tpu.memory_space<vmem>>, vector<64x32xf32>
    tpu.vector_store %arg3[%c0_4, %c0_5], %4 {strides = array<i32>} : memref<64x32xf32, #tpu.memory_space<vmem>>, vector<64x32xf32>,
    return
  }
  func.func @transform_0(%arg0: i32) -> (i32, i32) {
    %c0_i32 = arith.constant 0 : i32
    %c0_i32_0 = arith.constant 0 : i32
    return %arg0, %c0_i32 : i32, i32
  }
  func.func @transform_1(%arg0: i32) -> (i32, i32) {
    %c0_i32 = arith.constant 0 : i32
    %c0_i32_0 = arith.constant 0 : i32
    %c0_i32_1 = arith.constant 0 : i32
    return %c0_i32, %c0_i32_0 : i32, i32
  }
  func.func @transform_2(%arg0: i32) -> (i32, i32) {
    %c0_i32 = arith.constant 0 : i32
    %c0_i32_0 = arith.constant 0 : i32
    return %arg0, %c0_i32 : i32, i32
  }
}

module attributes {stable_mosaic.version = 11 : i64} {
  func.func @_matmul_kernel(%arg0: i32, %arg1: memref<64x272xbf16, #tpu.memory_space<vmem>>, %arg2: memref<272x16xbf16, #tpu.memory_space<vmem>>, %arg3: memref<64x16xf32, #tpu.memory_space<vmem>>) attributes {dimension_semantics = [#tpu.dimension_semantics<parallel>], iteration_bounds = array<i64: 2>, scalar_prefetch = 0 : i64, scratch_operands = 0 : i64, tpu.core_type = #tpu.core_type<tc>, window_params = [{transform_indices = @transform_0, window_bounds = array<i64: 64, 272>}, {pipeline_mode = #tpu.pipeline_mode<synchronous>, transform_indices = @transform_1, window_bounds = array<i64: 272, 16>}, {transform_indices = @transform_2, window_bounds = array<i64: 64, 16>}]} {
    %c0 = arith.constant 0 : index
    %c0_0 = arith.constant 0 : index
    %0 = vector.load %arg1[%c0, %c0_0] : memref<64x272xbf16, #tpu.memory_space<vmem>>, vector<64x272xbf16>
    %cst = arith.constant 0.000000e+00 : bf16
    %1 = vector.broadcast %cst : bf16 to vector<64x272xbf16>
    %2 = arith.maximumf %0, %1 : vector<64x272xbf16>
    %c0_1 = arith.constant 0 : index
    %c0_2 = arith.constant 0 : index
    %3 = vector.load %arg2[%c0_1, %c0_2] : memref<272x16xbf16, #tpu.memory_space<vmem>>, vector<272x16xbf16>
    %cst_3 = arith.constant dense<0.000000e+00> : vector<64x16xf32>
    %4 = tpu.matmul %2, %3, %cst_3 {dimension_numbers = #tpu.dot_dimension_numbers<[1], [0], [0], [1], [0, 0, 1, 1], [], []>} : vector<64x272xbf16>, vector<272x16xbf16>, vector<64x16xf32> -> vector<64x16xf32>
    %c0_4 = arith.constant 0 : index
    %c0_5 = arith.constant 0 : index
    %5 = vector.load %arg3[%c0_4, %c0_5] : memref<64x16xf32, #tpu.memory_space<vmem>>, vector<64x16xf32>
    tpu.vector_store %arg3[%c0_4, %c0_5], %4 {strides = array<i32>} : memref<64x16xf32, #tpu.memory_space<vmem>>, vector<64x16xf32>,
    return
  }
  func.func @transform_0(%arg0: i32) -> (i32, i32) {
    %c0_i32 = arith.constant 0 : i32
    %c0_i32_0 = arith.constant 0 : i32
    return %arg0, %c0_i32 : i32, i32
  }
  func.func @transform_1(%arg0: i32) -> (i32, i32) {
    %c0_i32 = arith.constant 0 : i32
    %c0_i32_0 = arith.constant 0 : i32
    %c0_i32_1 = arith.constant 0 : i32
    return %c0_i32, %c0_i32_0 : i32, i32
  }
  func.func @transform_2(%arg0: i32) -> (i32, i32) {
    %c0_i32 = arith.constant 0 : i32
    %c0_i32_0 = arith.constant 0 : i32
    return %arg0, %c0_i32 : i32, i32
  }
}

module attributes {stable_mosaic.version = 11 : i64} {
  func.func @_matmul_kernel(%arg0: i32, %arg1: memref<64x216xbf16, #tpu.memory_space<vmem>>, %arg2: memref<216x24xbf16, #tpu.memory_space<vmem>>, %arg3: memref<64x24xf32, #tpu.memory_space<vmem>>) attributes {dimension_semantics = [#tpu.dimension_semantics<parallel>], iteration_bounds = array<i64: 2>, scalar_prefetch = 0 : i64, scratch_operands = 0 : i64, tpu.core_type = #tpu.core_type<tc>, window_params = [{transform_indices = @transform_0, window_bounds = array<i64: 64, 216>}, {pipeline_mode = #tpu.pipeline_mode<synchronous>, transform_indices = @transform_1, window_bounds = array<i64: 216, 24>}, {transform_indices = @transform_2, window_bounds = array<i64: 64, 24>}]} {
    %c0 = arith.constant 0 : index
    %c0_0 = arith.constant 0 : index
    %0 = vector.load %arg1[%c0, %c0_0] : memref<64x216xbf16, #tpu.memory_space<vmem>>, vector<64x216xbf16>
    %cst = arith.constant 0.000000e+00 : bf16
    %1 = vector.broadcast %cst : bf16 to vector<64x216xbf16>
    %2 = arith.maximumf %0, %1 : vector<64x216xbf16>
    %c0_1 = arith.constant 0 : index
    %c0_2 = arith.constant 0 : index
    %3 = vector.load %arg2[%c0_1, %c0_2] : memref<216x24xbf16, #tpu.memory_space<vmem>>, vector<216x24xbf16>
    %cst_3 = arith.constant dense<0.000000e+00> : vector<64x24xf32>
    %4 = tpu.matmul %2, %3, %cst_3 {dimension_numbers = #tpu.dot_dimension_numbers<[1], [0], [0], [1], [0, 0, 1, 1], [], []>} : vector<64x216xbf16>, vector<216x24xbf16>, vector<64x24xf32> -> vector<64x24xf32>
    %c0_4 = arith.constant 0 : index
    %c0_5 = arith.constant 0 : index
    %5 = vector.load %arg3[%c0_4, %c0_5] : memref<64x24xf32, #tpu.memory_space<vmem>>, vector<64x24xf32>
    tpu.vector_store %arg3[%c0_4, %c0_5], %4 {strides = array<i32>} : memref<64x24xf32, #tpu.memory_space<vmem>>, vector<64x24xf32>,
    return
  }
  func.func @transform_0(%arg0: i32) -> (i32, i32) {
    %c0_i32 = arith.constant 0 : i32
    %c0_i32_0 = arith.constant 0 : i32
    return %arg0, %c0_i32 : i32, i32
  }
  func.func @transform_1(%arg0: i32) -> (i32, i32) {
    %c0_i32 = arith.constant 0 : i32
    %c0_i32_0 = arith.constant 0 : i32
    %c0_i32_1 = arith.constant 0 : i32
    return %c0_i32, %c0_i32_0 : i32, i32
  }
  func.func @transform_2(%arg0: i32) -> (i32, i32) {
    %c0_i32 = arith.constant 0 : i32
    %c0_i32_0 = arith.constant 0 : i32
    return %arg0, %c0_i32 : i32, i32
  }
}

module attributes {stable_mosaic.version = 11 : i64} {
  func.func @_matmul_kernel(%arg0: i32, %arg1: memref<64x24xbf16, #tpu.memory_space<vmem>>, %arg2: memref<24x8xbf16, #tpu.memory_space<vmem>>, %arg3: memref<64x8xf32, #tpu.memory_space<vmem>>) attributes {dimension_semantics = [#tpu.dimension_semantics<parallel>], iteration_bounds = array<i64: 2>, scalar_prefetch = 0 : i64, scratch_operands = 0 : i64, tpu.core_type = #tpu.core_type<tc>, window_params = [{transform_indices = @transform_0, window_bounds = array<i64: 64, 24>}, {pipeline_mode = #tpu.pipeline_mode<synchronous>, transform_indices = @transform_1, window_bounds = array<i64: 24, 8>}, {transform_indices = @transform_2, window_bounds = array<i64: 64, 8>}]} {
    %c0 = arith.constant 0 : index
    %c0_0 = arith.constant 0 : index
    %0 = vector.load %arg1[%c0, %c0_0] : memref<64x24xbf16, #tpu.memory_space<vmem>>, vector<64x24xbf16>
    %cst = arith.constant 0.000000e+00 : bf16
    %1 = vector.broadcast %cst : bf16 to vector<64x24xbf16>
    %2 = arith.maximumf %0, %1 : vector<64x24xbf16>
    %c0_1 = arith.constant 0 : index
    %c0_2 = arith.constant 0 : index
    %3 = vector.load %arg2[%c0_1, %c0_2] : memref<24x8xbf16, #tpu.memory_space<vmem>>, vector<24x8xbf16>
    %cst_3 = arith.constant dense<0.000000e+00> : vector<64x8xf32>
    %4 = tpu.matmul %2, %3, %cst_3 {dimension_numbers = #tpu.dot_dimension_numbers<[1], [0], [0], [1], [0, 0, 1, 1], [], []>} : vector<64x24xbf16>, vector<24x8xbf16>, vector<64x8xf32> -> vector<64x8xf32>
    %c0_4 = arith.constant 0 : index
    %c0_5 = arith.constant 0 : index
    %5 = vector.load %arg3[%c0_4, %c0_5] : memref<64x8xf32, #tpu.memory_space<vmem>>, vector<64x8xf32>
    tpu.vector_store %arg3[%c0_4, %c0_5], %4 {strides = array<i32>} : memref<64x8xf32, #tpu.memory_space<vmem>>, vector<64x8xf32>,
    return
  }
  func.func @transform_0(%arg0: i32) -> (i32, i32) {
    %c0_i32 = arith.constant 0 : i32
    %c0_i32_0 = arith.constant 0 : i32
    return %arg0, %c0_i32 : i32, i32
  }
  func.func @transform_1(%arg0: i32) -> (i32, i32) {
    %c0_i32 = arith.constant 0 : i32
    %c0_i32_0 = arith.constant 0 : i32
    %c0_i32_1 = arith.constant 0 : i32
    return %c0_i32, %c0_i32_0 : i32, i32
  }
  func.func @transform_2(%arg0: i32) -> (i32, i32) {
    %c0_i32 = arith.constant 0 : i32
    %c0_i32_0 = arith.constant 0 : i32
    return %arg0, %c0_i32 : i32, i32
  }
}

module attributes {stable_mosaic.version = 11 : i64} {
  func.func @_matmul_kernel(%arg0: i32, %arg1: memref<64x324xbf16, #tpu.memory_space<vmem>>, %arg2: memref<324x16xbf16, #tpu.memory_space<vmem>>, %arg3: memref<64x16xf32, #tpu.memory_space<vmem>>) attributes {dimension_semantics = [#tpu.dimension_semantics<parallel>], iteration_bounds = array<i64: 2>, scalar_prefetch = 0 : i64, scratch_operands = 0 : i64, tpu.core_type = #tpu.core_type<tc>, window_params = [{transform_indices = @transform_0, window_bounds = array<i64: 64, 324>}, {pipeline_mode = #tpu.pipeline_mode<synchronous>, transform_indices = @transform_1, window_bounds = array<i64: 324, 16>}, {transform_indices = @transform_2, window_bounds = array<i64: 64, 16>}]} {
    %c0 = arith.constant 0 : index
    %c0_0 = arith.constant 0 : index
    %0 = vector.load %arg1[%c0, %c0_0] : memref<64x324xbf16, #tpu.memory_space<vmem>>, vector<64x324xbf16>
    %cst = arith.constant 0.000000e+00 : bf16
    %1 = vector.broadcast %cst : bf16 to vector<64x324xbf16>
    %2 = arith.maximumf %0, %1 : vector<64x324xbf16>
    %c0_1 = arith.constant 0 : index
    %c0_2 = arith.constant 0 : index
    %3 = vector.load %arg2[%c0_1, %c0_2] : memref<324x16xbf16, #tpu.memory_space<vmem>>, vector<324x16xbf16>
    %cst_3 = arith.constant dense<0.000000e+00> : vector<64x16xf32>
    %4 = tpu.matmul %2, %3, %cst_3 {dimension_numbers = #tpu.dot_dimension_numbers<[1], [0], [0], [1], [0, 0, 1, 1], [], []>} : vector<64x324xbf16>, vector<324x16xbf16>, vector<64x16xf32> -> vector<64x16xf32>
    %c0_4 = arith.constant 0 : index
    %c0_5 = arith.constant 0 : index
    %5 = vector.load %arg3[%c0_4, %c0_5] : memref<64x16xf32, #tpu.memory_space<vmem>>, vector<64x16xf32>
    tpu.vector_store %arg3[%c0_4, %c0_5], %4 {strides = array<i32>} : memref<64x16xf32, #tpu.memory_space<vmem>>, vector<64x16xf32>,
    return
  }
  func.func @transform_0(%arg0: i32) -> (i32, i32) {
    %c0_i32 = arith.constant 0 : i32
    %c0_i32_0 = arith.constant 0 : i32
    return %arg0, %c0_i32 : i32, i32
  }
  func.func @transform_1(%arg0: i32) -> (i32, i32) {
    %c0_i32 = arith.constant 0 : i32
    %c0_i32_0 = arith.constant 0 : i32
    %c0_i32_1 = arith.constant 0 : i32
    return %c0_i32, %c0_i32_0 : i32, i32
  }
  func.func @transform_2(%arg0: i32) -> (i32, i32) {
    %c0_i32 = arith.constant 0 : i32
    %c0_i32_0 = arith.constant 0 : i32
    return %arg0, %c0_i32 : i32, i32
  }
}

module attributes {stable_mosaic.version = 11 : i64} {
  func.func @_matmul_kernel(%arg0: i32, %arg1: memref<64x136xbf16, #tpu.memory_space<vmem>>, %arg2: memref<136x8xbf16, #tpu.memory_space<vmem>>, %arg3: memref<64x8xf32, #tpu.memory_space<vmem>>) attributes {dimension_semantics = [#tpu.dimension_semantics<parallel>], iteration_bounds = array<i64: 2>, scalar_prefetch = 0 : i64, scratch_operands = 0 : i64, tpu.core_type = #tpu.core_type<tc>, window_params = [{transform_indices = @transform_0, window_bounds = array<i64: 64, 136>}, {pipeline_mode = #tpu.pipeline_mode<synchronous>, transform_indices = @transform_1, window_bounds = array<i64: 136, 8>}, {transform_indices = @transform_2, window_bounds = array<i64: 64, 8>}]} {
    %c0 = arith.constant 0 : index
    %c0_0 = arith.constant 0 : index
    %0 = vector.load %arg1[%c0, %c0_0] : memref<64x136xbf16, #tpu.memory_space<vmem>>, vector<64x136xbf16>
    %cst = arith.constant 0.000000e+00 : bf16
    %1 = vector.broadcast %cst : bf16 to vector<64x136xbf16>
    %2 = arith.maximumf %0, %1 : vector<64x136xbf16>
    %c0_1 = arith.constant 0 : index
    %c0_2 = arith.constant 0 : index
    %3 = vector.load %arg2[%c0_1, %c0_2] : memref<136x8xbf16, #tpu.memory_space<vmem>>, vector<136x8xbf16>
    %cst_3 = arith.constant dense<0.000000e+00> : vector<64x8xf32>
    %4 = tpu.matmul %2, %3, %cst_3 {dimension_numbers = #tpu.dot_dimension_numbers<[1], [0], [0], [1], [0, 0, 1, 1], [], []>} : vector<64x136xbf16>, vector<136x8xbf16>, vector<64x8xf32> -> vector<64x8xf32>
    %c0_4 = arith.constant 0 : index
    %c0_5 = arith.constant 0 : index
    %5 = vector.load %arg3[%c0_4, %c0_5] : memref<64x8xf32, #tpu.memory_space<vmem>>, vector<64x8xf32>
    tpu.vector_store %arg3[%c0_4, %c0_5], %4 {strides = array<i32>} : memref<64x8xf32, #tpu.memory_space<vmem>>, vector<64x8xf32>,
    return
  }
  func.func @transform_0(%arg0: i32) -> (i32, i32) {
    %c0_i32 = arith.constant 0 : i32
    %c0_i32_0 = arith.constant 0 : i32
    return %arg0, %c0_i32 : i32, i32
  }
  func.func @transform_1(%arg0: i32) -> (i32, i32) {
    %c0_i32 = arith.constant 0 : i32
    %c0_i32_0 = arith.constant 0 : i32
    %c0_i32_1 = arith.constant 0 : i32
    return %c0_i32, %c0_i32_0 : i32, i32
  }
  func.func @transform_2(%arg0: i32) -> (i32, i32) {
    %c0_i32 = arith.constant 0 : i32
    %c0_i32_0 = arith.constant 0 : i32
    return %arg0, %c0_i32 : i32, i32
  }
}

module attributes {stable_mosaic.version = 11 : i64} {
  func.func @_matmul_kernel(%arg0: i32, %arg1: memref<64x16xbf16, #tpu.memory_space<vmem>>, %arg2: memref<16x16xbf16, #tpu.memory_space<vmem>>, %arg3: memref<64x16xf32, #tpu.memory_space<vmem>>) attributes {dimension_semantics = [#tpu.dimension_semantics<parallel>], iteration_bounds = array<i64: 2>, scalar_prefetch = 0 : i64, scratch_operands = 0 : i64, tpu.core_type = #tpu.core_type<tc>, window_params = [{transform_indices = @transform_0, window_bounds = array<i64: 64, 16>}, {pipeline_mode = #tpu.pipeline_mode<synchronous>, transform_indices = @transform_1, window_bounds = array<i64: 16, 16>}, {transform_indices = @transform_2, window_bounds = array<i64: 64, 16>}]} {
    %c0 = arith.constant 0 : index
    %c0_0 = arith.constant 0 : index
    %0 = vector.load %arg1[%c0, %c0_0] : memref<64x16xbf16, #tpu.memory_space<vmem>>, vector<64x16xbf16>
    %cst = arith.constant 0.000000e+00 : bf16
    %1 = vector.broadcast %cst : bf16 to vector<64x16xbf16>
    %2 = arith.maximumf %0, %1 : vector<64x16xbf16>
    %c0_1 = arith.constant 0 : index
    %c0_2 = arith.constant 0 : index
    %3 = vector.load %arg2[%c0_1, %c0_2] : memref<16x16xbf16, #tpu.memory_space<vmem>>, vector<16x16xbf16>
    %cst_3 = arith.constant dense<0.000000e+00> : vector<64x16xf32>
    %4 = tpu.matmul %2, %3, %cst_3 {dimension_numbers = #tpu.dot_dimension_numbers<[1], [0], [0], [1], [0, 0, 1, 1], [], []>} : vector<64x16xbf16>, vector<16x16xbf16>, vector<64x16xf32> -> vector<64x16xf32>
    %c0_4 = arith.constant 0 : index
    %c0_5 = arith.constant 0 : index
    %5 = vector.load %arg3[%c0_4, %c0_5] : memref<64x16xf32, #tpu.memory_space<vmem>>, vector<64x16xf32>
    tpu.vector_store %arg3[%c0_4, %c0_5], %4 {strides = array<i32>} : memref<64x16xf32, #tpu.memory_space<vmem>>, vector<64x16xf32>,
    return
  }
  func.func @transform_0(%arg0: i32) -> (i32, i32) {
    %c0_i32 = arith.constant 0 : i32
    %c0_i32_0 = arith.constant 0 : i32
    return %arg0, %c0_i32 : i32, i32
  }
  func.func @transform_1(%arg0: i32) -> (i32, i32) {
    %c0_i32 = arith.constant 0 : i32
    %c0_i32_0 = arith.constant 0 : i32
    %c0_i32_1 = arith.constant 0 : i32
    return %c0_i32, %c0_i32_0 : i32, i32
  }
  func.func @transform_2(%arg0: i32) -> (i32, i32) {
    %c0_i32 = arith.constant 0 : i32
    %c0_i32_0 = arith.constant 0 : i32
    return %arg0, %c0_i32 : i32, i32
  }
}

module attributes {stable_mosaic.version = 11 : i64} {
  func.func @_matmul_kernel(%arg0: i32, %arg1: memref<16x648xbf16, #tpu.memory_space<vmem>>, %arg2: memref<648x80xbf16, #tpu.memory_space<vmem>>, %arg3: memref<16x80xf32, #tpu.memory_space<vmem>>) attributes {dimension_semantics = [#tpu.dimension_semantics<parallel>], iteration_bounds = array<i64: 2>, scalar_prefetch = 0 : i64, scratch_operands = 0 : i64, tpu.core_type = #tpu.core_type<tc>, window_params = [{transform_indices = @transform_0, window_bounds = array<i64: 16, 648>}, {pipeline_mode = #tpu.pipeline_mode<synchronous>, transform_indices = @transform_1, window_bounds = array<i64: 648, 80>}, {transform_indices = @transform_2, window_bounds = array<i64: 16, 80>}]} {
    %c0 = arith.constant 0 : index
    %c0_0 = arith.constant 0 : index
    %0 = vector.load %arg1[%c0, %c0_0] : memref<16x648xbf16, #tpu.memory_space<vmem>>, vector<16x648xbf16>
    %cst = arith.constant 0.000000e+00 : bf16
    %1 = vector.broadcast %cst : bf16 to vector<16x648xbf16>
    %2 = arith.maximumf %0, %1 : vector<16x648xbf16>
    %c0_1 = arith.constant 0 : index
    %c0_2 = arith.constant 0 : index
    %3 = vector.load %arg2[%c0_1, %c0_2] : memref<648x80xbf16, #tpu.memory_space<vmem>>, vector<648x80xbf16>
    %cst_3 = arith.constant dense<0.000000e+00> : vector<16x80xf32>
    %4 = tpu.matmul %2, %3, %cst_3 {dimension_numbers = #tpu.dot_dimension_numbers<[1], [0], [0], [1], [0, 0, 1, 1], [], []>} : vector<16x648xbf16>, vector<648x80xbf16>, vector<16x80xf32> -> vector<16x80xf32>
    %c0_4 = arith.constant 0 : index
    %c0_5 = arith.constant 0 : index
    %5 = vector.load %arg3[%c0_4, %c0_5] : memref<16x80xf32, #tpu.memory_space<vmem>>, vector<16x80xf32>
    tpu.vector_store %arg3[%c0_4, %c0_5], %4 {strides = array<i32>} : memref<16x80xf32, #tpu.memory_space<vmem>>, vector<16x80xf32>,
    return
  }
  func.func @transform_0(%arg0: i32) -> (i32, i32) {
    %c0_i32 = arith.constant 0 : i32
    %c0_i32_0 = arith.constant 0 : i32
    return %arg0, %c0_i32 : i32, i32
  }
  func.func @transform_1(%arg0: i32) -> (i32, i32) {
    %c0_i32 = arith.constant 0 : i32
    %c0_i32_0 = arith.constant 0 : i32
    %c0_i32_1 = arith.constant 0 : i32
    return %c0_i32, %c0_i32_0 : i32, i32
  }
  func.func @transform_2(%arg0: i32) -> (i32, i32) {
    %c0_i32 = arith.constant 0 : i32
    %c0_i32_0 = arith.constant 0 : i32
    return %arg0, %c0_i32 : i32, i32
  }
}

module attributes {stable_mosaic.version = 11 : i64} {
  func.func @_matmul_kernel(%arg0: i32, %arg1: memref<16x544xbf16, #tpu.memory_space<vmem>>, %arg2: memref<544x32xbf16, #tpu.memory_space<vmem>>, %arg3: memref<16x32xf32, #tpu.memory_space<vmem>>) attributes {dimension_semantics = [#tpu.dimension_semantics<parallel>], iteration_bounds = array<i64: 2>, scalar_prefetch = 0 : i64, scratch_operands = 0 : i64, tpu.core_type = #tpu.core_type<tc>, window_params = [{transform_indices = @transform_0, window_bounds = array<i64: 16, 544>}, {pipeline_mode = #tpu.pipeline_mode<synchronous>, transform_indices = @transform_1, window_bounds = array<i64: 544, 32>}, {transform_indices = @transform_2, window_bounds = array<i64: 16, 32>}]} {
    %c0 = arith.constant 0 : index
    %c0_0 = arith.constant 0 : index
    %0 = vector.load %arg1[%c0, %c0_0] : memref<16x544xbf16, #tpu.memory_space<vmem>>, vector<16x544xbf16>
    %cst = arith.constant 0.000000e+00 : bf16
    %1 = vector.broadcast %cst : bf16 to vector<16x544xbf16>
    %2 = arith.maximumf %0, %1 : vector<16x544xbf16>
    %c0_1 = arith.constant 0 : index
    %c0_2 = arith.constant 0 : index
    %3 = vector.load %arg2[%c0_1, %c0_2] : memref<544x32xbf16, #tpu.memory_space<vmem>>, vector<544x32xbf16>
    %cst_3 = arith.constant dense<0.000000e+00> : vector<16x32xf32>
    %4 = tpu.matmul %2, %3, %cst_3 {dimension_numbers = #tpu.dot_dimension_numbers<[1], [0], [0], [1], [0, 0, 1, 1], [], []>} : vector<16x544xbf16>, vector<544x32xbf16>, vector<16x32xf32> -> vector<16x32xf32>
    %c0_4 = arith.constant 0 : index
    %c0_5 = arith.constant 0 : index
    %5 = vector.load %arg3[%c0_4, %c0_5] : memref<16x32xf32, #tpu.memory_space<vmem>>, vector<16x32xf32>
    tpu.vector_store %arg3[%c0_4, %c0_5], %4 {strides = array<i32>} : memref<16x32xf32, #tpu.memory_space<vmem>>, vector<16x32xf32>,
    return
  }
  func.func @transform_0(%arg0: i32) -> (i32, i32) {
    %c0_i32 = arith.constant 0 : i32
    %c0_i32_0 = arith.constant 0 : i32
    return %arg0, %c0_i32 : i32, i32
  }
  func.func @transform_1(%arg0: i32) -> (i32, i32) {
    %c0_i32 = arith.constant 0 : i32
    %c0_i32_0 = arith.constant 0 : i32
    %c0_i32_1 = arith.constant 0 : i32
    return %c0_i32, %c0_i32_0 : i32, i32
  }
  func.func @transform_2(%arg0: i32) -> (i32, i32) {
    %c0_i32 = arith.constant 0 : i32
    %c0_i32_0 = arith.constant 0 : i32
    return %arg0, %c0_i32 : i32, i32
  }
}

module attributes {stable_mosaic.version = 11 : i64} {
  func.func @_matmul_kernel(%arg0: i32, %arg1: memref<64x24xbf16, #tpu.memory_space<vmem>>, %arg2: memref<24x16xbf16, #tpu.memory_space<vmem>>, %arg3: memref<64x16xf32, #tpu.memory_space<vmem>>) attributes {dimension_semantics = [#tpu.dimension_semantics<parallel>], iteration_bounds = array<i64: 2>, scalar_prefetch = 0 : i64, scratch_operands = 0 : i64, tpu.core_type = #tpu.core_type<tc>, window_params = [{transform_indices = @transform_0, window_bounds = array<i64: 64, 24>}, {pipeline_mode = #tpu.pipeline_mode<synchronous>, transform_indices = @transform_1, window_bounds = array<i64: 24, 16>}, {transform_indices = @transform_2, window_bounds = array<i64: 64, 16>}]} {
    %c0 = arith.constant 0 : index
    %c0_0 = arith.constant 0 : index
    %0 = vector.load %arg1[%c0, %c0_0] : memref<64x24xbf16, #tpu.memory_space<vmem>>, vector<64x24xbf16>
    %cst = arith.constant 0.000000e+00 : bf16
    %1 = vector.broadcast %cst : bf16 to vector<64x24xbf16>
    %2 = arith.maximumf %0, %1 : vector<64x24xbf16>
    %c0_1 = arith.constant 0 : index
    %c0_2 = arith.constant 0 : index
    %3 = vector.load %arg2[%c0_1, %c0_2] : memref<24x16xbf16, #tpu.memory_space<vmem>>, vector<24x16xbf16>
    %cst_3 = arith.constant dense<0.000000e+00> : vector<64x16xf32>
    %4 = tpu.matmul %2, %3, %cst_3 {dimension_numbers = #tpu.dot_dimension_numbers<[1], [0], [0], [1], [0, 0, 1, 1], [], []>} : vector<64x24xbf16>, vector<24x16xbf16>, vector<64x16xf32> -> vector<64x16xf32>
    %c0_4 = arith.constant 0 : index
    %c0_5 = arith.constant 0 : index
    %5 = vector.load %arg3[%c0_4, %c0_5] : memref<64x16xf32, #tpu.memory_space<vmem>>, vector<64x16xf32>
    tpu.vector_store %arg3[%c0_4, %c0_5], %4 {strides = array<i32>} : memref<64x16xf32, #tpu.memory_space<vmem>>, vector<64x16xf32>,
    return
  }
  func.func @transform_0(%arg0: i32) -> (i32, i32) {
    %c0_i32 = arith.constant 0 : i32
    %c0_i32_0 = arith.constant 0 : i32
    return %arg0, %c0_i32 : i32, i32
  }
  func.func @transform_1(%arg0: i32) -> (i32, i32) {
    %c0_i32 = arith.constant 0 : i32
    %c0_i32_0 = arith.constant 0 : i32
    %c0_i32_1 = arith.constant 0 : i32
    return %c0_i32, %c0_i32_0 : i32, i32
  }
  func.func @transform_2(%arg0: i32) -> (i32, i32) {
    %c0_i32 = arith.constant 0 : i32
    %c0_i32_0 = arith.constant 0 : i32
    return %arg0, %c0_i32 : i32, i32
  }
}

module attributes {stable_mosaic.version = 11 : i64} {
  func.func @_matmul_kernel(%arg0: i32, %arg1: memref<16x648xbf16, #tpu.memory_space<vmem>>, %arg2: memref<648x32xbf16, #tpu.memory_space<vmem>>, %arg3: memref<16x32xf32, #tpu.memory_space<vmem>>) attributes {dimension_semantics = [#tpu.dimension_semantics<parallel>], iteration_bounds = array<i64: 2>, scalar_prefetch = 0 : i64, scratch_operands = 0 : i64, tpu.core_type = #tpu.core_type<tc>, window_params = [{transform_indices = @transform_0, window_bounds = array<i64: 16, 648>}, {pipeline_mode = #tpu.pipeline_mode<synchronous>, transform_indices = @transform_1, window_bounds = array<i64: 648, 32>}, {transform_indices = @transform_2, window_bounds = array<i64: 16, 32>}]} {
    %c0 = arith.constant 0 : index
    %c0_0 = arith.constant 0 : index
    %0 = vector.load %arg1[%c0, %c0_0] : memref<16x648xbf16, #tpu.memory_space<vmem>>, vector<16x648xbf16>
    %cst = arith.constant 0.000000e+00 : bf16
    %1 = vector.broadcast %cst : bf16 to vector<16x648xbf16>
    %2 = arith.maximumf %0, %1 : vector<16x648xbf16>
    %c0_1 = arith.constant 0 : index
    %c0_2 = arith.constant 0 : index
    %3 = vector.load %arg2[%c0_1, %c0_2] : memref<648x32xbf16, #tpu.memory_space<vmem>>, vector<648x32xbf16>
    %cst_3 = arith.constant dense<0.000000e+00> : vector<16x32xf32>
    %4 = tpu.matmul %2, %3, %cst_3 {dimension_numbers = #tpu.dot_dimension_numbers<[1], [0], [0], [1], [0, 0, 1, 1], [], []>} : vector<16x648xbf16>, vector<648x32xbf16>, vector<16x32xf32> -> vector<16x32xf32>
    %c0_4 = arith.constant 0 : index
    %c0_5 = arith.constant 0 : index
    %5 = vector.load %arg3[%c0_4, %c0_5] : memref<16x32xf32, #tpu.memory_space<vmem>>, vector<16x32xf32>
    tpu.vector_store %arg3[%c0_4, %c0_5], %4 {strides = array<i32>} : memref<16x32xf32, #tpu.memory_space<vmem>>, vector<16x32xf32>,
    return
  }
  func.func @transform_0(%arg0: i32) -> (i32, i32) {
    %c0_i32 = arith.constant 0 : i32
    %c0_i32_0 = arith.constant 0 : i32
    return %arg0, %c0_i32 : i32, i32
  }
  func.func @transform_1(%arg0: i32) -> (i32, i32) {
    %c0_i32 = arith.constant 0 : i32
    %c0_i32_0 = arith.constant 0 : i32
    %c0_i32_1 = arith.constant 0 : i32
    return %c0_i32, %c0_i32_0 : i32, i32
  }
  func.func @transform_2(%arg0: i32) -> (i32, i32) {
    %c0_i32 = arith.constant 0 : i32
    %c0_i32_0 = arith.constant 0 : i32
    return %arg0, %c0_i32 : i32, i32
  }
}

module attributes {stable_mosaic.version = 11 : i64} {
  func.func @_matmul_kernel(%arg0: i32, %arg1: memref<16x272xbf16, #tpu.memory_space<vmem>>, %arg2: memref<272x16xbf16, #tpu.memory_space<vmem>>, %arg3: memref<16x16xf32, #tpu.memory_space<vmem>>) attributes {dimension_semantics = [#tpu.dimension_semantics<parallel>], iteration_bounds = array<i64: 2>, scalar_prefetch = 0 : i64, scratch_operands = 0 : i64, tpu.core_type = #tpu.core_type<tc>, window_params = [{transform_indices = @transform_0, window_bounds = array<i64: 16, 272>}, {pipeline_mode = #tpu.pipeline_mode<synchronous>, transform_indices = @transform_1, window_bounds = array<i64: 272, 16>}, {transform_indices = @transform_2, window_bounds = array<i64: 16, 16>}]} {
    %c0 = arith.constant 0 : index
    %c0_0 = arith.constant 0 : index
    %0 = vector.load %arg1[%c0, %c0_0] : memref<16x272xbf16, #tpu.memory_space<vmem>>, vector<16x272xbf16>
    %cst = arith.constant 0.000000e+00 : bf16
    %1 = vector.broadcast %cst : bf16 to vector<16x272xbf16>
    %2 = arith.maximumf %0, %1 : vector<16x272xbf16>
    %c0_1 = arith.constant 0 : index
    %c0_2 = arith.constant 0 : index
    %3 = vector.load %arg2[%c0_1, %c0_2] : memref<272x16xbf16, #tpu.memory_space<vmem>>, vector<272x16xbf16>
    %cst_3 = arith.constant dense<0.000000e+00> : vector<16x16xf32>
    %4 = tpu.matmul %2, %3, %cst_3 {dimension_numbers = #tpu.dot_dimension_numbers<[1], [0], [0], [1], [0, 0, 1, 1], [], []>} : vector<16x272xbf16>, vector<272x16xbf16>, vector<16x16xf32> -> vector<16x16xf32>
    %c0_4 = arith.constant 0 : index
    %c0_5 = arith.constant 0 : index
    %5 = vector.load %arg3[%c0_4, %c0_5] : memref<16x16xf32, #tpu.memory_space<vmem>>, vector<16x16xf32>
    tpu.vector_store %arg3[%c0_4, %c0_5], %4 {strides = array<i32>} : memref<16x16xf32, #tpu.memory_space<vmem>>, vector<16x16xf32>,
    return
  }
  func.func @transform_0(%arg0: i32) -> (i32, i32) {
    %c0_i32 = arith.constant 0 : i32
    %c0_i32_0 = arith.constant 0 : i32
    return %arg0, %c0_i32 : i32, i32
  }
  func.func @transform_1(%arg0: i32) -> (i32, i32) {
    %c0_i32 = arith.constant 0 : i32
    %c0_i32_0 = arith.constant 0 : i32
    %c0_i32_1 = arith.constant 0 : i32
    return %c0_i32, %c0_i32_0 : i32, i32
  }
  func.func @transform_2(%arg0: i32) -> (i32, i32) {
    %c0_i32 = arith.constant 0 : i32
    %c0_i32_0 = arith.constant 0 : i32
    return %arg0, %c0_i32 : i32, i32
  }
}

module attributes {stable_mosaic.version = 11 : i64} {
  func.func @_matmul_kernel(%arg0: i32, %arg1: memref<16x32xbf16, #tpu.memory_space<vmem>>, %arg2: memref<32x32xbf16, #tpu.memory_space<vmem>>, %arg3: memref<16x32xf32, #tpu.memory_space<vmem>>) attributes {dimension_semantics = [#tpu.dimension_semantics<parallel>], iteration_bounds = array<i64: 2>, scalar_prefetch = 0 : i64, scratch_operands = 0 : i64, tpu.core_type = #tpu.core_type<tc>, window_params = [{transform_indices = @transform_0, window_bounds = array<i64: 16, 32>}, {pipeline_mode = #tpu.pipeline_mode<synchronous>, transform_indices = @transform_1, window_bounds = array<i64: 32, 32>}, {transform_indices = @transform_2, window_bounds = array<i64: 16, 32>}]} {
    %c0 = arith.constant 0 : index
    %c0_0 = arith.constant 0 : index
    %0 = vector.load %arg1[%c0, %c0_0] : memref<16x32xbf16, #tpu.memory_space<vmem>>, vector<16x32xbf16>
    %cst = arith.constant 0.000000e+00 : bf16
    %1 = vector.broadcast %cst : bf16 to vector<16x32xbf16>
    %2 = arith.maximumf %0, %1 : vector<16x32xbf16>
    %c0_1 = arith.constant 0 : index
    %c0_2 = arith.constant 0 : index
    %3 = vector.load %arg2[%c0_1, %c0_2] : memref<32x32xbf16, #tpu.memory_space<vmem>>, vector<32x32xbf16>
    %cst_3 = arith.constant dense<0.000000e+00> : vector<16x32xf32>
    %4 = tpu.matmul %2, %3, %cst_3 {dimension_numbers = #tpu.dot_dimension_numbers<[1], [0], [0], [1], [0, 0, 1, 1], [], []>} : vector<16x32xbf16>, vector<32x32xbf16>, vector<16x32xf32> -> vector<16x32xf32>
    %c0_4 = arith.constant 0 : index
    %c0_5 = arith.constant 0 : index
    %5 = vector.load %arg3[%c0_4, %c0_5] : memref<16x32xf32, #tpu.memory_space<vmem>>, vector<16x32xf32>
    tpu.vector_store %arg3[%c0_4, %c0_5], %4 {strides = array<i32>} : memref<16x32xf32, #tpu.memory_space<vmem>>, vector<16x32xf32>,
    return
  }
  func.func @transform_0(%arg0: i32) -> (i32, i32) {
    %c0_i32 = arith.constant 0 : i32
    %c0_i32_0 = arith.constant 0 : i32
    return %arg0, %c0_i32 : i32, i32
  }
  func.func @transform_1(%arg0: i32) -> (i32, i32) {
    %c0_i32 = arith.constant 0 : i32
    %c0_i32_0 = arith.constant 0 : i32
    %c0_i32_1 = arith.constant 0 : i32
    return %c0_i32, %c0_i32_0 : i32, i32
  }
  func.func @transform_2(%arg0: i32) -> (i32, i32) {
    %c0_i32 = arith.constant 0 : i32
    %c0_i32_0 = arith.constant 0 : i32
    return %arg0, %c0_i32 : i32, i32
  }
}

module attributes {stable_mosaic.version = 11 : i64} {
  func.func @_matmul_kernel(%arg0: i32, %arg1: memref<8x1296xbf16, #tpu.memory_space<vmem>>, %arg2: memref<1296x160xbf16, #tpu.memory_space<vmem>>, %arg3: memref<8x160xf32, #tpu.memory_space<vmem>>) attributes {dimension_semantics = [#tpu.dimension_semantics<parallel>], iteration_bounds = array<i64: 1>, scalar_prefetch = 0 : i64, scratch_operands = 0 : i64, tpu.core_type = #tpu.core_type<tc>, window_params = [{transform_indices = @transform_0, window_bounds = array<i64: 8, 1296>}, {pipeline_mode = #tpu.pipeline_mode<synchronous>, transform_indices = @transform_1, window_bounds = array<i64: 1296, 160>}, {transform_indices = @transform_2, window_bounds = array<i64: 8, 160>}]} {
    %c0 = arith.constant 0 : index
    %c0_0 = arith.constant 0 : index
    %0 = vector.load %arg1[%c0, %c0_0] : memref<8x1296xbf16, #tpu.memory_space<vmem>>, vector<8x1296xbf16>
    %cst = arith.constant 0.000000e+00 : bf16
    %1 = vector.broadcast %cst : bf16 to vector<8x1296xbf16>
    %2 = arith.maximumf %0, %1 : vector<8x1296xbf16>
    %c0_1 = arith.constant 0 : index
    %c0_2 = arith.constant 0 : index
    %3 = vector.load %arg2[%c0_1, %c0_2] : memref<1296x160xbf16, #tpu.memory_space<vmem>>, vector<1296x160xbf16>
    %cst_3 = arith.constant dense<0.000000e+00> : vector<8x160xf32>
    %4 = tpu.matmul %2, %3, %cst_3 {dimension_numbers = #tpu.dot_dimension_numbers<[1], [0], [0], [1], [0, 0, 1, 1], [], []>} : vector<8x1296xbf16>, vector<1296x160xbf16>, vector<8x160xf32> -> vector<8x160xf32>
    %c0_4 = arith.constant 0 : index
    %c0_5 = arith.constant 0 : index
    %5 = vector.load %arg3[%c0_4, %c0_5] : memref<8x160xf32, #tpu.memory_space<vmem>>, vector<8x160xf32>
    tpu.vector_store %arg3[%c0_4, %c0_5], %4 {strides = array<i32>} : memref<8x160xf32, #tpu.memory_space<vmem>>, vector<8x160xf32>,
    return
  }
  func.func @transform_0(%arg0: i32) -> (i32, i32) {
    %c0_i32 = arith.constant 0 : i32
    %c0_i32_0 = arith.constant 0 : i32
    return %arg0, %c0_i32 : i32, i32
  }
  func.func @transform_1(%arg0: i32) -> (i32, i32) {
    %c0_i32 = arith.constant 0 : i32
    %c0_i32_0 = arith.constant 0 : i32
    %c0_i32_1 = arith.constant 0 : i32
    return %c0_i32, %c0_i32_0 : i32, i32
  }
  func.func @transform_2(%arg0: i32) -> (i32, i32) {
    %c0_i32 = arith.constant 0 : i32
    %c0_i32_0 = arith.constant 0 : i32
    return %arg0, %c0_i32 : i32, i32
  }
}

module attributes {stable_mosaic.version = 11 : i64} {
  func.func @_matmul_kernel(%arg0: i32, %arg1: memref<8x1088xbf16, #tpu.memory_space<vmem>>, %arg2: memref<1088x64xbf16, #tpu.memory_space<vmem>>, %arg3: memref<8x64xf32, #tpu.memory_space<vmem>>) attributes {dimension_semantics = [#tpu.dimension_semantics<parallel>], iteration_bounds = array<i64: 1>, scalar_prefetch = 0 : i64, scratch_operands = 0 : i64, tpu.core_type = #tpu.core_type<tc>, window_params = [{transform_indices = @transform_0, window_bounds = array<i64: 8, 1088>}, {pipeline_mode = #tpu.pipeline_mode<synchronous>, transform_indices = @transform_1, window_bounds = array<i64: 1088, 64>}, {transform_indices = @transform_2, window_bounds = array<i64: 8, 64>}]} {
    %c0 = arith.constant 0 : index
    %c0_0 = arith.constant 0 : index
    %0 = vector.load %arg1[%c0, %c0_0] : memref<8x1088xbf16, #tpu.memory_space<vmem>>, vector<8x1088xbf16>
    %cst = arith.constant 0.000000e+00 : bf16
    %1 = vector.broadcast %cst : bf16 to vector<8x1088xbf16>
    %2 = arith.maximumf %0, %1 : vector<8x1088xbf16>
    %c0_1 = arith.constant 0 : index
    %c0_2 = arith.constant 0 : index
    %3 = vector.load %arg2[%c0_1, %c0_2] : memref<1088x64xbf16, #tpu.memory_space<vmem>>, vector<1088x64xbf16>
    %cst_3 = arith.constant dense<0.000000e+00> : vector<8x64xf32>
    %4 = tpu.matmul %2, %3, %cst_3 {dimension_numbers = #tpu.dot_dimension_numbers<[1], [0], [0], [1], [0, 0, 1, 1], [], []>} : vector<8x1088xbf16>, vector<1088x64xbf16>, vector<8x64xf32> -> vector<8x64xf32>
    %c0_4 = arith.constant 0 : index
    %c0_5 = arith.constant 0 : index
    %5 = vector.load %arg3[%c0_4, %c0_5] : memref<8x64xf32, #tpu.memory_space<vmem>>, vector<8x64xf32>
    tpu.vector_store %arg3[%c0_4, %c0_5], %4 {strides = array<i32>} : memref<8x64xf32, #tpu.memory_space<vmem>>, vector<8x64xf32>,
    return
  }
  func.func @transform_0(%arg0: i32) -> (i32, i32) {
    %c0_i32 = arith.constant 0 : i32
    %c0_i32_0 = arith.constant 0 : i32
    return %arg0, %c0_i32 : i32, i32
  }
  func.func @transform_1(%arg0: i32) -> (i32, i32) {
    %c0_i32 = arith.constant 0 : i32
    %c0_i32_0 = arith.constant 0 : i32
    %c0_i32_1 = arith.constant 0 : i32
    return %c0_i32, %c0_i32_0 : i32, i32
  }
  func.func @transform_2(%arg0: i32) -> (i32, i32) {
    %c0_i32 = arith.constant 0 : i32
    %c0_i32_0 = arith.constant 0 : i32
    return %arg0, %c0_i32 : i32, i32
  }
}

module attributes {stable_mosaic.version = 11 : i64} {
  func.func @_matmul_kernel(%arg0: i32, %arg1: memref<8x1296xbf16, #tpu.memory_space<vmem>>, %arg2: memref<1296x64xbf16, #tpu.memory_space<vmem>>, %arg3: memref<8x64xf32, #tpu.memory_space<vmem>>) attributes {dimension_semantics = [#tpu.dimension_semantics<parallel>], iteration_bounds = array<i64: 1>, scalar_prefetch = 0 : i64, scratch_operands = 0 : i64, tpu.core_type = #tpu.core_type<tc>, window_params = [{transform_indices = @transform_0, window_bounds = array<i64: 8, 1296>}, {pipeline_mode = #tpu.pipeline_mode<synchronous>, transform_indices = @transform_1, window_bounds = array<i64: 1296, 64>}, {transform_indices = @transform_2, window_bounds = array<i64: 8, 64>}]} {
    %c0 = arith.constant 0 : index
    %c0_0 = arith.constant 0 : index
    %0 = vector.load %arg1[%c0, %c0_0] : memref<8x1296xbf16, #tpu.memory_space<vmem>>, vector<8x1296xbf16>
    %cst = arith.constant 0.000000e+00 : bf16
    %1 = vector.broadcast %cst : bf16 to vector<8x1296xbf16>
    %2 = arith.maximumf %0, %1 : vector<8x1296xbf16>
    %c0_1 = arith.constant 0 : index
    %c0_2 = arith.constant 0 : index
    %3 = vector.load %arg2[%c0_1, %c0_2] : memref<1296x64xbf16, #tpu.memory_space<vmem>>, vector<1296x64xbf16>
    %cst_3 = arith.constant dense<0.000000e+00> : vector<8x64xf32>
    %4 = tpu.matmul %2, %3, %cst_3 {dimension_numbers = #tpu.dot_dimension_numbers<[1], [0], [0], [1], [0, 0, 1, 1], [], []>} : vector<8x1296xbf16>, vector<1296x64xbf16>, vector<8x64xf32> -> vector<8x64xf32>
    %c0_4 = arith.constant 0 : index
    %c0_5 = arith.constant 0 : index
    %5 = vector.load %arg3[%c0_4, %c0_5] : memref<8x64xf32, #tpu.memory_space<vmem>>, vector<8x64xf32>
    tpu.vector_store %arg3[%c0_4, %c0_5], %4 {strides = array<i32>} : memref<8x64xf32, #tpu.memory_space<vmem>>, vector<8x64xf32>,
    return
  }
  func.func @transform_0(%arg0: i32) -> (i32, i32) {
    %c0_i32 = arith.constant 0 : i32
    %c0_i32_0 = arith.constant 0 : i32
    return %arg0, %c0_i32 : i32, i32
  }
  func.func @transform_1(%arg0: i32) -> (i32, i32) {
    %c0_i32 = arith.constant 0 : i32
    %c0_i32_0 = arith.constant 0 : i32
    %c0_i32_1 = arith.constant 0 : i32
    return %c0_i32, %c0_i32_0 : i32, i32
  }
  func.func @transform_2(%arg0: i32) -> (i32, i32) {
    %c0_i32 = arith.constant 0 : i32
    %c0_i32_0 = arith.constant 0 : i32
    return %arg0, %c0_i32 : i32, i32
  }
}

module attributes {stable_mosaic.version = 11 : i64} {
  func.func @_matmul_kernel(%arg0: i32, %arg1: memref<8x544xbf16, #tpu.memory_space<vmem>>, %arg2: memref<544x32xbf16, #tpu.memory_space<vmem>>, %arg3: memref<8x32xf32, #tpu.memory_space<vmem>>) attributes {dimension_semantics = [#tpu.dimension_semantics<parallel>], iteration_bounds = array<i64: 1>, scalar_prefetch = 0 : i64, scratch_operands = 0 : i64, tpu.core_type = #tpu.core_type<tc>, window_params = [{transform_indices = @transform_0, window_bounds = array<i64: 8, 544>}, {pipeline_mode = #tpu.pipeline_mode<synchronous>, transform_indices = @transform_1, window_bounds = array<i64: 544, 32>}, {transform_indices = @transform_2, window_bounds = array<i64: 8, 32>}]} {
    %c0 = arith.constant 0 : index
    %c0_0 = arith.constant 0 : index
    %0 = vector.load %arg1[%c0, %c0_0] : memref<8x544xbf16, #tpu.memory_space<vmem>>, vector<8x544xbf16>
    %cst = arith.constant 0.000000e+00 : bf16
    %1 = vector.broadcast %cst : bf16 to vector<8x544xbf16>
    %2 = arith.maximumf %0, %1 : vector<8x544xbf16>
    %c0_1 = arith.constant 0 : index
    %c0_2 = arith.constant 0 : index
    %3 = vector.load %arg2[%c0_1, %c0_2] : memref<544x32xbf16, #tpu.memory_space<vmem>>, vector<544x32xbf16>
    %cst_3 = arith.constant dense<0.000000e+00> : vector<8x32xf32>
    %4 = tpu.matmul %2, %3, %cst_3 {dimension_numbers = #tpu.dot_dimension_numbers<[1], [0], [0], [1], [0, 0, 1, 1], [], []>} : vector<8x544xbf16>, vector<544x32xbf16>, vector<8x32xf32> -> vector<8x32xf32>
    %c0_4 = arith.constant 0 : index
    %c0_5 = arith.constant 0 : index
    %5 = vector.load %arg3[%c0_4, %c0_5] : memref<8x32xf32, #tpu.memory_space<vmem>>, vector<8x32xf32>
    tpu.vector_store %arg3[%c0_4, %c0_5], %4 {strides = array<i32>} : memref<8x32xf32, #tpu.memory_space<vmem>>, vector<8x32xf32>,
    return
  }
  func.func @transform_0(%arg0: i32) -> (i32, i32) {
    %c0_i32 = arith.constant 0 : i32
    %c0_i32_0 = arith.constant 0 : i32
    return %arg0, %c0_i32 : i32, i32
  }
  func.func @transform_1(%arg0: i32) -> (i32, i32) {
    %c0_i32 = arith.constant 0 : i32
    %c0_i32_0 = arith.constant 0 : i32
    %c0_i32_1 = arith.constant 0 : i32
    return %c0_i32, %c0_i32_0 : i32, i32
  }
  func.func @transform_2(%arg0: i32) -> (i32, i32) {
    %c0_i32 = arith.constant 0 : i32
    %c0_i32_0 = arith.constant 0 : i32
    return %arg0, %c0_i32 : i32, i32
  }
}

module attributes {stable_mosaic.version = 11 : i64} {
  func.func @_matmul_kernel(%arg0: i32, %arg1: memref<2x64xbf16, #tpu.memory_space<vmem>>, %arg2: memref<64x10xbf16, #tpu.memory_space<vmem>>, %arg3: memref<2x10xf32, #tpu.memory_space<vmem>>) attributes {dimension_semantics = [#tpu.dimension_semantics<parallel>], iteration_bounds = array<i64: 1>, scalar_prefetch = 0 : i64, scratch_operands = 0 : i64, tpu.core_type = #tpu.core_type<tc>, window_params = [{transform_indices = @transform_0, window_bounds = array<i64: 2, 64>}, {pipeline_mode = #tpu.pipeline_mode<synchronous>, transform_indices = @transform_1, window_bounds = array<i64: 64, 10>}, {transform_indices = @transform_2, window_bounds = array<i64: 2, 10>}]} {
    %c0 = arith.constant 0 : index
    %c0_0 = arith.constant 0 : index
    %0 = vector.load %arg1[%c0, %c0_0] : memref<2x64xbf16, #tpu.memory_space<vmem>>, vector<2x64xbf16>
    %c0_1 = arith.constant 0 : index
    %c0_2 = arith.constant 0 : index
    %1 = vector.load %arg2[%c0_1, %c0_2] : memref<64x10xbf16, #tpu.memory_space<vmem>>, vector<64x10xbf16>
    %cst = arith.constant dense<0.000000e+00> : vector<2x10xf32>
    %2 = tpu.matmul %0, %1, %cst {dimension_numbers = #tpu.dot_dimension_numbers<[1], [0], [0], [1], [0, 0, 1, 1], [], []>} : vector<2x64xbf16>, vector<64x10xbf16>, vector<2x10xf32> -> vector<2x10xf32>
    %c0_3 = arith.constant 0 : index
    %c0_4 = arith.constant 0 : index
    %3 = vector.load %arg3[%c0_3, %c0_4] : memref<2x10xf32, #tpu.memory_space<vmem>>, vector<2x10xf32>
    tpu.vector_store %arg3[%c0_3, %c0_4], %2 {strides = array<i32>} : memref<2x10xf32, #tpu.memory_space<vmem>>, vector<2x10xf32>,
    return
  }
  func.func @transform_0(%arg0: i32) -> (i32, i32) {
    %c0_i32 = arith.constant 0 : i32
    %c0_i32_0 = arith.constant 0 : i32
    return %arg0, %c0_i32 : i32, i32
  }
  func.func @transform_1(%arg0: i32) -> (i32, i32) {
    %c0_i32 = arith.constant 0 : i32
    %c0_i32_0 = arith.constant 0 : i32
    %c0_i32_1 = arith.constant 0 : i32
    return %c0_i32, %c0_i32_0 : i32, i32
  }
  func.func @transform_2(%arg0: i32) -> (i32, i32) {
    %c0_i32 = arith.constant 0 : i32
    %c0_i32_0 = arith.constant 0 : i32
    return %arg0, %c0_i32 : i32, i32
  }
}

</mosaic_0001>

<llo_original>
// kernel: _lambda_.28
$region0: #{_lambda_.28}
  #allocation0 [shape = 'u32[]', space=smem, size = 0x4, offset = 0x4, fixed_abs, tag = 'smem constant byte address 0x4 - core index']
  #allocation1 [shape = 'u32[144,128]{1,0:T(1,128)}', space=vmem, size = 0x12000, scoped, tag = 'internal scratch']
  %s0 = inlined_call_operand.vmem [shape: bf16[2048,27], index: 0, kind: input, shape index: {}]
  %s1 = inlined_call_operand.vmem [shape: bf16[27,12], index: 1, kind: input, shape index: {}]
  %s2 = inlined_call_operand.vmem [shape: f32[2048,12], index: 2, kind: output, shape index: {}]
  %s3 = sld [smem:[#allocation0]]
  $region41: #{_lambda_.28} parent=0
    _
  %s5 = ssub.s32 1, %s3
  %s6 = scalar_select 0, %s5, %s3
  loop: start=0, step=1, limit=6
  $region2: #{_lambda_.28} parent=0 // loop_pre_header
    _
  $region3: #{_lambda_.28} parent=0 // loop_header
    %s8 = sphi 0, %s12
    %p9 = scmp.ge.s32.totalorder %s8, 6
    %s18 = sphi 0, %s20
    %s21 = sphi 0, %s18
    %s22 = sphi 0, %s21
    %s38 = sphi 0, %s22
    %s42 = sphi 0, %s42
    %s44 = sphi 0, %s42
    %s45 = sphi 0, %s44
    %s59 = sphi 0, %s45
    %s65 = sphi 0, %s67
    %s68 = sphi 0, %s65
    %s69 = sphi 0, %s68
    %s85 = sphi 0, %s69
  $region4: #{_lambda_.28} parent=0 // loop_header_branch
    %11 = sbr.rel (%p9) target = $region8
  $region5: #{_lambda_.28} parent=0 // loop_body
    %s13 = ssub.s32 %s8, 1
    %s14 = ssub.s32 %s8, 2
    %s15 = sadd.s32 %s8, 1
    %s16 = ssub.s32 %s8, %s15
    %p17 = scmp.eq.s32.totalorder %s16, 0
    %s19 = sadd.s32 %s18, 1
    %s20 = scalar_select %p17, %s18, %s19
    %p23 = pneg %p17
    %p24 = scmp.eq.s32.totalorder %s8, 3
    %p25 = por %p23, %p24
    %p26 = scmp.ne.s32.totalorder %s18, %s21
    %p27 = scmp.eq.s32.totalorder %s8, 0
    %p28 = por %p26, %p27
    %p29 = scmp.ne.s32.totalorder %s18, %s21
    %p30 = scmp.eq.s32.totalorder %s13, 3
    %p31 = por %p29, %p30
    %p32 = scmp.ne.s32.totalorder %s21, %s22
    %p33 = scmp.eq.s32.totalorder %s13, 0
    %p34 = por %p32, %p33
    %p35 = scmp.ne.s32.totalorder %s21, %s22
    %p36 = scmp.eq.s32.totalorder %s14, 3
    %p37 = por %p35, %p36
    %p39 = scmp.ne.s32.totalorder %s22, %s38
    %p40 = scmp.eq.s32.totalorder %s14, 0
    %p41 = por %p39, %p40
    %s43 = sadd.s32 %s42, 1
    %p46 = scmp.eq.s32.totalorder %s8, 3
    %p47 = scmp.ne.s32.totalorder %s42, %s44
    %p48 = scmp.eq.s32.totalorder %s8, 0
    %p49 = por %p47, %p48
    %p50 = scmp.ne.s32.totalorder %s42, %s44
    %p51 = scmp.eq.s32.totalorder %s13, 3
    %p52 = por %p50, %p51
    %p53 = scmp.ne.s32.totalorder %s44, %s45
    %p54 = scmp.eq.s32.totalorder %s13, 0
    %p55 = por %p53, %p54
    %p56 = scmp.ne.s32.totalorder %s44, %s45
    %p57 = scmp.eq.s32.totalorder %s14, 3
    %p58 = por %p56, %p57
    %p60 = scmp.ne.s32.totalorder %s45, %s59
    %p61 = scmp.eq.s32.totalorder %s14, 0
    %p62 = por %p60, %p61
    %s63 = ssub.s32 %s8, %s15
    %p64 = scmp.eq.s32.totalorder %s63, 0
    %s66 = sadd.s32 %s65, 1
    %s67 = scalar_select %p64, %s65, %s66
    %p70 = pneg %p64
    %p71 = scmp.eq.s32.totalorder %s8, 3
    %p72 = por %p70, %p71
    %p73 = scmp.ne.s32.totalorder %s65, %s68
    %p74 = scmp.eq.s32.totalorder %s8, 0
    %p75 = por %p73, %p74
    %p76 = scmp.ne.s32.totalorder %s65, %s68
    %p77 = scmp.eq.s32.totalorder %s13, 3
    %p78 = por %p76, %p77
    %p79 = scmp.ne.s32.totalorder %s68, %s69
    %p80 = scmp.eq.s32.totalorder %s13, 0
    %p81 = por %p79, %p80
    %p82 = scmp.ne.s32.totalorder %s68, %s69
    %p83 = scmp.eq.s32.totalorder %s14, 3
    %p84 = por %p82, %p83
    %p86 = scmp.ne.s32.totalorder %s69, %s85
    %p87 = scmp.eq.s32.totalorder %s14, 0
    %p88 = por %p86, %p87
    %p89 = scmp.le.s32.totalorder 1, %s8
    %p90 = scmp.lt.s32.totalorder %s8, 5
    %p91 = pnand %p89, %p90
    %p92 = pneg %p91
    // Predicated region
    $region9: #{_lambda_.28} parent=5 // pred_check
      _
    $region10: #{_lambda_.28} parent=5 // pred_check_branch
      %94 = sbr.rel (%p91) target = $region12
    $region11: #{_lambda_.28} parent=5 // pred_region
      %s95 = ssub.s32 %s8, 1
      // Predicated region
      $region13: #{_lambda_.28} parent=11 // pred_check
        %p96 = pneg %p55
      $region14: #{_lambda_.28} parent=11 // pred_check_branch
        %98 = sbr.rel (%p96) target = $region16
      $region15: #{_lambda_.28} parent=11 // pred_region
        _
      $region16: #{_lambda_.28} parent=11 // pred_fallthru
        _
    $region12: #{_lambda_.28} parent=5 // pred_fallthru
      _
    %p99 = scmp.lt.s32.totalorder %s8, 4
    // Predicated region
    $region17: #{_lambda_.28} parent=5 // pred_check
      %p100 = pneg %p99
    $region18: #{_lambda_.28} parent=5 // pred_check_branch
      %102 = sbr.rel (%p100) target = $region20
    $region19: #{_lambda_.28} parent=5 // pred_region
      // Predicated region
      $region21: #{_lambda_.28} parent=19 // pred_check
        %p103 = pneg %p28
      $region22: #{_lambda_.28} parent=19 // pred_check_branch
        %105 = sbr.rel (%p103) target = $region24
      $region23: #{_lambda_.28} parent=19 // pred_region
        %s106 = smul.u32 64, %s8
        %p107 = scmp.lt.s32.totalorder %s106, 255
        %s108 = scalar_select %p107, %s106, 255
        %s109 = smul.addr %s108, 4
        %s110 = scalar_lea.vmem %s0, %s109
        %s111 = smul.u32 64, %s8
      $region24: #{_lambda_.28} parent=19 // pred_fallthru
        _
    $region20: #{_lambda_.28} parent=5 // pred_fallthru
      _
    %p112 = scmp.le.s32.totalorder 1, %s8
    %p113 = scmp.lt.s32.totalorder %s8, 5
    %p114 = pnand %p112, %p113
    %p115 = pneg %p114
    // Predicated region
    $region25: #{_lambda_.28} parent=5 // pred_check
      _
    $region26: #{_lambda_.28} parent=5 // pred_check_branch
      %117 = sbr.rel (%p114) target = $region28
    $region27: #{_lambda_.28} parent=5 // pred_region
      %s118 = ssub.s32 %s8, 1
      %s119 = smul.u32 64, %s13
      %p120 = scmp.lt.s32.totalorder %s119, 255
      %s121 = scalar_select %p120, %s119, 255
      %s122 = smul.addr %s121, 4
      %s123 = scalar_lea.vmem %s0, %s122
      %p124 = pneg %p34
      %p125 = pneg %p31
      %p126 = pneg %p55
      %p127 = pneg %p52
      %p128 = pneg %p81
      %p129 = pneg %p78
      %s130 = smul.u32 64, %s13
      %p131 = scmp.lt.s32.totalorder %s130, 255
      %s132 = scalar_select %p131, %s130, 255
      %s133 = smul.addr %s132, 8
      %s134 = scalar_lea.vmem %s2, %s133
      %s135 = smul.u32 64, %s13
      %p136 = scmp.lt.s32.totalorder %s135, 255
      %s137 = scalar_select %p136, %s135, 255
      %s138 = smul.addr %s137, 4
      %s139 = scalar_lea.vmem %s0, %s138
      %s140 = smul.u32 64, %s13
      %s141 = smul.u32 64, %s13
      %p142 = scmp.lt.s32.totalorder %s141, 255
      %s143 = scalar_select %p142, %s141, 255
      %s144 = smul.addr %s143, 8
      %s145 = scalar_lea.vmem %s2, %s144
      %s146 = smul.u32 64, %s13
      %v148 = vld [vmem:[%s139] sm:$0xf]
      %v149 = vld [vmem:[%s139 + $0x4] sm:$0xf]
      %v150 = vld [vmem:[%s139 + $0x8] sm:$0xf]
      %v151 = vld [vmem:[%s139 + $0xc] sm:$0xf]
      %v152 = vld [vmem:[%s139 + $0x10] sm:$0xf]
      %v153 = vld [vmem:[%s139 + $0x14] sm:$0xf]
      %v154 = vld [vmem:[%s139 + $0x18] sm:$0xf]
      %v155 = vld [vmem:[%s139 + $0x1c] sm:$0xf]
      %v156 = vld [vmem:[%s139 + $0x20] sm:$0xf]
      %v157 = vld [vmem:[%s139 + $0x24] sm:$0xf]
      %v158 = vld [vmem:[%s139 + $0x28] sm:$0xf]
      %v159 = vld [vmem:[%s139 + $0x2c] sm:$0xf]
      %v160 = vld [vmem:[%s139 + $0x30] sm:$0xf]
      %v161 = vld [vmem:[%s139 + $0x34] sm:$0xf]
      %v162 = vld [vmem:[%s139 + $0x38] sm:$0xf]
      %v163 = vld [vmem:[%s139 + $0x3c] sm:$0xf]
      %v164 = vld [vmem:[%s139 + $0x40] sm:$0xf]
      %v165 = vld [vmem:[%s139 + $0x44] sm:$0xf]
      %v166 = vld [vmem:[%s139 + $0x48] sm:$0xf]
      %v167 = vld [vmem:[%s139 + $0x4c] sm:$0xf]
      %v168 = vld [vmem:[%s139 + $0x50] sm:$0xf]
      %v169 = vld [vmem:[%s139 + $0x54] sm:$0xf]
      %v170 = vld [vmem:[%s139 + $0x58] sm:$0xf]
      %v171 = vld [vmem:[%s139 + $0x5c] sm:$0xf]
      %v172 = vld [vmem:[%s139 + $0x60] sm:$0xf]
      %v173 = vld [vmem:[%s139 + $0x64] sm:$0xf]
      %v174 = vld [vmem:[%s139 + $0x68] sm:$0xf]
      %v175 = vld [vmem:[%s139 + $0x6c] sm:$0xf]
      %v176 = vld [vmem:[%s139 + $0x70] sm:$0xf]
      %v177 = vld [vmem:[%s139 + $0x74] sm:$0xf]
      %v178 = vld [vmem:[%s139 + $0x78] sm:$0xf]
      %v179 = vld [vmem:[%s139 + $0x7c] sm:$0xf]
      %v180 = vld [vmem:[%s139 + $0x80] sm:$0xf]
      %v181 = vld [vmem:[%s139 + $0x84] sm:$0xf]
      %v182 = vld [vmem:[%s139 + $0x88] sm:$0xf]
      %v183 = vld [vmem:[%s139 + $0x8c] sm:$0xf]
      %v184 = vld [vmem:[%s139 + $0x90] sm:$0xf]
      %v185 = vld [vmem:[%s139 + $0x94] sm:$0xf]
      %v186 = vld [vmem:[%s139 + $0x98] sm:$0xf]
      %v187 = vld [vmem:[%s139 + $0x9c] sm:$0xf]
      %v188 = vld [vmem:[%s139 + $0xa0] sm:$0xf]
      %v189 = vld [vmem:[%s139 + $0xa4] sm:$0xf]
      %v190 = vld [vmem:[%s139 + $0xa8] sm:$0xf]
      %v191 = vld [vmem:[%s139 + $0xac] sm:$0xf]
      %v192 = vld [vmem:[%s139 + $0xb0] sm:$0xf]
      %v193 = vld [vmem:[%s139 + $0xb4] sm:$0xf]
      %v194 = vld [vmem:[%s139 + $0xb8] sm:$0xf]
      %v195 = vld [vmem:[%s139 + $0xbc] sm:$0xf]
      %v196 = vld [vmem:[%s139 + $0xc0] sm:$0xf]
      %v197 = vld [vmem:[%s139 + $0xc4] sm:$0xf]
      %v198 = vld [vmem:[%s139 + $0xc8] sm:$0xf]
      %v199 = vld [vmem:[%s139 + $0xcc] sm:$0xf]
      %v200 = vld [vmem:[%s139 + $0xd0] sm:$0xf]
      %v201 = vld [vmem:[%s139 + $0xd4] sm:$0xf]
      %v202 = vld [vmem:[%s139 + $0xd8] sm:$0xf]
      %v203 = vld [vmem:[%s139 + $0xdc] sm:$0xf]
      %v204 = vld [vmem:[%s139 + $0xe0] sm:$0xf]
      %v205 = vld [vmem:[%s139 + $0xe4] sm:$0xf]
      %v206 = vld [vmem:[%s139 + $0xe8] sm:$0xf]
      %v207 = vld [vmem:[%s139 + $0xec] sm:$0xf]
      %v208 = vld [vmem:[%s139 + $0xf0] sm:$0xf]
      %v209 = vld [vmem:[%s139 + $0xf4] sm:$0xf]
      %v210 = vld [vmem:[%s139 + $0xf8] sm:$0xf]
      %v211 = vld [vmem:[%s139 + $0xfc] sm:$0xf]
      %v212 = vld [vmem:[%s1] sm:$0xf]
      %v213 = vld [vmem:[%s1 + $0x4] sm:$0xf]
      %v214 = vld [vmem:[%s1 + $0x8] sm:$0xf]
      %v215 = vld [vmem:[%s1 + $0xc] sm:$0x3]
      %v280 = vunpack.c.l.b16 %v148
      %v281 = vunpack.c.l.b16 %v149
      %v282 = vunpack.c.l.b16 %v150
      %v283 = vunpack.c.l.b16 %v151
      %v284 = vunpack.c.l.b16 %v152
      %v285 = vunpack.c.l.b16 %v153
      %v286 = vunpack.c.l.b16 %v154
      %v287 = vunpack.c.l.b16 %v155
      %v288 = vunpack.c.l.b16 %v156
      %v289 = vunpack.c.l.b16 %v157
      %v290 = vunpack.c.l.b16 %v158
      %v291 = vunpack.c.l.b16 %v159
      %v292 = vunpack.c.l.b16 %v160
      %v293 = vunpack.c.l.b16 %v161
      %v294 = vunpack.c.l.b16 %v162
      %v295 = vunpack.c.l.b16 %v163
      %v296 = vunpack.c.l.b16 %v164
      %v297 = vunpack.c.l.b16 %v165
      %v298 = vunpack.c.l.b16 %v166
      %v299 = vunpack.c.l.b16 %v167
      %v300 = vunpack.c.l.b16 %v168
      %v301 = vunpack.c.l.b16 %v169
      %v302 = vunpack.c.l.b16 %v170
      %v303 = vunpack.c.l.b16 %v171
      %v304 = vunpack.c.l.b16 %v172
      %v305 = vunpack.c.l.b16 %v173
      %v306 = vunpack.c.l.b16 %v174
      %v307 = vunpack.c.l.b16 %v175
      %v308 = vunpack.c.l.b16 %v176
      %v309 = vunpack.c.l.b16 %v177
      %v310 = vunpack.c.l.b16 %v178
      %v311 = vunpack.c.l.b16 %v179
      %v312 = vunpack.c.l.b16 %v180
      %v313 = vunpack.c.l.b16 %v181
      %v314 = vunpack.c.l.b16 %v182
      %v315 = vunpack.c.l.b16 %v183
      %v316 = vunpack.c.l.b16 %v184
      %v317 = vunpack.c.l.b16 %v185
      %v318 = vunpack.c.l.b16 %v186
      %v319 = vunpack.c.l.b16 %v187
      %v320 = vunpack.c.l.b16 %v188
      %v321 = vunpack.c.l.b16 %v189
      %v322 = vunpack.c.l.b16 %v190
      %v323 = vunpack.c.l.b16 %v191
      %v324 = vunpack.c.l.b16 %v192
      %v325 = vunpack.c.l.b16 %v193
      %v326 = vunpack.c.l.b16 %v194
      %v327 = vunpack.c.l.b16 %v195
      %v328 = vunpack.c.l.b16 %v196
      %v329 = vunpack.c.l.b16 %v197
      %v330 = vunpack.c.l.b16 %v198
      %v331 = vunpack.c.l.b16 %v199
      %v332 = vunpack.c.l.b16 %v200
      %v333 = vunpack.c.l.b16 %v201
      %v334 = vunpack.c.l.b16 %v202
      %v335 = vunpack.c.l.b16 %v203
      %v336 = vunpack.c.l.b16 %v204
      %v337 = vunpack.c.l.b16 %v205
      %v338 = vunpack.c.l.b16 %v206
      %v339 = vunpack.c.l.b16 %v207
      %v340 = vunpack.c.l.b16 %v208
      %v341 = vunpack.c.l.b16 %v209
      %v342 = vunpack.c.l.b16 %v210
      %v343 = vunpack.c.l.b16 %v211
      %v344 = vpack.c.b16 %v281, %v280
      %v345 = vpack.c.b16 %v283, %v282
      %v346 = vpack.c.b16 %v285, %v284
      %v347 = vpack.c.b16 %v287, %v286
      %v348 = vpack.c.b16 %v289, %v288
      %v349 = vpack.c.b16 %v291, %v290
      %v350 = vpack.c.b16 %v293, %v292
      %v351 = vpack.c.b16 %v295, %v294
      %v352 = vpack.c.b16 %v297, %v296
      %v353 = vpack.c.b16 %v299, %v298
      %v354 = vpack.c.b16 %v301, %v300
      %v355 = vpack.c.b16 %v303, %v302
      %v356 = vpack.c.b16 %v305, %v304
      %v357 = vpack.c.b16 %v307, %v306
      %v358 = vpack.c.b16 %v309, %v308
      %v359 = vpack.c.b16 %v311, %v310
      %v360 = vpack.c.b16 %v313, %v312
      %v361 = vpack.c.b16 %v315, %v314
      %v362 = vpack.c.b16 %v317, %v316
      %v363 = vpack.c.b16 %v319, %v318
      %v364 = vpack.c.b16 %v321, %v320
      %v365 = vpack.c.b16 %v323, %v322
      %v366 = vpack.c.b16 %v325, %v324
      %v367 = vpack.c.b16 %v327, %v326
      %v368 = vpack.c.b16 %v329, %v328
      %v369 = vpack.c.b16 %v331, %v330
      %v370 = vpack.c.b16 %v333, %v332
      %v371 = vpack.c.b16 %v335, %v334
      %v372 = vpack.c.b16 %v337, %v336
      %v373 = vpack.c.b16 %v339, %v338
      %v374 = vpack.c.b16 %v341, %v340
      %v375 = vpack.c.b16 %v343, %v342
      %v380 = vunpack.c.l.b16 %v212
      %v381 = vunpack.c.l.b16 %v213
      %v382 = vunpack.c.l.b16 %v214
      %v383 = vunpack.c.l.b16 %v215
      %v384 = vpack.c.b16 %v381, %v380
      %v385 = vpack.c.b16 %v383, %v382
      %vm387 = vcmask 220160
      %v389 = vsel %vm387, %v344, 0
      %v392 = vsel %vm387, %v345, 0
      %v395 = vsel %vm387, %v346, 0
      %v398 = vsel %vm387, %v347, 0
      %v401 = vsel %vm387, %v348, 0
      %v404 = vsel %vm387, %v349, 0
      %v407 = vsel %vm387, %v350, 0
      %v410 = vsel %vm387, %v351, 0
      %v413 = vsel %vm387, %v352, 0
      %v416 = vsel %vm387, %v353, 0
      %v419 = vsel %vm387, %v354, 0
      %v422 = vsel %vm387, %v355, 0
      %v425 = vsel %vm387, %v356, 0
      %v428 = vsel %vm387, %v357, 0
      %v431 = vsel %vm387, %v358, 0
      %v434 = vsel %vm387, %v359, 0
      %v437 = vsel %vm387, %v360, 0
      %v440 = vsel %vm387, %v361, 0
      %v443 = vsel %vm387, %v362, 0
      %v446 = vsel %vm387, %v363, 0
      %v449 = vsel %vm387, %v364, 0
      %v452 = vsel %vm387, %v365, 0
      %v455 = vsel %vm387, %v366, 0
      %v458 = vsel %vm387, %v367, 0
      %v461 = vsel %vm387, %v368, 0
      %v464 = vsel %vm387, %v369, 0
      %v467 = vsel %vm387, %v370, 0
      %v470 = vsel %vm387, %v371, 0
      %v473 = vsel %vm387, %v372, 0
      %v476 = vsel %vm387, %v373, 0
      %v479 = vsel %vm387, %v374, 0
      %v482 = vsel %vm387, %v375, 0
      %vm484 = vcmask 1044480
      %vm485 = vcmask 1045504
      %v486 = vsel %vm484, 4294967295, 65535
      %v487 = vsel %vm485, %v486, 0
      %v489 = vand.u32 %v385, %v487
      %491 = vmatprep.subr.bf16.mxu0 0
      %492 = vmatpush1.bf16.msra.mxu0 0
      %493 = vmatprep.subr.bf16.mxu0 0
      %494 = vmatpush1.bf16.msra.mxu0 0
      %495 = vmatprep.subr.bf16.mxu0 0
      %496 = vmatpush1.bf16.msra.mxu0 0
      %497 = vmatprep.subr.bf16.mxu0 0
      %498 = vmatpush1.bf16.msra.mxu0 0
      %499 = vmatprep.subr.bf16.mxu0 0
      %500 = vmatpush1.bf16.msra.mxu0 0
      %501 = vmatprep.subr.bf16.mxu0 0
      %502 = vmatpush1.bf16.msra.mxu0 0
      %503 = vmatprep.subr.bf16.mxu0 0
      %504 = vmatpush1.bf16.msra.mxu0 %v489
      %505 = vmatprep.subr.bf16.mxu0 0
      %506 = vmatpush1.bf16.msra.mxu0 %v384
      %507 = vmatprep.subr.bf16.mxu0 0
      %508 = vmatpush2.bf16.msra.mxu0 0
      %509 = vmatprep.subr.bf16.mxu0 0
      %510 = vmatpush2.bf16.msra.mxu0 0
      %511 = vmatprep.subr.bf16.mxu0 0
      %512 = vmatpush2.bf16.msra.mxu0 0
      %513 = vmatprep.subr.bf16.mxu0 0
      %514 = vmatpush2.bf16.msra.mxu0 0
      %515 = vmatprep.subr.bf16.mxu0 0
      %516 = vmatpush2.bf16.msra.mxu0 0
      %517 = vmatprep.subr.bf16.mxu0 0
      %518 = vmatpush2.bf16.msra.mxu0 0
      %519 = vmatprep.subr.bf16.mxu0 0
      %520 = vmatpush2.bf16.msra.mxu0 0
      %521 = vmatprep.subr.bf16.mxu0 0
      %522 = vmatpush2.bf16.msra.mxu0 0
      %523 = vmatprep.mubr.bf16.mxu0 0
      %524 = vmatmul.mubr.bf16.gmra.mxu0 %v389
      %v525 = vpop.f32.mrf.mxu0
      %v526 = vadd.f32 0.0, %v525
      %v527 = vpop.f32.mrf.mxu0
      %v528 = vpop.f32.mrf.mxu0
      %v529 = vadd.f32 0.0, %v528
      %v530 = vpop.f32.mrf.mxu0
      %531 = vmatprep.mubr.bf16.mxu0 0
      %532 = vmatmul.mubr.bf16.gmra.mxu0 %v392
      %v533 = vpop.f32.mrf.mxu0
      %v534 = vadd.f32 0.0, %v533
      %v535 = vpop.f32.mrf.mxu0
      %v536 = vpop.f32.mrf.mxu0
      %v537 = vadd.f32 0.0, %v536
      %v538 = vpop.f32.mrf.mxu0
      %539 = vmatprep.mubr.bf16.mxu0 0
      %540 = vmatmul.mubr.bf16.gmra.mxu0 %v395
      %v541 = vpop.f32.mrf.mxu0
      %v542 = vadd.f32 0.0, %v541
      %v543 = vpop.f32.mrf.mxu0
      %v544 = vpop.f32.mrf.mxu0
      %v545 = vadd.f32 0.0, %v544
      %v546 = vpop.f32.mrf.mxu0
      %547 = vmatprep.mubr.bf16.mxu0 0
      %548 = vmatmul.mubr.bf16.gmra.mxu0 %v398
      %v549 = vpop.f32.mrf.mxu0
      %v550 = vadd.f32 0.0, %v549
      %v551 = vpop.f32.mrf.mxu0
      %v552 = vpop.f32.mrf.mxu0
      %v553 = vadd.f32 0.0, %v552
      %v554 = vpop.f32.mrf.mxu0
      %555 = vmatprep.mubr.bf16.mxu0 0
      %556 = vmatmul.mubr.bf16.gmra.mxu0 %v401
      %v557 = vpop.f32.mrf.mxu0
      %v558 = vadd.f32 0.0, %v557
      %v559 = vpop.f32.mrf.mxu0
      %v560 = vpop.f32.mrf.mxu0
      %v561 = vadd.f32 0.0, %v560
      %v562 = vpop.f32.mrf.mxu0
      %563 = vmatprep.mubr.bf16.mxu0 0
      %564 = vmatmul.mubr.bf16.gmra.mxu0 %v404
      %v565 = vpop.f32.mrf.mxu0
      %v566 = vadd.f32 0.0, %v565
      %v567 = vpop.f32.mrf.mxu0
      %v568 = vpop.f32.mrf.mxu0
      %v569 = vadd.f32 0.0, %v568
      %v570 = vpop.f32.mrf.mxu0
      %571 = vmatprep.mubr.bf16.mxu0 0
      %572 = vmatmul.mubr.bf16.gmra.mxu0 %v407
      %v573 = vpop.f32.mrf.mxu0
      %v574 = vadd.f32 0.0, %v573
      %v575 = vpop.f32.mrf.mxu0
      %v576 = vpop.f32.mrf.mxu0
      %v577 = vadd.f32 0.0, %v576
      %v578 = vpop.f32.mrf.mxu0
      %579 = vmatprep.mubr.bf16.mxu0 0
      %580 = vmatmul.mubr.bf16.gmra.mxu0 %v410
      %v581 = vpop.f32.mrf.mxu0
      %v582 = vadd.f32 0.0, %v581
      %v583 = vpop.f32.mrf.mxu0
      %v584 = vpop.f32.mrf.mxu0
      %v585 = vadd.f32 0.0, %v584
      %v586 = vpop.f32.mrf.mxu0
      %587 = vmatprep.mubr.bf16.mxu0 0
      %588 = vmatmul.mubr.bf16.gmra.mxu0 %v413
      %v589 = vpop.f32.mrf.mxu0
      %v590 = vadd.f32 0.0, %v589
      %v591 = vpop.f32.mrf.mxu0
      %v592 = vpop.f32.mrf.mxu0
      %v593 = vadd.f32 0.0, %v592
      %v594 = vpop.f32.mrf.mxu0
      %595 = vmatprep.mubr.bf16.mxu0 0
      %596 = vmatmul.mubr.bf16.gmra.mxu0 %v416
      %v597 = vpop.f32.mrf.mxu0
      %v598 = vadd.f32 0.0, %v597
      %v599 = vpop.f32.mrf.mxu0
      %v600 = vpop.f32.mrf.mxu0
      %v601 = vadd.f32 0.0, %v600
      %v602 = vpop.f32.mrf.mxu0
      %603 = vmatprep.mubr.bf16.mxu0 0
      %604 = vmatmul.mubr.bf16.gmra.mxu0 %v419
      %v605 = vpop.f32.mrf.mxu0
      %v606 = vadd.f32 0.0, %v605
      %v607 = vpop.f32.mrf.mxu0
      %v608 = vpop.f32.mrf.mxu0
      %v609 = vadd.f32 0.0, %v608
      %v610 = vpop.f32.mrf.mxu0
      %611 = vmatprep.mubr.bf16.mxu0 0
      %612 = vmatmul.mubr.bf16.gmra.mxu0 %v422
      %v613 = vpop.f32.mrf.mxu0
      %v614 = vadd.f32 0.0, %v613
      %v615 = vpop.f32.mrf.mxu0
      %v616 = vpop.f32.mrf.mxu0
      %v617 = vadd.f32 0.0, %v616
      %v618 = vpop.f32.mrf.mxu0
      %619 = vmatprep.mubr.bf16.mxu0 0
      %620 = vmatmul.mubr.bf16.gmra.mxu0 %v425
      %v621 = vpop.f32.mrf.mxu0
      %v622 = vadd.f32 0.0, %v621
      %v623 = vpop.f32.mrf.mxu0
      %v624 = vpop.f32.mrf.mxu0
      %v625 = vadd.f32 0.0, %v624
      %v626 = vpop.f32.mrf.mxu0
      %627 = vmatprep.mubr.bf16.mxu0 0
      %628 = vmatmul.mubr.bf16.gmra.mxu0 %v428
      %v629 = vpop.f32.mrf.mxu0
      %v630 = vadd.f32 0.0, %v629
      %v631 = vpop.f32.mrf.mxu0
      %v632 = vpop.f32.mrf.mxu0
      %v633 = vadd.f32 0.0, %v632
      %v634 = vpop.f32.mrf.mxu0
      %635 = vmatprep.mubr.bf16.mxu0 0
      %636 = vmatmul.mubr.bf16.gmra.mxu0 %v431
      %v637 = vpop.f32.mrf.mxu0
      %v638 = vadd.f32 0.0, %v637
      %v639 = vpop.f32.mrf.mxu0
      %v640 = vpop.f32.mrf.mxu0
      %v641 = vadd.f32 0.0, %v640
      %v642 = vpop.f32.mrf.mxu0
      %643 = vmatprep.mubr.bf16.mxu0 0
      %644 = vmatmul.mubr.bf16.gmra.mxu0 %v434
      %v645 = vpop.f32.mrf.mxu0
      %v646 = vadd.f32 0.0, %v645
      %v647 = vpop.f32.mrf.mxu0
      %v648 = vpop.f32.mrf.mxu0
      %v649 = vadd.f32 0.0, %v648
      %v650 = vpop.f32.mrf.mxu0
      %651 = vmatprep.mubr.bf16.mxu0 0
      %652 = vmatmul.mubr.bf16.gmra.mxu0 %v437
      %v653 = vpop.f32.mrf.mxu0
      %v654 = vadd.f32 0.0, %v653
      %v655 = vpop.f32.mrf.mxu0
      %v656 = vpop.f32.mrf.mxu0
      %v657 = vadd.f32 0.0, %v656
      %v658 = vpop.f32.mrf.mxu0
      %659 = vmatprep.mubr.bf16.mxu0 0
      %660 = vmatmul.mubr.bf16.gmra.mxu0 %v440
      %v661 = vpop.f32.mrf.mxu0
      %v662 = vadd.f32 0.0, %v661
      %v663 = vpop.f32.mrf.mxu0
      %v664 = vpop.f32.mrf.mxu0
      %v665 = vadd.f32 0.0, %v664
      %v666 = vpop.f32.mrf.mxu0
      %667 = vmatprep.mubr.bf16.mxu0 0
      %668 = vmatmul.mubr.bf16.gmra.mxu0 %v443
      %v669 = vpop.f32.mrf.mxu0
      %v670 = vadd.f32 0.0, %v669
      %v671 = vpop.f32.mrf.mxu0
      %v672 = vpop.f32.mrf.mxu0
      %v673 = vadd.f32 0.0, %v672
      %v674 = vpop.f32.mrf.mxu0
      %675 = vmatprep.mubr.bf16.mxu0 0
      %676 = vmatmul.mubr.bf16.gmra.mxu0 %v446
      %v677 = vpop.f32.mrf.mxu0
      %v678 = vadd.f32 0.0, %v677
      %v679 = vpop.f32.mrf.mxu0
      %v680 = vpop.f32.mrf.mxu0
      %v681 = vadd.f32 0.0, %v680
      %v682 = vpop.f32.mrf.mxu0
      %683 = vmatprep.mubr.bf16.mxu0 0
      %684 = vmatmul.mubr.bf16.gmra.mxu0 %v449
      %v685 = vpop.f32.mrf.mxu0
      %v686 = vadd.f32 0.0, %v685
      %v687 = vpop.f32.mrf.mxu0
      %v688 = vpop.f32.mrf.mxu0
      %v689 = vadd.f32 0.0, %v688
      %v690 = vpop.f32.mrf.mxu0
      %691 = vmatprep.mubr.bf16.mxu0 0
      %692 = vmatmul.mubr.bf16.gmra.mxu0 %v452
      %v693 = vpop.f32.mrf.mxu0
      %v694 = vadd.f32 0.0, %v693
      %v695 = vpop.f32.mrf.mxu0
      %v696 = vpop.f32.mrf.mxu0
      %v697 = vadd.f32 0.0, %v696
      %v698 = vpop.f32.mrf.mxu0
      %699 = vmatprep.mubr.bf16.mxu0 0
      %700 = vmatmul.mubr.bf16.gmra.mxu0 %v455
      %v701 = vpop.f32.mrf.mxu0
      %v702 = vadd.f32 0.0, %v701
      %v703 = vpop.f32.mrf.mxu0
      %v704 = vpop.f32.mrf.mxu0
      %v705 = vadd.f32 0.0, %v704
      %v706 = vpop.f32.mrf.mxu0
      %707 = vmatprep.mubr.bf16.mxu0 0
      %708 = vmatmul.mubr.bf16.gmra.mxu0 %v458
      %v709 = vpop.f32.mrf.mxu0
      %v710 = vadd.f32 0.0, %v709
      %v711 = vpop.f32.mrf.mxu0
      %v712 = vpop.f32.mrf.mxu0
      %v713 = vadd.f32 0.0, %v712
      %v714 = vpop.f32.mrf.mxu0
      %715 = vmatprep.mubr.bf16.mxu0 0
      %716 = vmatmul.mubr.bf16.gmra.mxu0 %v461
      %v717 = vpop.f32.mrf.mxu0
      %v718 = vadd.f32 0.0, %v717
      %v719 = vpop.f32.mrf.mxu0
      %v720 = vpop.f32.mrf.mxu0
      %v721 = vadd.f32 0.0, %v720
      %v722 = vpop.f32.mrf.mxu0
      %723 = vmatprep.mubr.bf16.mxu0 0
      %724 = vmatmul.mubr.bf16.gmra.mxu0 %v464
      %v725 = vpop.f32.mrf.mxu0
      %v726 = vadd.f32 0.0, %v725
      %v727 = vpop.f32.mrf.mxu0
      %v728 = vpop.f32.mrf.mxu0
      %v729 = vadd.f32 0.0, %v728
      %v730 = vpop.f32.mrf.mxu0
      %731 = vmatprep.mubr.bf16.mxu0 0
      %732 = vmatmul.mubr.bf16.gmra.mxu0 %v467
      %v733 = vpop.f32.mrf.mxu0
      %v734 = vadd.f32 0.0, %v733
      %v735 = vpop.f32.mrf.mxu0
      %v736 = vpop.f32.mrf.mxu0
      %v737 = vadd.f32 0.0, %v736
      %v738 = vpop.f32.mrf.mxu0
      %739 = vmatprep.mubr.bf16.mxu0 0
      %740 = vmatmul.mubr.bf16.gmra.mxu0 %v470
      %v741 = vpop.f32.mrf.mxu0
      %v742 = vadd.f32 0.0, %v741
      %v743 = vpop.f32.mrf.mxu0
      %v744 = vpop.f32.mrf.mxu0
      %v745 = vadd.f32 0.0, %v744
      %v746 = vpop.f32.mrf.mxu0
      %747 = vmatprep.mubr.bf16.mxu0 0
      %748 = vmatmul.mubr.bf16.gmra.mxu0 %v473
      %v749 = vpop.f32.mrf.mxu0
      %v750 = vadd.f32 0.0, %v749
      %v751 = vpop.f32.mrf.mxu0
      %v752 = vpop.f32.mrf.mxu0
      %v753 = vadd.f32 0.0, %v752
      %v754 = vpop.f32.mrf.mxu0
      %755 = vmatprep.mubr.bf16.mxu0 0
      %756 = vmatmul.mubr.bf16.gmra.mxu0 %v476
      %v757 = vpop.f32.mrf.mxu0
      %v758 = vadd.f32 0.0, %v757
      %v759 = vpop.f32.mrf.mxu0
      %v760 = vpop.f32.mrf.mxu0
      %v761 = vadd.f32 0.0, %v760
      %v762 = vpop.f32.mrf.mxu0
      %763 = vmatprep.mubr.bf16.mxu0 0
      %764 = vmatmul.mubr.bf16.gmra.mxu0 %v479
      %v765 = vpop.f32.mrf.mxu0
      %v766 = vadd.f32 0.0, %v765
      %v767 = vpop.f32.mrf.mxu0
      %v768 = vpop.f32.mrf.mxu0
      %v769 = vadd.f32 0.0, %v768
      %v770 = vpop.f32.mrf.mxu0
      %771 = vmatprep.mubr.bf16.mxu0 0
      %772 = vmatmul.mubr.bf16.gmra.mxu0 %v482
      %v773 = vpop.f32.mrf.mxu0
      %v774 = vadd.f32 0.0, %v773
      %v775 = vpop.f32.mrf.mxu0
      %v776 = vpop.f32.mrf.mxu0
      %v777 = vadd.f32 0.0, %v776
      %v778 = vpop.f32.mrf.mxu0
      %779 = vdwg.mxu0
      %vm780 = vcmask 97280
      %781 = vst.msk [vmem:[%s145] sm:$0xff] %vm780, %v526
      %782 = vst.msk [vmem:[%s145 + $0x8] sm:$0xff] %vm780, %v529
      %783 = vst.msk [vmem:[%s145 + $0x10] sm:$0xff] %vm780, %v534
      %784 = vst.msk [vmem:[%s145 + $0x18] sm:$0xff] %vm780, %v537
      %785 = vst.msk [vmem:[%s145 + $0x20] sm:$0xff] %vm780, %v542
      %786 = vst.msk [vmem:[%s145 + $0x28] sm:$0xff] %vm780, %v545
      %787 = vst.msk [vmem:[%s145 + $0x30] sm:$0xff] %vm780, %v550
      %788 = vst.msk [vmem:[%s145 + $0x38] sm:$0xff] %vm780, %v553
      %789 = vst.msk [vmem:[%s145 + $0x40] sm:$0xff] %vm780, %v558
      %790 = vst.msk [vmem:[%s145 + $0x48] sm:$0xff] %vm780, %v561
      %791 = vst.msk [vmem:[%s145 + $0x50] sm:$0xff] %vm780, %v566
      %792 = vst.msk [vmem:[%s145 + $0x58] sm:$0xff] %vm780, %v569
      %793 = vst.msk [vmem:[%s145 + $0x60] sm:$0xff] %vm780, %v574
      %794 = vst.msk [vmem:[%s145 + $0x68] sm:$0xff] %vm780, %v577
      %795 = vst.msk [vmem:[%s145 + $0x70] sm:$0xff] %vm780, %v582
      %796 = vst.msk [vmem:[%s145 + $0x78] sm:$0xff] %vm780, %v585
      %797 = vst.msk [vmem:[%s145 + $0x80] sm:$0xff] %vm780, %v590
      %798 = vst.msk [vmem:[%s145 + $0x88] sm:$0xff] %vm780, %v593
      %799 = vst.msk [vmem:[%s145 + $0x90] sm:$0xff] %vm780, %v598
      %800 = vst.msk [vmem:[%s145 + $0x98] sm:$0xff] %vm780, %v601
      %801 = vst.msk [vmem:[%s145 + $0xa0] sm:$0xff] %vm780, %v606
      %802 = vst.msk [vmem:[%s145 + $0xa8] sm:$0xff] %vm780, %v609
      %803 = vst.msk [vmem:[%s145 + $0xb0] sm:$0xff] %vm780, %v614
      %804 = vst.msk [vmem:[%s145 + $0xb8] sm:$0xff] %vm780, %v617
      %805 = vst.msk [vmem:[%s145 + $0xc0] sm:$0xff] %vm780, %v622
      %806 = vst.msk [vmem:[%s145 + $0xc8] sm:$0xff] %vm780, %v625
      %807 = vst.msk [vmem:[%s145 + $0xd0] sm:$0xff] %vm780, %v630
      %808 = vst.msk [vmem:[%s145 + $0xd8] sm:$0xff] %vm780, %v633
      %809 = vst.msk [vmem:[%s145 + $0xe0] sm:$0xff] %vm780, %v638
      %810 = vst.msk [vmem:[%s145 + $0xe8] sm:$0xff] %vm780, %v641
      %811 = vst.msk [vmem:[%s145 + $0xf0] sm:$0xff] %vm780, %v646
      %812 = vst.msk [vmem:[%s145 + $0xf8] sm:$0xff] %vm780, %v649
      %813 = vst.msk [vmem:[%s145 + $0x100] sm:$0xff] %vm780, %v654
      %814 = vst.msk [vmem:[%s145 + $0x108] sm:$0xff] %vm780, %v657
      %815 = vst.msk [vmem:[%s145 + $0x110] sm:$0xff] %vm780, %v662
      %816 = vst.msk [vmem:[%s145 + $0x118] sm:$0xff] %vm780, %v665
      %817 = vst.msk [vmem:[%s145 + $0x120] sm:$0xff] %vm780, %v670
      %818 = vst.msk [vmem:[%s145 + $0x128] sm:$0xff] %vm780, %v673
      %819 = vst.msk [vmem:[%s145 + $0x130] sm:$0xff] %vm780, %v678
      %820 = vst.msk [vmem:[%s145 + $0x138] sm:$0xff] %vm780, %v681
      %821 = vst.msk [vmem:[%s145 + $0x140] sm:$0xff] %vm780, %v686
      %822 = vst.msk [vmem:[%s145 + $0x148] sm:$0xff] %vm780, %v689
      %823 = vst.msk [vmem:[%s145 + $0x150] sm:$0xff] %vm780, %v694
      %824 = vst.msk [vmem:[%s145 + $0x158] sm:$0xff] %vm780, %v697
      %825 = vst.msk [vmem:[%s145 + $0x160] sm:$0xff] %vm780, %v702
      %826 = vst.msk [vmem:[%s145 + $0x168] sm:$0xff] %vm780, %v705
      %827 = vst.msk [vmem:[%s145 + $0x170] sm:$0xff] %vm780, %v710
      %828 = vst.msk [vmem:[%s145 + $0x178] sm:$0xff] %vm780, %v713
      %829 = vst.msk [vmem:[%s145 + $0x180] sm:$0xff] %vm780, %v718
      %830 = vst.msk [vmem:[%s145 + $0x188] sm:$0xff] %vm780, %v721
      %831 = vst.msk [vmem:[%s145 + $0x190] sm:$0xff] %vm780, %v726
      %832 = vst.msk [vmem:[%s145 + $0x198] sm:$0xff] %vm780, %v729
      %833 = vst.msk [vmem:[%s145 + $0x1a0] sm:$0xff] %vm780, %v734
      %834 = vst.msk [vmem:[%s145 + $0x1a8] sm:$0xff] %vm780, %v737
      %835 = vst.msk [vmem:[%s145 + $0x1b0] sm:$0xff] %vm780, %v742
      %836 = vst.msk [vmem:[%s145 + $0x1b8] sm:$0xff] %vm780, %v745
      %837 = vst.msk [vmem:[%s145 + $0x1c0] sm:$0xff] %vm780, %v750
      %838 = vst.msk [vmem:[%s145 + $0x1c8] sm:$0xff] %vm780, %v753
      %839 = vst.msk [vmem:[%s145 + $0x1d0] sm:$0xff] %vm780, %v758
      %840 = vst.msk [vmem:[%s145 + $0x1d8] sm:$0xff] %vm780, %v761
      %841 = vst.msk [vmem:[%s145 + $0x1e0] sm:$0xff] %vm780, %v766
      %842 = vst.msk [vmem:[%s145 + $0x1e8] sm:$0xff] %vm780, %v769
      %843 = vst.msk [vmem:[%s145 + $0x1f0] sm:$0xff] %vm780, %v774
      %844 = vst.msk [vmem:[%s145 + $0x1f8] sm:$0xff] %vm780, %v777
      %s845 = smul.u32 64, %s13
      %p846 = scmp.lt.s32.totalorder %s845, 255
      %s847 = scalar_select %p846, %s845, 255
      %s848 = smul.addr %s847, 8
      %s849 = scalar_lea.vmem %s2, %s848
      // Predicated region
      $region29: #{_lambda_.28} parent=27 // pred_check
        %p850 = pneg %p78
      $region30: #{_lambda_.28} parent=27 // pred_check_branch
        %852 = sbr.rel (%p850) target = $region32
      $region31: #{_lambda_.28} parent=27 // pred_region
        %s853 = smul.u32 64, %s13
      $region32: #{_lambda_.28} parent=27 // pred_fallthru
        _
    $region28: #{_lambda_.28} parent=5 // pred_fallthru
      _
    %p854 = scmp.le.s32.totalorder 2, %s8
    // Predicated region
    $region33: #{_lambda_.28} parent=5 // pred_check
      %p855 = pneg %p854
    $region34: #{_lambda_.28} parent=5 // pred_check_branch
      %857 = sbr.rel (%p855) target = $region36
    $region35: #{_lambda_.28} parent=5 // pred_region
      %s858 = ssub.s32 %s8, 2
      // Predicated region
      $region37: #{_lambda_.28} parent=35 // pred_check
        %p859 = pneg %p84
      $region38: #{_lambda_.28} parent=35 // pred_check_branch
        %861 = sbr.rel (%p859) target = $region40
      $region39: #{_lambda_.28} parent=35 // pred_region
        %s862 = smul.u32 64, %s14
        %p863 = scmp.lt.s32.totalorder %s862, 255
        %s864 = scalar_select %p863, %s862, 255
        %s865 = smul.addr %s864, 8
        %s866 = scalar_lea.vmem %s2, %s865
      $region40: #{_lambda_.28} parent=35 // pred_fallthru
        _
    $region36: #{_lambda_.28} parent=5 // pred_fallthru
      _
  $region6: #{_lambda_.28} parent=0 // loop_footer
    %s12 = sadd.s32 1, %s8
  $region7: #{_lambda_.28} parent=0 // loop_footer_branch
    %7 = sbr.rel target = $region3
  $region8: #{_lambda_.28} parent=0 // loop_exit
    _

// kernel: _lambda_.29
$region0: #{_lambda_.29}
  #allocation0 [shape = 'u32[]', space=smem, size = 0x4, offset = 0x4, fixed_abs, tag = 'smem constant byte address 0x4 - core index']
  #allocation1 [shape = 'u32[144,128]{1,0:T(1,128)}', space=vmem, size = 0x12000, scoped, tag = 'internal scratch']
  %s0 = inlined_call_operand.vmem [shape: bf16[512,108], index: 0, kind: input, shape index: {}]
  %s1 = inlined_call_operand.vmem [shape: bf16[108,24], index: 1, kind: input, shape index: {}]
  %s2 = inlined_call_operand.vmem [shape: f32[512,24], index: 2, kind: output, shape index: {}]
  %s3 = sld [smem:[#allocation0]]
  $region41: #{_lambda_.29} parent=0
    _
  %s5 = ssub.s32 1, %s3
  %s6 = scalar_select 0, %s5, %s3
  loop: start=0, step=1, limit=4
  $region2: #{_lambda_.29} parent=0 // loop_pre_header
    _
  $region3: #{_lambda_.29} parent=0 // loop_header
    %s8 = sphi 0, %s12
    %p9 = scmp.ge.s32.totalorder %s8, 4
    %s18 = sphi 0, %s20
    %s21 = sphi 0, %s18
    %s22 = sphi 0, %s21
    %s38 = sphi 0, %s22
    %s42 = sphi 0, %s42
    %s44 = sphi 0, %s42
    %s45 = sphi 0, %s44
    %s59 = sphi 0, %s45
    %s65 = sphi 0, %s67
    %s68 = sphi 0, %s65
    %s69 = sphi 0, %s68
    %s85 = sphi 0, %s69
  $region4: #{_lambda_.29} parent=0 // loop_header_branch
    %11 = sbr.rel (%p9) target = $region8
  $region5: #{_lambda_.29} parent=0 // loop_body
    %s13 = ssub.s32 %s8, 1
    %s14 = ssub.s32 %s8, 2
    %s15 = sadd.s32 %s8, 1
    %s16 = ssub.s32 %s8, %s15
    %p17 = scmp.eq.s32.totalorder %s16, 0
    %s19 = sadd.s32 %s18, 1
    %s20 = scalar_select %p17, %s18, %s19
    %p23 = pneg %p17
    %p24 = scmp.eq.s32.totalorder %s8, 1
    %p25 = por %p23, %p24
    %p26 = scmp.ne.s32.totalorder %s18, %s21
    %p27 = scmp.eq.s32.totalorder %s8, 0
    %p28 = por %p26, %p27
    %p29 = scmp.ne.s32.totalorder %s18, %s21
    %p30 = scmp.eq.s32.totalorder %s13, 1
    %p31 = por %p29, %p30
    %p32 = scmp.ne.s32.totalorder %s21, %s22
    %p33 = scmp.eq.s32.totalorder %s13, 0
    %p34 = por %p32, %p33
    %p35 = scmp.ne.s32.totalorder %s21, %s22
    %p36 = scmp.eq.s32.totalorder %s14, 1
    %p37 = por %p35, %p36
    %p39 = scmp.ne.s32.totalorder %s22, %s38
    %p40 = scmp.eq.s32.totalorder %s14, 0
    %p41 = por %p39, %p40
    %s43 = sadd.s32 %s42, 1
    %p46 = scmp.eq.s32.totalorder %s8, 1
    %p47 = scmp.ne.s32.totalorder %s42, %s44
    %p48 = scmp.eq.s32.totalorder %s8, 0
    %p49 = por %p47, %p48
    %p50 = scmp.ne.s32.totalorder %s42, %s44
    %p51 = scmp.eq.s32.totalorder %s13, 1
    %p52 = por %p50, %p51
    %p53 = scmp.ne.s32.totalorder %s44, %s45
    %p54 = scmp.eq.s32.totalorder %s13, 0
    %p55 = por %p53, %p54
    %p56 = scmp.ne.s32.totalorder %s44, %s45
    %p57 = scmp.eq.s32.totalorder %s14, 1
    %p58 = por %p56, %p57
    %p60 = scmp.ne.s32.totalorder %s45, %s59
    %p61 = scmp.eq.s32.totalorder %s14, 0
    %p62 = por %p60, %p61
    %s63 = ssub.s32 %s8, %s15
    %p64 = scmp.eq.s32.totalorder %s63, 0
    %s66 = sadd.s32 %s65, 1
    %s67 = scalar_select %p64, %s65, %s66
    %p70 = pneg %p64
    %p71 = scmp.eq.s32.totalorder %s8, 1
    %p72 = por %p70, %p71
    %p73 = scmp.ne.s32.totalorder %s65, %s68
    %p74 = scmp.eq.s32.totalorder %s8, 0
    %p75 = por %p73, %p74
    %p76 = scmp.ne.s32.totalorder %s65, %s68
    %p77 = scmp.eq.s32.totalorder %s13, 1
    %p78 = por %p76, %p77
    %p79 = scmp.ne.s32.totalorder %s68, %s69
    %p80 = scmp.eq.s32.totalorder %s13, 0
    %p81 = por %p79, %p80
    %p82 = scmp.ne.s32.totalorder %s68, %s69
    %p83 = scmp.eq.s32.totalorder %s14, 1
    %p84 = por %p82, %p83
    %p86 = scmp.ne.s32.totalorder %s69, %s85
    %p87 = scmp.eq.s32.totalorder %s14, 0
    %p88 = por %p86, %p87
    %p89 = scmp.le.s32.totalorder 1, %s8
    %p90 = scmp.lt.s32.totalorder %s8, 3
    %p91 = pnand %p89, %p90
    %p92 = pneg %p91
    // Predicated region
    $region9: #{_lambda_.29} parent=5 // pred_check
      _
    $region10: #{_lambda_.29} parent=5 // pred_check_branch
      %94 = sbr.rel (%p91) target = $region12
    $region11: #{_lambda_.29} parent=5 // pred_region
      %s95 = ssub.s32 %s8, 1
      // Predicated region
      $region13: #{_lambda_.29} parent=11 // pred_check
        %p96 = pneg %p55
      $region14: #{_lambda_.29} parent=11 // pred_check_branch
        %98 = sbr.rel (%p96) target = $region16
      $region15: #{_lambda_.29} parent=11 // pred_region
        _
      $region16: #{_lambda_.29} parent=11 // pred_fallthru
        _
    $region12: #{_lambda_.29} parent=5 // pred_fallthru
      _
    %p99 = scmp.lt.s32.totalorder %s8, 2
    // Predicated region
    $region17: #{_lambda_.29} parent=5 // pred_check
      %p100 = pneg %p99
    $region18: #{_lambda_.29} parent=5 // pred_check_branch
      %102 = sbr.rel (%p100) target = $region20
    $region19: #{_lambda_.29} parent=5 // pred_region
      // Predicated region
      $region21: #{_lambda_.29} parent=19 // pred_check
        %p103 = pneg %p28
      $region22: #{_lambda_.29} parent=19 // pred_check_branch
        %105 = sbr.rel (%p103) target = $region24
      $region23: #{_lambda_.29} parent=19 // pred_region
        %s106 = smul.u32 32, %s8
        %p107 = scmp.lt.s32.totalorder %s106, 63
        %s108 = scalar_select %p107, %s106, 63
        %s109 = smul.addr %s108, 4
        %s110 = scalar_lea.vmem %s0, %s109
        %s111 = smul.u32 32, %s8
      $region24: #{_lambda_.29} parent=19 // pred_fallthru
        _
    $region20: #{_lambda_.29} parent=5 // pred_fallthru
      _
    %p112 = scmp.le.s32.totalorder 1, %s8
    %p113 = scmp.lt.s32.totalorder %s8, 3
    %p114 = pnand %p112, %p113
    %p115 = pneg %p114
    // Predicated region
    $region25: #{_lambda_.29} parent=5 // pred_check
      _
    $region26: #{_lambda_.29} parent=5 // pred_check_branch
      %117 = sbr.rel (%p114) target = $region28
    $region27: #{_lambda_.29} parent=5 // pred_region
      %s118 = ssub.s32 %s8, 1
      %s119 = smul.u32 32, %s13
      %p120 = scmp.lt.s32.totalorder %s119, 63
      %s121 = scalar_select %p120, %s119, 63
      %s122 = smul.addr %s121, 4
      %s123 = scalar_lea.vmem %s0, %s122
      %p124 = pneg %p34
      %p125 = pneg %p31
      %p126 = pneg %p55
      %p127 = pneg %p52
      %p128 = pneg %p81
      %p129 = pneg %p78
      %s130 = smul.u32 32, %s13
      %p131 = scmp.lt.s32.totalorder %s130, 63
      %s132 = scalar_select %p131, %s130, 63
      %s133 = smul.addr %s132, 8
      %s134 = scalar_lea.vmem %s2, %s133
      %s135 = smul.u32 32, %s13
      %p136 = scmp.lt.s32.totalorder %s135, 63
      %s137 = scalar_select %p136, %s135, 63
      %s138 = smul.addr %s137, 4
      %s139 = scalar_lea.vmem %s0, %s138
      %s140 = smul.u32 32, %s13
      %s141 = smul.u32 32, %s13
      %p142 = scmp.lt.s32.totalorder %s141, 63
      %s143 = scalar_select %p142, %s141, 63
      %s144 = smul.addr %s143, 8
      %s145 = scalar_lea.vmem %s2, %s144
      %s146 = smul.u32 32, %s13
      %v148 = vld [vmem:[%s139] sm:$0xf]
      %v149 = vld [vmem:[%s139 + $0x4] sm:$0xf]
      %v150 = vld [vmem:[%s139 + $0x8] sm:$0xf]
      %v151 = vld [vmem:[%s139 + $0xc] sm:$0xf]
      %v152 = vld [vmem:[%s139 + $0x10] sm:$0xf]
      %v153 = vld [vmem:[%s139 + $0x14] sm:$0xf]
      %v154 = vld [vmem:[%s139 + $0x18] sm:$0xf]
      %v155 = vld [vmem:[%s139 + $0x1c] sm:$0xf]
      %v156 = vld [vmem:[%s139 + $0x20] sm:$0xf]
      %v157 = vld [vmem:[%s139 + $0x24] sm:$0xf]
      %v158 = vld [vmem:[%s139 + $0x28] sm:$0xf]
      %v159 = vld [vmem:[%s139 + $0x2c] sm:$0xf]
      %v160 = vld [vmem:[%s139 + $0x30] sm:$0xf]
      %v161 = vld [vmem:[%s139 + $0x34] sm:$0xf]
      %v162 = vld [vmem:[%s139 + $0x38] sm:$0xf]
      %v163 = vld [vmem:[%s139 + $0x3c] sm:$0xf]
      %v164 = vld [vmem:[%s139 + $0x40] sm:$0xf]
      %v165 = vld [vmem:[%s139 + $0x44] sm:$0xf]
      %v166 = vld [vmem:[%s139 + $0x48] sm:$0xf]
      %v167 = vld [vmem:[%s139 + $0x4c] sm:$0xf]
      %v168 = vld [vmem:[%s139 + $0x50] sm:$0xf]
      %v169 = vld [vmem:[%s139 + $0x54] sm:$0xf]
      %v170 = vld [vmem:[%s139 + $0x58] sm:$0xf]
      %v171 = vld [vmem:[%s139 + $0x5c] sm:$0xf]
      %v172 = vld [vmem:[%s139 + $0x60] sm:$0xf]
      %v173 = vld [vmem:[%s139 + $0x64] sm:$0xf]
      %v174 = vld [vmem:[%s139 + $0x68] sm:$0xf]
      %v175 = vld [vmem:[%s139 + $0x6c] sm:$0xf]
      %v176 = vld [vmem:[%s139 + $0x70] sm:$0xf]
      %v177 = vld [vmem:[%s139 + $0x74] sm:$0xf]
      %v178 = vld [vmem:[%s139 + $0x78] sm:$0xf]
      %v179 = vld [vmem:[%s139 + $0x7c] sm:$0xf]
      %v180 = vmax.bf16 %v148, 0
      %v181 = vmax.bf16 %v149, 0
      %v182 = vmax.bf16 %v150, 0
      %v183 = vmax.bf16 %v151, 0
      %v184 = vmax.bf16 %v152, 0
      %v185 = vmax.bf16 %v153, 0
      %v186 = vmax.bf16 %v154, 0
      %v187 = vmax.bf16 %v155, 0
      %v188 = vmax.bf16 %v156, 0
      %v189 = vmax.bf16 %v157, 0
      %v190 = vmax.bf16 %v158, 0
      %v191 = vmax.bf16 %v159, 0
      %v192 = vmax.bf16 %v160, 0
      %v193 = vmax.bf16 %v161, 0
      %v194 = vmax.bf16 %v162, 0
      %v195 = vmax.bf16 %v163, 0
      %v196 = vmax.bf16 %v164, 0
      %v197 = vmax.bf16 %v165, 0
      %v198 = vmax.bf16 %v166, 0
      %v199 = vmax.bf16 %v167, 0
      %v200 = vmax.bf16 %v168, 0
      %v201 = vmax.bf16 %v169, 0
      %v202 = vmax.bf16 %v170, 0
      %v203 = vmax.bf16 %v171, 0
      %v204 = vmax.bf16 %v172, 0
      %v205 = vmax.bf16 %v173, 0
      %v206 = vmax.bf16 %v174, 0
      %v207 = vmax.bf16 %v175, 0
      %v208 = vmax.bf16 %v176, 0
      %v209 = vmax.bf16 %v177, 0
      %v210 = vmax.bf16 %v178, 0
      %v211 = vmax.bf16 %v179, 0
      %v212 = vld [vmem:[%s1] sm:$0xf]
      %v213 = vld [vmem:[%s1 + $0x4] sm:$0xf]
      %v214 = vld [vmem:[%s1 + $0x8] sm:$0xf]
      %v215 = vld [vmem:[%s1 + $0xc] sm:$0xf]
      %v216 = vld [vmem:[%s1 + $0x10] sm:$0xf]
      %v217 = vld [vmem:[%s1 + $0x14] sm:$0xf]
      %v218 = vld [vmem:[%s1 + $0x18] sm:$0xf]
      %v219 = vld [vmem:[%s1 + $0x1c] sm:$0xf]
      %v220 = vld [vmem:[%s1 + $0x20] sm:$0xf]
      %v221 = vld [vmem:[%s1 + $0x24] sm:$0xf]
      %v222 = vld [vmem:[%s1 + $0x28] sm:$0xf]
      %v223 = vld [vmem:[%s1 + $0x2c] sm:$0xf]
      %v224 = vld [vmem:[%s1 + $0x30] sm:$0xf]
      %v225 = vld [vmem:[%s1 + $0x34] sm:$0x3]
      %v258 = vunpack.c.l.b16 %v180
      %v259 = vunpack.c.l.b16 %v181
      %v260 = vunpack.c.l.b16 %v182
      %v261 = vunpack.c.l.b16 %v183
      %v262 = vunpack.c.l.b16 %v184
      %v263 = vunpack.c.l.b16 %v185
      %v264 = vunpack.c.l.b16 %v186
      %v265 = vunpack.c.l.b16 %v187
      %v266 = vunpack.c.l.b16 %v188
      %v267 = vunpack.c.l.b16 %v189
      %v268 = vunpack.c.l.b16 %v190
      %v269 = vunpack.c.l.b16 %v191
      %v270 = vunpack.c.l.b16 %v192
      %v271 = vunpack.c.l.b16 %v193
      %v272 = vunpack.c.l.b16 %v194
      %v273 = vunpack.c.l.b16 %v195
      %v274 = vunpack.c.l.b16 %v196
      %v275 = vunpack.c.l.b16 %v197
      %v276 = vunpack.c.l.b16 %v198
      %v277 = vunpack.c.l.b16 %v199
      %v278 = vunpack.c.l.b16 %v200
      %v279 = vunpack.c.l.b16 %v201
      %v280 = vunpack.c.l.b16 %v202
      %v281 = vunpack.c.l.b16 %v203
      %v282 = vunpack.c.l.b16 %v204
      %v283 = vunpack.c.l.b16 %v205
      %v284 = vunpack.c.l.b16 %v206
      %v285 = vunpack.c.l.b16 %v207
      %v286 = vunpack.c.l.b16 %v208
      %v287 = vunpack.c.l.b16 %v209
      %v288 = vunpack.c.l.b16 %v210
      %v289 = vunpack.c.l.b16 %v211
      %v290 = vpack.c.b16 %v259, %v258
      %v291 = vpack.c.b16 %v261, %v260
      %v292 = vpack.c.b16 %v263, %v262
      %v293 = vpack.c.b16 %v265, %v264
      %v294 = vpack.c.b16 %v267, %v266
      %v295 = vpack.c.b16 %v269, %v268
      %v296 = vpack.c.b16 %v271, %v270
      %v297 = vpack.c.b16 %v273, %v272
      %v298 = vpack.c.b16 %v275, %v274
      %v299 = vpack.c.b16 %v277, %v276
      %v300 = vpack.c.b16 %v279, %v278
      %v301 = vpack.c.b16 %v281, %v280
      %v302 = vpack.c.b16 %v283, %v282
      %v303 = vpack.c.b16 %v285, %v284
      %v304 = vpack.c.b16 %v287, %v286
      %v305 = vpack.c.b16 %v289, %v288
      %v320 = vunpack.c.l.b16 %v212
      %v321 = vunpack.c.l.b16 %v213
      %v322 = vunpack.c.l.b16 %v214
      %v323 = vunpack.c.l.b16 %v215
      %v324 = vunpack.c.l.b16 %v216
      %v325 = vunpack.c.l.b16 %v217
      %v326 = vunpack.c.l.b16 %v218
      %v327 = vunpack.c.l.b16 %v219
      %v328 = vunpack.c.l.b16 %v220
      %v329 = vunpack.c.l.b16 %v221
      %v330 = vunpack.c.l.b16 %v222
      %v331 = vunpack.c.l.b16 %v223
      %v332 = vunpack.c.l.b16 %v224
      %v333 = vunpack.c.l.b16 %v225
      %v334 = vpack.c.b16 %v321, %v320
      %v335 = vpack.c.b16 %v323, %v322
      %v336 = vpack.c.b16 %v325, %v324
      %v337 = vpack.c.b16 %v327, %v326
      %v338 = vpack.c.b16 %v329, %v328
      %v339 = vpack.c.b16 %v331, %v330
      %v340 = vpack.c.b16 %v333, %v332
      %vm347 = vcmask 883712
      %v349 = vsel %vm347, %v290, 0
      %v352 = vsel %vm347, %v291, 0
      %v355 = vsel %vm347, %v292, 0
      %v358 = vsel %vm347, %v293, 0
      %v361 = vsel %vm347, %v294, 0
      %v364 = vsel %vm347, %v295, 0
      %v367 = vsel %vm347, %v296, 0
      %v370 = vsel %vm347, %v297, 0
      %v373 = vsel %vm347, %v298, 0
      %v376 = vsel %vm347, %v299, 0
      %v379 = vsel %vm347, %v300, 0
      %v382 = vsel %vm347, %v301, 0
      %v385 = vsel %vm347, %v302, 0
      %v388 = vsel %vm347, %v303, 0
      %v391 = vsel %vm347, %v304, 0
      %v394 = vsel %vm347, %v305, 0
      %vm396 = vcmask 1045504
      %v398 = vsel %vm396, %v340, 0
      %400 = vmatprep.subr.bf16.mxu0 0
      %401 = vmatpush1.bf16.msra.mxu0 0
      %402 = vmatprep.subr.bf16.mxu0 0
      %403 = vmatpush1.bf16.msra.mxu0 %v398
      %404 = vmatprep.subr.bf16.mxu0 0
      %405 = vmatpush1.bf16.msra.mxu0 %v339
      %406 = vmatprep.subr.bf16.mxu0 0
      %407 = vmatpush1.bf16.msra.mxu0 %v338
      %408 = vmatprep.subr.bf16.mxu0 0
      %409 = vmatpush1.bf16.msra.mxu0 %v337
      %410 = vmatprep.subr.bf16.mxu0 0
      %411 = vmatpush1.bf16.msra.mxu0 %v336
      %412 = vmatprep.subr.bf16.mxu0 0
      %413 = vmatpush1.bf16.msra.mxu0 %v335
      %414 = vmatprep.subr.bf16.mxu0 0
      %415 = vmatpush1.bf16.msra.mxu0 %v334
      %416 = vmatprep.subr.bf16.mxu0 0
      %417 = vmatpush2.bf16.msra.mxu0 0
      %418 = vmatprep.subr.bf16.mxu0 0
      %419 = vmatpush2.bf16.msra.mxu0 0
      %420 = vmatprep.subr.bf16.mxu0 0
      %421 = vmatpush2.bf16.msra.mxu0 0
      %422 = vmatprep.subr.bf16.mxu0 0
      %423 = vmatpush2.bf16.msra.mxu0 0
      %424 = vmatprep.subr.bf16.mxu0 0
      %425 = vmatpush2.bf16.msra.mxu0 0
      %426 = vmatprep.subr.bf16.mxu0 0
      %427 = vmatpush2.bf16.msra.mxu0 0
      %428 = vmatprep.subr.bf16.mxu0 0
      %429 = vmatpush2.bf16.msra.mxu0 0
      %430 = vmatprep.subr.bf16.mxu0 0
      %431 = vmatpush2.bf16.msra.mxu0 0
      %432 = vmatprep.mubr.bf16.mxu0 0
      %433 = vmatmul.mubr.bf16.gmra.mxu0 %v349
      %v434 = vpop.f32.mrf.mxu0
      %v435 = vadd.f32 0.0, %v434
      %v436 = vpop.f32.mrf.mxu0
      %v437 = vpop.f32.mrf.mxu0
      %v438 = vadd.f32 0.0, %v437
      %v439 = vpop.f32.mrf.mxu0
      %440 = vmatprep.mubr.bf16.mxu0 0
      %441 = vmatmul.mubr.bf16.gmra.mxu0 %v352
      %v442 = vpop.f32.mrf.mxu0
      %v443 = vadd.f32 0.0, %v442
      %v444 = vpop.f32.mrf.mxu0
      %v445 = vpop.f32.mrf.mxu0
      %v446 = vadd.f32 0.0, %v445
      %v447 = vpop.f32.mrf.mxu0
      %448 = vmatprep.mubr.bf16.mxu0 0
      %449 = vmatmul.mubr.bf16.gmra.mxu0 %v355
      %v450 = vpop.f32.mrf.mxu0
      %v451 = vadd.f32 0.0, %v450
      %v452 = vpop.f32.mrf.mxu0
      %v453 = vpop.f32.mrf.mxu0
      %v454 = vadd.f32 0.0, %v453
      %v455 = vpop.f32.mrf.mxu0
      %456 = vmatprep.mubr.bf16.mxu0 0
      %457 = vmatmul.mubr.bf16.gmra.mxu0 %v358
      %v458 = vpop.f32.mrf.mxu0
      %v459 = vadd.f32 0.0, %v458
      %v460 = vpop.f32.mrf.mxu0
      %v461 = vpop.f32.mrf.mxu0
      %v462 = vadd.f32 0.0, %v461
      %v463 = vpop.f32.mrf.mxu0
      %464 = vmatprep.mubr.bf16.mxu0 0
      %465 = vmatmul.mubr.bf16.gmra.mxu0 %v361
      %v466 = vpop.f32.mrf.mxu0
      %v467 = vadd.f32 0.0, %v466
      %v468 = vpop.f32.mrf.mxu0
      %v469 = vpop.f32.mrf.mxu0
      %v470 = vadd.f32 0.0, %v469
      %v471 = vpop.f32.mrf.mxu0
      %472 = vmatprep.mubr.bf16.mxu0 0
      %473 = vmatmul.mubr.bf16.gmra.mxu0 %v364
      %v474 = vpop.f32.mrf.mxu0
      %v475 = vadd.f32 0.0, %v474
      %v476 = vpop.f32.mrf.mxu0
      %v477 = vpop.f32.mrf.mxu0
      %v478 = vadd.f32 0.0, %v477
      %v479 = vpop.f32.mrf.mxu0
      %480 = vmatprep.mubr.bf16.mxu0 0
      %481 = vmatmul.mubr.bf16.gmra.mxu0 %v367
      %v482 = vpop.f32.mrf.mxu0
      %v483 = vadd.f32 0.0, %v482
      %v484 = vpop.f32.mrf.mxu0
      %v485 = vpop.f32.mrf.mxu0
      %v486 = vadd.f32 0.0, %v485
      %v487 = vpop.f32.mrf.mxu0
      %488 = vmatprep.mubr.bf16.mxu0 0
      %489 = vmatmul.mubr.bf16.gmra.mxu0 %v370
      %v490 = vpop.f32.mrf.mxu0
      %v491 = vadd.f32 0.0, %v490
      %v492 = vpop.f32.mrf.mxu0
      %v493 = vpop.f32.mrf.mxu0
      %v494 = vadd.f32 0.0, %v493
      %v495 = vpop.f32.mrf.mxu0
      %496 = vmatprep.mubr.bf16.mxu0 0
      %497 = vmatmul.mubr.bf16.gmra.mxu0 %v373
      %v498 = vpop.f32.mrf.mxu0
      %v499 = vadd.f32 0.0, %v498
      %v500 = vpop.f32.mrf.mxu0
      %v501 = vpop.f32.mrf.mxu0
      %v502 = vadd.f32 0.0, %v501
      %v503 = vpop.f32.mrf.mxu0
      %504 = vmatprep.mubr.bf16.mxu0 0
      %505 = vmatmul.mubr.bf16.gmra.mxu0 %v376
      %v506 = vpop.f32.mrf.mxu0
      %v507 = vadd.f32 0.0, %v506
      %v508 = vpop.f32.mrf.mxu0
      %v509 = vpop.f32.mrf.mxu0
      %v510 = vadd.f32 0.0, %v509
      %v511 = vpop.f32.mrf.mxu0
      %512 = vmatprep.mubr.bf16.mxu0 0
      %513 = vmatmul.mubr.bf16.gmra.mxu0 %v379
      %v514 = vpop.f32.mrf.mxu0
      %v515 = vadd.f32 0.0, %v514
      %v516 = vpop.f32.mrf.mxu0
      %v517 = vpop.f32.mrf.mxu0
      %v518 = vadd.f32 0.0, %v517
      %v519 = vpop.f32.mrf.mxu0
      %520 = vmatprep.mubr.bf16.mxu0 0
      %521 = vmatmul.mubr.bf16.gmra.mxu0 %v382
      %v522 = vpop.f32.mrf.mxu0
      %v523 = vadd.f32 0.0, %v522
      %v524 = vpop.f32.mrf.mxu0
      %v525 = vpop.f32.mrf.mxu0
      %v526 = vadd.f32 0.0, %v525
      %v527 = vpop.f32.mrf.mxu0
      %528 = vmatprep.mubr.bf16.mxu0 0
      %529 = vmatmul.mubr.bf16.gmra.mxu0 %v385
      %v530 = vpop.f32.mrf.mxu0
      %v531 = vadd.f32 0.0, %v530
      %v532 = vpop.f32.mrf.mxu0
      %v533 = vpop.f32.mrf.mxu0
      %v534 = vadd.f32 0.0, %v533
      %v535 = vpop.f32.mrf.mxu0
      %536 = vmatprep.mubr.bf16.mxu0 0
      %537 = vmatmul.mubr.bf16.gmra.mxu0 %v388
      %v538 = vpop.f32.mrf.mxu0
      %v539 = vadd.f32 0.0, %v538
      %v540 = vpop.f32.mrf.mxu0
      %v541 = vpop.f32.mrf.mxu0
      %v542 = vadd.f32 0.0, %v541
      %v543 = vpop.f32.mrf.mxu0
      %544 = vmatprep.mubr.bf16.mxu0 0
      %545 = vmatmul.mubr.bf16.gmra.mxu0 %v391
      %v546 = vpop.f32.mrf.mxu0
      %v547 = vadd.f32 0.0, %v546
      %v548 = vpop.f32.mrf.mxu0
      %v549 = vpop.f32.mrf.mxu0
      %v550 = vadd.f32 0.0, %v549
      %v551 = vpop.f32.mrf.mxu0
      %552 = vmatprep.mubr.bf16.mxu0 0
      %553 = vmatmul.mubr.bf16.gmra.mxu0 %v394
      %v554 = vpop.f32.mrf.mxu0
      %v555 = vadd.f32 0.0, %v554
      %v556 = vpop.f32.mrf.mxu0
      %v557 = vpop.f32.mrf.mxu0
      %v558 = vadd.f32 0.0, %v557
      %v559 = vpop.f32.mrf.mxu0
      %560 = vdwg.mxu0
      %vm561 = vcmask 195584
      %562 = vst.msk [vmem:[%s145] sm:$0xff] %vm561, %v435
      %563 = vst.msk [vmem:[%s145 + $0x8] sm:$0xff] %vm561, %v438
      %564 = vst.msk [vmem:[%s145 + $0x10] sm:$0xff] %vm561, %v443
      %565 = vst.msk [vmem:[%s145 + $0x18] sm:$0xff] %vm561, %v446
      %566 = vst.msk [vmem:[%s145 + $0x20] sm:$0xff] %vm561, %v451
      %567 = vst.msk [vmem:[%s145 + $0x28] sm:$0xff] %vm561, %v454
      %568 = vst.msk [vmem:[%s145 + $0x30] sm:$0xff] %vm561, %v459
      %569 = vst.msk [vmem:[%s145 + $0x38] sm:$0xff] %vm561, %v462
      %570 = vst.msk [vmem:[%s145 + $0x40] sm:$0xff] %vm561, %v467
      %571 = vst.msk [vmem:[%s145 + $0x48] sm:$0xff] %vm561, %v470
      %572 = vst.msk [vmem:[%s145 + $0x50] sm:$0xff] %vm561, %v475
      %573 = vst.msk [vmem:[%s145 + $0x58] sm:$0xff] %vm561, %v478
      %574 = vst.msk [vmem:[%s145 + $0x60] sm:$0xff] %vm561, %v483
      %575 = vst.msk [vmem:[%s145 + $0x68] sm:$0xff] %vm561, %v486
      %576 = vst.msk [vmem:[%s145 + $0x70] sm:$0xff] %vm561, %v491
      %577 = vst.msk [vmem:[%s145 + $0x78] sm:$0xff] %vm561, %v494
      %578 = vst.msk [vmem:[%s145 + $0x80] sm:$0xff] %vm561, %v499
      %579 = vst.msk [vmem:[%s145 + $0x88] sm:$0xff] %vm561, %v502
      %580 = vst.msk [vmem:[%s145 + $0x90] sm:$0xff] %vm561, %v507
      %581 = vst.msk [vmem:[%s145 + $0x98] sm:$0xff] %vm561, %v510
      %582 = vst.msk [vmem:[%s145 + $0xa0] sm:$0xff] %vm561, %v515
      %583 = vst.msk [vmem:[%s145 + $0xa8] sm:$0xff] %vm561, %v518
      %584 = vst.msk [vmem:[%s145 + $0xb0] sm:$0xff] %vm561, %v523
      %585 = vst.msk [vmem:[%s145 + $0xb8] sm:$0xff] %vm561, %v526
      %586 = vst.msk [vmem:[%s145 + $0xc0] sm:$0xff] %vm561, %v531
      %587 = vst.msk [vmem:[%s145 + $0xc8] sm:$0xff] %vm561, %v534
      %588 = vst.msk [vmem:[%s145 + $0xd0] sm:$0xff] %vm561, %v539
      %589 = vst.msk [vmem:[%s145 + $0xd8] sm:$0xff] %vm561, %v542
      %590 = vst.msk [vmem:[%s145 + $0xe0] sm:$0xff] %vm561, %v547
      %591 = vst.msk [vmem:[%s145 + $0xe8] sm:$0xff] %vm561, %v550
      %592 = vst.msk [vmem:[%s145 + $0xf0] sm:$0xff] %vm561, %v555
      %593 = vst.msk [vmem:[%s145 + $0xf8] sm:$0xff] %vm561, %v558
      %s594 = smul.u32 32, %s13
      %p595 = scmp.lt.s32.totalorder %s594, 63
      %s596 = scalar_select %p595, %s594, 63
      %s597 = smul.addr %s596, 8
      %s598 = scalar_lea.vmem %s2, %s597
      // Predicated region
      $region29: #{_lambda_.29} parent=27 // pred_check
        %p599 = pneg %p78
      $region30: #{_lambda_.29} parent=27 // pred_check_branch
        %601 = sbr.rel (%p599) target = $region32
      $region31: #{_lambda_.29} parent=27 // pred_region
        %s602 = smul.u32 32, %s13
      $region32: #{_lambda_.29} parent=27 // pred_fallthru
        _
    $region28: #{_lambda_.29} parent=5 // pred_fallthru
      _
    %p603 = scmp.le.s32.totalorder 2, %s8
    // Predicated region
    $region33: #{_lambda_.29} parent=5 // pred_check
      %p604 = pneg %p603
    $region34: #{_lambda_.29} parent=5 // pred_check_branch
      %606 = sbr.rel (%p604) target = $region36
    $region35: #{_lambda_.29} parent=5 // pred_region
      %s607 = ssub.s32 %s8, 2
      // Predicated region
      $region37: #{_lambda_.29} parent=35 // pred_check
        %p608 = pneg %p84
      $region38: #{_lambda_.29} parent=35 // pred_check_branch
        %610 = sbr.rel (%p608) target = $region40
      $region39: #{_lambda_.29} parent=35 // pred_region
        %s611 = smul.u32 32, %s14
        %p612 = scmp.lt.s32.totalorder %s611, 63
        %s613 = scalar_select %p612, %s611, 63
        %s614 = smul.addr %s613, 8
        %s615 = scalar_lea.vmem %s2, %s614
      $region40: #{_lambda_.29} parent=35 // pred_fallthru
        _
    $region36: #{_lambda_.29} parent=5 // pred_fallthru
      _
  $region6: #{_lambda_.29} parent=0 // loop_footer
    %s12 = sadd.s32 1, %s8
  $region7: #{_lambda_.29} parent=0 // loop_footer_branch
    %7 = sbr.rel target = $region3
  $region8: #{_lambda_.29} parent=0 // loop_exit
    _

// kernel: _lambda_.31
$region0: #{_lambda_.31}
  #allocation0 [shape = 'u32[]', space=smem, size = 0x4, offset = 0x4, fixed_abs, tag = 'smem constant byte address 0x4 - core index']
  #allocation1 [shape = 'u32[144,128]{1,0:T(1,128)}', space=vmem, size = 0x12000, scoped, tag = 'internal scratch']
  %s0 = inlined_call_operand.vmem [shape: bf16[128,48], index: 0, kind: input, shape index: {}]
  %s1 = inlined_call_operand.vmem [shape: bf16[48,8], index: 1, kind: input, shape index: {}]
  %s2 = inlined_call_operand.vmem [shape: f32[128,8], index: 2, kind: output, shape index: {}]
  %s3 = sld [smem:[#allocation0]]
  $region41: #{_lambda_.31} parent=0
    _
  %s5 = ssub.s32 1, %s3
  %s6 = scalar_select 0, %s5, %s3
  loop: start=0, step=1, limit=4
  $region2: #{_lambda_.31} parent=0 // loop_pre_header
    _
  $region3: #{_lambda_.31} parent=0 // loop_header
    %s8 = sphi 0, %s12
    %p9 = scmp.ge.s32.totalorder %s8, 4
    %s18 = sphi 0, %s20
    %s21 = sphi 0, %s18
    %s22 = sphi 0, %s21
    %s38 = sphi 0, %s22
    %s42 = sphi 0, %s42
    %s44 = sphi 0, %s42
    %s45 = sphi 0, %s44
    %s59 = sphi 0, %s45
    %s65 = sphi 0, %s67
    %s68 = sphi 0, %s65
    %s69 = sphi 0, %s68
    %s85 = sphi 0, %s69
  $region4: #{_lambda_.31} parent=0 // loop_header_branch
    %11 = sbr.rel (%p9) target = $region8
  $region5: #{_lambda_.31} parent=0 // loop_body
    %s13 = ssub.s32 %s8, 1
    %s14 = ssub.s32 %s8, 2
    %s15 = sadd.s32 %s8, 1
    %s16 = ssub.s32 %s8, %s15
    %p17 = scmp.eq.s32.totalorder %s16, 0
    %s19 = sadd.s32 %s18, 1
    %s20 = scalar_select %p17, %s18, %s19
    %p23 = pneg %p17
    %p24 = scmp.eq.s32.totalorder %s8, 1
    %p25 = por %p23, %p24
    %p26 = scmp.ne.s32.totalorder %s18, %s21
    %p27 = scmp.eq.s32.totalorder %s8, 0
    %p28 = por %p26, %p27
    %p29 = scmp.ne.s32.totalorder %s18, %s21
    %p30 = scmp.eq.s32.totalorder %s13, 1
    %p31 = por %p29, %p30
    %p32 = scmp.ne.s32.totalorder %s21, %s22
    %p33 = scmp.eq.s32.totalorder %s13, 0
    %p34 = por %p32, %p33
    %p35 = scmp.ne.s32.totalorder %s21, %s22
    %p36 = scmp.eq.s32.totalorder %s14, 1
    %p37 = por %p35, %p36
    %p39 = scmp.ne.s32.totalorder %s22, %s38
    %p40 = scmp.eq.s32.totalorder %s14, 0
    %p41 = por %p39, %p40
    %s43 = sadd.s32 %s42, 1
    %p46 = scmp.eq.s32.totalorder %s8, 1
    %p47 = scmp.ne.s32.totalorder %s42, %s44
    %p48 = scmp.eq.s32.totalorder %s8, 0
    %p49 = por %p47, %p48
    %p50 = scmp.ne.s32.totalorder %s42, %s44
    %p51 = scmp.eq.s32.totalorder %s13, 1
    %p52 = por %p50, %p51
    %p53 = scmp.ne.s32.totalorder %s44, %s45
    %p54 = scmp.eq.s32.totalorder %s13, 0
    %p55 = por %p53, %p54
    %p56 = scmp.ne.s32.totalorder %s44, %s45
    %p57 = scmp.eq.s32.totalorder %s14, 1
    %p58 = por %p56, %p57
    %p60 = scmp.ne.s32.totalorder %s45, %s59
    %p61 = scmp.eq.s32.totalorder %s14, 0
    %p62 = por %p60, %p61
    %s63 = ssub.s32 %s8, %s15
    %p64 = scmp.eq.s32.totalorder %s63, 0
    %s66 = sadd.s32 %s65, 1
    %s67 = scalar_select %p64, %s65, %s66
    %p70 = pneg %p64
    %p71 = scmp.eq.s32.totalorder %s8, 1
    %p72 = por %p70, %p71
    %p73 = scmp.ne.s32.totalorder %s65, %s68
    %p74 = scmp.eq.s32.totalorder %s8, 0
    %p75 = por %p73, %p74
    %p76 = scmp.ne.s32.totalorder %s65, %s68
    %p77 = scmp.eq.s32.totalorder %s13, 1
    %p78 = por %p76, %p77
    %p79 = scmp.ne.s32.totalorder %s68, %s69
    %p80 = scmp.eq.s32.totalorder %s13, 0
    %p81 = por %p79, %p80
    %p82 = scmp.ne.s32.totalorder %s68, %s69
    %p83 = scmp.eq.s32.totalorder %s14, 1
    %p84 = por %p82, %p83
    %p86 = scmp.ne.s32.totalorder %s69, %s85
    %p87 = scmp.eq.s32.totalorder %s14, 0
    %p88 = por %p86, %p87
    %p89 = scmp.le.s32.totalorder 1, %s8
    %p90 = scmp.lt.s32.totalorder %s8, 3
    %p91 = pnand %p89, %p90
    %p92 = pneg %p91
    // Predicated region
    $region9: #{_lambda_.31} parent=5 // pred_check
      _
    $region10: #{_lambda_.31} parent=5 // pred_check_branch
      %94 = sbr.rel (%p91) target = $region12
    $region11: #{_lambda_.31} parent=5 // pred_region
      %s95 = ssub.s32 %s8, 1
      // Predicated region
      $region13: #{_lambda_.31} parent=11 // pred_check
        %p96 = pneg %p55
      $region14: #{_lambda_.31} parent=11 // pred_check_branch
        %98 = sbr.rel (%p96) target = $region16
      $region15: #{_lambda_.31} parent=11 // pred_region
        _
      $region16: #{_lambda_.31} parent=11 // pred_fallthru
        _
    $region12: #{_lambda_.31} parent=5 // pred_fallthru
      _
    %p99 = scmp.lt.s32.totalorder %s8, 2
    // Predicated region
    $region17: #{_lambda_.31} parent=5 // pred_check
      %p100 = pneg %p99
    $region18: #{_lambda_.31} parent=5 // pred_check_branch
      %102 = sbr.rel (%p100) target = $region20
    $region19: #{_lambda_.31} parent=5 // pred_region
      // Predicated region
      $region21: #{_lambda_.31} parent=19 // pred_check
        %p103 = pneg %p28
      $region22: #{_lambda_.31} parent=19 // pred_check_branch
        %105 = sbr.rel (%p103) target = $region24
      $region23: #{_lambda_.31} parent=19 // pred_region
        %s106 = smul.u32 8, %s8
        %p107 = scmp.lt.s32.totalorder %s106, 15
        %s108 = scalar_select %p107, %s106, 15
        %s109 = smul.addr %s108, 4
        %s110 = scalar_lea.vmem %s0, %s109
        %s111 = smul.u32 8, %s8
      $region24: #{_lambda_.31} parent=19 // pred_fallthru
        _
    $region20: #{_lambda_.31} parent=5 // pred_fallthru
      _
    %p112 = scmp.le.s32.totalorder 1, %s8
    %p113 = scmp.lt.s32.totalorder %s8, 3
    %p114 = pnand %p112, %p113
    %p115 = pneg %p114
    // Predicated region
    $region25: #{_lambda_.31} parent=5 // pred_check
      _
    $region26: #{_lambda_.31} parent=5 // pred_check_branch
      %117 = sbr.rel (%p114) target = $region28
    $region27: #{_lambda_.31} parent=5 // pred_region
      %s118 = ssub.s32 %s8, 1
      %s119 = smul.u32 8, %s13
      %p120 = scmp.lt.s32.totalorder %s119, 15
      %s121 = scalar_select %p120, %s119, 15
      %s122 = smul.addr %s121, 4
      %s123 = scalar_lea.vmem %s0, %s122
      %p124 = pneg %p34
      %p125 = pneg %p31
      %p126 = pneg %p55
      %p127 = pneg %p52
      %p128 = pneg %p81
      %p129 = pneg %p78
      %s130 = smul.u32 8, %s13
      %p131 = scmp.lt.s32.totalorder %s130, 15
      %s132 = scalar_select %p131, %s130, 15
      %s133 = smul.addr %s132, 8
      %s134 = scalar_lea.vmem %s2, %s133
      %s135 = smul.u32 8, %s13
      %p136 = scmp.lt.s32.totalorder %s135, 15
      %s137 = scalar_select %p136, %s135, 15
      %s138 = smul.addr %s137, 4
      %s139 = scalar_lea.vmem %s0, %s138
      %s140 = smul.u32 8, %s13
      %s141 = smul.u32 8, %s13
      %p142 = scmp.lt.s32.totalorder %s141, 15
      %s143 = scalar_select %p142, %s141, 15
      %s144 = smul.addr %s143, 8
      %s145 = scalar_lea.vmem %s2, %s144
      %s146 = smul.u32 8, %s13
      %v148 = vld [vmem:[%s139] sm:$0xf]
      %v149 = vld [vmem:[%s139 + $0x4] sm:$0xf]
      %v150 = vld [vmem:[%s139 + $0x8] sm:$0xf]
      %v151 = vld [vmem:[%s139 + $0xc] sm:$0xf]
      %v152 = vld [vmem:[%s139 + $0x10] sm:$0xf]
      %v153 = vld [vmem:[%s139 + $0x14] sm:$0xf]
      %v154 = vld [vmem:[%s139 + $0x18] sm:$0xf]
      %v155 = vld [vmem:[%s139 + $0x1c] sm:$0xf]
      %v156 = vmax.bf16 %v148, 0
      %v157 = vmax.bf16 %v149, 0
      %v158 = vmax.bf16 %v150, 0
      %v159 = vmax.bf16 %v151, 0
      %v160 = vmax.bf16 %v152, 0
      %v161 = vmax.bf16 %v153, 0
      %v162 = vmax.bf16 %v154, 0
      %v163 = vmax.bf16 %v155, 0
      %v164 = vld [vmem:[%s1] sm:$0xf]
      %v165 = vld [vmem:[%s1 + $0x4] sm:$0xf]
      %v166 = vld [vmem:[%s1 + $0x8] sm:$0xf]
      %v167 = vld [vmem:[%s1 + $0xc] sm:$0xf]
      %v168 = vld [vmem:[%s1 + $0x10] sm:$0xf]
      %v169 = vld [vmem:[%s1 + $0x14] sm:$0xf]
      %v178 = vunpack.c.l.b16 %v156
      %v179 = vunpack.c.l.b16 %v157
      %v180 = vunpack.c.l.b16 %v158
      %v181 = vunpack.c.l.b16 %v159
      %v182 = vunpack.c.l.b16 %v160
      %v183 = vunpack.c.l.b16 %v161
      %v184 = vunpack.c.l.b16 %v162
      %v185 = vunpack.c.l.b16 %v163
      %v186 = vpack.c.b16 %v179, %v178
      %v187 = vpack.c.b16 %v181, %v180
      %v188 = vpack.c.b16 %v183, %v182
      %v189 = vpack.c.b16 %v185, %v184
      %v196 = vunpack.c.l.b16 %v164
      %v197 = vunpack.c.l.b16 %v165
      %v198 = vunpack.c.l.b16 %v166
      %v199 = vunpack.c.l.b16 %v167
      %v200 = vunpack.c.l.b16 %v168
      %v201 = vunpack.c.l.b16 %v169
      %v202 = vpack.c.b16 %v197, %v196
      %v203 = vpack.c.b16 %v199, %v198
      %v204 = vpack.c.b16 %v201, %v200
      %vm208 = vcmask 392192
      %v210 = vsel %vm208, %v186, 0
      %v213 = vsel %vm208, %v187, 0
      %v216 = vsel %vm208, %v188, 0
      %v219 = vsel %vm208, %v189, 0
      %221 = vmatprep.subr.bf16.mxu0 0
      %222 = vmatpush1.bf16.msra.mxu0 0
      %223 = vmatprep.subr.bf16.mxu0 0
      %224 = vmatpush1.bf16.msra.mxu0 0
      %225 = vmatprep.subr.bf16.mxu0 0
      %226 = vmatpush1.bf16.msra.mxu0 0
      %227 = vmatprep.subr.bf16.mxu0 0
      %228 = vmatpush1.bf16.msra.mxu0 0
      %229 = vmatprep.subr.bf16.mxu0 0
      %230 = vmatpush1.bf16.msra.mxu0 0
      %231 = vmatprep.subr.bf16.mxu0 0
      %232 = vmatpush1.bf16.msra.mxu0 %v204
      %233 = vmatprep.subr.bf16.mxu0 0
      %234 = vmatpush1.bf16.msra.mxu0 %v203
      %235 = vmatprep.subr.bf16.mxu0 0
      %236 = vmatpush1.bf16.msra.mxu0 %v202
      %237 = vmatprep.subr.bf16.mxu0 0
      %238 = vmatpush2.bf16.msra.mxu0 0
      %239 = vmatprep.subr.bf16.mxu0 0
      %240 = vmatpush2.bf16.msra.mxu0 0
      %241 = vmatprep.subr.bf16.mxu0 0
      %242 = vmatpush2.bf16.msra.mxu0 0
      %243 = vmatprep.subr.bf16.mxu0 0
      %244 = vmatpush2.bf16.msra.mxu0 0
      %245 = vmatprep.subr.bf16.mxu0 0
      %246 = vmatpush2.bf16.msra.mxu0 0
      %247 = vmatprep.subr.bf16.mxu0 0
      %248 = vmatpush2.bf16.msra.mxu0 0
      %249 = vmatprep.subr.bf16.mxu0 0
      %250 = vmatpush2.bf16.msra.mxu0 0
      %251 = vmatprep.subr.bf16.mxu0 0
      %252 = vmatpush2.bf16.msra.mxu0 0
      %253 = vmatprep.mubr.bf16.mxu0 0
      %254 = vmatmul.mubr.bf16.gmra.mxu0 %v210
      %v255 = vpop.f32.mrf.mxu0
      %v256 = vadd.f32 0.0, %v255
      %v257 = vpop.f32.mrf.mxu0
      %v258 = vpop.f32.mrf.mxu0
      %v259 = vadd.f32 0.0, %v258
      %v260 = vpop.f32.mrf.mxu0
      %261 = vmatprep.mubr.bf16.mxu0 0
      %262 = vmatmul.mubr.bf16.gmra.mxu0 %v213
      %v263 = vpop.f32.mrf.mxu0
      %v264 = vadd.f32 0.0, %v263
      %v265 = vpop.f32.mrf.mxu0
      %v266 = vpop.f32.mrf.mxu0
      %v267 = vadd.f32 0.0, %v266
      %v268 = vpop.f32.mrf.mxu0
      %269 = vmatprep.mubr.bf16.mxu0 0
      %270 = vmatmul.mubr.bf16.gmra.mxu0 %v216
      %v271 = vpop.f32.mrf.mxu0
      %v272 = vadd.f32 0.0, %v271
      %v273 = vpop.f32.mrf.mxu0
      %v274 = vpop.f32.mrf.mxu0
      %v275 = vadd.f32 0.0, %v274
      %v276 = vpop.f32.mrf.mxu0
      %277 = vmatprep.mubr.bf16.mxu0 0
      %278 = vmatmul.mubr.bf16.gmra.mxu0 %v219
      %v279 = vpop.f32.mrf.mxu0
      %v280 = vadd.f32 0.0, %v279
      %v281 = vpop.f32.mrf.mxu0
      %v282 = vpop.f32.mrf.mxu0
      %v283 = vadd.f32 0.0, %v282
      %v284 = vpop.f32.mrf.mxu0
      %285 = vdwg.mxu0
      %vm286 = vcmask 64512
      %287 = vst.msk [vmem:[%s145] sm:$0xff] %vm286, %v256
      %288 = vst.msk [vmem:[%s145 + $0x8] sm:$0xff] %vm286, %v259
      %289 = vst.msk [vmem:[%s145 + $0x10] sm:$0xff] %vm286, %v264
      %290 = vst.msk [vmem:[%s145 + $0x18] sm:$0xff] %vm286, %v267
      %291 = vst.msk [vmem:[%s145 + $0x20] sm:$0xff] %vm286, %v272
      %292 = vst.msk [vmem:[%s145 + $0x28] sm:$0xff] %vm286, %v275
      %293 = vst.msk [vmem:[%s145 + $0x30] sm:$0xff] %vm286, %v280
      %294 = vst.msk [vmem:[%s145 + $0x38] sm:$0xff] %vm286, %v283
      %s295 = smul.u32 8, %s13
      %p296 = scmp.lt.s32.totalorder %s295, 15
      %s297 = scalar_select %p296, %s295, 15
      %s298 = smul.addr %s297, 8
      %s299 = scalar_lea.vmem %s2, %s298
      // Predicated region
      $region29: #{_lambda_.31} parent=27 // pred_check
        %p300 = pneg %p78
      $region30: #{_lambda_.31} parent=27 // pred_check_branch
        %302 = sbr.rel (%p300) target = $region32
      $region31: #{_lambda_.31} parent=27 // pred_region
        %s303 = smul.u32 8, %s13
      $region32: #{_lambda_.31} parent=27 // pred_fallthru
        _
    $region28: #{_lambda_.31} parent=5 // pred_fallthru
      _
    %p304 = scmp.le.s32.totalorder 2, %s8
    // Predicated region
    $region33: #{_lambda_.31} parent=5 // pred_check
      %p305 = pneg %p304
    $region34: #{_lambda_.31} parent=5 // pred_check_branch
      %307 = sbr.rel (%p305) target = $region36
    $region35: #{_lambda_.31} parent=5 // pred_region
      %s308 = ssub.s32 %s8, 2
      // Predicated region
      $region37: #{_lambda_.31} parent=35 // pred_check
        %p309 = pneg %p84
      $region38: #{_lambda_.31} parent=35 // pred_check_branch
        %311 = sbr.rel (%p309) target = $region40
      $region39: #{_lambda_.31} parent=35 // pred_region
        %s312 = smul.u32 8, %s14
        %p313 = scmp.lt.s32.totalorder %s312, 15
        %s314 = scalar_select %p313, %s312, 15
        %s315 = smul.addr %s314, 8
        %s316 = scalar_lea.vmem %s2, %s315
      $region40: #{_lambda_.31} parent=35 // pred_fallthru
        _
    $region36: #{_lambda_.31} parent=5 // pred_fallthru
      _
  $region6: #{_lambda_.31} parent=0 // loop_footer
    %s12 = sadd.s32 1, %s8
  $region7: #{_lambda_.31} parent=0 // loop_footer_branch
    %7 = sbr.rel target = $region3
  $region8: #{_lambda_.31} parent=0 // loop_exit
    _

// kernel: _lambda_.33
$region0: #{_lambda_.33}
  #allocation0 [shape = 'u32[]', space=smem, size = 0x4, offset = 0x4, fixed_abs, tag = 'smem constant byte address 0x4 - core index']
  #allocation1 [shape = 'u32[144,128]{1,0:T(1,128)}', space=vmem, size = 0x12000, scoped, tag = 'internal scratch']
  %s0 = inlined_call_operand.vmem [shape: bf16[128,324], index: 0, kind: input, shape index: {}]
  %s1 = inlined_call_operand.vmem [shape: bf16[324,32], index: 1, kind: input, shape index: {}]
  %s2 = inlined_call_operand.vmem [shape: f32[128,32], index: 2, kind: output, shape index: {}]
  %s3 = sld [smem:[#allocation0]]
  $region41: #{_lambda_.33} parent=0
    _
  %s5 = ssub.s32 1, %s3
  %s6 = scalar_select 0, %s5, %s3
  loop: start=0, step=1, limit=4
  $region2: #{_lambda_.33} parent=0 // loop_pre_header
    _
  $region3: #{_lambda_.33} parent=0 // loop_header
    %s8 = sphi 0, %s12
    %p9 = scmp.ge.s32.totalorder %s8, 4
    %s18 = sphi 0, %s20
    %s21 = sphi 0, %s18
    %s22 = sphi 0, %s21
    %s38 = sphi 0, %s22
    %s42 = sphi 0, %s42
    %s44 = sphi 0, %s42
    %s45 = sphi 0, %s44
    %s59 = sphi 0, %s45
    %s65 = sphi 0, %s67
    %s68 = sphi 0, %s65
    %s69 = sphi 0, %s68
    %s85 = sphi 0, %s69
  $region4: #{_lambda_.33} parent=0 // loop_header_branch
    %11 = sbr.rel (%p9) target = $region8
  $region5: #{_lambda_.33} parent=0 // loop_body
    %s13 = ssub.s32 %s8, 1
    %s14 = ssub.s32 %s8, 2
    %s15 = sadd.s32 %s8, 1
    %s16 = ssub.s32 %s8, %s15
    %p17 = scmp.eq.s32.totalorder %s16, 0
    %s19 = sadd.s32 %s18, 1
    %s20 = scalar_select %p17, %s18, %s19
    %p23 = pneg %p17
    %p24 = scmp.eq.s32.totalorder %s8, 1
    %p25 = por %p23, %p24
    %p26 = scmp.ne.s32.totalorder %s18, %s21
    %p27 = scmp.eq.s32.totalorder %s8, 0
    %p28 = por %p26, %p27
    %p29 = scmp.ne.s32.totalorder %s18, %s21
    %p30 = scmp.eq.s32.totalorder %s13, 1
    %p31 = por %p29, %p30
    %p32 = scmp.ne.s32.totalorder %s21, %s22
    %p33 = scmp.eq.s32.totalorder %s13, 0
    %p34 = por %p32, %p33
    %p35 = scmp.ne.s32.totalorder %s21, %s22
    %p36 = scmp.eq.s32.totalorder %s14, 1
    %p37 = por %p35, %p36
    %p39 = scmp.ne.s32.totalorder %s22, %s38
    %p40 = scmp.eq.s32.totalorder %s14, 0
    %p41 = por %p39, %p40
    %s43 = sadd.s32 %s42, 1
    %p46 = scmp.eq.s32.totalorder %s8, 1
    %p47 = scmp.ne.s32.totalorder %s42, %s44
    %p48 = scmp.eq.s32.totalorder %s8, 0
    %p49 = por %p47, %p48
    %p50 = scmp.ne.s32.totalorder %s42, %s44
    %p51 = scmp.eq.s32.totalorder %s13, 1
    %p52 = por %p50, %p51
    %p53 = scmp.ne.s32.totalorder %s44, %s45
    %p54 = scmp.eq.s32.totalorder %s13, 0
    %p55 = por %p53, %p54
    %p56 = scmp.ne.s32.totalorder %s44, %s45
    %p57 = scmp.eq.s32.totalorder %s14, 1
    %p58 = por %p56, %p57
    %p60 = scmp.ne.s32.totalorder %s45, %s59
    %p61 = scmp.eq.s32.totalorder %s14, 0
    %p62 = por %p60, %p61
    %s63 = ssub.s32 %s8, %s15
    %p64 = scmp.eq.s32.totalorder %s63, 0
    %s66 = sadd.s32 %s65, 1
    %s67 = scalar_select %p64, %s65, %s66
    %p70 = pneg %p64
    %p71 = scmp.eq.s32.totalorder %s8, 1
    %p72 = por %p70, %p71
    %p73 = scmp.ne.s32.totalorder %s65, %s68
    %p74 = scmp.eq.s32.totalorder %s8, 0
    %p75 = por %p73, %p74
    %p76 = scmp.ne.s32.totalorder %s65, %s68
    %p77 = scmp.eq.s32.totalorder %s13, 1
    %p78 = por %p76, %p77
    %p79 = scmp.ne.s32.totalorder %s68, %s69
    %p80 = scmp.eq.s32.totalorder %s13, 0
    %p81 = por %p79, %p80
    %p82 = scmp.ne.s32.totalorder %s68, %s69
    %p83 = scmp.eq.s32.totalorder %s14, 1
    %p84 = por %p82, %p83
    %p86 = scmp.ne.s32.totalorder %s69, %s85
    %p87 = scmp.eq.s32.totalorder %s14, 0
    %p88 = por %p86, %p87
    %p89 = scmp.le.s32.totalorder 1, %s8
    %p90 = scmp.lt.s32.totalorder %s8, 3
    %p91 = pnand %p89, %p90
    %p92 = pneg %p91
    // Predicated region
    $region9: #{_lambda_.33} parent=5 // pred_check
      _
    $region10: #{_lambda_.33} parent=5 // pred_check_branch
      %94 = sbr.rel (%p91) target = $region12
    $region11: #{_lambda_.33} parent=5 // pred_region
      %s95 = ssub.s32 %s8, 1
      // Predicated region
      $region13: #{_lambda_.33} parent=11 // pred_check
        %p96 = pneg %p55
      $region14: #{_lambda_.33} parent=11 // pred_check_branch
        %98 = sbr.rel (%p96) target = $region16
      $region15: #{_lambda_.33} parent=11 // pred_region
        _
      $region16: #{_lambda_.33} parent=11 // pred_fallthru
        _
    $region12: #{_lambda_.33} parent=5 // pred_fallthru
      _
    %p99 = scmp.lt.s32.totalorder %s8, 2
    // Predicated region
    $region17: #{_lambda_.33} parent=5 // pred_check
      %p100 = pneg %p99
    $region18: #{_lambda_.33} parent=5 // pred_check_branch
      %102 = sbr.rel (%p100) target = $region20
    $region19: #{_lambda_.33} parent=5 // pred_region
      // Predicated region
      $region21: #{_lambda_.33} parent=19 // pred_check
        %p103 = pneg %p28
      $region22: #{_lambda_.33} parent=19 // pred_check_branch
        %105 = sbr.rel (%p103) target = $region24
      $region23: #{_lambda_.33} parent=19 // pred_region
        %s106 = smul.u32 8, %s8
        %p107 = scmp.lt.s32.totalorder %s106, 15
        %s108 = scalar_select %p107, %s106, 15
        %s109 = smul.addr %s108, 3
        %s110 = smul.addr %s109, 4
        %s111 = scalar_lea.vmem %s0, %s110
        %s112 = smul.u32 8, %s8
      $region24: #{_lambda_.33} parent=19 // pred_fallthru
        _
    $region20: #{_lambda_.33} parent=5 // pred_fallthru
      _
    %p113 = scmp.le.s32.totalorder 1, %s8
    %p114 = scmp.lt.s32.totalorder %s8, 3
    %p115 = pnand %p113, %p114
    %p116 = pneg %p115
    // Predicated region
    $region25: #{_lambda_.33} parent=5 // pred_check
      _
    $region26: #{_lambda_.33} parent=5 // pred_check_branch
      %118 = sbr.rel (%p115) target = $region28
    $region27: #{_lambda_.33} parent=5 // pred_region
      %s119 = ssub.s32 %s8, 1
      %s120 = smul.u32 8, %s13
      %p121 = scmp.lt.s32.totalorder %s120, 15
      %s122 = scalar_select %p121, %s120, 15
      %s123 = smul.addr %s122, 3
      %s124 = smul.addr %s123, 4
      %s125 = scalar_lea.vmem %s0, %s124
      %p126 = pneg %p34
      %p127 = pneg %p31
      %p128 = pneg %p55
      %p129 = pneg %p52
      %p130 = pneg %p81
      %p131 = pneg %p78
      %s132 = smul.u32 8, %s13
      %p133 = scmp.lt.s32.totalorder %s132, 15
      %s134 = scalar_select %p133, %s132, 15
      %s135 = smul.addr %s134, 8
      %s136 = scalar_lea.vmem %s2, %s135
      %s137 = smul.u32 8, %s13
      %p138 = scmp.lt.s32.totalorder %s137, 15
      %s139 = scalar_select %p138, %s137, 15
      %s140 = smul.addr %s139, 3
      %s141 = smul.addr %s140, 4
      %s142 = scalar_lea.vmem %s0, %s141
      %s143 = smul.u32 8, %s13
      %s144 = smul.u32 8, %s13
      %p145 = scmp.lt.s32.totalorder %s144, 15
      %s146 = scalar_select %p145, %s144, 15
      %s147 = smul.addr %s146, 8
      %s148 = scalar_lea.vmem %s2, %s147
      %s149 = smul.u32 8, %s13
      %v151 = vld [vmem:[%s142] sm:$0xff]
      %v152 = vld [vmem:[%s142 + $0x8] sm:$0xf]
      %v153 = vld [vmem:[%s142 + $0xc] sm:$0xff]
      %v154 = vld [vmem:[%s142 + $0x14] sm:$0xf]
      %v155 = vld [vmem:[%s142 + $0x18] sm:$0xff]
      %v156 = vld [vmem:[%s142 + $0x20] sm:$0xf]
      %v157 = vld [vmem:[%s142 + $0x24] sm:$0xff]
      %v158 = vld [vmem:[%s142 + $0x2c] sm:$0xf]
      %v159 = vld [vmem:[%s142 + $0x30] sm:$0xff]
      %v160 = vld [vmem:[%s142 + $0x38] sm:$0xf]
      %v161 = vld [vmem:[%s142 + $0x3c] sm:$0xff]
      %v162 = vld [vmem:[%s142 + $0x44] sm:$0xf]
      %v163 = vld [vmem:[%s142 + $0x48] sm:$0xff]
      %v164 = vld [vmem:[%s142 + $0x50] sm:$0xf]
      %v165 = vld [vmem:[%s142 + $0x54] sm:$0xff]
      %v166 = vld [vmem:[%s142 + $0x5c] sm:$0xf]
      %v167 = vmax.bf16 %v151, 0
      %v168 = vmax.bf16 %v152, 0
      %v169 = vmax.bf16 %v153, 0
      %v170 = vmax.bf16 %v154, 0
      %v171 = vmax.bf16 %v155, 0
      %v172 = vmax.bf16 %v156, 0
      %v173 = vmax.bf16 %v157, 0
      %v174 = vmax.bf16 %v158, 0
      %v175 = vmax.bf16 %v159, 0
      %v176 = vmax.bf16 %v160, 0
      %v177 = vmax.bf16 %v161, 0
      %v178 = vmax.bf16 %v162, 0
      %v179 = vmax.bf16 %v163, 0
      %v180 = vmax.bf16 %v164, 0
      %v181 = vmax.bf16 %v165, 0
      %v182 = vmax.bf16 %v166, 0
      %v183 = vld [vmem:[%s1] sm:$0xf]
      %v184 = vld [vmem:[%s1 + $0x4] sm:$0xf]
      %v185 = vld [vmem:[%s1 + $0x8] sm:$0xf]
      %v186 = vld [vmem:[%s1 + $0xc] sm:$0xf]
      %v187 = vld [vmem:[%s1 + $0x10] sm:$0xf]
      %v188 = vld [vmem:[%s1 + $0x14] sm:$0xf]
      %v189 = vld [vmem:[%s1 + $0x18] sm:$0xf]
      %v190 = vld [vmem:[%s1 + $0x1c] sm:$0xf]
      %v191 = vld [vmem:[%s1 + $0x20] sm:$0xf]
      %v192 = vld [vmem:[%s1 + $0x24] sm:$0xf]
      %v193 = vld [vmem:[%s1 + $0x28] sm:$0xf]
      %v194 = vld [vmem:[%s1 + $0x2c] sm:$0xf]
      %v195 = vld [vmem:[%s1 + $0x30] sm:$0xf]
      %v196 = vld [vmem:[%s1 + $0x34] sm:$0xf]
      %v197 = vld [vmem:[%s1 + $0x38] sm:$0xf]
      %v198 = vld [vmem:[%s1 + $0x3c] sm:$0xf]
      %v199 = vld [vmem:[%s1 + $0x40] sm:$0xf]
      %v200 = vld [vmem:[%s1 + $0x44] sm:$0xf]
      %v201 = vld [vmem:[%s1 + $0x48] sm:$0xf]
      %v202 = vld [vmem:[%s1 + $0x4c] sm:$0xf]
      %v203 = vld [vmem:[%s1 + $0x50] sm:$0xf]
      %v204 = vld [vmem:[%s1 + $0x54] sm:$0xf]
      %v205 = vld [vmem:[%s1 + $0x58] sm:$0xf]
      %v206 = vld [vmem:[%s1 + $0x5c] sm:$0xf]
      %v207 = vld [vmem:[%s1 + $0x60] sm:$0xf]
      %v208 = vld [vmem:[%s1 + $0x64] sm:$0xf]
      %v209 = vld [vmem:[%s1 + $0x68] sm:$0xf]
      %v210 = vld [vmem:[%s1 + $0x6c] sm:$0xf]
      %v211 = vld [vmem:[%s1 + $0x70] sm:$0xf]
      %v212 = vld [vmem:[%s1 + $0x74] sm:$0xf]
      %v213 = vld [vmem:[%s1 + $0x78] sm:$0xf]
      %v214 = vld [vmem:[%s1 + $0x7c] sm:$0xf]
      %v215 = vld [vmem:[%s1 + $0x80] sm:$0xf]
      %v216 = vld [vmem:[%s1 + $0x84] sm:$0xf]
      %v217 = vld [vmem:[%s1 + $0x88] sm:$0xf]
      %v218 = vld [vmem:[%s1 + $0x8c] sm:$0xf]
      %v219 = vld [vmem:[%s1 + $0x90] sm:$0xf]
      %v220 = vld [vmem:[%s1 + $0x94] sm:$0xf]
      %v221 = vld [vmem:[%s1 + $0x98] sm:$0xf]
      %v222 = vld [vmem:[%s1 + $0x9c] sm:$0xf]
      %v223 = vld [vmem:[%s1 + $0xa0] sm:$0x3]
      %v240 = vunpack.c.l.b16 %v167
      %v241 = vunpack.c.h.b16 %v167
      %v242 = vunpack.c.l.b16 %v168
      %v243 = vunpack.c.l.b16 %v169
      %v244 = vunpack.c.h.b16 %v169
      %v245 = vunpack.c.l.b16 %v170
      %v246 = vunpack.c.l.b16 %v171
      %v247 = vunpack.c.h.b16 %v171
      %v248 = vunpack.c.l.b16 %v172
      %v249 = vunpack.c.l.b16 %v173
      %v250 = vunpack.c.h.b16 %v173
      %v251 = vunpack.c.l.b16 %v174
      %v252 = vunpack.c.l.b16 %v175
      %v253 = vunpack.c.h.b16 %v175
      %v254 = vunpack.c.l.b16 %v176
      %v255 = vunpack.c.l.b16 %v177
      %v256 = vunpack.c.h.b16 %v177
      %v257 = vunpack.c.l.b16 %v178
      %v258 = vunpack.c.l.b16 %v179
      %v259 = vunpack.c.h.b16 %v179
      %v260 = vunpack.c.l.b16 %v180
      %v261 = vunpack.c.l.b16 %v181
      %v262 = vunpack.c.h.b16 %v181
      %v263 = vunpack.c.l.b16 %v182
      %v264 = vpack.c.b16 %v243, %v240
      %v265 = vpack.c.b16 %v244, %v241
      %v266 = vpack.c.b16 %v245, %v242
      %v267 = vpack.c.b16 %v249, %v246
      %v268 = vpack.c.b16 %v250, %v247
      %v269 = vpack.c.b16 %v251, %v248
      %v270 = vpack.c.b16 %v255, %v252
      %v271 = vpack.c.b16 %v256, %v253
      %v272 = vpack.c.b16 %v257, %v254
      %v273 = vpack.c.b16 %v261, %v258
      %v274 = vpack.c.b16 %v262, %v259
      %v275 = vpack.c.b16 %v263, %v260
      %v325 = vunpack.c.l.b16 %v183
      %v326 = vunpack.c.l.b16 %v184
      %v327 = vunpack.c.l.b16 %v185
      %v328 = vunpack.c.l.b16 %v186
      %v329 = vunpack.c.l.b16 %v187
      %v330 = vunpack.c.l.b16 %v188
      %v331 = vunpack.c.l.b16 %v189
      %v332 = vunpack.c.l.b16 %v190
      %v333 = vunpack.c.l.b16 %v191
      %v334 = vunpack.c.l.b16 %v192
      %v335 = vunpack.c.l.b16 %v193
      %v336 = vunpack.c.l.b16 %v194
      %v337 = vunpack.c.l.b16 %v195
      %v338 = vunpack.c.l.b16 %v196
      %v339 = vunpack.c.l.b16 %v197
      %v340 = vunpack.c.l.b16 %v198
      %v341 = vunpack.c.l.b16 %v199
      %v342 = vunpack.c.l.b16 %v200
      %v343 = vunpack.c.l.b16 %v201
      %v344 = vunpack.c.l.b16 %v202
      %v345 = vunpack.c.l.b16 %v203
      %v346 = vunpack.c.l.b16 %v204
      %v347 = vunpack.c.l.b16 %v205
      %v348 = vunpack.c.l.b16 %v206
      %v349 = vunpack.c.l.b16 %v207
      %v350 = vunpack.c.l.b16 %v208
      %v351 = vunpack.c.l.b16 %v209
      %v352 = vunpack.c.l.b16 %v210
      %v353 = vunpack.c.l.b16 %v211
      %v354 = vunpack.c.l.b16 %v212
      %v355 = vunpack.c.l.b16 %v213
      %v356 = vunpack.c.l.b16 %v214
      %v357 = vunpack.c.l.b16 %v215
      %v358 = vunpack.c.l.b16 %v216
      %v359 = vunpack.c.l.b16 %v217
      %v360 = vunpack.c.l.b16 %v218
      %v361 = vunpack.c.l.b16 %v219
      %v362 = vunpack.c.l.b16 %v220
      %v363 = vunpack.c.l.b16 %v221
      %v364 = vunpack.c.l.b16 %v222
      %v365 = vunpack.c.l.b16 %v223
      %v366 = vpack.c.b16 %v326, %v325
      %v367 = vpack.c.b16 %v328, %v327
      %v368 = vpack.c.b16 %v330, %v329
      %v369 = vpack.c.b16 %v332, %v331
      %v370 = vpack.c.b16 %v334, %v333
      %v371 = vpack.c.b16 %v336, %v335
      %v372 = vpack.c.b16 %v338, %v337
      %v373 = vpack.c.b16 %v340, %v339
      %v374 = vpack.c.b16 %v342, %v341
      %v375 = vpack.c.b16 %v344, %v343
      %v376 = vpack.c.b16 %v346, %v345
      %v377 = vpack.c.b16 %v348, %v347
      %v378 = vpack.c.b16 %v350, %v349
      %v379 = vpack.c.b16 %v352, %v351
      %v380 = vpack.c.b16 %v354, %v353
      %v381 = vpack.c.b16 %v356, %v355
      %v382 = vpack.c.b16 %v358, %v357
      %v383 = vpack.c.b16 %v360, %v359
      %v384 = vpack.c.b16 %v362, %v361
      %v385 = vpack.c.b16 %v364, %v363
      %v386 = vpack.c.b16 %v365, %v365
      %vm407 = vcmask 556032
      %v409 = vsel %vm407, %v266, 0
      %v412 = vsel %vm407, %v269, 0
      %v415 = vsel %vm407, %v272, 0
      %v418 = vsel %vm407, %v275, 0
      %vm420 = vcmask 1041408
      %v422 = vsel %vm420, %v386, 0
      %424 = vmatprep.subr.bf16.mxu0 0
      %425 = vmatpush1.bf16.msra.mxu0 %v373
      %426 = vmatprep.subr.bf16.mxu0 0
      %427 = vmatpush1.bf16.msra.mxu0 %v372
      %428 = vmatprep.subr.bf16.mxu0 0
      %429 = vmatpush1.bf16.msra.mxu0 %v371
      %430 = vmatprep.subr.bf16.mxu0 0
      %431 = vmatpush1.bf16.msra.mxu0 %v370
      %432 = vmatprep.subr.bf16.mxu0 0
      %433 = vmatpush1.bf16.msra.mxu0 %v369
      %434 = vmatprep.subr.bf16.mxu0 0
      %435 = vmatpush1.bf16.msra.mxu0 %v368
      %436 = vmatprep.subr.bf16.mxu0 0
      %437 = vmatpush1.bf16.msra.mxu0 %v367
      %438 = vmatprep.subr.bf16.mxu0 0
      %439 = vmatpush1.bf16.msra.mxu0 %v366
      %440 = vmatprep.subr.bf16.mxu0 0
      %441 = vmatpush2.bf16.msra.mxu0 %v381
      %442 = vmatprep.subr.bf16.mxu0 0
      %443 = vmatpush2.bf16.msra.mxu0 %v380
      %444 = vmatprep.subr.bf16.mxu0 0
      %445 = vmatpush2.bf16.msra.mxu0 %v379
      %446 = vmatprep.subr.bf16.mxu0 0
      %447 = vmatpush2.bf16.msra.mxu0 %v378
      %448 = vmatprep.subr.bf16.mxu0 0
      %449 = vmatpush2.bf16.msra.mxu0 %v377
      %450 = vmatprep.subr.bf16.mxu0 0
      %451 = vmatpush2.bf16.msra.mxu0 %v376
      %452 = vmatprep.subr.bf16.mxu0 0
      %453 = vmatpush2.bf16.msra.mxu0 %v375
      %454 = vmatprep.subr.bf16.mxu0 0
      %455 = vmatpush2.bf16.msra.mxu0 %v374
      %456 = vmatprep.mubr.bf16.mxu0 %v265
      %457 = vmatmul.mubr.bf16.gmra.mxu0 %v264
      %v458 = vpop.f32.mrf.mxu0
      %v459 = vadd.f32 0.0, %v458
      %v460 = vpop.f32.mrf.mxu0
      %v461 = vpop.f32.mrf.mxu0
      %v462 = vadd.f32 0.0, %v461
      %v463 = vpop.f32.mrf.mxu0
      %464 = vmatprep.mubr.bf16.mxu0 %v268
      %465 = vmatmul.mubr.bf16.gmra.mxu0 %v267
      %v466 = vpop.f32.mrf.mxu0
      %v467 = vadd.f32 0.0, %v466
      %v468 = vpop.f32.mrf.mxu0
      %v469 = vpop.f32.mrf.mxu0
      %v470 = vadd.f32 0.0, %v469
      %v471 = vpop.f32.mrf.mxu0
      %472 = vmatprep.mubr.bf16.mxu0 %v271
      %473 = vmatmul.mubr.bf16.gmra.mxu0 %v270
      %v474 = vpop.f32.mrf.mxu0
      %v475 = vadd.f32 0.0, %v474
      %v476 = vpop.f32.mrf.mxu0
      %v477 = vpop.f32.mrf.mxu0
      %v478 = vadd.f32 0.0, %v477
      %v479 = vpop.f32.mrf.mxu0
      %480 = vmatprep.mubr.bf16.mxu0 %v274
      %481 = vmatmul.mubr.bf16.gmra.mxu0 %v273
      %v482 = vpop.f32.mrf.mxu0
      %v483 = vadd.f32 0.0, %v482
      %v484 = vpop.f32.mrf.mxu0
      %v485 = vpop.f32.mrf.mxu0
      %v486 = vadd.f32 0.0, %v485
      %v487 = vpop.f32.mrf.mxu0
      %488 = vdwg.mxu0
      %489 = vmatprep.subr.bf16.mxu0 0
      %490 = vmatpush1.bf16.msra.mxu0 0
      %491 = vmatprep.subr.bf16.mxu0 0
      %492 = vmatpush1.bf16.msra.mxu0 0
      %493 = vmatprep.subr.bf16.mxu0 0
      %494 = vmatpush1.bf16.msra.mxu0 0
      %495 = vmatprep.subr.bf16.mxu0 0
      %496 = vmatpush1.bf16.msra.mxu0 %v422
      %497 = vmatprep.subr.bf16.mxu0 0
      %498 = vmatpush1.bf16.msra.mxu0 %v385
      %499 = vmatprep.subr.bf16.mxu0 0
      %500 = vmatpush1.bf16.msra.mxu0 %v384
      %501 = vmatprep.subr.bf16.mxu0 0
      %502 = vmatpush1.bf16.msra.mxu0 %v383
      %503 = vmatprep.subr.bf16.mxu0 0
      %504 = vmatpush1.bf16.msra.mxu0 %v382
      %505 = vmatprep.subr.bf16.mxu0 0
      %506 = vmatpush2.bf16.msra.mxu0 0
      %507 = vmatprep.subr.bf16.mxu0 0
      %508 = vmatpush2.bf16.msra.mxu0 0
      %509 = vmatprep.subr.bf16.mxu0 0
      %510 = vmatpush2.bf16.msra.mxu0 0
      %511 = vmatprep.subr.bf16.mxu0 0
      %512 = vmatpush2.bf16.msra.mxu0 0
      %513 = vmatprep.subr.bf16.mxu0 0
      %514 = vmatpush2.bf16.msra.mxu0 0
      %515 = vmatprep.subr.bf16.mxu0 0
      %516 = vmatpush2.bf16.msra.mxu0 0
      %517 = vmatprep.subr.bf16.mxu0 0
      %518 = vmatpush2.bf16.msra.mxu0 0
      %519 = vmatprep.subr.bf16.mxu0 0
      %520 = vmatpush2.bf16.msra.mxu0 0
      %521 = vmatprep.mubr.bf16.mxu0 0
      %522 = vmatmul.mubr.bf16.gmra.mxu0 %v409
      %v523 = vpop.f32.mrf.mxu0
      %v524 = vadd.f32 %v459, %v523
      %v525 = vpop.f32.mrf.mxu0
      %v526 = vpop.f32.mrf.mxu0
      %v527 = vadd.f32 %v462, %v526
      %v528 = vpop.f32.mrf.mxu0
      %529 = vmatprep.mubr.bf16.mxu0 0
      %530 = vmatmul.mubr.bf16.gmra.mxu0 %v412
      %v531 = vpop.f32.mrf.mxu0
      %v532 = vadd.f32 %v467, %v531
      %v533 = vpop.f32.mrf.mxu0
      %v534 = vpop.f32.mrf.mxu0
      %v535 = vadd.f32 %v470, %v534
      %v536 = vpop.f32.mrf.mxu0
      %537 = vmatprep.mubr.bf16.mxu0 0
      %538 = vmatmul.mubr.bf16.gmra.mxu0 %v415
      %v539 = vpop.f32.mrf.mxu0
      %v540 = vadd.f32 %v475, %v539
      %v541 = vpop.f32.mrf.mxu0
      %v542 = vpop.f32.mrf.mxu0
      %v543 = vadd.f32 %v478, %v542
      %v544 = vpop.f32.mrf.mxu0
      %545 = vmatprep.mubr.bf16.mxu0 0
      %546 = vmatmul.mubr.bf16.gmra.mxu0 %v418
      %v547 = vpop.f32.mrf.mxu0
      %v548 = vadd.f32 %v483, %v547
      %v549 = vpop.f32.mrf.mxu0
      %v550 = vpop.f32.mrf.mxu0
      %v551 = vadd.f32 %v486, %v550
      %v552 = vpop.f32.mrf.mxu0
      %553 = vdwg.mxu0
      %vm554 = vcmask 261120
      %555 = vst.msk [vmem:[%s148] sm:$0xff] %vm554, %v524
      %556 = vst.msk [vmem:[%s148 + $0x8] sm:$0xff] %vm554, %v527
      %557 = vst.msk [vmem:[%s148 + $0x10] sm:$0xff] %vm554, %v532
      %558 = vst.msk [vmem:[%s148 + $0x18] sm:$0xff] %vm554, %v535
      %559 = vst.msk [vmem:[%s148 + $0x20] sm:$0xff] %vm554, %v540
      %560 = vst.msk [vmem:[%s148 + $0x28] sm:$0xff] %vm554, %v543
      %561 = vst.msk [vmem:[%s148 + $0x30] sm:$0xff] %vm554, %v548
      %562 = vst.msk [vmem:[%s148 + $0x38] sm:$0xff] %vm554, %v551
      %s563 = smul.u32 8, %s13
      %p564 = scmp.lt.s32.totalorder %s563, 15
      %s565 = scalar_select %p564, %s563, 15
      %s566 = smul.addr %s565, 8
      %s567 = scalar_lea.vmem %s2, %s566
      // Predicated region
      $region29: #{_lambda_.33} parent=27 // pred_check
        %p568 = pneg %p78
      $region30: #{_lambda_.33} parent=27 // pred_check_branch
        %570 = sbr.rel (%p568) target = $region32
      $region31: #{_lambda_.33} parent=27 // pred_region
        %s571 = smul.u32 8, %s13
      $region32: #{_lambda_.33} parent=27 // pred_fallthru
        _
    $region28: #{_lambda_.33} parent=5 // pred_fallthru
      _
    %p572 = scmp.le.s32.totalorder 2, %s8
    // Predicated region
    $region33: #{_lambda_.33} parent=5 // pred_check
      %p573 = pneg %p572
    $region34: #{_lambda_.33} parent=5 // pred_check_branch
      %575 = sbr.rel (%p573) target = $region36
    $region35: #{_lambda_.33} parent=5 // pred_region
      %s576 = ssub.s32 %s8, 2
      // Predicated region
      $region37: #{_lambda_.33} parent=35 // pred_check
        %p577 = pneg %p84
      $region38: #{_lambda_.33} parent=35 // pred_check_branch
        %579 = sbr.rel (%p577) target = $region40
      $region39: #{_lambda_.33} parent=35 // pred_region
        %s580 = smul.u32 8, %s14
        %p581 = scmp.lt.s32.totalorder %s580, 15
        %s582 = scalar_select %p581, %s580, 15
        %s583 = smul.addr %s582, 8
        %s584 = scalar_lea.vmem %s2, %s583
      $region40: #{_lambda_.33} parent=35 // pred_fallthru
        _
    $region36: #{_lambda_.33} parent=5 // pred_fallthru
      _
  $region6: #{_lambda_.33} parent=0 // loop_footer
    %s12 = sadd.s32 1, %s8
  $region7: #{_lambda_.33} parent=0 // loop_footer_branch
    %7 = sbr.rel target = $region3
  $region8: #{_lambda_.33} parent=0 // loop_exit
    _

// kernel: _lambda_.34
$region0: #{_lambda_.34}
  #allocation0 [shape = 'u32[]', space=smem, size = 0x4, offset = 0x4, fixed_abs, tag = 'smem constant byte address 0x4 - core index']
  #allocation1 [shape = 'u32[144,128]{1,0:T(1,128)}', space=vmem, size = 0x12000, scoped, tag = 'internal scratch']
  %s0 = inlined_call_operand.vmem [shape: bf16[128,272], index: 0, kind: input, shape index: {}]
  %s1 = inlined_call_operand.vmem [shape: bf16[272,16], index: 1, kind: input, shape index: {}]
  %s2 = inlined_call_operand.vmem [shape: f32[128,16], index: 2, kind: output, shape index: {}]
  %s3 = sld [smem:[#allocation0]]
  $region41: #{_lambda_.34} parent=0
    _
  %s5 = ssub.s32 1, %s3
  %s6 = scalar_select 0, %s5, %s3
  loop: start=0, step=1, limit=4
  $region2: #{_lambda_.34} parent=0 // loop_pre_header
    _
  $region3: #{_lambda_.34} parent=0 // loop_header
    %s8 = sphi 0, %s12
    %p9 = scmp.ge.s32.totalorder %s8, 4
    %s18 = sphi 0, %s20
    %s21 = sphi 0, %s18
    %s22 = sphi 0, %s21
    %s38 = sphi 0, %s22
    %s42 = sphi 0, %s42
    %s44 = sphi 0, %s42
    %s45 = sphi 0, %s44
    %s59 = sphi 0, %s45
    %s65 = sphi 0, %s67
    %s68 = sphi 0, %s65
    %s69 = sphi 0, %s68
    %s85 = sphi 0, %s69
  $region4: #{_lambda_.34} parent=0 // loop_header_branch
    %11 = sbr.rel (%p9) target = $region8
  $region5: #{_lambda_.34} parent=0 // loop_body
    %s13 = ssub.s32 %s8, 1
    %s14 = ssub.s32 %s8, 2
    %s15 = sadd.s32 %s8, 1
    %s16 = ssub.s32 %s8, %s15
    %p17 = scmp.eq.s32.totalorder %s16, 0
    %s19 = sadd.s32 %s18, 1
    %s20 = scalar_select %p17, %s18, %s19
    %p23 = pneg %p17
    %p24 = scmp.eq.s32.totalorder %s8, 1
    %p25 = por %p23, %p24
    %p26 = scmp.ne.s32.totalorder %s18, %s21
    %p27 = scmp.eq.s32.totalorder %s8, 0
    %p28 = por %p26, %p27
    %p29 = scmp.ne.s32.totalorder %s18, %s21
    %p30 = scmp.eq.s32.totalorder %s13, 1
    %p31 = por %p29, %p30
    %p32 = scmp.ne.s32.totalorder %s21, %s22
    %p33 = scmp.eq.s32.totalorder %s13, 0
    %p34 = por %p32, %p33
    %p35 = scmp.ne.s32.totalorder %s21, %s22
    %p36 = scmp.eq.s32.totalorder %s14, 1
    %p37 = por %p35, %p36
    %p39 = scmp.ne.s32.totalorder %s22, %s38
    %p40 = scmp.eq.s32.totalorder %s14, 0
    %p41 = por %p39, %p40
    %s43 = sadd.s32 %s42, 1
    %p46 = scmp.eq.s32.totalorder %s8, 1
    %p47 = scmp.ne.s32.totalorder %s42, %s44
    %p48 = scmp.eq.s32.totalorder %s8, 0
    %p49 = por %p47, %p48
    %p50 = scmp.ne.s32.totalorder %s42, %s44
    %p51 = scmp.eq.s32.totalorder %s13, 1
    %p52 = por %p50, %p51
    %p53 = scmp.ne.s32.totalorder %s44, %s45
    %p54 = scmp.eq.s32.totalorder %s13, 0
    %p55 = por %p53, %p54
    %p56 = scmp.ne.s32.totalorder %s44, %s45
    %p57 = scmp.eq.s32.totalorder %s14, 1
    %p58 = por %p56, %p57
    %p60 = scmp.ne.s32.totalorder %s45, %s59
    %p61 = scmp.eq.s32.totalorder %s14, 0
    %p62 = por %p60, %p61
    %s63 = ssub.s32 %s8, %s15
    %p64 = scmp.eq.s32.totalorder %s63, 0
    %s66 = sadd.s32 %s65, 1
    %s67 = scalar_select %p64, %s65, %s66
    %p70 = pneg %p64
    %p71 = scmp.eq.s32.totalorder %s8, 1
    %p72 = por %p70, %p71
    %p73 = scmp.ne.s32.totalorder %s65, %s68
    %p74 = scmp.eq.s32.totalorder %s8, 0
    %p75 = por %p73, %p74
    %p76 = scmp.ne.s32.totalorder %s65, %s68
    %p77 = scmp.eq.s32.totalorder %s13, 1
    %p78 = por %p76, %p77
    %p79 = scmp.ne.s32.totalorder %s68, %s69
    %p80 = scmp.eq.s32.totalorder %s13, 0
    %p81 = por %p79, %p80
    %p82 = scmp.ne.s32.totalorder %s68, %s69
    %p83 = scmp.eq.s32.totalorder %s14, 1
    %p84 = por %p82, %p83
    %p86 = scmp.ne.s32.totalorder %s69, %s85
    %p87 = scmp.eq.s32.totalorder %s14, 0
    %p88 = por %p86, %p87
    %p89 = scmp.le.s32.totalorder 1, %s8
    %p90 = scmp.lt.s32.totalorder %s8, 3
    %p91 = pnand %p89, %p90
    %p92 = pneg %p91
    // Predicated region
    $region9: #{_lambda_.34} parent=5 // pred_check
      _
    $region10: #{_lambda_.34} parent=5 // pred_check_branch
      %94 = sbr.rel (%p91) target = $region12
    $region11: #{_lambda_.34} parent=5 // pred_region
      %s95 = ssub.s32 %s8, 1
      // Predicated region
      $region13: #{_lambda_.34} parent=11 // pred_check
        %p96 = pneg %p55
      $region14: #{_lambda_.34} parent=11 // pred_check_branch
        %98 = sbr.rel (%p96) target = $region16
      $region15: #{_lambda_.34} parent=11 // pred_region
        _
      $region16: #{_lambda_.34} parent=11 // pred_fallthru
        _
    $region12: #{_lambda_.34} parent=5 // pred_fallthru
      _
    %p99 = scmp.lt.s32.totalorder %s8, 2
    // Predicated region
    $region17: #{_lambda_.34} parent=5 // pred_check
      %p100 = pneg %p99
    $region18: #{_lambda_.34} parent=5 // pred_check_branch
      %102 = sbr.rel (%p100) target = $region20
    $region19: #{_lambda_.34} parent=5 // pred_region
      // Predicated region
      $region21: #{_lambda_.34} parent=19 // pred_check
        %p103 = pneg %p28
      $region22: #{_lambda_.34} parent=19 // pred_check_branch
        %105 = sbr.rel (%p103) target = $region24
      $region23: #{_lambda_.34} parent=19 // pred_region
        %s106 = smul.u32 8, %s8
        %p107 = scmp.lt.s32.totalorder %s106, 15
        %s108 = scalar_select %p107, %s106, 15
        %s109 = smul.addr %s108, 3
        %s110 = smul.addr %s109, 4
        %s111 = scalar_lea.vmem %s0, %s110
        %s112 = smul.u32 8, %s8
      $region24: #{_lambda_.34} parent=19 // pred_fallthru
        _
    $region20: #{_lambda_.34} parent=5 // pred_fallthru
      _
    %p113 = scmp.le.s32.totalorder 1, %s8
    %p114 = scmp.lt.s32.totalorder %s8, 3
    %p115 = pnand %p113, %p114
    %p116 = pneg %p115
    // Predicated region
    $region25: #{_lambda_.34} parent=5 // pred_check
      _
    $region26: #{_lambda_.34} parent=5 // pred_check_branch
      %118 = sbr.rel (%p115) target = $region28
    $region27: #{_lambda_.34} parent=5 // pred_region
      %s119 = ssub.s32 %s8, 1
      %s120 = smul.u32 8, %s13
      %p121 = scmp.lt.s32.totalorder %s120, 15
      %s122 = scalar_select %p121, %s120, 15
      %s123 = smul.addr %s122, 3
      %s124 = smul.addr %s123, 4
      %s125 = scalar_lea.vmem %s0, %s124
      %p126 = pneg %p34
      %p127 = pneg %p31
      %p128 = pneg %p55
      %p129 = pneg %p52
      %p130 = pneg %p81
      %p131 = pneg %p78
      %s132 = smul.u32 8, %s13
      %p133 = scmp.lt.s32.totalorder %s132, 15
      %s134 = scalar_select %p133, %s132, 15
      %s135 = smul.addr %s134, 8
      %s136 = scalar_lea.vmem %s2, %s135
      %s137 = smul.u32 8, %s13
      %p138 = scmp.lt.s32.totalorder %s137, 15
      %s139 = scalar_select %p138, %s137, 15
      %s140 = smul.addr %s139, 3
      %s141 = smul.addr %s140, 4
      %s142 = scalar_lea.vmem %s0, %s141
      %s143 = smul.u32 8, %s13
      %s144 = smul.u32 8, %s13
      %p145 = scmp.lt.s32.totalorder %s144, 15
      %s146 = scalar_select %p145, %s144, 15
      %s147 = smul.addr %s146, 8
      %s148 = scalar_lea.vmem %s2, %s147
      %s149 = smul.u32 8, %s13
      %v151 = vld [vmem:[%s142] sm:$0xff]
      %v152 = vld [vmem:[%s142 + $0x8] sm:$0xf]
      %v153 = vld [vmem:[%s142 + $0xc] sm:$0xff]
      %v154 = vld [vmem:[%s142 + $0x14] sm:$0xf]
      %v155 = vld [vmem:[%s142 + $0x18] sm:$0xff]
      %v156 = vld [vmem:[%s142 + $0x20] sm:$0xf]
      %v157 = vld [vmem:[%s142 + $0x24] sm:$0xff]
      %v158 = vld [vmem:[%s142 + $0x2c] sm:$0xf]
      %v159 = vld [vmem:[%s142 + $0x30] sm:$0xff]
      %v160 = vld [vmem:[%s142 + $0x38] sm:$0xf]
      %v161 = vld [vmem:[%s142 + $0x3c] sm:$0xff]
      %v162 = vld [vmem:[%s142 + $0x44] sm:$0xf]
      %v163 = vld [vmem:[%s142 + $0x48] sm:$0xff]
      %v164 = vld [vmem:[%s142 + $0x50] sm:$0xf]
      %v165 = vld [vmem:[%s142 + $0x54] sm:$0xff]
      %v166 = vld [vmem:[%s142 + $0x5c] sm:$0xf]
      %v167 = vmax.bf16 %v151, 0
      %v168 = vmax.bf16 %v152, 0
      %v169 = vmax.bf16 %v153, 0
      %v170 = vmax.bf16 %v154, 0
      %v171 = vmax.bf16 %v155, 0
      %v172 = vmax.bf16 %v156, 0
      %v173 = vmax.bf16 %v157, 0
      %v174 = vmax.bf16 %v158, 0
      %v175 = vmax.bf16 %v159, 0
      %v176 = vmax.bf16 %v160, 0
      %v177 = vmax.bf16 %v161, 0
      %v178 = vmax.bf16 %v162, 0
      %v179 = vmax.bf16 %v163, 0
      %v180 = vmax.bf16 %v164, 0
      %v181 = vmax.bf16 %v165, 0
      %v182 = vmax.bf16 %v166, 0
      %v183 = vld [vmem:[%s1] sm:$0xf]
      %v184 = vld [vmem:[%s1 + $0x4] sm:$0xf]
      %v185 = vld [vmem:[%s1 + $0x8] sm:$0xf]
      %v186 = vld [vmem:[%s1 + $0xc] sm:$0xf]
      %v187 = vld [vmem:[%s1 + $0x10] sm:$0xf]
      %v188 = vld [vmem:[%s1 + $0x14] sm:$0xf]
      %v189 = vld [vmem:[%s1 + $0x18] sm:$0xf]
      %v190 = vld [vmem:[%s1 + $0x1c] sm:$0xf]
      %v191 = vld [vmem:[%s1 + $0x20] sm:$0xf]
      %v192 = vld [vmem:[%s1 + $0x24] sm:$0xf]
      %v193 = vld [vmem:[%s1 + $0x28] sm:$0xf]
      %v194 = vld [vmem:[%s1 + $0x2c] sm:$0xf]
      %v195 = vld [vmem:[%s1 + $0x30] sm:$0xf]
      %v196 = vld [vmem:[%s1 + $0x34] sm:$0xf]
      %v197 = vld [vmem:[%s1 + $0x38] sm:$0xf]
      %v198 = vld [vmem:[%s1 + $0x3c] sm:$0xf]
      %v199 = vld [vmem:[%s1 + $0x40] sm:$0xf]
      %v200 = vld [vmem:[%s1 + $0x44] sm:$0xf]
      %v201 = vld [vmem:[%s1 + $0x48] sm:$0xf]
      %v202 = vld [vmem:[%s1 + $0x4c] sm:$0xf]
      %v203 = vld [vmem:[%s1 + $0x50] sm:$0xf]
      %v204 = vld [vmem:[%s1 + $0x54] sm:$0xf]
      %v205 = vld [vmem:[%s1 + $0x58] sm:$0xf]
      %v206 = vld [vmem:[%s1 + $0x5c] sm:$0xf]
      %v207 = vld [vmem:[%s1 + $0x60] sm:$0xf]
      %v208 = vld [vmem:[%s1 + $0x64] sm:$0xf]
      %v209 = vld [vmem:[%s1 + $0x68] sm:$0xf]
      %v210 = vld [vmem:[%s1 + $0x6c] sm:$0xf]
      %v211 = vld [vmem:[%s1 + $0x70] sm:$0xf]
      %v212 = vld [vmem:[%s1 + $0x74] sm:$0xf]
      %v213 = vld [vmem:[%s1 + $0x78] sm:$0xf]
      %v214 = vld [vmem:[%s1 + $0x7c] sm:$0xf]
      %v215 = vld [vmem:[%s1 + $0x80] sm:$0xf]
      %v216 = vld [vmem:[%s1 + $0x84] sm:$0xf]
      %v233 = vunpack.c.l.b16 %v167
      %v234 = vunpack.c.h.b16 %v167
      %v235 = vunpack.c.l.b16 %v168
      %v236 = vunpack.c.l.b16 %v169
      %v237 = vunpack.c.h.b16 %v169
      %v238 = vunpack.c.l.b16 %v170
      %v239 = vunpack.c.l.b16 %v171
      %v240 = vunpack.c.h.b16 %v171
      %v241 = vunpack.c.l.b16 %v172
      %v242 = vunpack.c.l.b16 %v173
      %v243 = vunpack.c.h.b16 %v173
      %v244 = vunpack.c.l.b16 %v174
      %v245 = vunpack.c.l.b16 %v175
      %v246 = vunpack.c.h.b16 %v175
      %v247 = vunpack.c.l.b16 %v176
      %v248 = vunpack.c.l.b16 %v177
      %v249 = vunpack.c.h.b16 %v177
      %v250 = vunpack.c.l.b16 %v178
      %v251 = vunpack.c.l.b16 %v179
      %v252 = vunpack.c.h.b16 %v179
      %v253 = vunpack.c.l.b16 %v180
      %v254 = vunpack.c.l.b16 %v181
      %v255 = vunpack.c.h.b16 %v181
      %v256 = vunpack.c.l.b16 %v182
      %v257 = vpack.c.b16 %v236, %v233
      %v258 = vpack.c.b16 %v237, %v234
      %v259 = vpack.c.b16 %v238, %v235
      %v260 = vpack.c.b16 %v242, %v239
      %v261 = vpack.c.b16 %v243, %v240
      %v262 = vpack.c.b16 %v244, %v241
      %v263 = vpack.c.b16 %v248, %v245
      %v264 = vpack.c.b16 %v249, %v246
      %v265 = vpack.c.b16 %v250, %v247
      %v266 = vpack.c.b16 %v254, %v251
      %v267 = vpack.c.b16 %v255, %v252
      %v268 = vpack.c.b16 %v256, %v253
      %v311 = vunpack.c.l.b16 %v183
      %v312 = vunpack.c.l.b16 %v184
      %v313 = vunpack.c.l.b16 %v185
      %v314 = vunpack.c.l.b16 %v186
      %v315 = vunpack.c.l.b16 %v187
      %v316 = vunpack.c.l.b16 %v188
      %v317 = vunpack.c.l.b16 %v189
      %v318 = vunpack.c.l.b16 %v190
      %v319 = vunpack.c.l.b16 %v191
      %v320 = vunpack.c.l.b16 %v192
      %v321 = vunpack.c.l.b16 %v193
      %v322 = vunpack.c.l.b16 %v194
      %v323 = vunpack.c.l.b16 %v195
      %v324 = vunpack.c.l.b16 %v196
      %v325 = vunpack.c.l.b16 %v197
      %v326 = vunpack.c.l.b16 %v198
      %v327 = vunpack.c.l.b16 %v199
      %v328 = vunpack.c.l.b16 %v200
      %v329 = vunpack.c.l.b16 %v201
      %v330 = vunpack.c.l.b16 %v202
      %v331 = vunpack.c.l.b16 %v203
      %v332 = vunpack.c.l.b16 %v204
      %v333 = vunpack.c.l.b16 %v205
      %v334 = vunpack.c.l.b16 %v206
      %v335 = vunpack.c.l.b16 %v207
      %v336 = vunpack.c.l.b16 %v208
      %v337 = vunpack.c.l.b16 %v209
      %v338 = vunpack.c.l.b16 %v210
      %v339 = vunpack.c.l.b16 %v211
      %v340 = vunpack.c.l.b16 %v212
      %v341 = vunpack.c.l.b16 %v213
      %v342 = vunpack.c.l.b16 %v214
      %v343 = vunpack.c.l.b16 %v215
      %v344 = vunpack.c.l.b16 %v216
      %v345 = vpack.c.b16 %v312, %v311
      %v346 = vpack.c.b16 %v314, %v313
      %v347 = vpack.c.b16 %v316, %v315
      %v348 = vpack.c.b16 %v318, %v317
      %v349 = vpack.c.b16 %v320, %v319
      %v350 = vpack.c.b16 %v322, %v321
      %v351 = vpack.c.b16 %v324, %v323
      %v352 = vpack.c.b16 %v326, %v325
      %v353 = vpack.c.b16 %v328, %v327
      %v354 = vpack.c.b16 %v330, %v329
      %v355 = vpack.c.b16 %v332, %v331
      %v356 = vpack.c.b16 %v334, %v333
      %v357 = vpack.c.b16 %v336, %v335
      %v358 = vpack.c.b16 %v338, %v337
      %v359 = vpack.c.b16 %v340, %v339
      %v360 = vpack.c.b16 %v342, %v341
      %v361 = vpack.c.b16 %v344, %v343
      %vm379 = vcmask 130048
      %v381 = vsel %vm379, %v259, 0
      %v384 = vsel %vm379, %v262, 0
      %v387 = vsel %vm379, %v265, 0
      %v390 = vsel %vm379, %v268, 0
      %392 = vmatprep.subr.bf16.mxu0 0
      %393 = vmatpush1.bf16.msra.mxu0 %v352
      %394 = vmatprep.subr.bf16.mxu0 0
      %395 = vmatpush1.bf16.msra.mxu0 %v351
      %396 = vmatprep.subr.bf16.mxu0 0
      %397 = vmatpush1.bf16.msra.mxu0 %v350
      %398 = vmatprep.subr.bf16.mxu0 0
      %399 = vmatpush1.bf16.msra.mxu0 %v349
      %400 = vmatprep.subr.bf16.mxu0 0
      %401 = vmatpush1.bf16.msra.mxu0 %v348
      %402 = vmatprep.subr.bf16.mxu0 0
      %403 = vmatpush1.bf16.msra.mxu0 %v347
      %404 = vmatprep.subr.bf16.mxu0 0
      %405 = vmatpush1.bf16.msra.mxu0 %v346
      %406 = vmatprep.subr.bf16.mxu0 0
      %407 = vmatpush1.bf16.msra.mxu0 %v345
      %408 = vmatprep.subr.bf16.mxu0 0
      %409 = vmatpush2.bf16.msra.mxu0 %v360
      %410 = vmatprep.subr.bf16.mxu0 0
      %411 = vmatpush2.bf16.msra.mxu0 %v359
      %412 = vmatprep.subr.bf16.mxu0 0
      %413 = vmatpush2.bf16.msra.mxu0 %v358
      %414 = vmatprep.subr.bf16.mxu0 0
      %415 = vmatpush2.bf16.msra.mxu0 %v357
      %416 = vmatprep.subr.bf16.mxu0 0
      %417 = vmatpush2.bf16.msra.mxu0 %v356
      %418 = vmatprep.subr.bf16.mxu0 0
      %419 = vmatpush2.bf16.msra.mxu0 %v355
      %420 = vmatprep.subr.bf16.mxu0 0
      %421 = vmatpush2.bf16.msra.mxu0 %v354
      %422 = vmatprep.subr.bf16.mxu0 0
      %423 = vmatpush2.bf16.msra.mxu0 %v353
      %424 = vmatprep.mubr.bf16.mxu0 %v258
      %425 = vmatmul.mubr.bf16.gmra.mxu0 %v257
      %v426 = vpop.f32.mrf.mxu0
      %v427 = vadd.f32 0.0, %v426
      %v428 = vpop.f32.mrf.mxu0
      %v429 = vpop.f32.mrf.mxu0
      %v430 = vadd.f32 0.0, %v429
      %v431 = vpop.f32.mrf.mxu0
      %432 = vmatprep.mubr.bf16.mxu0 %v261
      %433 = vmatmul.mubr.bf16.gmra.mxu0 %v260
      %v434 = vpop.f32.mrf.mxu0
      %v435 = vadd.f32 0.0, %v434
      %v436 = vpop.f32.mrf.mxu0
      %v437 = vpop.f32.mrf.mxu0
      %v438 = vadd.f32 0.0, %v437
      %v439 = vpop.f32.mrf.mxu0
      %440 = vmatprep.mubr.bf16.mxu0 %v264
      %441 = vmatmul.mubr.bf16.gmra.mxu0 %v263
      %v442 = vpop.f32.mrf.mxu0
      %v443 = vadd.f32 0.0, %v442
      %v444 = vpop.f32.mrf.mxu0
      %v445 = vpop.f32.mrf.mxu0
      %v446 = vadd.f32 0.0, %v445
      %v447 = vpop.f32.mrf.mxu0
      %448 = vmatprep.mubr.bf16.mxu0 %v267
      %449 = vmatmul.mubr.bf16.gmra.mxu0 %v266
      %v450 = vpop.f32.mrf.mxu0
      %v451 = vadd.f32 0.0, %v450
      %v452 = vpop.f32.mrf.mxu0
      %v453 = vpop.f32.mrf.mxu0
      %v454 = vadd.f32 0.0, %v453
      %v455 = vpop.f32.mrf.mxu0
      %456 = vdwg.mxu0
      %457 = vmatprep.subr.bf16.mxu0 0
      %458 = vmatpush1.bf16.msra.mxu0 0
      %459 = vmatprep.subr.bf16.mxu0 0
      %460 = vmatpush1.bf16.msra.mxu0 0
      %461 = vmatprep.subr.bf16.mxu0 0
      %462 = vmatpush1.bf16.msra.mxu0 0
      %463 = vmatprep.subr.bf16.mxu0 0
      %464 = vmatpush1.bf16.msra.mxu0 0
      %465 = vmatprep.subr.bf16.mxu0 0
      %466 = vmatpush1.bf16.msra.mxu0 0
      %467 = vmatprep.subr.bf16.mxu0 0
      %468 = vmatpush1.bf16.msra.mxu0 0
      %469 = vmatprep.subr.bf16.mxu0 0
      %470 = vmatpush1.bf16.msra.mxu0 0
      %471 = vmatprep.subr.bf16.mxu0 0
      %472 = vmatpush1.bf16.msra.mxu0 %v361
      %473 = vmatprep.subr.bf16.mxu0 0
      %474 = vmatpush2.bf16.msra.mxu0 0
      %475 = vmatprep.subr.bf16.mxu0 0
      %476 = vmatpush2.bf16.msra.mxu0 0
      %477 = vmatprep.subr.bf16.mxu0 0
      %478 = vmatpush2.bf16.msra.mxu0 0
      %479 = vmatprep.subr.bf16.mxu0 0
      %480 = vmatpush2.bf16.msra.mxu0 0
      %481 = vmatprep.subr.bf16.mxu0 0
      %482 = vmatpush2.bf16.msra.mxu0 0
      %483 = vmatprep.subr.bf16.mxu0 0
      %484 = vmatpush2.bf16.msra.mxu0 0
      %485 = vmatprep.subr.bf16.mxu0 0
      %486 = vmatpush2.bf16.msra.mxu0 0
      %487 = vmatprep.subr.bf16.mxu0 0
      %488 = vmatpush2.bf16.msra.mxu0 0
      %489 = vmatprep.mubr.bf16.mxu0 0
      %490 = vmatmul.mubr.bf16.gmra.mxu0 %v381
      %v491 = vpop.f32.mrf.mxu0
      %v492 = vadd.f32 %v427, %v491
      %v493 = vpop.f32.mrf.mxu0
      %v494 = vpop.f32.mrf.mxu0
      %v495 = vadd.f32 %v430, %v494
      %v496 = vpop.f32.mrf.mxu0
      %497 = vmatprep.mubr.bf16.mxu0 0
      %498 = vmatmul.mubr.bf16.gmra.mxu0 %v384
      %v499 = vpop.f32.mrf.mxu0
      %v500 = vadd.f32 %v435, %v499
      %v501 = vpop.f32.mrf.mxu0
      %v502 = vpop.f32.mrf.mxu0
      %v503 = vadd.f32 %v438, %v502
      %v504 = vpop.f32.mrf.mxu0
      %505 = vmatprep.mubr.bf16.mxu0 0
      %506 = vmatmul.mubr.bf16.gmra.mxu0 %v387
      %v507 = vpop.f32.mrf.mxu0
      %v508 = vadd.f32 %v443, %v507
      %v509 = vpop.f32.mrf.mxu0
      %v510 = vpop.f32.mrf.mxu0
      %v511 = vadd.f32 %v446, %v510
      %v512 = vpop.f32.mrf.mxu0
      %513 = vmatprep.mubr.bf16.mxu0 0
      %514 = vmatmul.mubr.bf16.gmra.mxu0 %v390
      %v515 = vpop.f32.mrf.mxu0
      %v516 = vadd.f32 %v451, %v515
      %v517 = vpop.f32.mrf.mxu0
      %v518 = vpop.f32.mrf.mxu0
      %v519 = vadd.f32 %v454, %v518
      %v520 = vpop.f32.mrf.mxu0
      %521 = vdwg.mxu0
      %522 = vst.msk [vmem:[%s148] sm:$0xff] %vm379, %v492
      %523 = vst.msk [vmem:[%s148 + $0x8] sm:$0xff] %vm379, %v495
      %524 = vst.msk [vmem:[%s148 + $0x10] sm:$0xff] %vm379, %v500
      %525 = vst.msk [vmem:[%s148 + $0x18] sm:$0xff] %vm379, %v503
      %526 = vst.msk [vmem:[%s148 + $0x20] sm:$0xff] %vm379, %v508
      %527 = vst.msk [vmem:[%s148 + $0x28] sm:$0xff] %vm379, %v511
      %528 = vst.msk [vmem:[%s148 + $0x30] sm:$0xff] %vm379, %v516
      %529 = vst.msk [vmem:[%s148 + $0x38] sm:$0xff] %vm379, %v519
      %s530 = smul.u32 8, %s13
      %p531 = scmp.lt.s32.totalorder %s530, 15
      %s532 = scalar_select %p531, %s530, 15
      %s533 = smul.addr %s532, 8
      %s534 = scalar_lea.vmem %s2, %s533
      // Predicated region
      $region29: #{_lambda_.34} parent=27 // pred_check
        %p535 = pneg %p78
      $region30: #{_lambda_.34} parent=27 // pred_check_branch
        %537 = sbr.rel (%p535) target = $region32
      $region31: #{_lambda_.34} parent=27 // pred_region
        %s538 = smul.u32 8, %s13
      $region32: #{_lambda_.34} parent=27 // pred_fallthru
        _
    $region28: #{_lambda_.34} parent=5 // pred_fallthru
      _
    %p539 = scmp.le.s32.totalorder 2, %s8
    // Predicated region
    $region33: #{_lambda_.34} parent=5 // pred_check
      %p540 = pneg %p539
    $region34: #{_lambda_.34} parent=5 // pred_check_branch
      %542 = sbr.rel (%p540) target = $region36
    $region35: #{_lambda_.34} parent=5 // pred_region
      %s543 = ssub.s32 %s8, 2
      // Predicated region
      $region37: #{_lambda_.34} parent=35 // pred_check
        %p544 = pneg %p84
      $region38: #{_lambda_.34} parent=35 // pred_check_branch
        %546 = sbr.rel (%p544) target = $region40
      $region39: #{_lambda_.34} parent=35 // pred_region
        %s547 = smul.u32 8, %s14
        %p548 = scmp.lt.s32.totalorder %s547, 15
        %s549 = scalar_select %p548, %s547, 15
        %s550 = smul.addr %s549, 8
        %s551 = scalar_lea.vmem %s2, %s550
      $region40: #{_lambda_.34} parent=35 // pred_fallthru
        _
    $region36: #{_lambda_.34} parent=5 // pred_fallthru
      _
  $region6: #{_lambda_.34} parent=0 // loop_footer
    %s12 = sadd.s32 1, %s8
  $region7: #{_lambda_.34} parent=0 // loop_footer_branch
    %7 = sbr.rel target = $region3
  $region8: #{_lambda_.34} parent=0 // loop_exit
    _

// kernel: _lambda_.30
$region0: #{_lambda_.30}
  #allocation0 [shape = 'u32[]', space=smem, size = 0x4, offset = 0x4, fixed_abs, tag = 'smem constant byte address 0x4 - core index']
  #allocation1 [shape = 'u32[144,128]{1,0:T(1,128)}', space=vmem, size = 0x12000, scoped, tag = 'internal scratch']
  %s0 = inlined_call_operand.vmem [shape: bf16[128,216], index: 0, kind: input, shape index: {}]
  %s1 = inlined_call_operand.vmem [shape: bf16[216,24], index: 1, kind: input, shape index: {}]
  %s2 = inlined_call_operand.vmem [shape: f32[128,24], index: 2, kind: output, shape index: {}]
  %s3 = sld [smem:[#allocation0]]
  $region41: #{_lambda_.30} parent=0
    _
  %s5 = ssub.s32 1, %s3
  %s6 = scalar_select 0, %s5, %s3
  loop: start=0, step=1, limit=4
  $region2: #{_lambda_.30} parent=0 // loop_pre_header
    _
  $region3: #{_lambda_.30} parent=0 // loop_header
    %s8 = sphi 0, %s12
    %p9 = scmp.ge.s32.totalorder %s8, 4
    %s18 = sphi 0, %s20
    %s21 = sphi 0, %s18
    %s22 = sphi 0, %s21
    %s38 = sphi 0, %s22
    %s42 = sphi 0, %s42
    %s44 = sphi 0, %s42
    %s45 = sphi 0, %s44
    %s59 = sphi 0, %s45
    %s65 = sphi 0, %s67
    %s68 = sphi 0, %s65
    %s69 = sphi 0, %s68
    %s85 = sphi 0, %s69
  $region4: #{_lambda_.30} parent=0 // loop_header_branch
    %11 = sbr.rel (%p9) target = $region8
  $region5: #{_lambda_.30} parent=0 // loop_body
    %s13 = ssub.s32 %s8, 1
    %s14 = ssub.s32 %s8, 2
    %s15 = sadd.s32 %s8, 1
    %s16 = ssub.s32 %s8, %s15
    %p17 = scmp.eq.s32.totalorder %s16, 0
    %s19 = sadd.s32 %s18, 1
    %s20 = scalar_select %p17, %s18, %s19
    %p23 = pneg %p17
    %p24 = scmp.eq.s32.totalorder %s8, 1
    %p25 = por %p23, %p24
    %p26 = scmp.ne.s32.totalorder %s18, %s21
    %p27 = scmp.eq.s32.totalorder %s8, 0
    %p28 = por %p26, %p27
    %p29 = scmp.ne.s32.totalorder %s18, %s21
    %p30 = scmp.eq.s32.totalorder %s13, 1
    %p31 = por %p29, %p30
    %p32 = scmp.ne.s32.totalorder %s21, %s22
    %p33 = scmp.eq.s32.totalorder %s13, 0
    %p34 = por %p32, %p33
    %p35 = scmp.ne.s32.totalorder %s21, %s22
    %p36 = scmp.eq.s32.totalorder %s14, 1
    %p37 = por %p35, %p36
    %p39 = scmp.ne.s32.totalorder %s22, %s38
    %p40 = scmp.eq.s32.totalorder %s14, 0
    %p41 = por %p39, %p40
    %s43 = sadd.s32 %s42, 1
    %p46 = scmp.eq.s32.totalorder %s8, 1
    %p47 = scmp.ne.s32.totalorder %s42, %s44
    %p48 = scmp.eq.s32.totalorder %s8, 0
    %p49 = por %p47, %p48
    %p50 = scmp.ne.s32.totalorder %s42, %s44
    %p51 = scmp.eq.s32.totalorder %s13, 1
    %p52 = por %p50, %p51
    %p53 = scmp.ne.s32.totalorder %s44, %s45
    %p54 = scmp.eq.s32.totalorder %s13, 0
    %p55 = por %p53, %p54
    %p56 = scmp.ne.s32.totalorder %s44, %s45
    %p57 = scmp.eq.s32.totalorder %s14, 1
    %p58 = por %p56, %p57
    %p60 = scmp.ne.s32.totalorder %s45, %s59
    %p61 = scmp.eq.s32.totalorder %s14, 0
    %p62 = por %p60, %p61
    %s63 = ssub.s32 %s8, %s15
    %p64 = scmp.eq.s32.totalorder %s63, 0
    %s66 = sadd.s32 %s65, 1
    %s67 = scalar_select %p64, %s65, %s66
    %p70 = pneg %p64
    %p71 = scmp.eq.s32.totalorder %s8, 1
    %p72 = por %p70, %p71
    %p73 = scmp.ne.s32.totalorder %s65, %s68
    %p74 = scmp.eq.s32.totalorder %s8, 0
    %p75 = por %p73, %p74
    %p76 = scmp.ne.s32.totalorder %s65, %s68
    %p77 = scmp.eq.s32.totalorder %s13, 1
    %p78 = por %p76, %p77
    %p79 = scmp.ne.s32.totalorder %s68, %s69
    %p80 = scmp.eq.s32.totalorder %s13, 0
    %p81 = por %p79, %p80
    %p82 = scmp.ne.s32.totalorder %s68, %s69
    %p83 = scmp.eq.s32.totalorder %s14, 1
    %p84 = por %p82, %p83
    %p86 = scmp.ne.s32.totalorder %s69, %s85
    %p87 = scmp.eq.s32.totalorder %s14, 0
    %p88 = por %p86, %p87
    %p89 = scmp.le.s32.totalorder 1, %s8
    %p90 = scmp.lt.s32.totalorder %s8, 3
    %p91 = pnand %p89, %p90
    %p92 = pneg %p91
    // Predicated region
    $region9: #{_lambda_.30} parent=5 // pred_check
      _
    $region10: #{_lambda_.30} parent=5 // pred_check_branch
      %94 = sbr.rel (%p91) target = $region12
    $region11: #{_lambda_.30} parent=5 // pred_region
      %s95 = ssub.s32 %s8, 1
      // Predicated region
      $region13: #{_lambda_.30} parent=11 // pred_check
        %p96 = pneg %p55
      $region14: #{_lambda_.30} parent=11 // pred_check_branch
        %98 = sbr.rel (%p96) target = $region16
      $region15: #{_lambda_.30} parent=11 // pred_region
        _
      $region16: #{_lambda_.30} parent=11 // pred_fallthru
        _
    $region12: #{_lambda_.30} parent=5 // pred_fallthru
      _
    %p99 = scmp.lt.s32.totalorder %s8, 2
    // Predicated region
    $region17: #{_lambda_.30} parent=5 // pred_check
      %p100 = pneg %p99
    $region18: #{_lambda_.30} parent=5 // pred_check_branch
      %102 = sbr.rel (%p100) target = $region20
    $region19: #{_lambda_.30} parent=5 // pred_region
      // Predicated region
      $region21: #{_lambda_.30} parent=19 // pred_check
        %p103 = pneg %p28
      $region22: #{_lambda_.30} parent=19 // pred_check_branch
        %105 = sbr.rel (%p103) target = $region24
      $region23: #{_lambda_.30} parent=19 // pred_region
        %s106 = smul.u32 8, %s8
        %p107 = scmp.lt.s32.totalorder %s106, 15
        %s108 = scalar_select %p107, %s106, 15
        %s109 = smul.addr %s108, 2
        %s110 = smul.addr %s109, 4
        %s111 = scalar_lea.vmem %s0, %s110
        %s112 = smul.u32 8, %s8
      $region24: #{_lambda_.30} parent=19 // pred_fallthru
        _
    $region20: #{_lambda_.30} parent=5 // pred_fallthru
      _
    %p113 = scmp.le.s32.totalorder 1, %s8
    %p114 = scmp.lt.s32.totalorder %s8, 3
    %p115 = pnand %p113, %p114
    %p116 = pneg %p115
    // Predicated region
    $region25: #{_lambda_.30} parent=5 // pred_check
      _
    $region26: #{_lambda_.30} parent=5 // pred_check_branch
      %118 = sbr.rel (%p115) target = $region28
    $region27: #{_lambda_.30} parent=5 // pred_region
      %s119 = ssub.s32 %s8, 1
      %s120 = smul.u32 8, %s13
      %p121 = scmp.lt.s32.totalorder %s120, 15
      %s122 = scalar_select %p121, %s120, 15
      %s123 = smul.addr %s122, 2
      %s124 = smul.addr %s123, 4
      %s125 = scalar_lea.vmem %s0, %s124
      %p126 = pneg %p34
      %p127 = pneg %p31
      %p128 = pneg %p55
      %p129 = pneg %p52
      %p130 = pneg %p81
      %p131 = pneg %p78
      %s132 = smul.u32 8, %s13
      %p133 = scmp.lt.s32.totalorder %s132, 15
      %s134 = scalar_select %p133, %s132, 15
      %s135 = smul.addr %s134, 8
      %s136 = scalar_lea.vmem %s2, %s135
      %s137 = smul.u32 8, %s13
      %p138 = scmp.lt.s32.totalorder %s137, 15
      %s139 = scalar_select %p138, %s137, 15
      %s140 = smul.addr %s139, 2
      %s141 = smul.addr %s140, 4
      %s142 = scalar_lea.vmem %s0, %s141
      %s143 = smul.u32 8, %s13
      %s144 = smul.u32 8, %s13
      %p145 = scmp.lt.s32.totalorder %s144, 15
      %s146 = scalar_select %p145, %s144, 15
      %s147 = smul.addr %s146, 8
      %s148 = scalar_lea.vmem %s2, %s147
      %s149 = smul.u32 8, %s13
      %v151 = vld [vmem:[%s142] sm:$0xff]
      %v152 = vld [vmem:[%s142 + $0x8] sm:$0xff]
      %v153 = vld [vmem:[%s142 + $0x10] sm:$0xff]
      %v154 = vld [vmem:[%s142 + $0x18] sm:$0xff]
      %v155 = vld [vmem:[%s142 + $0x20] sm:$0xff]
      %v156 = vld [vmem:[%s142 + $0x28] sm:$0xff]
      %v157 = vld [vmem:[%s142 + $0x30] sm:$0xff]
      %v158 = vld [vmem:[%s142 + $0x38] sm:$0xff]
      %v159 = vmax.bf16 %v151, 0
      %v160 = vmax.bf16 %v152, 0
      %v161 = vmax.bf16 %v153, 0
      %v162 = vmax.bf16 %v154, 0
      %v163 = vmax.bf16 %v155, 0
      %v164 = vmax.bf16 %v156, 0
      %v165 = vmax.bf16 %v157, 0
      %v166 = vmax.bf16 %v158, 0
      %v167 = vld [vmem:[%s1] sm:$0xf]
      %v168 = vld [vmem:[%s1 + $0x4] sm:$0xf]
      %v169 = vld [vmem:[%s1 + $0x8] sm:$0xf]
      %v170 = vld [vmem:[%s1 + $0xc] sm:$0xf]
      %v171 = vld [vmem:[%s1 + $0x10] sm:$0xf]
      %v172 = vld [vmem:[%s1 + $0x14] sm:$0xf]
      %v173 = vld [vmem:[%s1 + $0x18] sm:$0xf]
      %v174 = vld [vmem:[%s1 + $0x1c] sm:$0xf]
      %v175 = vld [vmem:[%s1 + $0x20] sm:$0xf]
      %v176 = vld [vmem:[%s1 + $0x24] sm:$0xf]
      %v177 = vld [vmem:[%s1 + $0x28] sm:$0xf]
      %v178 = vld [vmem:[%s1 + $0x2c] sm:$0xf]
      %v179 = vld [vmem:[%s1 + $0x30] sm:$0xf]
      %v180 = vld [vmem:[%s1 + $0x34] sm:$0xf]
      %v181 = vld [vmem:[%s1 + $0x38] sm:$0xf]
      %v182 = vld [vmem:[%s1 + $0x3c] sm:$0xf]
      %v183 = vld [vmem:[%s1 + $0x40] sm:$0xf]
      %v184 = vld [vmem:[%s1 + $0x44] sm:$0xf]
      %v185 = vld [vmem:[%s1 + $0x48] sm:$0xf]
      %v186 = vld [vmem:[%s1 + $0x4c] sm:$0xf]
      %v187 = vld [vmem:[%s1 + $0x50] sm:$0xf]
      %v188 = vld [vmem:[%s1 + $0x54] sm:$0xf]
      %v189 = vld [vmem:[%s1 + $0x58] sm:$0xf]
      %v190 = vld [vmem:[%s1 + $0x5c] sm:$0xf]
      %v191 = vld [vmem:[%s1 + $0x60] sm:$0xf]
      %v192 = vld [vmem:[%s1 + $0x64] sm:$0xf]
      %v193 = vld [vmem:[%s1 + $0x68] sm:$0xf]
      %v202 = vunpack.c.l.b16 %v159
      %v203 = vunpack.c.h.b16 %v159
      %v204 = vunpack.c.l.b16 %v160
      %v205 = vunpack.c.h.b16 %v160
      %v206 = vunpack.c.l.b16 %v161
      %v207 = vunpack.c.h.b16 %v161
      %v208 = vunpack.c.l.b16 %v162
      %v209 = vunpack.c.h.b16 %v162
      %v210 = vunpack.c.l.b16 %v163
      %v211 = vunpack.c.h.b16 %v163
      %v212 = vunpack.c.l.b16 %v164
      %v213 = vunpack.c.h.b16 %v164
      %v214 = vunpack.c.l.b16 %v165
      %v215 = vunpack.c.h.b16 %v165
      %v216 = vunpack.c.l.b16 %v166
      %v217 = vunpack.c.h.b16 %v166
      %v218 = vpack.c.b16 %v204, %v202
      %v219 = vpack.c.b16 %v205, %v203
      %v220 = vpack.c.b16 %v208, %v206
      %v221 = vpack.c.b16 %v209, %v207
      %v222 = vpack.c.b16 %v212, %v210
      %v223 = vpack.c.b16 %v213, %v211
      %v224 = vpack.c.b16 %v216, %v214
      %v225 = vpack.c.b16 %v217, %v215
      %v257 = vunpack.c.l.b16 %v167
      %v258 = vunpack.c.l.b16 %v168
      %v259 = vunpack.c.l.b16 %v169
      %v260 = vunpack.c.l.b16 %v170
      %v261 = vunpack.c.l.b16 %v171
      %v262 = vunpack.c.l.b16 %v172
      %v263 = vunpack.c.l.b16 %v173
      %v264 = vunpack.c.l.b16 %v174
      %v265 = vunpack.c.l.b16 %v175
      %v266 = vunpack.c.l.b16 %v176
      %v267 = vunpack.c.l.b16 %v177
      %v268 = vunpack.c.l.b16 %v178
      %v269 = vunpack.c.l.b16 %v179
      %v270 = vunpack.c.l.b16 %v180
      %v271 = vunpack.c.l.b16 %v181
      %v272 = vunpack.c.l.b16 %v182
      %v273 = vunpack.c.l.b16 %v183
      %v274 = vunpack.c.l.b16 %v184
      %v275 = vunpack.c.l.b16 %v185
      %v276 = vunpack.c.l.b16 %v186
      %v277 = vunpack.c.l.b16 %v187
      %v278 = vunpack.c.l.b16 %v188
      %v279 = vunpack.c.l.b16 %v189
      %v280 = vunpack.c.l.b16 %v190
      %v281 = vunpack.c.l.b16 %v191
      %v282 = vunpack.c.l.b16 %v192
      %v283 = vunpack.c.l.b16 %v193
      %v284 = vpack.c.b16 %v258, %v257
      %v285 = vpack.c.b16 %v260, %v259
      %v286 = vpack.c.b16 %v262, %v261
      %v287 = vpack.c.b16 %v264, %v263
      %v288 = vpack.c.b16 %v266, %v265
      %v289 = vpack.c.b16 %v268, %v267
      %v290 = vpack.c.b16 %v270, %v269
      %v291 = vpack.c.b16 %v272, %v271
      %v292 = vpack.c.b16 %v274, %v273
      %v293 = vpack.c.b16 %v276, %v275
      %v294 = vpack.c.b16 %v278, %v277
      %v295 = vpack.c.b16 %v280, %v279
      %v296 = vpack.c.b16 %v282, %v281
      %v297 = vpack.c.b16 %v283, %v283
      %vm311 = vcmask 719872
      %v313 = vsel %vm311, %v219, 0
      %v316 = vsel %vm311, %v221, 0
      %v319 = vsel %vm311, %v223, 0
      %v322 = vsel %vm311, %v225, 0
      %vm324 = vcmask 1043456
      %v326 = vsel %vm324, %v297, 0
      %328 = vmatprep.subr.bf16.mxu0 0
      %329 = vmatpush1.bf16.msra.mxu0 %v291
      %330 = vmatprep.subr.bf16.mxu0 0
      %331 = vmatpush1.bf16.msra.mxu0 %v290
      %332 = vmatprep.subr.bf16.mxu0 0
      %333 = vmatpush1.bf16.msra.mxu0 %v289
      %334 = vmatprep.subr.bf16.mxu0 0
      %335 = vmatpush1.bf16.msra.mxu0 %v288
      %336 = vmatprep.subr.bf16.mxu0 0
      %337 = vmatpush1.bf16.msra.mxu0 %v287
      %338 = vmatprep.subr.bf16.mxu0 0
      %339 = vmatpush1.bf16.msra.mxu0 %v286
      %340 = vmatprep.subr.bf16.mxu0 0
      %341 = vmatpush1.bf16.msra.mxu0 %v285
      %342 = vmatprep.subr.bf16.mxu0 0
      %343 = vmatpush1.bf16.msra.mxu0 %v284
      %344 = vmatprep.subr.bf16.mxu0 0
      %345 = vmatpush2.bf16.msra.mxu0 0
      %346 = vmatprep.subr.bf16.mxu0 0
      %347 = vmatpush2.bf16.msra.mxu0 0
      %348 = vmatprep.subr.bf16.mxu0 0
      %349 = vmatpush2.bf16.msra.mxu0 %v326
      %350 = vmatprep.subr.bf16.mxu0 0
      %351 = vmatpush2.bf16.msra.mxu0 %v296
      %352 = vmatprep.subr.bf16.mxu0 0
      %353 = vmatpush2.bf16.msra.mxu0 %v295
      %354 = vmatprep.subr.bf16.mxu0 0
      %355 = vmatpush2.bf16.msra.mxu0 %v294
      %356 = vmatprep.subr.bf16.mxu0 0
      %357 = vmatpush2.bf16.msra.mxu0 %v293
      %358 = vmatprep.subr.bf16.mxu0 0
      %359 = vmatpush2.bf16.msra.mxu0 %v292
      %360 = vmatprep.mubr.bf16.mxu0 %v313
      %361 = vmatmul.mubr.bf16.gmra.mxu0 %v218
      %v362 = vpop.f32.mrf.mxu0
      %v363 = vadd.f32 0.0, %v362
      %v364 = vpop.f32.mrf.mxu0
      %v365 = vpop.f32.mrf.mxu0
      %v366 = vadd.f32 0.0, %v365
      %v367 = vpop.f32.mrf.mxu0
      %368 = vmatprep.mubr.bf16.mxu0 %v316
      %369 = vmatmul.mubr.bf16.gmra.mxu0 %v220
      %v370 = vpop.f32.mrf.mxu0
      %v371 = vadd.f32 0.0, %v370
      %v372 = vpop.f32.mrf.mxu0
      %v373 = vpop.f32.mrf.mxu0
      %v374 = vadd.f32 0.0, %v373
      %v375 = vpop.f32.mrf.mxu0
      %376 = vmatprep.mubr.bf16.mxu0 %v319
      %377 = vmatmul.mubr.bf16.gmra.mxu0 %v222
      %v378 = vpop.f32.mrf.mxu0
      %v379 = vadd.f32 0.0, %v378
      %v380 = vpop.f32.mrf.mxu0
      %v381 = vpop.f32.mrf.mxu0
      %v382 = vadd.f32 0.0, %v381
      %v383 = vpop.f32.mrf.mxu0
      %384 = vmatprep.mubr.bf16.mxu0 %v322
      %385 = vmatmul.mubr.bf16.gmra.mxu0 %v224
      %v386 = vpop.f32.mrf.mxu0
      %v387 = vadd.f32 0.0, %v386
      %v388 = vpop.f32.mrf.mxu0
      %v389 = vpop.f32.mrf.mxu0
      %v390 = vadd.f32 0.0, %v389
      %v391 = vpop.f32.mrf.mxu0
      %392 = vdwg.mxu0
      %vm393 = vcmask 195584
      %394 = vst.msk [vmem:[%s148] sm:$0xff] %vm393, %v363
      %395 = vst.msk [vmem:[%s148 + $0x8] sm:$0xff] %vm393, %v366
      %396 = vst.msk [vmem:[%s148 + $0x10] sm:$0xff] %vm393, %v371
      %397 = vst.msk [vmem:[%s148 + $0x18] sm:$0xff] %vm393, %v374
      %398 = vst.msk [vmem:[%s148 + $0x20] sm:$0xff] %vm393, %v379
      %399 = vst.msk [vmem:[%s148 + $0x28] sm:$0xff] %vm393, %v382
      %400 = vst.msk [vmem:[%s148 + $0x30] sm:$0xff] %vm393, %v387
      %401 = vst.msk [vmem:[%s148 + $0x38] sm:$0xff] %vm393, %v390
      %s402 = smul.u32 8, %s13
      %p403 = scmp.lt.s32.totalorder %s402, 15
      %s404 = scalar_select %p403, %s402, 15
      %s405 = smul.addr %s404, 8
      %s406 = scalar_lea.vmem %s2, %s405
      // Predicated region
      $region29: #{_lambda_.30} parent=27 // pred_check
        %p407 = pneg %p78
      $region30: #{_lambda_.30} parent=27 // pred_check_branch
        %409 = sbr.rel (%p407) target = $region32
      $region31: #{_lambda_.30} parent=27 // pred_region
        %s410 = smul.u32 8, %s13
      $region32: #{_lambda_.30} parent=27 // pred_fallthru
        _
    $region28: #{_lambda_.30} parent=5 // pred_fallthru
      _
    %p411 = scmp.le.s32.totalorder 2, %s8
    // Predicated region
    $region33: #{_lambda_.30} parent=5 // pred_check
      %p412 = pneg %p411
    $region34: #{_lambda_.30} parent=5 // pred_check_branch
      %414 = sbr.rel (%p412) target = $region36
    $region35: #{_lambda_.30} parent=5 // pred_region
      %s415 = ssub.s32 %s8, 2
      // Predicated region
      $region37: #{_lambda_.30} parent=35 // pred_check
        %p416 = pneg %p84
      $region38: #{_lambda_.30} parent=35 // pred_check_branch
        %418 = sbr.rel (%p416) target = $region40
      $region39: #{_lambda_.30} parent=35 // pred_region
        %s419 = smul.u32 8, %s14
        %p420 = scmp.lt.s32.totalorder %s419, 15
        %s421 = scalar_select %p420, %s419, 15
        %s422 = smul.addr %s421, 8
        %s423 = scalar_lea.vmem %s2, %s422
      $region40: #{_lambda_.30} parent=35 // pred_fallthru
        _
    $region36: #{_lambda_.30} parent=5 // pred_fallthru
      _
  $region6: #{_lambda_.30} parent=0 // loop_footer
    %s12 = sadd.s32 1, %s8
  $region7: #{_lambda_.30} parent=0 // loop_footer_branch
    %7 = sbr.rel target = $region3
  $region8: #{_lambda_.30} parent=0 // loop_exit
    _

// kernel: _lambda_.32
$region0: #{_lambda_.32}
  #allocation0 [shape = 'u32[]', space=smem, size = 0x4, offset = 0x4, fixed_abs, tag = 'smem constant byte address 0x4 - core index']
  #allocation1 [shape = 'u32[144,128]{1,0:T(1,128)}', space=vmem, size = 0x12000, scoped, tag = 'internal scratch']
  %s0 = inlined_call_operand.vmem [shape: bf16[128,24], index: 0, kind: input, shape index: {}]
  %s1 = inlined_call_operand.vmem [shape: bf16[24,8], index: 1, kind: input, shape index: {}]
  %s2 = inlined_call_operand.vmem [shape: f32[128,8], index: 2, kind: output, shape index: {}]
  %s3 = sld [smem:[#allocation0]]
  $region41: #{_lambda_.32} parent=0
    _
  %s5 = ssub.s32 1, %s3
  %s6 = scalar_select 0, %s5, %s3
  loop: start=0, step=1, limit=4
  $region2: #{_lambda_.32} parent=0 // loop_pre_header
    _
  $region3: #{_lambda_.32} parent=0 // loop_header
    %s8 = sphi 0, %s12
    %p9 = scmp.ge.s32.totalorder %s8, 4
    %s18 = sphi 0, %s20
    %s21 = sphi 0, %s18
    %s22 = sphi 0, %s21
    %s38 = sphi 0, %s22
    %s42 = sphi 0, %s42
    %s44 = sphi 0, %s42
    %s45 = sphi 0, %s44
    %s59 = sphi 0, %s45
    %s65 = sphi 0, %s67
    %s68 = sphi 0, %s65
    %s69 = sphi 0, %s68
    %s85 = sphi 0, %s69
  $region4: #{_lambda_.32} parent=0 // loop_header_branch
    %11 = sbr.rel (%p9) target = $region8
  $region5: #{_lambda_.32} parent=0 // loop_body
    %s13 = ssub.s32 %s8, 1
    %s14 = ssub.s32 %s8, 2
    %s15 = sadd.s32 %s8, 1
    %s16 = ssub.s32 %s8, %s15
    %p17 = scmp.eq.s32.totalorder %s16, 0
    %s19 = sadd.s32 %s18, 1
    %s20 = scalar_select %p17, %s18, %s19
    %p23 = pneg %p17
    %p24 = scmp.eq.s32.totalorder %s8, 1
    %p25 = por %p23, %p24
    %p26 = scmp.ne.s32.totalorder %s18, %s21
    %p27 = scmp.eq.s32.totalorder %s8, 0
    %p28 = por %p26, %p27
    %p29 = scmp.ne.s32.totalorder %s18, %s21
    %p30 = scmp.eq.s32.totalorder %s13, 1
    %p31 = por %p29, %p30
    %p32 = scmp.ne.s32.totalorder %s21, %s22
    %p33 = scmp.eq.s32.totalorder %s13, 0
    %p34 = por %p32, %p33
    %p35 = scmp.ne.s32.totalorder %s21, %s22
    %p36 = scmp.eq.s32.totalorder %s14, 1
    %p37 = por %p35, %p36
    %p39 = scmp.ne.s32.totalorder %s22, %s38
    %p40 = scmp.eq.s32.totalorder %s14, 0
    %p41 = por %p39, %p40
    %s43 = sadd.s32 %s42, 1
    %p46 = scmp.eq.s32.totalorder %s8, 1
    %p47 = scmp.ne.s32.totalorder %s42, %s44
    %p48 = scmp.eq.s32.totalorder %s8, 0
    %p49 = por %p47, %p48
    %p50 = scmp.ne.s32.totalorder %s42, %s44
    %p51 = scmp.eq.s32.totalorder %s13, 1
    %p52 = por %p50, %p51
    %p53 = scmp.ne.s32.totalorder %s44, %s45
    %p54 = scmp.eq.s32.totalorder %s13, 0
    %p55 = por %p53, %p54
    %p56 = scmp.ne.s32.totalorder %s44, %s45
    %p57 = scmp.eq.s32.totalorder %s14, 1
    %p58 = por %p56, %p57
    %p60 = scmp.ne.s32.totalorder %s45, %s59
    %p61 = scmp.eq.s32.totalorder %s14, 0
    %p62 = por %p60, %p61
    %s63 = ssub.s32 %s8, %s15
    %p64 = scmp.eq.s32.totalorder %s63, 0
    %s66 = sadd.s32 %s65, 1
    %s67 = scalar_select %p64, %s65, %s66
    %p70 = pneg %p64
    %p71 = scmp.eq.s32.totalorder %s8, 1
    %p72 = por %p70, %p71
    %p73 = scmp.ne.s32.totalorder %s65, %s68
    %p74 = scmp.eq.s32.totalorder %s8, 0
    %p75 = por %p73, %p74
    %p76 = scmp.ne.s32.totalorder %s65, %s68
    %p77 = scmp.eq.s32.totalorder %s13, 1
    %p78 = por %p76, %p77
    %p79 = scmp.ne.s32.totalorder %s68, %s69
    %p80 = scmp.eq.s32.totalorder %s13, 0
    %p81 = por %p79, %p80
    %p82 = scmp.ne.s32.totalorder %s68, %s69
    %p83 = scmp.eq.s32.totalorder %s14, 1
    %p84 = por %p82, %p83
    %p86 = scmp.ne.s32.totalorder %s69, %s85
    %p87 = scmp.eq.s32.totalorder %s14, 0
    %p88 = por %p86, %p87
    %p89 = scmp.le.s32.totalorder 1, %s8
    %p90 = scmp.lt.s32.totalorder %s8, 3
    %p91 = pnand %p89, %p90
    %p92 = pneg %p91
    // Predicated region
    $region9: #{_lambda_.32} parent=5 // pred_check
      _
    $region10: #{_lambda_.32} parent=5 // pred_check_branch
      %94 = sbr.rel (%p91) target = $region12
    $region11: #{_lambda_.32} parent=5 // pred_region
      %s95 = ssub.s32 %s8, 1
      // Predicated region
      $region13: #{_lambda_.32} parent=11 // pred_check
        %p96 = pneg %p55
      $region14: #{_lambda_.32} parent=11 // pred_check_branch
        %98 = sbr.rel (%p96) target = $region16
      $region15: #{_lambda_.32} parent=11 // pred_region
        _
      $region16: #{_lambda_.32} parent=11 // pred_fallthru
        _
    $region12: #{_lambda_.32} parent=5 // pred_fallthru
      _
    %p99 = scmp.lt.s32.totalorder %s8, 2
    // Predicated region
    $region17: #{_lambda_.32} parent=5 // pred_check
      %p100 = pneg %p99
    $region18: #{_lambda_.32} parent=5 // pred_check_branch
      %102 = sbr.rel (%p100) target = $region20
    $region19: #{_lambda_.32} parent=5 // pred_region
      // Predicated region
      $region21: #{_lambda_.32} parent=19 // pred_check
        %p103 = pneg %p28
      $region22: #{_lambda_.32} parent=19 // pred_check_branch
        %105 = sbr.rel (%p103) target = $region24
      $region23: #{_lambda_.32} parent=19 // pred_region
        %s106 = smul.u32 8, %s8
        %p107 = scmp.lt.s32.totalorder %s106, 15
        %s108 = scalar_select %p107, %s106, 15
        %s109 = smul.addr %s108, 4
        %s110 = scalar_lea.vmem %s0, %s109
        %s111 = smul.u32 8, %s8
      $region24: #{_lambda_.32} parent=19 // pred_fallthru
        _
    $region20: #{_lambda_.32} parent=5 // pred_fallthru
      _
    %p112 = scmp.le.s32.totalorder 1, %s8
    %p113 = scmp.lt.s32.totalorder %s8, 3
    %p114 = pnand %p112, %p113
    %p115 = pneg %p114
    // Predicated region
    $region25: #{_lambda_.32} parent=5 // pred_check
      _
    $region26: #{_lambda_.32} parent=5 // pred_check_branch
      %117 = sbr.rel (%p114) target = $region28
    $region27: #{_lambda_.32} parent=5 // pred_region
      %s118 = ssub.s32 %s8, 1
      %s119 = smul.u32 8, %s13
      %p120 = scmp.lt.s32.totalorder %s119, 15
      %s121 = scalar_select %p120, %s119, 15
      %s122 = smul.addr %s121, 4
      %s123 = scalar_lea.vmem %s0, %s122
      %p124 = pneg %p34
      %p125 = pneg %p31
      %p126 = pneg %p55
      %p127 = pneg %p52
      %p128 = pneg %p81
      %p129 = pneg %p78
      %s130 = smul.u32 8, %s13
      %p131 = scmp.lt.s32.totalorder %s130, 15
      %s132 = scalar_select %p131, %s130, 15
      %s133 = smul.addr %s132, 8
      %s134 = scalar_lea.vmem %s2, %s133
      %s135 = smul.u32 8, %s13
      %p136 = scmp.lt.s32.totalorder %s135, 15
      %s137 = scalar_select %p136, %s135, 15
      %s138 = smul.addr %s137, 4
      %s139 = scalar_lea.vmem %s0, %s138
      %s140 = smul.u32 8, %s13
      %s141 = smul.u32 8, %s13
      %p142 = scmp.lt.s32.totalorder %s141, 15
      %s143 = scalar_select %p142, %s141, 15
      %s144 = smul.addr %s143, 8
      %s145 = scalar_lea.vmem %s2, %s144
      %s146 = smul.u32 8, %s13
      %v148 = vld [vmem:[%s139] sm:$0xf]
      %v149 = vld [vmem:[%s139 + $0x4] sm:$0xf]
      %v150 = vld [vmem:[%s139 + $0x8] sm:$0xf]
      %v151 = vld [vmem:[%s139 + $0xc] sm:$0xf]
      %v152 = vld [vmem:[%s139 + $0x10] sm:$0xf]
      %v153 = vld [vmem:[%s139 + $0x14] sm:$0xf]
      %v154 = vld [vmem:[%s139 + $0x18] sm:$0xf]
      %v155 = vld [vmem:[%s139 + $0x1c] sm:$0xf]
      %v156 = vmax.bf16 %v148, 0
      %v157 = vmax.bf16 %v149, 0
      %v158 = vmax.bf16 %v150, 0
      %v159 = vmax.bf16 %v151, 0
      %v160 = vmax.bf16 %v152, 0
      %v161 = vmax.bf16 %v153, 0
      %v162 = vmax.bf16 %v154, 0
      %v163 = vmax.bf16 %v155, 0
      %v164 = vld [vmem:[%s1] sm:$0xf]
      %v165 = vld [vmem:[%s1 + $0x4] sm:$0xf]
      %v166 = vld [vmem:[%s1 + $0x8] sm:$0xf]
      %v175 = vunpack.c.l.b16 %v156
      %v176 = vunpack.c.l.b16 %v157
      %v177 = vunpack.c.l.b16 %v158
      %v178 = vunpack.c.l.b16 %v159
      %v179 = vunpack.c.l.b16 %v160
      %v180 = vunpack.c.l.b16 %v161
      %v181 = vunpack.c.l.b16 %v162
      %v182 = vunpack.c.l.b16 %v163
      %v183 = vpack.c.b16 %v176, %v175
      %v184 = vpack.c.b16 %v178, %v177
      %v185 = vpack.c.b16 %v180, %v179
      %v186 = vpack.c.b16 %v182, %v181
      %v190 = vunpack.c.l.b16 %v164
      %v191 = vunpack.c.l.b16 %v165
      %v192 = vunpack.c.l.b16 %v166
      %v193 = vpack.c.b16 %v191, %v190
      %v194 = vpack.c.b16 %v192, %v192
      %vm196 = vcmask 195584
      %v198 = vsel %vm196, %v183, 0
      %v201 = vsel %vm196, %v184, 0
      %v204 = vsel %vm196, %v185, 0
      %v207 = vsel %vm196, %v186, 0
      %vm209 = vcmask 1043456
      %v211 = vsel %vm209, %v194, 0
      %213 = vmatprep.subr.bf16.mxu0 0
      %214 = vmatpush1.bf16.msra.mxu0 0
      %215 = vmatprep.subr.bf16.mxu0 0
      %216 = vmatpush1.bf16.msra.mxu0 0
      %217 = vmatprep.subr.bf16.mxu0 0
      %218 = vmatpush1.bf16.msra.mxu0 0
      %219 = vmatprep.subr.bf16.mxu0 0
      %220 = vmatpush1.bf16.msra.mxu0 0
      %221 = vmatprep.subr.bf16.mxu0 0
      %222 = vmatpush1.bf16.msra.mxu0 0
      %223 = vmatprep.subr.bf16.mxu0 0
      %224 = vmatpush1.bf16.msra.mxu0 0
      %225 = vmatprep.subr.bf16.mxu0 0
      %226 = vmatpush1.bf16.msra.mxu0 %v211
      %227 = vmatprep.subr.bf16.mxu0 0
      %228 = vmatpush1.bf16.msra.mxu0 %v193
      %229 = vmatprep.subr.bf16.mxu0 0
      %230 = vmatpush2.bf16.msra.mxu0 0
      %231 = vmatprep.subr.bf16.mxu0 0
      %232 = vmatpush2.bf16.msra.mxu0 0
      %233 = vmatprep.subr.bf16.mxu0 0
      %234 = vmatpush2.bf16.msra.mxu0 0
      %235 = vmatprep.subr.bf16.mxu0 0
      %236 = vmatpush2.bf16.msra.mxu0 0
      %237 = vmatprep.subr.bf16.mxu0 0
      %238 = vmatpush2.bf16.msra.mxu0 0
      %239 = vmatprep.subr.bf16.mxu0 0
      %240 = vmatpush2.bf16.msra.mxu0 0
      %241 = vmatprep.subr.bf16.mxu0 0
      %242 = vmatpush2.bf16.msra.mxu0 0
      %243 = vmatprep.subr.bf16.mxu0 0
      %244 = vmatpush2.bf16.msra.mxu0 0
      %245 = vmatprep.mubr.bf16.mxu0 0
      %246 = vmatmul.mubr.bf16.gmra.mxu0 %v198
      %v247 = vpop.f32.mrf.mxu0
      %v248 = vadd.f32 0.0, %v247
      %v249 = vpop.f32.mrf.mxu0
      %v250 = vpop.f32.mrf.mxu0
      %v251 = vadd.f32 0.0, %v250
      %v252 = vpop.f32.mrf.mxu0
      %253 = vmatprep.mubr.bf16.mxu0 0
      %254 = vmatmul.mubr.bf16.gmra.mxu0 %v201
      %v255 = vpop.f32.mrf.mxu0
      %v256 = vadd.f32 0.0, %v255
      %v257 = vpop.f32.mrf.mxu0
      %v258 = vpop.f32.mrf.mxu0
      %v259 = vadd.f32 0.0, %v258
      %v260 = vpop.f32.mrf.mxu0
      %261 = vmatprep.mubr.bf16.mxu0 0
      %262 = vmatmul.mubr.bf16.gmra.mxu0 %v204
      %v263 = vpop.f32.mrf.mxu0
      %v264 = vadd.f32 0.0, %v263
      %v265 = vpop.f32.mrf.mxu0
      %v266 = vpop.f32.mrf.mxu0
      %v267 = vadd.f32 0.0, %v266
      %v268 = vpop.f32.mrf.mxu0
      %269 = vmatprep.mubr.bf16.mxu0 0
      %270 = vmatmul.mubr.bf16.gmra.mxu0 %v207
      %v271 = vpop.f32.mrf.mxu0
      %v272 = vadd.f32 0.0, %v271
      %v273 = vpop.f32.mrf.mxu0
      %v274 = vpop.f32.mrf.mxu0
      %v275 = vadd.f32 0.0, %v274
      %v276 = vpop.f32.mrf.mxu0
      %277 = vdwg.mxu0
      %vm278 = vcmask 64512
      %279 = vst.msk [vmem:[%s145] sm:$0xff] %vm278, %v248
      %280 = vst.msk [vmem:[%s145 + $0x8] sm:$0xff] %vm278, %v251
      %281 = vst.msk [vmem:[%s145 + $0x10] sm:$0xff] %vm278, %v256
      %282 = vst.msk [vmem:[%s145 + $0x18] sm:$0xff] %vm278, %v259
      %283 = vst.msk [vmem:[%s145 + $0x20] sm:$0xff] %vm278, %v264
      %284 = vst.msk [vmem:[%s145 + $0x28] sm:$0xff] %vm278, %v267
      %285 = vst.msk [vmem:[%s145 + $0x30] sm:$0xff] %vm278, %v272
      %286 = vst.msk [vmem:[%s145 + $0x38] sm:$0xff] %vm278, %v275
      %s287 = smul.u32 8, %s13
      %p288 = scmp.lt.s32.totalorder %s287, 15
      %s289 = scalar_select %p288, %s287, 15
      %s290 = smul.addr %s289, 8
      %s291 = scalar_lea.vmem %s2, %s290
      // Predicated region
      $region29: #{_lambda_.32} parent=27 // pred_check
        %p292 = pneg %p78
      $region30: #{_lambda_.32} parent=27 // pred_check_branch
        %294 = sbr.rel (%p292) target = $region32
      $region31: #{_lambda_.32} parent=27 // pred_region
        %s295 = smul.u32 8, %s13
      $region32: #{_lambda_.32} parent=27 // pred_fallthru
        _
    $region28: #{_lambda_.32} parent=5 // pred_fallthru
      _
    %p296 = scmp.le.s32.totalorder 2, %s8
    // Predicated region
    $region33: #{_lambda_.32} parent=5 // pred_check
      %p297 = pneg %p296
    $region34: #{_lambda_.32} parent=5 // pred_check_branch
      %299 = sbr.rel (%p297) target = $region36
    $region35: #{_lambda_.32} parent=5 // pred_region
      %s300 = ssub.s32 %s8, 2
      // Predicated region
      $region37: #{_lambda_.32} parent=35 // pred_check
        %p301 = pneg %p84
      $region38: #{_lambda_.32} parent=35 // pred_check_branch
        %303 = sbr.rel (%p301) target = $region40
      $region39: #{_lambda_.32} parent=35 // pred_region
        %s304 = smul.u32 8, %s14
        %p305 = scmp.lt.s32.totalorder %s304, 15
        %s306 = scalar_select %p305, %s304, 15
        %s307 = smul.addr %s306, 8
        %s308 = scalar_lea.vmem %s2, %s307
      $region40: #{_lambda_.32} parent=35 // pred_fallthru
        _
    $region36: #{_lambda_.32} parent=5 // pred_fallthru
      _
  $region6: #{_lambda_.32} parent=0 // loop_footer
    %s12 = sadd.s32 1, %s8
  $region7: #{_lambda_.32} parent=0 // loop_footer_branch
    %7 = sbr.rel target = $region3
  $region8: #{_lambda_.32} parent=0 // loop_exit
    _

// kernel: _lambda_.37
$region0: #{_lambda_.37}
  #allocation0 [shape = 'u32[]', space=smem, size = 0x4, offset = 0x4, fixed_abs, tag = 'smem constant byte address 0x4 - core index']
  #allocation1 [shape = 'u32[144,128]{1,0:T(1,128)}', space=vmem, size = 0x12000, scoped, tag = 'internal scratch']
  %s0 = inlined_call_operand.vmem [shape: bf16[128,324], index: 0, kind: input, shape index: {}]
  %s1 = inlined_call_operand.vmem [shape: bf16[324,16], index: 1, kind: input, shape index: {}]
  %s2 = inlined_call_operand.vmem [shape: f32[128,16], index: 2, kind: output, shape index: {}]
  %s3 = sld [smem:[#allocation0]]
  $region41: #{_lambda_.37} parent=0
    _
  %s5 = ssub.s32 1, %s3
  %s6 = scalar_select 0, %s5, %s3
  loop: start=0, step=1, limit=4
  $region2: #{_lambda_.37} parent=0 // loop_pre_header
    _
  $region3: #{_lambda_.37} parent=0 // loop_header
    %s8 = sphi 0, %s12
    %p9 = scmp.ge.s32.totalorder %s8, 4
    %s18 = sphi 0, %s20
    %s21 = sphi 0, %s18
    %s22 = sphi 0, %s21
    %s38 = sphi 0, %s22
    %s42 = sphi 0, %s42
    %s44 = sphi 0, %s42
    %s45 = sphi 0, %s44
    %s59 = sphi 0, %s45
    %s65 = sphi 0, %s67
    %s68 = sphi 0, %s65
    %s69 = sphi 0, %s68
    %s85 = sphi 0, %s69
  $region4: #{_lambda_.37} parent=0 // loop_header_branch
    %11 = sbr.rel (%p9) target = $region8
  $region5: #{_lambda_.37} parent=0 // loop_body
    %s13 = ssub.s32 %s8, 1
    %s14 = ssub.s32 %s8, 2
    %s15 = sadd.s32 %s8, 1
    %s16 = ssub.s32 %s8, %s15
    %p17 = scmp.eq.s32.totalorder %s16, 0
    %s19 = sadd.s32 %s18, 1
    %s20 = scalar_select %p17, %s18, %s19
    %p23 = pneg %p17
    %p24 = scmp.eq.s32.totalorder %s8, 1
    %p25 = por %p23, %p24
    %p26 = scmp.ne.s32.totalorder %s18, %s21
    %p27 = scmp.eq.s32.totalorder %s8, 0
    %p28 = por %p26, %p27
    %p29 = scmp.ne.s32.totalorder %s18, %s21
    %p30 = scmp.eq.s32.totalorder %s13, 1
    %p31 = por %p29, %p30
    %p32 = scmp.ne.s32.totalorder %s21, %s22
    %p33 = scmp.eq.s32.totalorder %s13, 0
    %p34 = por %p32, %p33
    %p35 = scmp.ne.s32.totalorder %s21, %s22
    %p36 = scmp.eq.s32.totalorder %s14, 1
    %p37 = por %p35, %p36
    %p39 = scmp.ne.s32.totalorder %s22, %s38
    %p40 = scmp.eq.s32.totalorder %s14, 0
    %p41 = por %p39, %p40
    %s43 = sadd.s32 %s42, 1
    %p46 = scmp.eq.s32.totalorder %s8, 1
    %p47 = scmp.ne.s32.totalorder %s42, %s44
    %p48 = scmp.eq.s32.totalorder %s8, 0
    %p49 = por %p47, %p48
    %p50 = scmp.ne.s32.totalorder %s42, %s44
    %p51 = scmp.eq.s32.totalorder %s13, 1
    %p52 = por %p50, %p51
    %p53 = scmp.ne.s32.totalorder %s44, %s45
    %p54 = scmp.eq.s32.totalorder %s13, 0
    %p55 = por %p53, %p54
    %p56 = scmp.ne.s32.totalorder %s44, %s45
    %p57 = scmp.eq.s32.totalorder %s14, 1
    %p58 = por %p56, %p57
    %p60 = scmp.ne.s32.totalorder %s45, %s59
    %p61 = scmp.eq.s32.totalorder %s14, 0
    %p62 = por %p60, %p61
    %s63 = ssub.s32 %s8, %s15
    %p64 = scmp.eq.s32.totalorder %s63, 0
    %s66 = sadd.s32 %s65, 1
    %s67 = scalar_select %p64, %s65, %s66
    %p70 = pneg %p64
    %p71 = scmp.eq.s32.totalorder %s8, 1
    %p72 = por %p70, %p71
    %p73 = scmp.ne.s32.totalorder %s65, %s68
    %p74 = scmp.eq.s32.totalorder %s8, 0
    %p75 = por %p73, %p74
    %p76 = scmp.ne.s32.totalorder %s65, %s68
    %p77 = scmp.eq.s32.totalorder %s13, 1
    %p78 = por %p76, %p77
    %p79 = scmp.ne.s32.totalorder %s68, %s69
    %p80 = scmp.eq.s32.totalorder %s13, 0
    %p81 = por %p79, %p80
    %p82 = scmp.ne.s32.totalorder %s68, %s69
    %p83 = scmp.eq.s32.totalorder %s14, 1
    %p84 = por %p82, %p83
    %p86 = scmp.ne.s32.totalorder %s69, %s85
    %p87 = scmp.eq.s32.totalorder %s14, 0
    %p88 = por %p86, %p87
    %p89 = scmp.le.s32.totalorder 1, %s8
    %p90 = scmp.lt.s32.totalorder %s8, 3
    %p91 = pnand %p89, %p90
    %p92 = pneg %p91
    // Predicated region
    $region9: #{_lambda_.37} parent=5 // pred_check
      _
    $region10: #{_lambda_.37} parent=5 // pred_check_branch
      %94 = sbr.rel (%p91) target = $region12
    $region11: #{_lambda_.37} parent=5 // pred_region
      %s95 = ssub.s32 %s8, 1
      // Predicated region
      $region13: #{_lambda_.37} parent=11 // pred_check
        %p96 = pneg %p55
      $region14: #{_lambda_.37} parent=11 // pred_check_branch
        %98 = sbr.rel (%p96) target = $region16
      $region15: #{_lambda_.37} parent=11 // pred_region
        _
      $region16: #{_lambda_.37} parent=11 // pred_fallthru
        _
    $region12: #{_lambda_.37} parent=5 // pred_fallthru
      _
    %p99 = scmp.lt.s32.totalorder %s8, 2
    // Predicated region
    $region17: #{_lambda_.37} parent=5 // pred_check
      %p100 = pneg %p99
    $region18: #{_lambda_.37} parent=5 // pred_check_branch
      %102 = sbr.rel (%p100) target = $region20
    $region19: #{_lambda_.37} parent=5 // pred_region
      // Predicated region
      $region21: #{_lambda_.37} parent=19 // pred_check
        %p103 = pneg %p28
      $region22: #{_lambda_.37} parent=19 // pred_check_branch
        %105 = sbr.rel (%p103) target = $region24
      $region23: #{_lambda_.37} parent=19 // pred_region
        %s106 = smul.u32 8, %s8
        %p107 = scmp.lt.s32.totalorder %s106, 15
        %s108 = scalar_select %p107, %s106, 15
        %s109 = smul.addr %s108, 3
        %s110 = smul.addr %s109, 4
        %s111 = scalar_lea.vmem %s0, %s110
        %s112 = smul.u32 8, %s8
      $region24: #{_lambda_.37} parent=19 // pred_fallthru
        _
    $region20: #{_lambda_.37} parent=5 // pred_fallthru
      _
    %p113 = scmp.le.s32.totalorder 1, %s8
    %p114 = scmp.lt.s32.totalorder %s8, 3
    %p115 = pnand %p113, %p114
    %p116 = pneg %p115
    // Predicated region
    $region25: #{_lambda_.37} parent=5 // pred_check
      _
    $region26: #{_lambda_.37} parent=5 // pred_check_branch
      %118 = sbr.rel (%p115) target = $region28
    $region27: #{_lambda_.37} parent=5 // pred_region
      %s119 = ssub.s32 %s8, 1
      %s120 = smul.u32 8, %s13
      %p121 = scmp.lt.s32.totalorder %s120, 15
      %s122 = scalar_select %p121, %s120, 15
      %s123 = smul.addr %s122, 3
      %s124 = smul.addr %s123, 4
      %s125 = scalar_lea.vmem %s0, %s124
      %p126 = pneg %p34
      %p127 = pneg %p31
      %p128 = pneg %p55
      %p129 = pneg %p52
      %p130 = pneg %p81
      %p131 = pneg %p78
      %s132 = smul.u32 8, %s13
      %p133 = scmp.lt.s32.totalorder %s132, 15
      %s134 = scalar_select %p133, %s132, 15
      %s135 = smul.addr %s134, 8
      %s136 = scalar_lea.vmem %s2, %s135
      %s137 = smul.u32 8, %s13
      %p138 = scmp.lt.s32.totalorder %s137, 15
      %s139 = scalar_select %p138, %s137, 15
      %s140 = smul.addr %s139, 3
      %s141 = smul.addr %s140, 4
      %s142 = scalar_lea.vmem %s0, %s141
      %s143 = smul.u32 8, %s13
      %s144 = smul.u32 8, %s13
      %p145 = scmp.lt.s32.totalorder %s144, 15
      %s146 = scalar_select %p145, %s144, 15
      %s147 = smul.addr %s146, 8
      %s148 = scalar_lea.vmem %s2, %s147
      %s149 = smul.u32 8, %s13
      %v151 = vld [vmem:[%s142] sm:$0xff]
      %v152 = vld [vmem:[%s142 + $0x8] sm:$0xf]
      %v153 = vld [vmem:[%s142 + $0xc] sm:$0xff]
      %v154 = vld [vmem:[%s142 + $0x14] sm:$0xf]
      %v155 = vld [vmem:[%s142 + $0x18] sm:$0xff]
      %v156 = vld [vmem:[%s142 + $0x20] sm:$0xf]
      %v157 = vld [vmem:[%s142 + $0x24] sm:$0xff]
      %v158 = vld [vmem:[%s142 + $0x2c] sm:$0xf]
      %v159 = vld [vmem:[%s142 + $0x30] sm:$0xff]
      %v160 = vld [vmem:[%s142 + $0x38] sm:$0xf]
      %v161 = vld [vmem:[%s142 + $0x3c] sm:$0xff]
      %v162 = vld [vmem:[%s142 + $0x44] sm:$0xf]
      %v163 = vld [vmem:[%s142 + $0x48] sm:$0xff]
      %v164 = vld [vmem:[%s142 + $0x50] sm:$0xf]
      %v165 = vld [vmem:[%s142 + $0x54] sm:$0xff]
      %v166 = vld [vmem:[%s142 + $0x5c] sm:$0xf]
      %v167 = vmax.bf16 %v151, 0
      %v168 = vmax.bf16 %v152, 0
      %v169 = vmax.bf16 %v153, 0
      %v170 = vmax.bf16 %v154, 0
      %v171 = vmax.bf16 %v155, 0
      %v172 = vmax.bf16 %v156, 0
      %v173 = vmax.bf16 %v157, 0
      %v174 = vmax.bf16 %v158, 0
      %v175 = vmax.bf16 %v159, 0
      %v176 = vmax.bf16 %v160, 0
      %v177 = vmax.bf16 %v161, 0
      %v178 = vmax.bf16 %v162, 0
      %v179 = vmax.bf16 %v163, 0
      %v180 = vmax.bf16 %v164, 0
      %v181 = vmax.bf16 %v165, 0
      %v182 = vmax.bf16 %v166, 0
      %v183 = vld [vmem:[%s1] sm:$0xf]
      %v184 = vld [vmem:[%s1 + $0x4] sm:$0xf]
      %v185 = vld [vmem:[%s1 + $0x8] sm:$0xf]
      %v186 = vld [vmem:[%s1 + $0xc] sm:$0xf]
      %v187 = vld [vmem:[%s1 + $0x10] sm:$0xf]
      %v188 = vld [vmem:[%s1 + $0x14] sm:$0xf]
      %v189 = vld [vmem:[%s1 + $0x18] sm:$0xf]
      %v190 = vld [vmem:[%s1 + $0x1c] sm:$0xf]
      %v191 = vld [vmem:[%s1 + $0x20] sm:$0xf]
      %v192 = vld [vmem:[%s1 + $0x24] sm:$0xf]
      %v193 = vld [vmem:[%s1 + $0x28] sm:$0xf]
      %v194 = vld [vmem:[%s1 + $0x2c] sm:$0xf]
      %v195 = vld [vmem:[%s1 + $0x30] sm:$0xf]
      %v196 = vld [vmem:[%s1 + $0x34] sm:$0xf]
      %v197 = vld [vmem:[%s1 + $0x38] sm:$0xf]
      %v198 = vld [vmem:[%s1 + $0x3c] sm:$0xf]
      %v199 = vld [vmem:[%s1 + $0x40] sm:$0xf]
      %v200 = vld [vmem:[%s1 + $0x44] sm:$0xf]
      %v201 = vld [vmem:[%s1 + $0x48] sm:$0xf]
      %v202 = vld [vmem:[%s1 + $0x4c] sm:$0xf]
      %v203 = vld [vmem:[%s1 + $0x50] sm:$0xf]
      %v204 = vld [vmem:[%s1 + $0x54] sm:$0xf]
      %v205 = vld [vmem:[%s1 + $0x58] sm:$0xf]
      %v206 = vld [vmem:[%s1 + $0x5c] sm:$0xf]
      %v207 = vld [vmem:[%s1 + $0x60] sm:$0xf]
      %v208 = vld [vmem:[%s1 + $0x64] sm:$0xf]
      %v209 = vld [vmem:[%s1 + $0x68] sm:$0xf]
      %v210 = vld [vmem:[%s1 + $0x6c] sm:$0xf]
      %v211 = vld [vmem:[%s1 + $0x70] sm:$0xf]
      %v212 = vld [vmem:[%s1 + $0x74] sm:$0xf]
      %v213 = vld [vmem:[%s1 + $0x78] sm:$0xf]
      %v214 = vld [vmem:[%s1 + $0x7c] sm:$0xf]
      %v215 = vld [vmem:[%s1 + $0x80] sm:$0xf]
      %v216 = vld [vmem:[%s1 + $0x84] sm:$0xf]
      %v217 = vld [vmem:[%s1 + $0x88] sm:$0xf]
      %v218 = vld [vmem:[%s1 + $0x8c] sm:$0xf]
      %v219 = vld [vmem:[%s1 + $0x90] sm:$0xf]
      %v220 = vld [vmem:[%s1 + $0x94] sm:$0xf]
      %v221 = vld [vmem:[%s1 + $0x98] sm:$0xf]
      %v222 = vld [vmem:[%s1 + $0x9c] sm:$0xf]
      %v223 = vld [vmem:[%s1 + $0xa0] sm:$0x3]
      %v240 = vunpack.c.l.b16 %v167
      %v241 = vunpack.c.h.b16 %v167
      %v242 = vunpack.c.l.b16 %v168
      %v243 = vunpack.c.l.b16 %v169
      %v244 = vunpack.c.h.b16 %v169
      %v245 = vunpack.c.l.b16 %v170
      %v246 = vunpack.c.l.b16 %v171
      %v247 = vunpack.c.h.b16 %v171
      %v248 = vunpack.c.l.b16 %v172
      %v249 = vunpack.c.l.b16 %v173
      %v250 = vunpack.c.h.b16 %v173
      %v251 = vunpack.c.l.b16 %v174
      %v252 = vunpack.c.l.b16 %v175
      %v253 = vunpack.c.h.b16 %v175
      %v254 = vunpack.c.l.b16 %v176
      %v255 = vunpack.c.l.b16 %v177
      %v256 = vunpack.c.h.b16 %v177
      %v257 = vunpack.c.l.b16 %v178
      %v258 = vunpack.c.l.b16 %v179
      %v259 = vunpack.c.h.b16 %v179
      %v260 = vunpack.c.l.b16 %v180
      %v261 = vunpack.c.l.b16 %v181
      %v262 = vunpack.c.h.b16 %v181
      %v263 = vunpack.c.l.b16 %v182
      %v264 = vpack.c.b16 %v243, %v240
      %v265 = vpack.c.b16 %v244, %v241
      %v266 = vpack.c.b16 %v245, %v242
      %v267 = vpack.c.b16 %v249, %v246
      %v268 = vpack.c.b16 %v250, %v247
      %v269 = vpack.c.b16 %v251, %v248
      %v270 = vpack.c.b16 %v255, %v252
      %v271 = vpack.c.b16 %v256, %v253
      %v272 = vpack.c.b16 %v257, %v254
      %v273 = vpack.c.b16 %v261, %v258
      %v274 = vpack.c.b16 %v262, %v259
      %v275 = vpack.c.b16 %v263, %v260
      %v325 = vunpack.c.l.b16 %v183
      %v326 = vunpack.c.l.b16 %v184
      %v327 = vunpack.c.l.b16 %v185
      %v328 = vunpack.c.l.b16 %v186
      %v329 = vunpack.c.l.b16 %v187
      %v330 = vunpack.c.l.b16 %v188
      %v331 = vunpack.c.l.b16 %v189
      %v332 = vunpack.c.l.b16 %v190
      %v333 = vunpack.c.l.b16 %v191
      %v334 = vunpack.c.l.b16 %v192
      %v335 = vunpack.c.l.b16 %v193
      %v336 = vunpack.c.l.b16 %v194
      %v337 = vunpack.c.l.b16 %v195
      %v338 = vunpack.c.l.b16 %v196
      %v339 = vunpack.c.l.b16 %v197
      %v340 = vunpack.c.l.b16 %v198
      %v341 = vunpack.c.l.b16 %v199
      %v342 = vunpack.c.l.b16 %v200
      %v343 = vunpack.c.l.b16 %v201
      %v344 = vunpack.c.l.b16 %v202
      %v345 = vunpack.c.l.b16 %v203
      %v346 = vunpack.c.l.b16 %v204
      %v347 = vunpack.c.l.b16 %v205
      %v348 = vunpack.c.l.b16 %v206
      %v349 = vunpack.c.l.b16 %v207
      %v350 = vunpack.c.l.b16 %v208
      %v351 = vunpack.c.l.b16 %v209
      %v352 = vunpack.c.l.b16 %v210
      %v353 = vunpack.c.l.b16 %v211
      %v354 = vunpack.c.l.b16 %v212
      %v355 = vunpack.c.l.b16 %v213
      %v356 = vunpack.c.l.b16 %v214
      %v357 = vunpack.c.l.b16 %v215
      %v358 = vunpack.c.l.b16 %v216
      %v359 = vunpack.c.l.b16 %v217
      %v360 = vunpack.c.l.b16 %v218
      %v361 = vunpack.c.l.b16 %v219
      %v362 = vunpack.c.l.b16 %v220
      %v363 = vunpack.c.l.b16 %v221
      %v364 = vunpack.c.l.b16 %v222
      %v365 = vunpack.c.l.b16 %v223
      %v366 = vpack.c.b16 %v326, %v325
      %v367 = vpack.c.b16 %v328, %v327
      %v368 = vpack.c.b16 %v330, %v329
      %v369 = vpack.c.b16 %v332, %v331
      %v370 = vpack.c.b16 %v334, %v333
      %v371 = vpack.c.b16 %v336, %v335
      %v372 = vpack.c.b16 %v338, %v337
      %v373 = vpack.c.b16 %v340, %v339
      %v374 = vpack.c.b16 %v342, %v341
      %v375 = vpack.c.b16 %v344, %v343
      %v376 = vpack.c.b16 %v346, %v345
      %v377 = vpack.c.b16 %v348, %v347
      %v378 = vpack.c.b16 %v350, %v349
      %v379 = vpack.c.b16 %v352, %v351
      %v380 = vpack.c.b16 %v354, %v353
      %v381 = vpack.c.b16 %v356, %v355
      %v382 = vpack.c.b16 %v358, %v357
      %v383 = vpack.c.b16 %v360, %v359
      %v384 = vpack.c.b16 %v362, %v361
      %v385 = vpack.c.b16 %v364, %v363
      %v386 = vpack.c.b16 %v365, %v365
      %vm407 = vcmask 556032
      %v409 = vsel %vm407, %v266, 0
      %v412 = vsel %vm407, %v269, 0
      %v415 = vsel %vm407, %v272, 0
      %v418 = vsel %vm407, %v275, 0
      %vm420 = vcmask 1041408
      %v422 = vsel %vm420, %v386, 0
      %424 = vmatprep.subr.bf16.mxu0 0
      %425 = vmatpush1.bf16.msra.mxu0 %v373
      %426 = vmatprep.subr.bf16.mxu0 0
      %427 = vmatpush1.bf16.msra.mxu0 %v372
      %428 = vmatprep.subr.bf16.mxu0 0
      %429 = vmatpush1.bf16.msra.mxu0 %v371
      %430 = vmatprep.subr.bf16.mxu0 0
      %431 = vmatpush1.bf16.msra.mxu0 %v370
      %432 = vmatprep.subr.bf16.mxu0 0
      %433 = vmatpush1.bf16.msra.mxu0 %v369
      %434 = vmatprep.subr.bf16.mxu0 0
      %435 = vmatpush1.bf16.msra.mxu0 %v368
      %436 = vmatprep.subr.bf16.mxu0 0
      %437 = vmatpush1.bf16.msra.mxu0 %v367
      %438 = vmatprep.subr.bf16.mxu0 0
      %439 = vmatpush1.bf16.msra.mxu0 %v366
      %440 = vmatprep.subr.bf16.mxu0 0
      %441 = vmatpush2.bf16.msra.mxu0 %v381
      %442 = vmatprep.subr.bf16.mxu0 0
      %443 = vmatpush2.bf16.msra.mxu0 %v380
      %444 = vmatprep.subr.bf16.mxu0 0
      %445 = vmatpush2.bf16.msra.mxu0 %v379
      %446 = vmatprep.subr.bf16.mxu0 0
      %447 = vmatpush2.bf16.msra.mxu0 %v378
      %448 = vmatprep.subr.bf16.mxu0 0
      %449 = vmatpush2.bf16.msra.mxu0 %v377
      %450 = vmatprep.subr.bf16.mxu0 0
      %451 = vmatpush2.bf16.msra.mxu0 %v376
      %452 = vmatprep.subr.bf16.mxu0 0
      %453 = vmatpush2.bf16.msra.mxu0 %v375
      %454 = vmatprep.subr.bf16.mxu0 0
      %455 = vmatpush2.bf16.msra.mxu0 %v374
      %456 = vmatprep.mubr.bf16.mxu0 %v265
      %457 = vmatmul.mubr.bf16.gmra.mxu0 %v264
      %v458 = vpop.f32.mrf.mxu0
      %v459 = vadd.f32 0.0, %v458
      %v460 = vpop.f32.mrf.mxu0
      %v461 = vpop.f32.mrf.mxu0
      %v462 = vadd.f32 0.0, %v461
      %v463 = vpop.f32.mrf.mxu0
      %464 = vmatprep.mubr.bf16.mxu0 %v268
      %465 = vmatmul.mubr.bf16.gmra.mxu0 %v267
      %v466 = vpop.f32.mrf.mxu0
      %v467 = vadd.f32 0.0, %v466
      %v468 = vpop.f32.mrf.mxu0
      %v469 = vpop.f32.mrf.mxu0
      %v470 = vadd.f32 0.0, %v469
      %v471 = vpop.f32.mrf.mxu0
      %472 = vmatprep.mubr.bf16.mxu0 %v271
      %473 = vmatmul.mubr.bf16.gmra.mxu0 %v270
      %v474 = vpop.f32.mrf.mxu0
      %v475 = vadd.f32 0.0, %v474
      %v476 = vpop.f32.mrf.mxu0
      %v477 = vpop.f32.mrf.mxu0
      %v478 = vadd.f32 0.0, %v477
      %v479 = vpop.f32.mrf.mxu0
      %480 = vmatprep.mubr.bf16.mxu0 %v274
      %481 = vmatmul.mubr.bf16.gmra.mxu0 %v273
      %v482 = vpop.f32.mrf.mxu0
      %v483 = vadd.f32 0.0, %v482
      %v484 = vpop.f32.mrf.mxu0
      %v485 = vpop.f32.mrf.mxu0
      %v486 = vadd.f32 0.0, %v485
      %v487 = vpop.f32.mrf.mxu0
      %488 = vdwg.mxu0
      %489 = vmatprep.subr.bf16.mxu0 0
      %490 = vmatpush1.bf16.msra.mxu0 0
      %491 = vmatprep.subr.bf16.mxu0 0
      %492 = vmatpush1.bf16.msra.mxu0 0
      %493 = vmatprep.subr.bf16.mxu0 0
      %494 = vmatpush1.bf16.msra.mxu0 0
      %495 = vmatprep.subr.bf16.mxu0 0
      %496 = vmatpush1.bf16.msra.mxu0 %v422
      %497 = vmatprep.subr.bf16.mxu0 0
      %498 = vmatpush1.bf16.msra.mxu0 %v385
      %499 = vmatprep.subr.bf16.mxu0 0
      %500 = vmatpush1.bf16.msra.mxu0 %v384
      %501 = vmatprep.subr.bf16.mxu0 0
      %502 = vmatpush1.bf16.msra.mxu0 %v383
      %503 = vmatprep.subr.bf16.mxu0 0
      %504 = vmatpush1.bf16.msra.mxu0 %v382
      %505 = vmatprep.subr.bf16.mxu0 0
      %506 = vmatpush2.bf16.msra.mxu0 0
      %507 = vmatprep.subr.bf16.mxu0 0
      %508 = vmatpush2.bf16.msra.mxu0 0
      %509 = vmatprep.subr.bf16.mxu0 0
      %510 = vmatpush2.bf16.msra.mxu0 0
      %511 = vmatprep.subr.bf16.mxu0 0
      %512 = vmatpush2.bf16.msra.mxu0 0
      %513 = vmatprep.subr.bf16.mxu0 0
      %514 = vmatpush2.bf16.msra.mxu0 0
      %515 = vmatprep.subr.bf16.mxu0 0
      %516 = vmatpush2.bf16.msra.mxu0 0
      %517 = vmatprep.subr.bf16.mxu0 0
      %518 = vmatpush2.bf16.msra.mxu0 0
      %519 = vmatprep.subr.bf16.mxu0 0
      %520 = vmatpush2.bf16.msra.mxu0 0
      %521 = vmatprep.mubr.bf16.mxu0 0
      %522 = vmatmul.mubr.bf16.gmra.mxu0 %v409
      %v523 = vpop.f32.mrf.mxu0
      %v524 = vadd.f32 %v459, %v523
      %v525 = vpop.f32.mrf.mxu0
      %v526 = vpop.f32.mrf.mxu0
      %v527 = vadd.f32 %v462, %v526
      %v528 = vpop.f32.mrf.mxu0
      %529 = vmatprep.mubr.bf16.mxu0 0
      %530 = vmatmul.mubr.bf16.gmra.mxu0 %v412
      %v531 = vpop.f32.mrf.mxu0
      %v532 = vadd.f32 %v467, %v531
      %v533 = vpop.f32.mrf.mxu0
      %v534 = vpop.f32.mrf.mxu0
      %v535 = vadd.f32 %v470, %v534
      %v536 = vpop.f32.mrf.mxu0
      %537 = vmatprep.mubr.bf16.mxu0 0
      %538 = vmatmul.mubr.bf16.gmra.mxu0 %v415
      %v539 = vpop.f32.mrf.mxu0
      %v540 = vadd.f32 %v475, %v539
      %v541 = vpop.f32.mrf.mxu0
      %v542 = vpop.f32.mrf.mxu0
      %v543 = vadd.f32 %v478, %v542
      %v544 = vpop.f32.mrf.mxu0
      %545 = vmatprep.mubr.bf16.mxu0 0
      %546 = vmatmul.mubr.bf16.gmra.mxu0 %v418
      %v547 = vpop.f32.mrf.mxu0
      %v548 = vadd.f32 %v483, %v547
      %v549 = vpop.f32.mrf.mxu0
      %v550 = vpop.f32.mrf.mxu0
      %v551 = vadd.f32 %v486, %v550
      %v552 = vpop.f32.mrf.mxu0
      %553 = vdwg.mxu0
      %vm554 = vcmask 130048
      %555 = vst.msk [vmem:[%s148] sm:$0xff] %vm554, %v524
      %556 = vst.msk [vmem:[%s148 + $0x8] sm:$0xff] %vm554, %v527
      %557 = vst.msk [vmem:[%s148 + $0x10] sm:$0xff] %vm554, %v532
      %558 = vst.msk [vmem:[%s148 + $0x18] sm:$0xff] %vm554, %v535
      %559 = vst.msk [vmem:[%s148 + $0x20] sm:$0xff] %vm554, %v540
      %560 = vst.msk [vmem:[%s148 + $0x28] sm:$0xff] %vm554, %v543
      %561 = vst.msk [vmem:[%s148 + $0x30] sm:$0xff] %vm554, %v548
      %562 = vst.msk [vmem:[%s148 + $0x38] sm:$0xff] %vm554, %v551
      %s563 = smul.u32 8, %s13
      %p564 = scmp.lt.s32.totalorder %s563, 15
      %s565 = scalar_select %p564, %s563, 15
      %s566 = smul.addr %s565, 8
      %s567 = scalar_lea.vmem %s2, %s566
      // Predicated region
      $region29: #{_lambda_.37} parent=27 // pred_check
        %p568 = pneg %p78
      $region30: #{_lambda_.37} parent=27 // pred_check_branch
        %570 = sbr.rel (%p568) target = $region32
      $region31: #{_lambda_.37} parent=27 // pred_region
        %s571 = smul.u32 8, %s13
      $region32: #{_lambda_.37} parent=27 // pred_fallthru
        _
    $region28: #{_lambda_.37} parent=5 // pred_fallthru
      _
    %p572 = scmp.le.s32.totalorder 2, %s8
    // Predicated region
    $region33: #{_lambda_.37} parent=5 // pred_check
      %p573 = pneg %p572
    $region34: #{_lambda_.37} parent=5 // pred_check_branch
      %575 = sbr.rel (%p573) target = $region36
    $region35: #{_lambda_.37} parent=5 // pred_region
      %s576 = ssub.s32 %s8, 2
      // Predicated region
      $region37: #{_lambda_.37} parent=35 // pred_check
        %p577 = pneg %p84
      $region38: #{_lambda_.37} parent=35 // pred_check_branch
        %579 = sbr.rel (%p577) target = $region40
      $region39: #{_lambda_.37} parent=35 // pred_region
        %s580 = smul.u32 8, %s14
        %p581 = scmp.lt.s32.totalorder %s580, 15
        %s582 = scalar_select %p581, %s580, 15
        %s583 = smul.addr %s582, 8
        %s584 = scalar_lea.vmem %s2, %s583
      $region40: #{_lambda_.37} parent=35 // pred_fallthru
        _
    $region36: #{_lambda_.37} parent=5 // pred_fallthru
      _
  $region6: #{_lambda_.37} parent=0 // loop_footer
    %s12 = sadd.s32 1, %s8
  $region7: #{_lambda_.37} parent=0 // loop_footer_branch
    %7 = sbr.rel target = $region3
  $region8: #{_lambda_.37} parent=0 // loop_exit
    _

// kernel: _lambda_.38
$region0: #{_lambda_.38}
  #allocation0 [shape = 'u32[]', space=smem, size = 0x4, offset = 0x4, fixed_abs, tag = 'smem constant byte address 0x4 - core index']
  #allocation1 [shape = 'u32[144,128]{1,0:T(1,128)}', space=vmem, size = 0x12000, scoped, tag = 'internal scratch']
  %s0 = inlined_call_operand.vmem [shape: bf16[128,136], index: 0, kind: input, shape index: {}]
  %s1 = inlined_call_operand.vmem [shape: bf16[136,8], index: 1, kind: input, shape index: {}]
  %s2 = inlined_call_operand.vmem [shape: f32[128,8], index: 2, kind: output, shape index: {}]
  %s3 = sld [smem:[#allocation0]]
  $region41: #{_lambda_.38} parent=0
    _
  %s5 = ssub.s32 1, %s3
  %s6 = scalar_select 0, %s5, %s3
  loop: start=0, step=1, limit=4
  $region2: #{_lambda_.38} parent=0 // loop_pre_header
    _
  $region3: #{_lambda_.38} parent=0 // loop_header
    %s8 = sphi 0, %s12
    %p9 = scmp.ge.s32.totalorder %s8, 4
    %s18 = sphi 0, %s20
    %s21 = sphi 0, %s18
    %s22 = sphi 0, %s21
    %s38 = sphi 0, %s22
    %s42 = sphi 0, %s42
    %s44 = sphi 0, %s42
    %s45 = sphi 0, %s44
    %s59 = sphi 0, %s45
    %s65 = sphi 0, %s67
    %s68 = sphi 0, %s65
    %s69 = sphi 0, %s68
    %s85 = sphi 0, %s69
  $region4: #{_lambda_.38} parent=0 // loop_header_branch
    %11 = sbr.rel (%p9) target = $region8
  $region5: #{_lambda_.38} parent=0 // loop_body
    %s13 = ssub.s32 %s8, 1
    %s14 = ssub.s32 %s8, 2
    %s15 = sadd.s32 %s8, 1
    %s16 = ssub.s32 %s8, %s15
    %p17 = scmp.eq.s32.totalorder %s16, 0
    %s19 = sadd.s32 %s18, 1
    %s20 = scalar_select %p17, %s18, %s19
    %p23 = pneg %p17
    %p24 = scmp.eq.s32.totalorder %s8, 1
    %p25 = por %p23, %p24
    %p26 = scmp.ne.s32.totalorder %s18, %s21
    %p27 = scmp.eq.s32.totalorder %s8, 0
    %p28 = por %p26, %p27
    %p29 = scmp.ne.s32.totalorder %s18, %s21
    %p30 = scmp.eq.s32.totalorder %s13, 1
    %p31 = por %p29, %p30
    %p32 = scmp.ne.s32.totalorder %s21, %s22
    %p33 = scmp.eq.s32.totalorder %s13, 0
    %p34 = por %p32, %p33
    %p35 = scmp.ne.s32.totalorder %s21, %s22
    %p36 = scmp.eq.s32.totalorder %s14, 1
    %p37 = por %p35, %p36
    %p39 = scmp.ne.s32.totalorder %s22, %s38
    %p40 = scmp.eq.s32.totalorder %s14, 0
    %p41 = por %p39, %p40
    %s43 = sadd.s32 %s42, 1
    %p46 = scmp.eq.s32.totalorder %s8, 1
    %p47 = scmp.ne.s32.totalorder %s42, %s44
    %p48 = scmp.eq.s32.totalorder %s8, 0
    %p49 = por %p47, %p48
    %p50 = scmp.ne.s32.totalorder %s42, %s44
    %p51 = scmp.eq.s32.totalorder %s13, 1
    %p52 = por %p50, %p51
    %p53 = scmp.ne.s32.totalorder %s44, %s45
    %p54 = scmp.eq.s32.totalorder %s13, 0
    %p55 = por %p53, %p54
    %p56 = scmp.ne.s32.totalorder %s44, %s45
    %p57 = scmp.eq.s32.totalorder %s14, 1
    %p58 = por %p56, %p57
    %p60 = scmp.ne.s32.totalorder %s45, %s59
    %p61 = scmp.eq.s32.totalorder %s14, 0
    %p62 = por %p60, %p61
    %s63 = ssub.s32 %s8, %s15
    %p64 = scmp.eq.s32.totalorder %s63, 0
    %s66 = sadd.s32 %s65, 1
    %s67 = scalar_select %p64, %s65, %s66
    %p70 = pneg %p64
    %p71 = scmp.eq.s32.totalorder %s8, 1
    %p72 = por %p70, %p71
    %p73 = scmp.ne.s32.totalorder %s65, %s68
    %p74 = scmp.eq.s32.totalorder %s8, 0
    %p75 = por %p73, %p74
    %p76 = scmp.ne.s32.totalorder %s65, %s68
    %p77 = scmp.eq.s32.totalorder %s13, 1
    %p78 = por %p76, %p77
    %p79 = scmp.ne.s32.totalorder %s68, %s69
    %p80 = scmp.eq.s32.totalorder %s13, 0
    %p81 = por %p79, %p80
    %p82 = scmp.ne.s32.totalorder %s68, %s69
    %p83 = scmp.eq.s32.totalorder %s14, 1
    %p84 = por %p82, %p83
    %p86 = scmp.ne.s32.totalorder %s69, %s85
    %p87 = scmp.eq.s32.totalorder %s14, 0
    %p88 = por %p86, %p87
    %p89 = scmp.le.s32.totalorder 1, %s8
    %p90 = scmp.lt.s32.totalorder %s8, 3
    %p91 = pnand %p89, %p90
    %p92 = pneg %p91
    // Predicated region
    $region9: #{_lambda_.38} parent=5 // pred_check
      _
    $region10: #{_lambda_.38} parent=5 // pred_check_branch
      %94 = sbr.rel (%p91) target = $region12
    $region11: #{_lambda_.38} parent=5 // pred_region
      %s95 = ssub.s32 %s8, 1
      // Predicated region
      $region13: #{_lambda_.38} parent=11 // pred_check
        %p96 = pneg %p55
      $region14: #{_lambda_.38} parent=11 // pred_check_branch
        %98 = sbr.rel (%p96) target = $region16
      $region15: #{_lambda_.38} parent=11 // pred_region
        _
      $region16: #{_lambda_.38} parent=11 // pred_fallthru
        _
    $region12: #{_lambda_.38} parent=5 // pred_fallthru
      _
    %p99 = scmp.lt.s32.totalorder %s8, 2
    // Predicated region
    $region17: #{_lambda_.38} parent=5 // pred_check
      %p100 = pneg %p99
    $region18: #{_lambda_.38} parent=5 // pred_check_branch
      %102 = sbr.rel (%p100) target = $region20
    $region19: #{_lambda_.38} parent=5 // pred_region
      // Predicated region
      $region21: #{_lambda_.38} parent=19 // pred_check
        %p103 = pneg %p28
      $region22: #{_lambda_.38} parent=19 // pred_check_branch
        %105 = sbr.rel (%p103) target = $region24
      $region23: #{_lambda_.38} parent=19 // pred_region
        %s106 = smul.u32 8, %s8
        %p107 = scmp.lt.s32.totalorder %s106, 15
        %s108 = scalar_select %p107, %s106, 15
        %s109 = smul.addr %s108, 2
        %s110 = smul.addr %s109, 4
        %s111 = scalar_lea.vmem %s0, %s110
        %s112 = smul.u32 8, %s8
      $region24: #{_lambda_.38} parent=19 // pred_fallthru
        _
    $region20: #{_lambda_.38} parent=5 // pred_fallthru
      _
    %p113 = scmp.le.s32.totalorder 1, %s8
    %p114 = scmp.lt.s32.totalorder %s8, 3
    %p115 = pnand %p113, %p114
    %p116 = pneg %p115
    // Predicated region
    $region25: #{_lambda_.38} parent=5 // pred_check
      _
    $region26: #{_lambda_.38} parent=5 // pred_check_branch
      %118 = sbr.rel (%p115) target = $region28
    $region27: #{_lambda_.38} parent=5 // pred_region
      %s119 = ssub.s32 %s8, 1
      %s120 = smul.u32 8, %s13
      %p121 = scmp.lt.s32.totalorder %s120, 15
      %s122 = scalar_select %p121, %s120, 15
      %s123 = smul.addr %s122, 2
      %s124 = smul.addr %s123, 4
      %s125 = scalar_lea.vmem %s0, %s124
      %p126 = pneg %p34
      %p127 = pneg %p31
      %p128 = pneg %p55
      %p129 = pneg %p52
      %p130 = pneg %p81
      %p131 = pneg %p78
      %s132 = smul.u32 8, %s13
      %p133 = scmp.lt.s32.totalorder %s132, 15
      %s134 = scalar_select %p133, %s132, 15
      %s135 = smul.addr %s134, 8
      %s136 = scalar_lea.vmem %s2, %s135
      %s137 = smul.u32 8, %s13
      %p138 = scmp.lt.s32.totalorder %s137, 15
      %s139 = scalar_select %p138, %s137, 15
      %s140 = smul.addr %s139, 2
      %s141 = smul.addr %s140, 4
      %s142 = scalar_lea.vmem %s0, %s141
      %s143 = smul.u32 8, %s13
      %s144 = smul.u32 8, %s13
      %p145 = scmp.lt.s32.totalorder %s144, 15
      %s146 = scalar_select %p145, %s144, 15
      %s147 = smul.addr %s146, 8
      %s148 = scalar_lea.vmem %s2, %s147
      %s149 = smul.u32 8, %s13
      %v151 = vld [vmem:[%s142] sm:$0xff]
      %v152 = vld [vmem:[%s142 + $0x8] sm:$0xff]
      %v153 = vld [vmem:[%s142 + $0x10] sm:$0xff]
      %v154 = vld [vmem:[%s142 + $0x18] sm:$0xff]
      %v155 = vld [vmem:[%s142 + $0x20] sm:$0xff]
      %v156 = vld [vmem:[%s142 + $0x28] sm:$0xff]
      %v157 = vld [vmem:[%s142 + $0x30] sm:$0xff]
      %v158 = vld [vmem:[%s142 + $0x38] sm:$0xff]
      %v159 = vmax.bf16 %v151, 0
      %v160 = vmax.bf16 %v152, 0
      %v161 = vmax.bf16 %v153, 0
      %v162 = vmax.bf16 %v154, 0
      %v163 = vmax.bf16 %v155, 0
      %v164 = vmax.bf16 %v156, 0
      %v165 = vmax.bf16 %v157, 0
      %v166 = vmax.bf16 %v158, 0
      %v167 = vld [vmem:[%s1] sm:$0xf]
      %v168 = vld [vmem:[%s1 + $0x4] sm:$0xf]
      %v169 = vld [vmem:[%s1 + $0x8] sm:$0xf]
      %v170 = vld [vmem:[%s1 + $0xc] sm:$0xf]
      %v171 = vld [vmem:[%s1 + $0x10] sm:$0xf]
      %v172 = vld [vmem:[%s1 + $0x14] sm:$0xf]
      %v173 = vld [vmem:[%s1 + $0x18] sm:$0xf]
      %v174 = vld [vmem:[%s1 + $0x1c] sm:$0xf]
      %v175 = vld [vmem:[%s1 + $0x20] sm:$0xf]
      %v176 = vld [vmem:[%s1 + $0x24] sm:$0xf]
      %v177 = vld [vmem:[%s1 + $0x28] sm:$0xf]
      %v178 = vld [vmem:[%s1 + $0x2c] sm:$0xf]
      %v179 = vld [vmem:[%s1 + $0x30] sm:$0xf]
      %v180 = vld [vmem:[%s1 + $0x34] sm:$0xf]
      %v181 = vld [vmem:[%s1 + $0x38] sm:$0xf]
      %v182 = vld [vmem:[%s1 + $0x3c] sm:$0xf]
      %v183 = vld [vmem:[%s1 + $0x40] sm:$0xf]
      %v192 = vunpack.c.l.b16 %v159
      %v193 = vunpack.c.h.b16 %v159
      %v194 = vunpack.c.l.b16 %v160
      %v195 = vunpack.c.h.b16 %v160
      %v196 = vunpack.c.l.b16 %v161
      %v197 = vunpack.c.h.b16 %v161
      %v198 = vunpack.c.l.b16 %v162
      %v199 = vunpack.c.h.b16 %v162
      %v200 = vunpack.c.l.b16 %v163
      %v201 = vunpack.c.h.b16 %v163
      %v202 = vunpack.c.l.b16 %v164
      %v203 = vunpack.c.h.b16 %v164
      %v204 = vunpack.c.l.b16 %v165
      %v205 = vunpack.c.h.b16 %v165
      %v206 = vunpack.c.l.b16 %v166
      %v207 = vunpack.c.h.b16 %v166
      %v208 = vpack.c.b16 %v194, %v192
      %v209 = vpack.c.b16 %v195, %v193
      %v210 = vpack.c.b16 %v198, %v196
      %v211 = vpack.c.b16 %v199, %v197
      %v212 = vpack.c.b16 %v202, %v200
      %v213 = vpack.c.b16 %v203, %v201
      %v214 = vpack.c.b16 %v206, %v204
      %v215 = vpack.c.b16 %v207, %v205
      %v237 = vunpack.c.l.b16 %v167
      %v238 = vunpack.c.l.b16 %v168
      %v239 = vunpack.c.l.b16 %v169
      %v240 = vunpack.c.l.b16 %v170
      %v241 = vunpack.c.l.b16 %v171
      %v242 = vunpack.c.l.b16 %v172
      %v243 = vunpack.c.l.b16 %v173
      %v244 = vunpack.c.l.b16 %v174
      %v245 = vunpack.c.l.b16 %v175
      %v246 = vunpack.c.l.b16 %v176
      %v247 = vunpack.c.l.b16 %v177
      %v248 = vunpack.c.l.b16 %v178
      %v249 = vunpack.c.l.b16 %v179
      %v250 = vunpack.c.l.b16 %v180
      %v251 = vunpack.c.l.b16 %v181
      %v252 = vunpack.c.l.b16 %v182
      %v253 = vunpack.c.l.b16 %v183
      %v254 = vpack.c.b16 %v238, %v237
      %v255 = vpack.c.b16 %v240, %v239
      %v256 = vpack.c.b16 %v242, %v241
      %v257 = vpack.c.b16 %v244, %v243
      %v258 = vpack.c.b16 %v246, %v245
      %v259 = vpack.c.b16 %v248, %v247
      %v260 = vpack.c.b16 %v250, %v249
      %v261 = vpack.c.b16 %v252, %v251
      %v262 = vpack.c.b16 %v253, %v253
      %vm271 = vcmask 64512
      %v273 = vsel %vm271, %v209, 0
      %v276 = vsel %vm271, %v211, 0
      %v279 = vsel %vm271, %v213, 0
      %v282 = vsel %vm271, %v215, 0
      %vm284 = vcmask 1043456
      %v286 = vsel %vm284, %v262, 0
      %288 = vmatprep.subr.bf16.mxu0 0
      %289 = vmatpush1.bf16.msra.mxu0 %v261
      %290 = vmatprep.subr.bf16.mxu0 0
      %291 = vmatpush1.bf16.msra.mxu0 %v260
      %292 = vmatprep.subr.bf16.mxu0 0
      %293 = vmatpush1.bf16.msra.mxu0 %v259
      %294 = vmatprep.subr.bf16.mxu0 0
      %295 = vmatpush1.bf16.msra.mxu0 %v258
      %296 = vmatprep.subr.bf16.mxu0 0
      %297 = vmatpush1.bf16.msra.mxu0 %v257
      %298 = vmatprep.subr.bf16.mxu0 0
      %299 = vmatpush1.bf16.msra.mxu0 %v256
      %300 = vmatprep.subr.bf16.mxu0 0
      %301 = vmatpush1.bf16.msra.mxu0 %v255
      %302 = vmatprep.subr.bf16.mxu0 0
      %303 = vmatpush1.bf16.msra.mxu0 %v254
      %304 = vmatprep.subr.bf16.mxu0 0
      %305 = vmatpush2.bf16.msra.mxu0 0
      %306 = vmatprep.subr.bf16.mxu0 0
      %307 = vmatpush2.bf16.msra.mxu0 0
      %308 = vmatprep.subr.bf16.mxu0 0
      %309 = vmatpush2.bf16.msra.mxu0 0
      %310 = vmatprep.subr.bf16.mxu0 0
      %311 = vmatpush2.bf16.msra.mxu0 0
      %312 = vmatprep.subr.bf16.mxu0 0
      %313 = vmatpush2.bf16.msra.mxu0 0
      %314 = vmatprep.subr.bf16.mxu0 0
      %315 = vmatpush2.bf16.msra.mxu0 0
      %316 = vmatprep.subr.bf16.mxu0 0
      %317 = vmatpush2.bf16.msra.mxu0 0
      %318 = vmatprep.subr.bf16.mxu0 0
      %319 = vmatpush2.bf16.msra.mxu0 %v286
      %320 = vmatprep.mubr.bf16.mxu0 %v273
      %321 = vmatmul.mubr.bf16.gmra.mxu0 %v208
      %v322 = vpop.f32.mrf.mxu0
      %v323 = vadd.f32 0.0, %v322
      %v324 = vpop.f32.mrf.mxu0
      %v325 = vpop.f32.mrf.mxu0
      %v326 = vadd.f32 0.0, %v325
      %v327 = vpop.f32.mrf.mxu0
      %328 = vmatprep.mubr.bf16.mxu0 %v276
      %329 = vmatmul.mubr.bf16.gmra.mxu0 %v210
      %v330 = vpop.f32.mrf.mxu0
      %v331 = vadd.f32 0.0, %v330
      %v332 = vpop.f32.mrf.mxu0
      %v333 = vpop.f32.mrf.mxu0
      %v334 = vadd.f32 0.0, %v333
      %v335 = vpop.f32.mrf.mxu0
      %336 = vmatprep.mubr.bf16.mxu0 %v279
      %337 = vmatmul.mubr.bf16.gmra.mxu0 %v212
      %v338 = vpop.f32.mrf.mxu0
      %v339 = vadd.f32 0.0, %v338
      %v340 = vpop.f32.mrf.mxu0
      %v341 = vpop.f32.mrf.mxu0
      %v342 = vadd.f32 0.0, %v341
      %v343 = vpop.f32.mrf.mxu0
      %344 = vmatprep.mubr.bf16.mxu0 %v282
      %345 = vmatmul.mubr.bf16.gmra.mxu0 %v214
      %v346 = vpop.f32.mrf.mxu0
      %v347 = vadd.f32 0.0, %v346
      %v348 = vpop.f32.mrf.mxu0
      %v349 = vpop.f32.mrf.mxu0
      %v350 = vadd.f32 0.0, %v349
      %v351 = vpop.f32.mrf.mxu0
      %352 = vdwg.mxu0
      %353 = vst.msk [vmem:[%s148] sm:$0xff] %vm271, %v323
      %354 = vst.msk [vmem:[%s148 + $0x8] sm:$0xff] %vm271, %v326
      %355 = vst.msk [vmem:[%s148 + $0x10] sm:$0xff] %vm271, %v331
      %356 = vst.msk [vmem:[%s148 + $0x18] sm:$0xff] %vm271, %v334
      %357 = vst.msk [vmem:[%s148 + $0x20] sm:$0xff] %vm271, %v339
      %358 = vst.msk [vmem:[%s148 + $0x28] sm:$0xff] %vm271, %v342
      %359 = vst.msk [vmem:[%s148 + $0x30] sm:$0xff] %vm271, %v347
      %360 = vst.msk [vmem:[%s148 + $0x38] sm:$0xff] %vm271, %v350
      %s361 = smul.u32 8, %s13
      %p362 = scmp.lt.s32.totalorder %s361, 15
      %s363 = scalar_select %p362, %s361, 15
      %s364 = smul.addr %s363, 8
      %s365 = scalar_lea.vmem %s2, %s364
      // Predicated region
      $region29: #{_lambda_.38} parent=27 // pred_check
        %p366 = pneg %p78
      $region30: #{_lambda_.38} parent=27 // pred_check_branch
        %368 = sbr.rel (%p366) target = $region32
      $region31: #{_lambda_.38} parent=27 // pred_region
        %s369 = smul.u32 8, %s13
      $region32: #{_lambda_.38} parent=27 // pred_fallthru
        _
    $region28: #{_lambda_.38} parent=5 // pred_fallthru
      _
    %p370 = scmp.le.s32.totalorder 2, %s8
    // Predicated region
    $region33: #{_lambda_.38} parent=5 // pred_check
      %p371 = pneg %p370
    $region34: #{_lambda_.38} parent=5 // pred_check_branch
      %373 = sbr.rel (%p371) target = $region36
    $region35: #{_lambda_.38} parent=5 // pred_region
      %s374 = ssub.s32 %s8, 2
      // Predicated region
      $region37: #{_lambda_.38} parent=35 // pred_check
        %p375 = pneg %p84
      $region38: #{_lambda_.38} parent=35 // pred_check_branch
        %377 = sbr.rel (%p375) target = $region40
      $region39: #{_lambda_.38} parent=35 // pred_region
        %s378 = smul.u32 8, %s14
        %p379 = scmp.lt.s32.totalorder %s378, 15
        %s380 = scalar_select %p379, %s378, 15
        %s381 = smul.addr %s380, 8
        %s382 = scalar_lea.vmem %s2, %s381
      $region40: #{_lambda_.38} parent=35 // pred_fallthru
        _
    $region36: #{_lambda_.38} parent=5 // pred_fallthru
      _
  $region6: #{_lambda_.38} parent=0 // loop_footer
    %s12 = sadd.s32 1, %s8
  $region7: #{_lambda_.38} parent=0 // loop_footer_branch
    %7 = sbr.rel target = $region3
  $region8: #{_lambda_.38} parent=0 // loop_exit
    _

// kernel: _lambda_.40
$region0: #{_lambda_.40}
  #allocation0 [shape = 'u32[]', space=smem, size = 0x4, offset = 0x4, fixed_abs, tag = 'smem constant byte address 0x4 - core index']
  #allocation1 [shape = 'u32[144,128]{1,0:T(1,128)}', space=vmem, size = 0x12000, scoped, tag = 'internal scratch']
  %s0 = inlined_call_operand.vmem [shape: bf16[128,16], index: 0, kind: input, shape index: {}]
  %s1 = inlined_call_operand.vmem [shape: bf16[16,16], index: 1, kind: input, shape index: {}]
  %s2 = inlined_call_operand.vmem [shape: f32[128,16], index: 2, kind: output, shape index: {}]
  %s3 = sld [smem:[#allocation0]]
  $region41: #{_lambda_.40} parent=0
    _
  %s5 = ssub.s32 1, %s3
  %s6 = scalar_select 0, %s5, %s3
  loop: start=0, step=1, limit=4
  $region2: #{_lambda_.40} parent=0 // loop_pre_header
    _
  $region3: #{_lambda_.40} parent=0 // loop_header
    %s8 = sphi 0, %s12
    %p9 = scmp.ge.s32.totalorder %s8, 4
    %s18 = sphi 0, %s20
    %s21 = sphi 0, %s18
    %s22 = sphi 0, %s21
    %s38 = sphi 0, %s22
    %s42 = sphi 0, %s42
    %s44 = sphi 0, %s42
    %s45 = sphi 0, %s44
    %s59 = sphi 0, %s45
    %s65 = sphi 0, %s67
    %s68 = sphi 0, %s65
    %s69 = sphi 0, %s68
    %s85 = sphi 0, %s69
  $region4: #{_lambda_.40} parent=0 // loop_header_branch
    %11 = sbr.rel (%p9) target = $region8
  $region5: #{_lambda_.40} parent=0 // loop_body
    %s13 = ssub.s32 %s8, 1
    %s14 = ssub.s32 %s8, 2
    %s15 = sadd.s32 %s8, 1
    %s16 = ssub.s32 %s8, %s15
    %p17 = scmp.eq.s32.totalorder %s16, 0
    %s19 = sadd.s32 %s18, 1
    %s20 = scalar_select %p17, %s18, %s19
    %p23 = pneg %p17
    %p24 = scmp.eq.s32.totalorder %s8, 1
    %p25 = por %p23, %p24
    %p26 = scmp.ne.s32.totalorder %s18, %s21
    %p27 = scmp.eq.s32.totalorder %s8, 0
    %p28 = por %p26, %p27
    %p29 = scmp.ne.s32.totalorder %s18, %s21
    %p30 = scmp.eq.s32.totalorder %s13, 1
    %p31 = por %p29, %p30
    %p32 = scmp.ne.s32.totalorder %s21, %s22
    %p33 = scmp.eq.s32.totalorder %s13, 0
    %p34 = por %p32, %p33
    %p35 = scmp.ne.s32.totalorder %s21, %s22
    %p36 = scmp.eq.s32.totalorder %s14, 1
    %p37 = por %p35, %p36
    %p39 = scmp.ne.s32.totalorder %s22, %s38
    %p40 = scmp.eq.s32.totalorder %s14, 0
    %p41 = por %p39, %p40
    %s43 = sadd.s32 %s42, 1
    %p46 = scmp.eq.s32.totalorder %s8, 1
    %p47 = scmp.ne.s32.totalorder %s42, %s44
    %p48 = scmp.eq.s32.totalorder %s8, 0
    %p49 = por %p47, %p48
    %p50 = scmp.ne.s32.totalorder %s42, %s44
    %p51 = scmp.eq.s32.totalorder %s13, 1
    %p52 = por %p50, %p51
    %p53 = scmp.ne.s32.totalorder %s44, %s45
    %p54 = scmp.eq.s32.totalorder %s13, 0
    %p55 = por %p53, %p54
    %p56 = scmp.ne.s32.totalorder %s44, %s45
    %p57 = scmp.eq.s32.totalorder %s14, 1
    %p58 = por %p56, %p57
    %p60 = scmp.ne.s32.totalorder %s45, %s59
    %p61 = scmp.eq.s32.totalorder %s14, 0
    %p62 = por %p60, %p61
    %s63 = ssub.s32 %s8, %s15
    %p64 = scmp.eq.s32.totalorder %s63, 0
    %s66 = sadd.s32 %s65, 1
    %s67 = scalar_select %p64, %s65, %s66
    %p70 = pneg %p64
    %p71 = scmp.eq.s32.totalorder %s8, 1
    %p72 = por %p70, %p71
    %p73 = scmp.ne.s32.totalorder %s65, %s68
    %p74 = scmp.eq.s32.totalorder %s8, 0
    %p75 = por %p73, %p74
    %p76 = scmp.ne.s32.totalorder %s65, %s68
    %p77 = scmp.eq.s32.totalorder %s13, 1
    %p78 = por %p76, %p77
    %p79 = scmp.ne.s32.totalorder %s68, %s69
    %p80 = scmp.eq.s32.totalorder %s13, 0
    %p81 = por %p79, %p80
    %p82 = scmp.ne.s32.totalorder %s68, %s69
    %p83 = scmp.eq.s32.totalorder %s14, 1
    %p84 = por %p82, %p83
    %p86 = scmp.ne.s32.totalorder %s69, %s85
    %p87 = scmp.eq.s32.totalorder %s14, 0
    %p88 = por %p86, %p87
    %p89 = scmp.le.s32.totalorder 1, %s8
    %p90 = scmp.lt.s32.totalorder %s8, 3
    %p91 = pnand %p89, %p90
    %p92 = pneg %p91
    // Predicated region
    $region9: #{_lambda_.40} parent=5 // pred_check
      _
    $region10: #{_lambda_.40} parent=5 // pred_check_branch
      %94 = sbr.rel (%p91) target = $region12
    $region11: #{_lambda_.40} parent=5 // pred_region
      %s95 = ssub.s32 %s8, 1
      // Predicated region
      $region13: #{_lambda_.40} parent=11 // pred_check
        %p96 = pneg %p55
      $region14: #{_lambda_.40} parent=11 // pred_check_branch
        %98 = sbr.rel (%p96) target = $region16
      $region15: #{_lambda_.40} parent=11 // pred_region
        _
      $region16: #{_lambda_.40} parent=11 // pred_fallthru
        _
    $region12: #{_lambda_.40} parent=5 // pred_fallthru
      _
    %p99 = scmp.lt.s32.totalorder %s8, 2
    // Predicated region
    $region17: #{_lambda_.40} parent=5 // pred_check
      %p100 = pneg %p99
    $region18: #{_lambda_.40} parent=5 // pred_check_branch
      %102 = sbr.rel (%p100) target = $region20
    $region19: #{_lambda_.40} parent=5 // pred_region
      // Predicated region
      $region21: #{_lambda_.40} parent=19 // pred_check
        %p103 = pneg %p28
      $region22: #{_lambda_.40} parent=19 // pred_check_branch
        %105 = sbr.rel (%p103) target = $region24
      $region23: #{_lambda_.40} parent=19 // pred_region
        %s106 = smul.u32 8, %s8
        %p107 = scmp.lt.s32.totalorder %s106, 15
        %s108 = scalar_select %p107, %s106, 15
        %s109 = smul.addr %s108, 4
        %s110 = scalar_lea.vmem %s0, %s109
        %s111 = smul.u32 8, %s8
      $region24: #{_lambda_.40} parent=19 // pred_fallthru
        _
    $region20: #{_lambda_.40} parent=5 // pred_fallthru
      _
    %p112 = scmp.le.s32.totalorder 1, %s8
    %p113 = scmp.lt.s32.totalorder %s8, 3
    %p114 = pnand %p112, %p113
    %p115 = pneg %p114
    // Predicated region
    $region25: #{_lambda_.40} parent=5 // pred_check
      _
    $region26: #{_lambda_.40} parent=5 // pred_check_branch
      %117 = sbr.rel (%p114) target = $region28
    $region27: #{_lambda_.40} parent=5 // pred_region
      %s118 = ssub.s32 %s8, 1
      %s119 = smul.u32 8, %s13
      %p120 = scmp.lt.s32.totalorder %s119, 15
      %s121 = scalar_select %p120, %s119, 15
      %s122 = smul.addr %s121, 4
      %s123 = scalar_lea.vmem %s0, %s122
      %p124 = pneg %p34
      %p125 = pneg %p31
      %p126 = pneg %p55
      %p127 = pneg %p52
      %p128 = pneg %p81
      %p129 = pneg %p78
      %s130 = smul.u32 8, %s13
      %p131 = scmp.lt.s32.totalorder %s130, 15
      %s132 = scalar_select %p131, %s130, 15
      %s133 = smul.addr %s132, 8
      %s134 = scalar_lea.vmem %s2, %s133
      %s135 = smul.u32 8, %s13
      %p136 = scmp.lt.s32.totalorder %s135, 15
      %s137 = scalar_select %p136, %s135, 15
      %s138 = smul.addr %s137, 4
      %s139 = scalar_lea.vmem %s0, %s138
      %s140 = smul.u32 8, %s13
      %s141 = smul.u32 8, %s13
      %p142 = scmp.lt.s32.totalorder %s141, 15
      %s143 = scalar_select %p142, %s141, 15
      %s144 = smul.addr %s143, 8
      %s145 = scalar_lea.vmem %s2, %s144
      %s146 = smul.u32 8, %s13
      %v148 = vld [vmem:[%s139] sm:$0xf]
      %v149 = vld [vmem:[%s139 + $0x4] sm:$0xf]
      %v150 = vld [vmem:[%s139 + $0x8] sm:$0xf]
      %v151 = vld [vmem:[%s139 + $0xc] sm:$0xf]
      %v152 = vld [vmem:[%s139 + $0x10] sm:$0xf]
      %v153 = vld [vmem:[%s139 + $0x14] sm:$0xf]
      %v154 = vld [vmem:[%s139 + $0x18] sm:$0xf]
      %v155 = vld [vmem:[%s139 + $0x1c] sm:$0xf]
      %v156 = vmax.bf16 %v148, 0
      %v157 = vmax.bf16 %v149, 0
      %v158 = vmax.bf16 %v150, 0
      %v159 = vmax.bf16 %v151, 0
      %v160 = vmax.bf16 %v152, 0
      %v161 = vmax.bf16 %v153, 0
      %v162 = vmax.bf16 %v154, 0
      %v163 = vmax.bf16 %v155, 0
      %v164 = vld [vmem:[%s1] sm:$0xf]
      %v165 = vld [vmem:[%s1 + $0x4] sm:$0xf]
      %v174 = vunpack.c.l.b16 %v156
      %v175 = vunpack.c.l.b16 %v157
      %v176 = vunpack.c.l.b16 %v158
      %v177 = vunpack.c.l.b16 %v159
      %v178 = vunpack.c.l.b16 %v160
      %v179 = vunpack.c.l.b16 %v161
      %v180 = vunpack.c.l.b16 %v162
      %v181 = vunpack.c.l.b16 %v163
      %v182 = vpack.c.b16 %v175, %v174
      %v183 = vpack.c.b16 %v177, %v176
      %v184 = vpack.c.b16 %v179, %v178
      %v185 = vpack.c.b16 %v181, %v180
      %v188 = vunpack.c.l.b16 %v164
      %v189 = vunpack.c.l.b16 %v165
      %v190 = vpack.c.b16 %v189, %v188
      %vm192 = vcmask 130048
      %v194 = vsel %vm192, %v182, 0
      %v197 = vsel %vm192, %v183, 0
      %v200 = vsel %vm192, %v184, 0
      %v203 = vsel %vm192, %v185, 0
      %205 = vmatprep.subr.bf16.mxu0 0
      %206 = vmatpush1.bf16.msra.mxu0 0
      %207 = vmatprep.subr.bf16.mxu0 0
      %208 = vmatpush1.bf16.msra.mxu0 0
      %209 = vmatprep.subr.bf16.mxu0 0
      %210 = vmatpush1.bf16.msra.mxu0 0
      %211 = vmatprep.subr.bf16.mxu0 0
      %212 = vmatpush1.bf16.msra.mxu0 0
      %213 = vmatprep.subr.bf16.mxu0 0
      %214 = vmatpush1.bf16.msra.mxu0 0
      %215 = vmatprep.subr.bf16.mxu0 0
      %216 = vmatpush1.bf16.msra.mxu0 0
      %217 = vmatprep.subr.bf16.mxu0 0
      %218 = vmatpush1.bf16.msra.mxu0 0
      %219 = vmatprep.subr.bf16.mxu0 0
      %220 = vmatpush1.bf16.msra.mxu0 %v190
      %221 = vmatprep.subr.bf16.mxu0 0
      %222 = vmatpush2.bf16.msra.mxu0 0
      %223 = vmatprep.subr.bf16.mxu0 0
      %224 = vmatpush2.bf16.msra.mxu0 0
      %225 = vmatprep.subr.bf16.mxu0 0
      %226 = vmatpush2.bf16.msra.mxu0 0
      %227 = vmatprep.subr.bf16.mxu0 0
      %228 = vmatpush2.bf16.msra.mxu0 0
      %229 = vmatprep.subr.bf16.mxu0 0
      %230 = vmatpush2.bf16.msra.mxu0 0
      %231 = vmatprep.subr.bf16.mxu0 0
      %232 = vmatpush2.bf16.msra.mxu0 0
      %233 = vmatprep.subr.bf16.mxu0 0
      %234 = vmatpush2.bf16.msra.mxu0 0
      %235 = vmatprep.subr.bf16.mxu0 0
      %236 = vmatpush2.bf16.msra.mxu0 0
      %237 = vmatprep.mubr.bf16.mxu0 0
      %238 = vmatmul.mubr.bf16.gmra.mxu0 %v194
      %v239 = vpop.f32.mrf.mxu0
      %v240 = vadd.f32 0.0, %v239
      %v241 = vpop.f32.mrf.mxu0
      %v242 = vpop.f32.mrf.mxu0
      %v243 = vadd.f32 0.0, %v242
      %v244 = vpop.f32.mrf.mxu0
      %245 = vmatprep.mubr.bf16.mxu0 0
      %246 = vmatmul.mubr.bf16.gmra.mxu0 %v197
      %v247 = vpop.f32.mrf.mxu0
      %v248 = vadd.f32 0.0, %v247
      %v249 = vpop.f32.mrf.mxu0
      %v250 = vpop.f32.mrf.mxu0
      %v251 = vadd.f32 0.0, %v250
      %v252 = vpop.f32.mrf.mxu0
      %253 = vmatprep.mubr.bf16.mxu0 0
      %254 = vmatmul.mubr.bf16.gmra.mxu0 %v200
      %v255 = vpop.f32.mrf.mxu0
      %v256 = vadd.f32 0.0, %v255
      %v257 = vpop.f32.mrf.mxu0
      %v258 = vpop.f32.mrf.mxu0
      %v259 = vadd.f32 0.0, %v258
      %v260 = vpop.f32.mrf.mxu0
      %261 = vmatprep.mubr.bf16.mxu0 0
      %262 = vmatmul.mubr.bf16.gmra.mxu0 %v203
      %v263 = vpop.f32.mrf.mxu0
      %v264 = vadd.f32 0.0, %v263
      %v265 = vpop.f32.mrf.mxu0
      %v266 = vpop.f32.mrf.mxu0
      %v267 = vadd.f32 0.0, %v266
      %v268 = vpop.f32.mrf.mxu0
      %269 = vdwg.mxu0
      %270 = vst.msk [vmem:[%s145] sm:$0xff] %vm192, %v240
      %271 = vst.msk [vmem:[%s145 + $0x8] sm:$0xff] %vm192, %v243
      %272 = vst.msk [vmem:[%s145 + $0x10] sm:$0xff] %vm192, %v248
      %273 = vst.msk [vmem:[%s145 + $0x18] sm:$0xff] %vm192, %v251
      %274 = vst.msk [vmem:[%s145 + $0x20] sm:$0xff] %vm192, %v256
      %275 = vst.msk [vmem:[%s145 + $0x28] sm:$0xff] %vm192, %v259
      %276 = vst.msk [vmem:[%s145 + $0x30] sm:$0xff] %vm192, %v264
      %277 = vst.msk [vmem:[%s145 + $0x38] sm:$0xff] %vm192, %v267
      %s278 = smul.u32 8, %s13
      %p279 = scmp.lt.s32.totalorder %s278, 15
      %s280 = scalar_select %p279, %s278, 15
      %s281 = smul.addr %s280, 8
      %s282 = scalar_lea.vmem %s2, %s281
      // Predicated region
      $region29: #{_lambda_.40} parent=27 // pred_check
        %p283 = pneg %p78
      $region30: #{_lambda_.40} parent=27 // pred_check_branch
        %285 = sbr.rel (%p283) target = $region32
      $region31: #{_lambda_.40} parent=27 // pred_region
        %s286 = smul.u32 8, %s13
      $region32: #{_lambda_.40} parent=27 // pred_fallthru
        _
    $region28: #{_lambda_.40} parent=5 // pred_fallthru
      _
    %p287 = scmp.le.s32.totalorder 2, %s8
    // Predicated region
    $region33: #{_lambda_.40} parent=5 // pred_check
      %p288 = pneg %p287
    $region34: #{_lambda_.40} parent=5 // pred_check_branch
      %290 = sbr.rel (%p288) target = $region36
    $region35: #{_lambda_.40} parent=5 // pred_region
      %s291 = ssub.s32 %s8, 2
      // Predicated region
      $region37: #{_lambda_.40} parent=35 // pred_check
        %p292 = pneg %p84
      $region38: #{_lambda_.40} parent=35 // pred_check_branch
        %294 = sbr.rel (%p292) target = $region40
      $region39: #{_lambda_.40} parent=35 // pred_region
        %s295 = smul.u32 8, %s14
        %p296 = scmp.lt.s32.totalorder %s295, 15
        %s297 = scalar_select %p296, %s295, 15
        %s298 = smul.addr %s297, 8
        %s299 = scalar_lea.vmem %s2, %s298
      $region40: #{_lambda_.40} parent=35 // pred_fallthru
        _
    $region36: #{_lambda_.40} parent=5 // pred_fallthru
      _
  $region6: #{_lambda_.40} parent=0 // loop_footer
    %s12 = sadd.s32 1, %s8
  $region7: #{_lambda_.40} parent=0 // loop_footer_branch
    %7 = sbr.rel target = $region3
  $region8: #{_lambda_.40} parent=0 // loop_exit
    _

// kernel: _lambda_.43
$region0: #{_lambda_.43}
  #allocation0 [shape = 'u32[]', space=smem, size = 0x4, offset = 0x4, fixed_abs, tag = 'smem constant byte address 0x4 - core index']
  #allocation1 [shape = 'u32[144,128]{1,0:T(1,128)}', space=vmem, size = 0x12000, scoped, tag = 'internal scratch']
  %s0 = inlined_call_operand.vmem [shape: bf16[32,648], index: 0, kind: input, shape index: {}]
  %s1 = inlined_call_operand.vmem [shape: bf16[648,80], index: 1, kind: input, shape index: {}]
  %s2 = inlined_call_operand.vmem [shape: f32[32,80], index: 2, kind: output, shape index: {}]
  %s3 = sld [smem:[#allocation0]]
  $region41: #{_lambda_.43} parent=0
    _
  %s5 = ssub.s32 1, %s3
  %s6 = scalar_select 0, %s5, %s3
  loop: start=0, step=1, limit=4
  $region2: #{_lambda_.43} parent=0 // loop_pre_header
    _
  $region3: #{_lambda_.43} parent=0 // loop_header
    %s8 = sphi 0, %s12
    %p9 = scmp.ge.s32.totalorder %s8, 4
    %s18 = sphi 0, %s20
    %s21 = sphi 0, %s18
    %s22 = sphi 0, %s21
    %s38 = sphi 0, %s22
    %s42 = sphi 0, %s42
    %s44 = sphi 0, %s42
    %s45 = sphi 0, %s44
    %s59 = sphi 0, %s45
    %s65 = sphi 0, %s67
    %s68 = sphi 0, %s65
    %s69 = sphi 0, %s68
    %s85 = sphi 0, %s69
  $region4: #{_lambda_.43} parent=0 // loop_header_branch
    %11 = sbr.rel (%p9) target = $region8
  $region5: #{_lambda_.43} parent=0 // loop_body
    %s13 = ssub.s32 %s8, 1
    %s14 = ssub.s32 %s8, 2
    %s15 = sadd.s32 %s8, 1
    %s16 = ssub.s32 %s8, %s15
    %p17 = scmp.eq.s32.totalorder %s16, 0
    %s19 = sadd.s32 %s18, 1
    %s20 = scalar_select %p17, %s18, %s19
    %p23 = pneg %p17
    %p24 = scmp.eq.s32.totalorder %s8, 1
    %p25 = por %p23, %p24
    %p26 = scmp.ne.s32.totalorder %s18, %s21
    %p27 = scmp.eq.s32.totalorder %s8, 0
    %p28 = por %p26, %p27
    %p29 = scmp.ne.s32.totalorder %s18, %s21
    %p30 = scmp.eq.s32.totalorder %s13, 1
    %p31 = por %p29, %p30
    %p32 = scmp.ne.s32.totalorder %s21, %s22
    %p33 = scmp.eq.s32.totalorder %s13, 0
    %p34 = por %p32, %p33
    %p35 = scmp.ne.s32.totalorder %s21, %s22
    %p36 = scmp.eq.s32.totalorder %s14, 1
    %p37 = por %p35, %p36
    %p39 = scmp.ne.s32.totalorder %s22, %s38
    %p40 = scmp.eq.s32.totalorder %s14, 0
    %p41 = por %p39, %p40
    %s43 = sadd.s32 %s42, 1
    %p46 = scmp.eq.s32.totalorder %s8, 1
    %p47 = scmp.ne.s32.totalorder %s42, %s44
    %p48 = scmp.eq.s32.totalorder %s8, 0
    %p49 = por %p47, %p48
    %p50 = scmp.ne.s32.totalorder %s42, %s44
    %p51 = scmp.eq.s32.totalorder %s13, 1
    %p52 = por %p50, %p51
    %p53 = scmp.ne.s32.totalorder %s44, %s45
    %p54 = scmp.eq.s32.totalorder %s13, 0
    %p55 = por %p53, %p54
    %p56 = scmp.ne.s32.totalorder %s44, %s45
    %p57 = scmp.eq.s32.totalorder %s14, 1
    %p58 = por %p56, %p57
    %p60 = scmp.ne.s32.totalorder %s45, %s59
    %p61 = scmp.eq.s32.totalorder %s14, 0
    %p62 = por %p60, %p61
    %s63 = ssub.s32 %s8, %s15
    %p64 = scmp.eq.s32.totalorder %s63, 0
    %s66 = sadd.s32 %s65, 1
    %s67 = scalar_select %p64, %s65, %s66
    %p70 = pneg %p64
    %p71 = scmp.eq.s32.totalorder %s8, 1
    %p72 = por %p70, %p71
    %p73 = scmp.ne.s32.totalorder %s65, %s68
    %p74 = scmp.eq.s32.totalorder %s8, 0
    %p75 = por %p73, %p74
    %p76 = scmp.ne.s32.totalorder %s65, %s68
    %p77 = scmp.eq.s32.totalorder %s13, 1
    %p78 = por %p76, %p77
    %p79 = scmp.ne.s32.totalorder %s68, %s69
    %p80 = scmp.eq.s32.totalorder %s13, 0
    %p81 = por %p79, %p80
    %p82 = scmp.ne.s32.totalorder %s68, %s69
    %p83 = scmp.eq.s32.totalorder %s14, 1
    %p84 = por %p82, %p83
    %p86 = scmp.ne.s32.totalorder %s69, %s85
    %p87 = scmp.eq.s32.totalorder %s14, 0
    %p88 = por %p86, %p87
    %p89 = scmp.le.s32.totalorder 1, %s8
    %p90 = scmp.lt.s32.totalorder %s8, 3
    %p91 = pnand %p89, %p90
    %p92 = pneg %p91
    // Predicated region
    $region9: #{_lambda_.43} parent=5 // pred_check
      _
    $region10: #{_lambda_.43} parent=5 // pred_check_branch
      %94 = sbr.rel (%p91) target = $region12
    $region11: #{_lambda_.43} parent=5 // pred_region
      %s95 = ssub.s32 %s8, 1
      // Predicated region
      $region13: #{_lambda_.43} parent=11 // pred_check
        %p96 = pneg %p55
      $region14: #{_lambda_.43} parent=11 // pred_check_branch
        %98 = sbr.rel (%p96) target = $region16
      $region15: #{_lambda_.43} parent=11 // pred_region
        _
      $region16: #{_lambda_.43} parent=11 // pred_fallthru
        _
    $region12: #{_lambda_.43} parent=5 // pred_fallthru
      _
    %p99 = scmp.lt.s32.totalorder %s8, 2
    // Predicated region
    $region17: #{_lambda_.43} parent=5 // pred_check
      %p100 = pneg %p99
    $region18: #{_lambda_.43} parent=5 // pred_check_branch
      %102 = sbr.rel (%p100) target = $region20
    $region19: #{_lambda_.43} parent=5 // pred_region
      // Predicated region
      $region21: #{_lambda_.43} parent=19 // pred_check
        %p103 = pneg %p28
      $region22: #{_lambda_.43} parent=19 // pred_check_branch
        %105 = sbr.rel (%p103) target = $region24
      $region23: #{_lambda_.43} parent=19 // pred_region
        %s106 = smul.u32 2, %s8
        %p107 = scmp.lt.s32.totalorder %s106, 3
        %s108 = scalar_select %p107, %s106, 3
        %s109 = smul.addr %s108, 6
        %s110 = smul.addr %s109, 4
        %s111 = scalar_lea.vmem %s0, %s110
        %s112 = smul.u32 2, %s8
      $region24: #{_lambda_.43} parent=19 // pred_fallthru
        _
    $region20: #{_lambda_.43} parent=5 // pred_fallthru
      _
    %p113 = scmp.le.s32.totalorder 1, %s8
    %p114 = scmp.lt.s32.totalorder %s8, 3
    %p115 = pnand %p113, %p114
    %p116 = pneg %p115
    // Predicated region
    $region25: #{_lambda_.43} parent=5 // pred_check
      _
    $region26: #{_lambda_.43} parent=5 // pred_check_branch
      %118 = sbr.rel (%p115) target = $region28
    $region27: #{_lambda_.43} parent=5 // pred_region
      %s119 = ssub.s32 %s8, 1
      %s120 = smul.u32 2, %s13
      %p121 = scmp.lt.s32.totalorder %s120, 3
      %s122 = scalar_select %p121, %s120, 3
      %s123 = smul.addr %s122, 6
      %s124 = smul.addr %s123, 4
      %s125 = scalar_lea.vmem %s0, %s124
      %p126 = pneg %p34
      %p127 = pneg %p31
      %p128 = pneg %p55
      %p129 = pneg %p52
      %p130 = pneg %p81
      %p131 = pneg %p78
      %s132 = smul.u32 2, %s13
      %p133 = scmp.lt.s32.totalorder %s132, 3
      %s134 = scalar_select %p133, %s132, 3
      %s135 = smul.addr %s134, 8
      %s136 = scalar_lea.vmem %s2, %s135
      %s137 = smul.u32 2, %s13
      %p138 = scmp.lt.s32.totalorder %s137, 3
      %s139 = scalar_select %p138, %s137, 3
      %s140 = smul.addr %s139, 6
      %s141 = smul.addr %s140, 4
      %s142 = scalar_lea.vmem %s0, %s141
      %s143 = smul.u32 2, %s13
      %s144 = smul.u32 2, %s13
      %p145 = scmp.lt.s32.totalorder %s144, 3
      %s146 = scalar_select %p145, %s144, 3
      %s147 = smul.addr %s146, 8
      %s148 = scalar_lea.vmem %s2, %s147
      %s149 = smul.u32 2, %s13
      %v151 = vld [vmem:[%s142] sm:$0xff]
      %v152 = vld [vmem:[%s142 + $0x8] sm:$0xff]
      %v153 = vld [vmem:[%s142 + $0x10] sm:$0xff]
      %v154 = vld [vmem:[%s142 + $0x18] sm:$0xff]
      %v155 = vld [vmem:[%s142 + $0x20] sm:$0xff]
      %v156 = vld [vmem:[%s142 + $0x28] sm:$0xff]
      %v157 = vmax.bf16 %v151, 0
      %v158 = vmax.bf16 %v152, 0
      %v159 = vmax.bf16 %v153, 0
      %v160 = vmax.bf16 %v154, 0
      %v161 = vmax.bf16 %v155, 0
      %v162 = vmax.bf16 %v156, 0
      %v163 = vld [vmem:[%s1] sm:$0xf]
      %v164 = vld [vmem:[%s1 + $0x4] sm:$0xf]
      %v165 = vld [vmem:[%s1 + $0x8] sm:$0xf]
      %v166 = vld [vmem:[%s1 + $0xc] sm:$0xf]
      %v167 = vld [vmem:[%s1 + $0x10] sm:$0xf]
      %v168 = vld [vmem:[%s1 + $0x14] sm:$0xf]
      %v169 = vld [vmem:[%s1 + $0x18] sm:$0xf]
      %v170 = vld [vmem:[%s1 + $0x1c] sm:$0xf]
      %v171 = vld [vmem:[%s1 + $0x20] sm:$0xf]
      %v172 = vld [vmem:[%s1 + $0x24] sm:$0xf]
      %v173 = vld [vmem:[%s1 + $0x28] sm:$0xf]
      %v174 = vld [vmem:[%s1 + $0x2c] sm:$0xf]
      %v175 = vld [vmem:[%s1 + $0x30] sm:$0xf]
      %v176 = vld [vmem:[%s1 + $0x34] sm:$0xf]
      %v177 = vld [vmem:[%s1 + $0x38] sm:$0xf]
      %v178 = vld [vmem:[%s1 + $0x3c] sm:$0xf]
      %v179 = vld [vmem:[%s1 + $0x40] sm:$0xf]
      %v180 = vld [vmem:[%s1 + $0x44] sm:$0xf]
      %v181 = vld [vmem:[%s1 + $0x48] sm:$0xf]
      %v182 = vld [vmem:[%s1 + $0x4c] sm:$0xf]
      %v183 = vld [vmem:[%s1 + $0x50] sm:$0xf]
      %v184 = vld [vmem:[%s1 + $0x54] sm:$0xf]
      %v185 = vld [vmem:[%s1 + $0x58] sm:$0xf]
      %v186 = vld [vmem:[%s1 + $0x5c] sm:$0xf]
      %v187 = vld [vmem:[%s1 + $0x60] sm:$0xf]
      %v188 = vld [vmem:[%s1 + $0x64] sm:$0xf]
      %v189 = vld [vmem:[%s1 + $0x68] sm:$0xf]
      %v190 = vld [vmem:[%s1 + $0x6c] sm:$0xf]
      %v191 = vld [vmem:[%s1 + $0x70] sm:$0xf]
      %v192 = vld [vmem:[%s1 + $0x74] sm:$0xf]
      %v193 = vld [vmem:[%s1 + $0x78] sm:$0xf]
      %v194 = vld [vmem:[%s1 + $0x7c] sm:$0xf]
      %v195 = vld [vmem:[%s1 + $0x80] sm:$0xf]
      %v196 = vld [vmem:[%s1 + $0x84] sm:$0xf]
      %v197 = vld [vmem:[%s1 + $0x88] sm:$0xf]
      %v198 = vld [vmem:[%s1 + $0x8c] sm:$0xf]
      %v199 = vld [vmem:[%s1 + $0x90] sm:$0xf]
      %v200 = vld [vmem:[%s1 + $0x94] sm:$0xf]
      %v201 = vld [vmem:[%s1 + $0x98] sm:$0xf]
      %v202 = vld [vmem:[%s1 + $0x9c] sm:$0xf]
      %v203 = vld [vmem:[%s1 + $0xa0] sm:$0xf]
      %v204 = vld [vmem:[%s1 + $0xa4] sm:$0xf]
      %v205 = vld [vmem:[%s1 + $0xa8] sm:$0xf]
      %v206 = vld [vmem:[%s1 + $0xac] sm:$0xf]
      %v207 = vld [vmem:[%s1 + $0xb0] sm:$0xf]
      %v208 = vld [vmem:[%s1 + $0xb4] sm:$0xf]
      %v209 = vld [vmem:[%s1 + $0xb8] sm:$0xf]
      %v210 = vld [vmem:[%s1 + $0xbc] sm:$0xf]
      %v211 = vld [vmem:[%s1 + $0xc0] sm:$0xf]
      %v212 = vld [vmem:[%s1 + $0xc4] sm:$0xf]
      %v213 = vld [vmem:[%s1 + $0xc8] sm:$0xf]
      %v214 = vld [vmem:[%s1 + $0xcc] sm:$0xf]
      %v215 = vld [vmem:[%s1 + $0xd0] sm:$0xf]
      %v216 = vld [vmem:[%s1 + $0xd4] sm:$0xf]
      %v217 = vld [vmem:[%s1 + $0xd8] sm:$0xf]
      %v218 = vld [vmem:[%s1 + $0xdc] sm:$0xf]
      %v219 = vld [vmem:[%s1 + $0xe0] sm:$0xf]
      %v220 = vld [vmem:[%s1 + $0xe4] sm:$0xf]
      %v221 = vld [vmem:[%s1 + $0xe8] sm:$0xf]
      %v222 = vld [vmem:[%s1 + $0xec] sm:$0xf]
      %v223 = vld [vmem:[%s1 + $0xf0] sm:$0xf]
      %v224 = vld [vmem:[%s1 + $0xf4] sm:$0xf]
      %v225 = vld [vmem:[%s1 + $0xf8] sm:$0xf]
      %v226 = vld [vmem:[%s1 + $0xfc] sm:$0xf]
      %v227 = vld [vmem:[%s1 + $0x100] sm:$0xf]
      %v228 = vld [vmem:[%s1 + $0x104] sm:$0xf]
      %v229 = vld [vmem:[%s1 + $0x108] sm:$0xf]
      %v230 = vld [vmem:[%s1 + $0x10c] sm:$0xf]
      %v231 = vld [vmem:[%s1 + $0x110] sm:$0xf]
      %v232 = vld [vmem:[%s1 + $0x114] sm:$0xf]
      %v233 = vld [vmem:[%s1 + $0x118] sm:$0xf]
      %v234 = vld [vmem:[%s1 + $0x11c] sm:$0xf]
      %v235 = vld [vmem:[%s1 + $0x120] sm:$0xf]
      %v236 = vld [vmem:[%s1 + $0x124] sm:$0xf]
      %v237 = vld [vmem:[%s1 + $0x128] sm:$0xf]
      %v238 = vld [vmem:[%s1 + $0x12c] sm:$0xf]
      %v239 = vld [vmem:[%s1 + $0x130] sm:$0xf]
      %v240 = vld [vmem:[%s1 + $0x134] sm:$0xf]
      %v241 = vld [vmem:[%s1 + $0x138] sm:$0xf]
      %v242 = vld [vmem:[%s1 + $0x13c] sm:$0xf]
      %v243 = vld [vmem:[%s1 + $0x140] sm:$0xf]
      %v250 = vunpack.c.l.b16 %v157
      %v251 = vunpack.c.h.b16 %v157
      %v252 = vunpack.c.l.b16 %v158
      %v253 = vunpack.c.h.b16 %v158
      %v254 = vunpack.c.l.b16 %v159
      %v255 = vunpack.c.h.b16 %v159
      %v256 = vunpack.c.l.b16 %v160
      %v257 = vunpack.c.h.b16 %v160
      %v258 = vunpack.c.l.b16 %v161
      %v259 = vunpack.c.h.b16 %v161
      %v260 = vunpack.c.l.b16 %v162
      %v261 = vunpack.c.h.b16 %v162
      %v262 = vpack.c.b16 %v256, %v250
      %v263 = vpack.c.b16 %v257, %v251
      %v264 = vpack.c.b16 %v258, %v252
      %v265 = vpack.c.b16 %v259, %v253
      %v266 = vpack.c.b16 %v260, %v254
      %v267 = vpack.c.b16 %v261, %v255
      %v354 = vunpack.c.l.b16 %v163
      %v355 = vunpack.c.l.b16 %v164
      %v356 = vunpack.c.l.b16 %v165
      %v357 = vunpack.c.l.b16 %v166
      %v358 = vunpack.c.l.b16 %v167
      %v359 = vunpack.c.l.b16 %v168
      %v360 = vunpack.c.l.b16 %v169
      %v361 = vunpack.c.l.b16 %v170
      %v362 = vunpack.c.l.b16 %v171
      %v363 = vunpack.c.l.b16 %v172
      %v364 = vunpack.c.l.b16 %v173
      %v365 = vunpack.c.l.b16 %v174
      %v366 = vunpack.c.l.b16 %v175
      %v367 = vunpack.c.l.b16 %v176
      %v368 = vunpack.c.l.b16 %v177
      %v369 = vunpack.c.l.b16 %v178
      %v370 = vunpack.c.l.b16 %v179
      %v371 = vunpack.c.l.b16 %v180
      %v372 = vunpack.c.l.b16 %v181
      %v373 = vunpack.c.l.b16 %v182
      %v374 = vunpack.c.l.b16 %v183
      %v375 = vunpack.c.l.b16 %v184
      %v376 = vunpack.c.l.b16 %v185
      %v377 = vunpack.c.l.b16 %v186
      %v378 = vunpack.c.l.b16 %v187
      %v379 = vunpack.c.l.b16 %v188
      %v380 = vunpack.c.l.b16 %v189
      %v381 = vunpack.c.l.b16 %v190
      %v382 = vunpack.c.l.b16 %v191
      %v383 = vunpack.c.l.b16 %v192
      %v384 = vunpack.c.l.b16 %v193
      %v385 = vunpack.c.l.b16 %v194
      %v386 = vunpack.c.l.b16 %v195
      %v387 = vunpack.c.l.b16 %v196
      %v388 = vunpack.c.l.b16 %v197
      %v389 = vunpack.c.l.b16 %v198
      %v390 = vunpack.c.l.b16 %v199
      %v391 = vunpack.c.l.b16 %v200
      %v392 = vunpack.c.l.b16 %v201
      %v393 = vunpack.c.l.b16 %v202
      %v394 = vunpack.c.l.b16 %v203
      %v395 = vunpack.c.l.b16 %v204
      %v396 = vunpack.c.l.b16 %v205
      %v397 = vunpack.c.l.b16 %v206
      %v398 = vunpack.c.l.b16 %v207
      %v399 = vunpack.c.l.b16 %v208
      %v400 = vunpack.c.l.b16 %v209
      %v401 = vunpack.c.l.b16 %v210
      %v402 = vunpack.c.l.b16 %v211
      %v403 = vunpack.c.l.b16 %v212
      %v404 = vunpack.c.l.b16 %v213
      %v405 = vunpack.c.l.b16 %v214
      %v406 = vunpack.c.l.b16 %v215
      %v407 = vunpack.c.l.b16 %v216
      %v408 = vunpack.c.l.b16 %v217
      %v409 = vunpack.c.l.b16 %v218
      %v410 = vunpack.c.l.b16 %v219
      %v411 = vunpack.c.l.b16 %v220
      %v412 = vunpack.c.l.b16 %v221
      %v413 = vunpack.c.l.b16 %v222
      %v414 = vunpack.c.l.b16 %v223
      %v415 = vunpack.c.l.b16 %v224
      %v416 = vunpack.c.l.b16 %v225
      %v417 = vunpack.c.l.b16 %v226
      %v418 = vunpack.c.l.b16 %v227
      %v419 = vunpack.c.l.b16 %v228
      %v420 = vunpack.c.l.b16 %v229
      %v421 = vunpack.c.l.b16 %v230
      %v422 = vunpack.c.l.b16 %v231
      %v423 = vunpack.c.l.b16 %v232
      %v424 = vunpack.c.l.b16 %v233
      %v425 = vunpack.c.l.b16 %v234
      %v426 = vunpack.c.l.b16 %v235
      %v427 = vunpack.c.l.b16 %v236
      %v428 = vunpack.c.l.b16 %v237
      %v429 = vunpack.c.l.b16 %v238
      %v430 = vunpack.c.l.b16 %v239
      %v431 = vunpack.c.l.b16 %v240
      %v432 = vunpack.c.l.b16 %v241
      %v433 = vunpack.c.l.b16 %v242
      %v434 = vunpack.c.l.b16 %v243
      %v435 = vpack.c.b16 %v355, %v354
      %v436 = vpack.c.b16 %v357, %v356
      %v437 = vpack.c.b16 %v359, %v358
      %v438 = vpack.c.b16 %v361, %v360
      %v439 = vpack.c.b16 %v363, %v362
      %v440 = vpack.c.b16 %v365, %v364
      %v441 = vpack.c.b16 %v367, %v366
      %v442 = vpack.c.b16 %v369, %v368
      %v443 = vpack.c.b16 %v371, %v370
      %v444 = vpack.c.b16 %v373, %v372
      %v445 = vpack.c.b16 %v375, %v374
      %v446 = vpack.c.b16 %v377, %v376
      %v447 = vpack.c.b16 %v379, %v378
      %v448 = vpack.c.b16 %v381, %v380
      %v449 = vpack.c.b16 %v383, %v382
      %v450 = vpack.c.b16 %v385, %v384
      %v451 = vpack.c.b16 %v387, %v386
      %v452 = vpack.c.b16 %v389, %v388
      %v453 = vpack.c.b16 %v391, %v390
      %v454 = vpack.c.b16 %v393, %v392
      %v455 = vpack.c.b16 %v395, %v394
      %v456 = vpack.c.b16 %v397, %v396
      %v457 = vpack.c.b16 %v399, %v398
      %v458 = vpack.c.b16 %v401, %v400
      %v459 = vpack.c.b16 %v403, %v402
      %v460 = vpack.c.b16 %v405, %v404
      %v461 = vpack.c.b16 %v407, %v406
      %v462 = vpack.c.b16 %v409, %v408
      %v463 = vpack.c.b16 %v411, %v410
      %v464 = vpack.c.b16 %v413, %v412
      %v465 = vpack.c.b16 %v415, %v414
      %v466 = vpack.c.b16 %v417, %v416
      %v467 = vpack.c.b16 %v419, %v418
      %v468 = vpack.c.b16 %v421, %v420
      %v469 = vpack.c.b16 %v423, %v422
      %v470 = vpack.c.b16 %v425, %v424
      %v471 = vpack.c.b16 %v427, %v426
      %v472 = vpack.c.b16 %v429, %v428
      %v473 = vpack.c.b16 %v431, %v430
      %v474 = vpack.c.b16 %v433, %v432
      %v475 = vpack.c.b16 %v434, %v434
      %vm516 = vcmask 64512
      %v518 = vsel %vm516, %v267, 0
      %vm520 = vcmask 1043456
      %v522 = vsel %vm520, %v475, 0
      %524 = vmatprep.subr.bf16.mxu0 0
      %525 = vmatpush1.bf16.msra.mxu0 %v442
      %526 = vmatprep.subr.bf16.mxu0 0
      %527 = vmatpush1.bf16.msra.mxu0 %v441
      %528 = vmatprep.subr.bf16.mxu0 0
      %529 = vmatpush1.bf16.msra.mxu0 %v440
      %530 = vmatprep.subr.bf16.mxu0 0
      %531 = vmatpush1.bf16.msra.mxu0 %v439
      %532 = vmatprep.subr.bf16.mxu0 0
      %533 = vmatpush1.bf16.msra.mxu0 %v438
      %534 = vmatprep.subr.bf16.mxu0 0
      %535 = vmatpush1.bf16.msra.mxu0 %v437
      %536 = vmatprep.subr.bf16.mxu0 0
      %537 = vmatpush1.bf16.msra.mxu0 %v436
      %538 = vmatprep.subr.bf16.mxu0 0
      %539 = vmatpush1.bf16.msra.mxu0 %v435
      %540 = vmatprep.subr.bf16.mxu0 0
      %541 = vmatpush2.bf16.msra.mxu0 %v450
      %542 = vmatprep.subr.bf16.mxu0 0
      %543 = vmatpush2.bf16.msra.mxu0 %v449
      %544 = vmatprep.subr.bf16.mxu0 0
      %545 = vmatpush2.bf16.msra.mxu0 %v448
      %546 = vmatprep.subr.bf16.mxu0 0
      %547 = vmatpush2.bf16.msra.mxu0 %v447
      %548 = vmatprep.subr.bf16.mxu0 0
      %549 = vmatpush2.bf16.msra.mxu0 %v446
      %550 = vmatprep.subr.bf16.mxu0 0
      %551 = vmatpush2.bf16.msra.mxu0 %v445
      %552 = vmatprep.subr.bf16.mxu0 0
      %553 = vmatpush2.bf16.msra.mxu0 %v444
      %554 = vmatprep.subr.bf16.mxu0 0
      %555 = vmatpush2.bf16.msra.mxu0 %v443
      %556 = vmatprep.mubr.bf16.mxu0 %v263
      %557 = vmatmul.mubr.bf16.gmra.mxu0 %v262
      %v558 = vpop.f32.mrf.mxu0
      %v559 = vadd.f32 0.0, %v558
      %v560 = vpop.f32.mrf.mxu0
      %v561 = vpop.f32.mrf.mxu0
      %v562 = vadd.f32 0.0, %v561
      %v563 = vpop.f32.mrf.mxu0
      %564 = vdwg.mxu0
      %565 = vmatprep.subr.bf16.mxu0 0
      %566 = vmatpush1.bf16.msra.mxu0 %v458
      %567 = vmatprep.subr.bf16.mxu0 0
      %568 = vmatpush1.bf16.msra.mxu0 %v457
      %569 = vmatprep.subr.bf16.mxu0 0
      %570 = vmatpush1.bf16.msra.mxu0 %v456
      %571 = vmatprep.subr.bf16.mxu0 0
      %572 = vmatpush1.bf16.msra.mxu0 %v455
      %573 = vmatprep.subr.bf16.mxu0 0
      %574 = vmatpush1.bf16.msra.mxu0 %v454
      %575 = vmatprep.subr.bf16.mxu0 0
      %576 = vmatpush1.bf16.msra.mxu0 %v453
      %577 = vmatprep.subr.bf16.mxu0 0
      %578 = vmatpush1.bf16.msra.mxu0 %v452
      %579 = vmatprep.subr.bf16.mxu0 0
      %580 = vmatpush1.bf16.msra.mxu0 %v451
      %581 = vmatprep.subr.bf16.mxu0 0
      %582 = vmatpush2.bf16.msra.mxu0 %v466
      %583 = vmatprep.subr.bf16.mxu0 0
      %584 = vmatpush2.bf16.msra.mxu0 %v465
      %585 = vmatprep.subr.bf16.mxu0 0
      %586 = vmatpush2.bf16.msra.mxu0 %v464
      %587 = vmatprep.subr.bf16.mxu0 0
      %588 = vmatpush2.bf16.msra.mxu0 %v463
      %589 = vmatprep.subr.bf16.mxu0 0
      %590 = vmatpush2.bf16.msra.mxu0 %v462
      %591 = vmatprep.subr.bf16.mxu0 0
      %592 = vmatpush2.bf16.msra.mxu0 %v461
      %593 = vmatprep.subr.bf16.mxu0 0
      %594 = vmatpush2.bf16.msra.mxu0 %v460
      %595 = vmatprep.subr.bf16.mxu0 0
      %596 = vmatpush2.bf16.msra.mxu0 %v459
      %597 = vmatprep.mubr.bf16.mxu0 %v265
      %598 = vmatmul.mubr.bf16.gmra.mxu0 %v264
      %v599 = vpop.f32.mrf.mxu0
      %v600 = vadd.f32 %v559, %v599
      %v601 = vpop.f32.mrf.mxu0
      %v602 = vpop.f32.mrf.mxu0
      %v603 = vadd.f32 %v562, %v602
      %v604 = vpop.f32.mrf.mxu0
      %605 = vdwg.mxu0
      %606 = vmatprep.subr.bf16.mxu0 0
      %607 = vmatpush1.bf16.msra.mxu0 %v474
      %608 = vmatprep.subr.bf16.mxu0 0
      %609 = vmatpush1.bf16.msra.mxu0 %v473
      %610 = vmatprep.subr.bf16.mxu0 0
      %611 = vmatpush1.bf16.msra.mxu0 %v472
      %612 = vmatprep.subr.bf16.mxu0 0
      %613 = vmatpush1.bf16.msra.mxu0 %v471
      %614 = vmatprep.subr.bf16.mxu0 0
      %615 = vmatpush1.bf16.msra.mxu0 %v470
      %616 = vmatprep.subr.bf16.mxu0 0
      %617 = vmatpush1.bf16.msra.mxu0 %v469
      %618 = vmatprep.subr.bf16.mxu0 0
      %619 = vmatpush1.bf16.msra.mxu0 %v468
      %620 = vmatprep.subr.bf16.mxu0 0
      %621 = vmatpush1.bf16.msra.mxu0 %v467
      %622 = vmatprep.subr.bf16.mxu0 0
      %623 = vmatpush2.bf16.msra.mxu0 0
      %624 = vmatprep.subr.bf16.mxu0 0
      %625 = vmatpush2.bf16.msra.mxu0 0
      %626 = vmatprep.subr.bf16.mxu0 0
      %627 = vmatpush2.bf16.msra.mxu0 0
      %628 = vmatprep.subr.bf16.mxu0 0
      %629 = vmatpush2.bf16.msra.mxu0 0
      %630 = vmatprep.subr.bf16.mxu0 0
      %631 = vmatpush2.bf16.msra.mxu0 0
      %632 = vmatprep.subr.bf16.mxu0 0
      %633 = vmatpush2.bf16.msra.mxu0 0
      %634 = vmatprep.subr.bf16.mxu0 0
      %635 = vmatpush2.bf16.msra.mxu0 0
      %636 = vmatprep.subr.bf16.mxu0 0
      %637 = vmatpush2.bf16.msra.mxu0 %v522
      %638 = vmatprep.mubr.bf16.mxu0 %v518
      %639 = vmatmul.mubr.bf16.gmra.mxu0 %v266
      %v640 = vpop.f32.mrf.mxu0
      %v641 = vadd.f32 %v600, %v640
      %v642 = vpop.f32.mrf.mxu0
      %v643 = vpop.f32.mrf.mxu0
      %v644 = vadd.f32 %v603, %v643
      %v645 = vpop.f32.mrf.mxu0
      %646 = vdwg.mxu0
      %vm647 = vcmask 654336
      %648 = vst.msk [vmem:[%s148] sm:$0xff] %vm647, %v641
      %649 = vst.msk [vmem:[%s148 + $0x8] sm:$0xff] %vm647, %v644
      %s650 = smul.u32 2, %s13
      %p651 = scmp.lt.s32.totalorder %s650, 3
      %s652 = scalar_select %p651, %s650, 3
      %s653 = smul.addr %s652, 8
      %s654 = scalar_lea.vmem %s2, %s653
      // Predicated region
      $region29: #{_lambda_.43} parent=27 // pred_check
        %p655 = pneg %p78
      $region30: #{_lambda_.43} parent=27 // pred_check_branch
        %657 = sbr.rel (%p655) target = $region32
      $region31: #{_lambda_.43} parent=27 // pred_region
        %s658 = smul.u32 2, %s13
      $region32: #{_lambda_.43} parent=27 // pred_fallthru
        _
    $region28: #{_lambda_.43} parent=5 // pred_fallthru
      _
    %p659 = scmp.le.s32.totalorder 2, %s8
    // Predicated region
    $region33: #{_lambda_.43} parent=5 // pred_check
      %p660 = pneg %p659
    $region34: #{_lambda_.43} parent=5 // pred_check_branch
      %662 = sbr.rel (%p660) target = $region36
    $region35: #{_lambda_.43} parent=5 // pred_region
      %s663 = ssub.s32 %s8, 2
      // Predicated region
      $region37: #{_lambda_.43} parent=35 // pred_check
        %p664 = pneg %p84
      $region38: #{_lambda_.43} parent=35 // pred_check_branch
        %666 = sbr.rel (%p664) target = $region40
      $region39: #{_lambda_.43} parent=35 // pred_region
        %s667 = smul.u32 2, %s14
        %p668 = scmp.lt.s32.totalorder %s667, 3
        %s669 = scalar_select %p668, %s667, 3
        %s670 = smul.addr %s669, 8
        %s671 = scalar_lea.vmem %s2, %s670
      $region40: #{_lambda_.43} parent=35 // pred_fallthru
        _
    $region36: #{_lambda_.43} parent=5 // pred_fallthru
      _
  $region6: #{_lambda_.43} parent=0 // loop_footer
    %s12 = sadd.s32 1, %s8
  $region7: #{_lambda_.43} parent=0 // loop_footer_branch
    %7 = sbr.rel target = $region3
  $region8: #{_lambda_.43} parent=0 // loop_exit
    _

// kernel: _lambda_.44
$region0: #{_lambda_.44}
  #allocation0 [shape = 'u32[]', space=smem, size = 0x4, offset = 0x4, fixed_abs, tag = 'smem constant byte address 0x4 - core index']
  #allocation1 [shape = 'u32[144,128]{1,0:T(1,128)}', space=vmem, size = 0x12000, scoped, tag = 'internal scratch']
  %s0 = inlined_call_operand.vmem [shape: bf16[32,544], index: 0, kind: input, shape index: {}]
  %s1 = inlined_call_operand.vmem [shape: bf16[544,32], index: 1, kind: input, shape index: {}]
  %s2 = inlined_call_operand.vmem [shape: f32[32,32], index: 2, kind: output, shape index: {}]
  %s3 = sld [smem:[#allocation0]]
  $region41: #{_lambda_.44} parent=0
    _
  %s5 = ssub.s32 1, %s3
  %s6 = scalar_select 0, %s5, %s3
  loop: start=0, step=1, limit=4
  $region2: #{_lambda_.44} parent=0 // loop_pre_header
    _
  $region3: #{_lambda_.44} parent=0 // loop_header
    %s8 = sphi 0, %s12
    %p9 = scmp.ge.s32.totalorder %s8, 4
    %s18 = sphi 0, %s20
    %s21 = sphi 0, %s18
    %s22 = sphi 0, %s21
    %s38 = sphi 0, %s22
    %s42 = sphi 0, %s42
    %s44 = sphi 0, %s42
    %s45 = sphi 0, %s44
    %s59 = sphi 0, %s45
    %s65 = sphi 0, %s67
    %s68 = sphi 0, %s65
    %s69 = sphi 0, %s68
    %s85 = sphi 0, %s69
  $region4: #{_lambda_.44} parent=0 // loop_header_branch
    %11 = sbr.rel (%p9) target = $region8
  $region5: #{_lambda_.44} parent=0 // loop_body
    %s13 = ssub.s32 %s8, 1
    %s14 = ssub.s32 %s8, 2
    %s15 = sadd.s32 %s8, 1
    %s16 = ssub.s32 %s8, %s15
    %p17 = scmp.eq.s32.totalorder %s16, 0
    %s19 = sadd.s32 %s18, 1
    %s20 = scalar_select %p17, %s18, %s19
    %p23 = pneg %p17
    %p24 = scmp.eq.s32.totalorder %s8, 1
    %p25 = por %p23, %p24
    %p26 = scmp.ne.s32.totalorder %s18, %s21
    %p27 = scmp.eq.s32.totalorder %s8, 0
    %p28 = por %p26, %p27
    %p29 = scmp.ne.s32.totalorder %s18, %s21
    %p30 = scmp.eq.s32.totalorder %s13, 1
    %p31 = por %p29, %p30
    %p32 = scmp.ne.s32.totalorder %s21, %s22
    %p33 = scmp.eq.s32.totalorder %s13, 0
    %p34 = por %p32, %p33
    %p35 = scmp.ne.s32.totalorder %s21, %s22
    %p36 = scmp.eq.s32.totalorder %s14, 1
    %p37 = por %p35, %p36
    %p39 = scmp.ne.s32.totalorder %s22, %s38
    %p40 = scmp.eq.s32.totalorder %s14, 0
    %p41 = por %p39, %p40
    %s43 = sadd.s32 %s42, 1
    %p46 = scmp.eq.s32.totalorder %s8, 1
    %p47 = scmp.ne.s32.totalorder %s42, %s44
    %p48 = scmp.eq.s32.totalorder %s8, 0
    %p49 = por %p47, %p48
    %p50 = scmp.ne.s32.totalorder %s42, %s44
    %p51 = scmp.eq.s32.totalorder %s13, 1
    %p52 = por %p50, %p51
    %p53 = scmp.ne.s32.totalorder %s44, %s45
    %p54 = scmp.eq.s32.totalorder %s13, 0
    %p55 = por %p53, %p54
    %p56 = scmp.ne.s32.totalorder %s44, %s45
    %p57 = scmp.eq.s32.totalorder %s14, 1
    %p58 = por %p56, %p57
    %p60 = scmp.ne.s32.totalorder %s45, %s59
    %p61 = scmp.eq.s32.totalorder %s14, 0
    %p62 = por %p60, %p61
    %s63 = ssub.s32 %s8, %s15
    %p64 = scmp.eq.s32.totalorder %s63, 0
    %s66 = sadd.s32 %s65, 1
    %s67 = scalar_select %p64, %s65, %s66
    %p70 = pneg %p64
    %p71 = scmp.eq.s32.totalorder %s8, 1
    %p72 = por %p70, %p71
    %p73 = scmp.ne.s32.totalorder %s65, %s68
    %p74 = scmp.eq.s32.totalorder %s8, 0
    %p75 = por %p73, %p74
    %p76 = scmp.ne.s32.totalorder %s65, %s68
    %p77 = scmp.eq.s32.totalorder %s13, 1
    %p78 = por %p76, %p77
    %p79 = scmp.ne.s32.totalorder %s68, %s69
    %p80 = scmp.eq.s32.totalorder %s13, 0
    %p81 = por %p79, %p80
    %p82 = scmp.ne.s32.totalorder %s68, %s69
    %p83 = scmp.eq.s32.totalorder %s14, 1
    %p84 = por %p82, %p83
    %p86 = scmp.ne.s32.totalorder %s69, %s85
    %p87 = scmp.eq.s32.totalorder %s14, 0
    %p88 = por %p86, %p87
    %p89 = scmp.le.s32.totalorder 1, %s8
    %p90 = scmp.lt.s32.totalorder %s8, 3
    %p91 = pnand %p89, %p90
    %p92 = pneg %p91
    // Predicated region
    $region9: #{_lambda_.44} parent=5 // pred_check
      _
    $region10: #{_lambda_.44} parent=5 // pred_check_branch
      %94 = sbr.rel (%p91) target = $region12
    $region11: #{_lambda_.44} parent=5 // pred_region
      %s95 = ssub.s32 %s8, 1
      // Predicated region
      $region13: #{_lambda_.44} parent=11 // pred_check
        %p96 = pneg %p55
      $region14: #{_lambda_.44} parent=11 // pred_check_branch
        %98 = sbr.rel (%p96) target = $region16
      $region15: #{_lambda_.44} parent=11 // pred_region
        _
      $region16: #{_lambda_.44} parent=11 // pred_fallthru
        _
    $region12: #{_lambda_.44} parent=5 // pred_fallthru
      _
    %p99 = scmp.lt.s32.totalorder %s8, 2
    // Predicated region
    $region17: #{_lambda_.44} parent=5 // pred_check
      %p100 = pneg %p99
    $region18: #{_lambda_.44} parent=5 // pred_check_branch
      %102 = sbr.rel (%p100) target = $region20
    $region19: #{_lambda_.44} parent=5 // pred_region
      // Predicated region
      $region21: #{_lambda_.44} parent=19 // pred_check
        %p103 = pneg %p28
      $region22: #{_lambda_.44} parent=19 // pred_check_branch
        %105 = sbr.rel (%p103) target = $region24
      $region23: #{_lambda_.44} parent=19 // pred_region
        %s106 = smul.u32 2, %s8
        %p107 = scmp.lt.s32.totalorder %s106, 3
        %s108 = scalar_select %p107, %s106, 3
        %s109 = smul.addr %s108, 5
        %s110 = smul.addr %s109, 4
        %s111 = scalar_lea.vmem %s0, %s110
        %s112 = smul.u32 2, %s8
      $region24: #{_lambda_.44} parent=19 // pred_fallthru
        _
    $region20: #{_lambda_.44} parent=5 // pred_fallthru
      _
    %p113 = scmp.le.s32.totalorder 1, %s8
    %p114 = scmp.lt.s32.totalorder %s8, 3
    %p115 = pnand %p113, %p114
    %p116 = pneg %p115
    // Predicated region
    $region25: #{_lambda_.44} parent=5 // pred_check
      _
    $region26: #{_lambda_.44} parent=5 // pred_check_branch
      %118 = sbr.rel (%p115) target = $region28
    $region27: #{_lambda_.44} parent=5 // pred_region
      %s119 = ssub.s32 %s8, 1
      %s120 = smul.u32 2, %s13
      %p121 = scmp.lt.s32.totalorder %s120, 3
      %s122 = scalar_select %p121, %s120, 3
      %s123 = smul.addr %s122, 5
      %s124 = smul.addr %s123, 4
      %s125 = scalar_lea.vmem %s0, %s124
      %p126 = pneg %p34
      %p127 = pneg %p31
      %p128 = pneg %p55
      %p129 = pneg %p52
      %p130 = pneg %p81
      %p131 = pneg %p78
      %s132 = smul.u32 2, %s13
      %p133 = scmp.lt.s32.totalorder %s132, 3
      %s134 = scalar_select %p133, %s132, 3
      %s135 = smul.addr %s134, 8
      %s136 = scalar_lea.vmem %s2, %s135
      %s137 = smul.u32 2, %s13
      %p138 = scmp.lt.s32.totalorder %s137, 3
      %s139 = scalar_select %p138, %s137, 3
      %s140 = smul.addr %s139, 5
      %s141 = smul.addr %s140, 4
      %s142 = scalar_lea.vmem %s0, %s141
      %s143 = smul.u32 2, %s13
      %s144 = smul.u32 2, %s13
      %p145 = scmp.lt.s32.totalorder %s144, 3
      %s146 = scalar_select %p145, %s144, 3
      %s147 = smul.addr %s146, 8
      %s148 = scalar_lea.vmem %s2, %s147
      %s149 = smul.u32 2, %s13
      %v151 = vld [vmem:[%s142] sm:$0xff]
      %v152 = vld [vmem:[%s142 + $0x8] sm:$0xff]
      %v153 = vld [vmem:[%s142 + $0x10] sm:$0xf]
      %v154 = vld [vmem:[%s142 + $0x14] sm:$0xff]
      %v155 = vld [vmem:[%s142 + $0x1c] sm:$0xff]
      %v156 = vld [vmem:[%s142 + $0x24] sm:$0xf]
      %v157 = vmax.bf16 %v151, 0
      %v158 = vmax.bf16 %v152, 0
      %v159 = vmax.bf16 %v153, 0
      %v160 = vmax.bf16 %v154, 0
      %v161 = vmax.bf16 %v155, 0
      %v162 = vmax.bf16 %v156, 0
      %v163 = vld [vmem:[%s1] sm:$0xf]
      %v164 = vld [vmem:[%s1 + $0x4] sm:$0xf]
      %v165 = vld [vmem:[%s1 + $0x8] sm:$0xf]
      %v166 = vld [vmem:[%s1 + $0xc] sm:$0xf]
      %v167 = vld [vmem:[%s1 + $0x10] sm:$0xf]
      %v168 = vld [vmem:[%s1 + $0x14] sm:$0xf]
      %v169 = vld [vmem:[%s1 + $0x18] sm:$0xf]
      %v170 = vld [vmem:[%s1 + $0x1c] sm:$0xf]
      %v171 = vld [vmem:[%s1 + $0x20] sm:$0xf]
      %v172 = vld [vmem:[%s1 + $0x24] sm:$0xf]
      %v173 = vld [vmem:[%s1 + $0x28] sm:$0xf]
      %v174 = vld [vmem:[%s1 + $0x2c] sm:$0xf]
      %v175 = vld [vmem:[%s1 + $0x30] sm:$0xf]
      %v176 = vld [vmem:[%s1 + $0x34] sm:$0xf]
      %v177 = vld [vmem:[%s1 + $0x38] sm:$0xf]
      %v178 = vld [vmem:[%s1 + $0x3c] sm:$0xf]
      %v179 = vld [vmem:[%s1 + $0x40] sm:$0xf]
      %v180 = vld [vmem:[%s1 + $0x44] sm:$0xf]
      %v181 = vld [vmem:[%s1 + $0x48] sm:$0xf]
      %v182 = vld [vmem:[%s1 + $0x4c] sm:$0xf]
      %v183 = vld [vmem:[%s1 + $0x50] sm:$0xf]
      %v184 = vld [vmem:[%s1 + $0x54] sm:$0xf]
      %v185 = vld [vmem:[%s1 + $0x58] sm:$0xf]
      %v186 = vld [vmem:[%s1 + $0x5c] sm:$0xf]
      %v187 = vld [vmem:[%s1 + $0x60] sm:$0xf]
      %v188 = vld [vmem:[%s1 + $0x64] sm:$0xf]
      %v189 = vld [vmem:[%s1 + $0x68] sm:$0xf]
      %v190 = vld [vmem:[%s1 + $0x6c] sm:$0xf]
      %v191 = vld [vmem:[%s1 + $0x70] sm:$0xf]
      %v192 = vld [vmem:[%s1 + $0x74] sm:$0xf]
      %v193 = vld [vmem:[%s1 + $0x78] sm:$0xf]
      %v194 = vld [vmem:[%s1 + $0x7c] sm:$0xf]
      %v195 = vld [vmem:[%s1 + $0x80] sm:$0xf]
      %v196 = vld [vmem:[%s1 + $0x84] sm:$0xf]
      %v197 = vld [vmem:[%s1 + $0x88] sm:$0xf]
      %v198 = vld [vmem:[%s1 + $0x8c] sm:$0xf]
      %v199 = vld [vmem:[%s1 + $0x90] sm:$0xf]
      %v200 = vld [vmem:[%s1 + $0x94] sm:$0xf]
      %v201 = vld [vmem:[%s1 + $0x98] sm:$0xf]
      %v202 = vld [vmem:[%s1 + $0x9c] sm:$0xf]
      %v203 = vld [vmem:[%s1 + $0xa0] sm:$0xf]
      %v204 = vld [vmem:[%s1 + $0xa4] sm:$0xf]
      %v205 = vld [vmem:[%s1 + $0xa8] sm:$0xf]
      %v206 = vld [vmem:[%s1 + $0xac] sm:$0xf]
      %v207 = vld [vmem:[%s1 + $0xb0] sm:$0xf]
      %v208 = vld [vmem:[%s1 + $0xb4] sm:$0xf]
      %v209 = vld [vmem:[%s1 + $0xb8] sm:$0xf]
      %v210 = vld [vmem:[%s1 + $0xbc] sm:$0xf]
      %v211 = vld [vmem:[%s1 + $0xc0] sm:$0xf]
      %v212 = vld [vmem:[%s1 + $0xc4] sm:$0xf]
      %v213 = vld [vmem:[%s1 + $0xc8] sm:$0xf]
      %v214 = vld [vmem:[%s1 + $0xcc] sm:$0xf]
      %v215 = vld [vmem:[%s1 + $0xd0] sm:$0xf]
      %v216 = vld [vmem:[%s1 + $0xd4] sm:$0xf]
      %v217 = vld [vmem:[%s1 + $0xd8] sm:$0xf]
      %v218 = vld [vmem:[%s1 + $0xdc] sm:$0xf]
      %v219 = vld [vmem:[%s1 + $0xe0] sm:$0xf]
      %v220 = vld [vmem:[%s1 + $0xe4] sm:$0xf]
      %v221 = vld [vmem:[%s1 + $0xe8] sm:$0xf]
      %v222 = vld [vmem:[%s1 + $0xec] sm:$0xf]
      %v223 = vld [vmem:[%s1 + $0xf0] sm:$0xf]
      %v224 = vld [vmem:[%s1 + $0xf4] sm:$0xf]
      %v225 = vld [vmem:[%s1 + $0xf8] sm:$0xf]
      %v226 = vld [vmem:[%s1 + $0xfc] sm:$0xf]
      %v227 = vld [vmem:[%s1 + $0x100] sm:$0xf]
      %v228 = vld [vmem:[%s1 + $0x104] sm:$0xf]
      %v229 = vld [vmem:[%s1 + $0x108] sm:$0xf]
      %v230 = vld [vmem:[%s1 + $0x10c] sm:$0xf]
      %v237 = vunpack.c.l.b16 %v157
      %v238 = vunpack.c.h.b16 %v157
      %v239 = vunpack.c.l.b16 %v158
      %v240 = vunpack.c.h.b16 %v158
      %v241 = vunpack.c.l.b16 %v159
      %v242 = vunpack.c.l.b16 %v160
      %v243 = vunpack.c.h.b16 %v160
      %v244 = vunpack.c.l.b16 %v161
      %v245 = vunpack.c.h.b16 %v161
      %v246 = vunpack.c.l.b16 %v162
      %v247 = vpack.c.b16 %v242, %v237
      %v248 = vpack.c.b16 %v243, %v238
      %v249 = vpack.c.b16 %v244, %v239
      %v250 = vpack.c.b16 %v245, %v240
      %v251 = vpack.c.b16 %v246, %v241
      %v324 = vunpack.c.l.b16 %v163
      %v325 = vunpack.c.l.b16 %v164
      %v326 = vunpack.c.l.b16 %v165
      %v327 = vunpack.c.l.b16 %v166
      %v328 = vunpack.c.l.b16 %v167
      %v329 = vunpack.c.l.b16 %v168
      %v330 = vunpack.c.l.b16 %v169
      %v331 = vunpack.c.l.b16 %v170
      %v332 = vunpack.c.l.b16 %v171
      %v333 = vunpack.c.l.b16 %v172
      %v334 = vunpack.c.l.b16 %v173
      %v335 = vunpack.c.l.b16 %v174
      %v336 = vunpack.c.l.b16 %v175
      %v337 = vunpack.c.l.b16 %v176
      %v338 = vunpack.c.l.b16 %v177
      %v339 = vunpack.c.l.b16 %v178
      %v340 = vunpack.c.l.b16 %v179
      %v341 = vunpack.c.l.b16 %v180
      %v342 = vunpack.c.l.b16 %v181
      %v343 = vunpack.c.l.b16 %v182
      %v344 = vunpack.c.l.b16 %v183
      %v345 = vunpack.c.l.b16 %v184
      %v346 = vunpack.c.l.b16 %v185
      %v347 = vunpack.c.l.b16 %v186
      %v348 = vunpack.c.l.b16 %v187
      %v349 = vunpack.c.l.b16 %v188
      %v350 = vunpack.c.l.b16 %v189
      %v351 = vunpack.c.l.b16 %v190
      %v352 = vunpack.c.l.b16 %v191
      %v353 = vunpack.c.l.b16 %v192
      %v354 = vunpack.c.l.b16 %v193
      %v355 = vunpack.c.l.b16 %v194
      %v356 = vunpack.c.l.b16 %v195
      %v357 = vunpack.c.l.b16 %v196
      %v358 = vunpack.c.l.b16 %v197
      %v359 = vunpack.c.l.b16 %v198
      %v360 = vunpack.c.l.b16 %v199
      %v361 = vunpack.c.l.b16 %v200
      %v362 = vunpack.c.l.b16 %v201
      %v363 = vunpack.c.l.b16 %v202
      %v364 = vunpack.c.l.b16 %v203
      %v365 = vunpack.c.l.b16 %v204
      %v366 = vunpack.c.l.b16 %v205
      %v367 = vunpack.c.l.b16 %v206
      %v368 = vunpack.c.l.b16 %v207
      %v369 = vunpack.c.l.b16 %v208
      %v370 = vunpack.c.l.b16 %v209
      %v371 = vunpack.c.l.b16 %v210
      %v372 = vunpack.c.l.b16 %v211
      %v373 = vunpack.c.l.b16 %v212
      %v374 = vunpack.c.l.b16 %v213
      %v375 = vunpack.c.l.b16 %v214
      %v376 = vunpack.c.l.b16 %v215
      %v377 = vunpack.c.l.b16 %v216
      %v378 = vunpack.c.l.b16 %v217
      %v379 = vunpack.c.l.b16 %v218
      %v380 = vunpack.c.l.b16 %v219
      %v381 = vunpack.c.l.b16 %v220
      %v382 = vunpack.c.l.b16 %v221
      %v383 = vunpack.c.l.b16 %v222
      %v384 = vunpack.c.l.b16 %v223
      %v385 = vunpack.c.l.b16 %v224
      %v386 = vunpack.c.l.b16 %v225
      %v387 = vunpack.c.l.b16 %v226
      %v388 = vunpack.c.l.b16 %v227
      %v389 = vunpack.c.l.b16 %v228
      %v390 = vunpack.c.l.b16 %v229
      %v391 = vunpack.c.l.b16 %v230
      %v392 = vpack.c.b16 %v325, %v324
      %v393 = vpack.c.b16 %v327, %v326
      %v394 = vpack.c.b16 %v329, %v328
      %v395 = vpack.c.b16 %v331, %v330
      %v396 = vpack.c.b16 %v333, %v332
      %v397 = vpack.c.b16 %v335, %v334
      %v398 = vpack.c.b16 %v337, %v336
      %v399 = vpack.c.b16 %v339, %v338
      %v400 = vpack.c.b16 %v341, %v340
      %v401 = vpack.c.b16 %v343, %v342
      %v402 = vpack.c.b16 %v345, %v344
      %v403 = vpack.c.b16 %v347, %v346
      %v404 = vpack.c.b16 %v349, %v348
      %v405 = vpack.c.b16 %v351, %v350
      %v406 = vpack.c.b16 %v353, %v352
      %v407 = vpack.c.b16 %v355, %v354
      %v408 = vpack.c.b16 %v357, %v356
      %v409 = vpack.c.b16 %v359, %v358
      %v410 = vpack.c.b16 %v361, %v360
      %v411 = vpack.c.b16 %v363, %v362
      %v412 = vpack.c.b16 %v365, %v364
      %v413 = vpack.c.b16 %v367, %v366
      %v414 = vpack.c.b16 %v369, %v368
      %v415 = vpack.c.b16 %v371, %v370
      %v416 = vpack.c.b16 %v373, %v372
      %v417 = vpack.c.b16 %v375, %v374
      %v418 = vpack.c.b16 %v377, %v376
      %v419 = vpack.c.b16 %v379, %v378
      %v420 = vpack.c.b16 %v381, %v380
      %v421 = vpack.c.b16 %v383, %v382
      %v422 = vpack.c.b16 %v385, %v384
      %v423 = vpack.c.b16 %v387, %v386
      %v424 = vpack.c.b16 %v389, %v388
      %v425 = vpack.c.b16 %v391, %v390
      %vm460 = vcmask 261120
      %v462 = vsel %vm460, %v251, 0
      %464 = vmatprep.subr.bf16.mxu0 0
      %465 = vmatpush1.bf16.msra.mxu0 %v399
      %466 = vmatprep.subr.bf16.mxu0 0
      %467 = vmatpush1.bf16.msra.mxu0 %v398
      %468 = vmatprep.subr.bf16.mxu0 0
      %469 = vmatpush1.bf16.msra.mxu0 %v397
      %470 = vmatprep.subr.bf16.mxu0 0
      %471 = vmatpush1.bf16.msra.mxu0 %v396
      %472 = vmatprep.subr.bf16.mxu0 0
      %473 = vmatpush1.bf16.msra.mxu0 %v395
      %474 = vmatprep.subr.bf16.mxu0 0
      %475 = vmatpush1.bf16.msra.mxu0 %v394
      %476 = vmatprep.subr.bf16.mxu0 0
      %477 = vmatpush1.bf16.msra.mxu0 %v393
      %478 = vmatprep.subr.bf16.mxu0 0
      %479 = vmatpush1.bf16.msra.mxu0 %v392
      %480 = vmatprep.subr.bf16.mxu0 0
      %481 = vmatpush2.bf16.msra.mxu0 %v407
      %482 = vmatprep.subr.bf16.mxu0 0
      %483 = vmatpush2.bf16.msra.mxu0 %v406
      %484 = vmatprep.subr.bf16.mxu0 0
      %485 = vmatpush2.bf16.msra.mxu0 %v405
      %486 = vmatprep.subr.bf16.mxu0 0
      %487 = vmatpush2.bf16.msra.mxu0 %v404
      %488 = vmatprep.subr.bf16.mxu0 0
      %489 = vmatpush2.bf16.msra.mxu0 %v403
      %490 = vmatprep.subr.bf16.mxu0 0
      %491 = vmatpush2.bf16.msra.mxu0 %v402
      %492 = vmatprep.subr.bf16.mxu0 0
      %493 = vmatpush2.bf16.msra.mxu0 %v401
      %494 = vmatprep.subr.bf16.mxu0 0
      %495 = vmatpush2.bf16.msra.mxu0 %v400
      %496 = vmatprep.mubr.bf16.mxu0 %v248
      %497 = vmatmul.mubr.bf16.gmra.mxu0 %v247
      %v498 = vpop.f32.mrf.mxu0
      %v499 = vadd.f32 0.0, %v498
      %v500 = vpop.f32.mrf.mxu0
      %v501 = vpop.f32.mrf.mxu0
      %v502 = vadd.f32 0.0, %v501
      %v503 = vpop.f32.mrf.mxu0
      %504 = vdwg.mxu0
      %505 = vmatprep.subr.bf16.mxu0 0
      %506 = vmatpush1.bf16.msra.mxu0 %v415
      %507 = vmatprep.subr.bf16.mxu0 0
      %508 = vmatpush1.bf16.msra.mxu0 %v414
      %509 = vmatprep.subr.bf16.mxu0 0
      %510 = vmatpush1.bf16.msra.mxu0 %v413
      %511 = vmatprep.subr.bf16.mxu0 0
      %512 = vmatpush1.bf16.msra.mxu0 %v412
      %513 = vmatprep.subr.bf16.mxu0 0
      %514 = vmatpush1.bf16.msra.mxu0 %v411
      %515 = vmatprep.subr.bf16.mxu0 0
      %516 = vmatpush1.bf16.msra.mxu0 %v410
      %517 = vmatprep.subr.bf16.mxu0 0
      %518 = vmatpush1.bf16.msra.mxu0 %v409
      %519 = vmatprep.subr.bf16.mxu0 0
      %520 = vmatpush1.bf16.msra.mxu0 %v408
      %521 = vmatprep.subr.bf16.mxu0 0
      %522 = vmatpush2.bf16.msra.mxu0 %v423
      %523 = vmatprep.subr.bf16.mxu0 0
      %524 = vmatpush2.bf16.msra.mxu0 %v422
      %525 = vmatprep.subr.bf16.mxu0 0
      %526 = vmatpush2.bf16.msra.mxu0 %v421
      %527 = vmatprep.subr.bf16.mxu0 0
      %528 = vmatpush2.bf16.msra.mxu0 %v420
      %529 = vmatprep.subr.bf16.mxu0 0
      %530 = vmatpush2.bf16.msra.mxu0 %v419
      %531 = vmatprep.subr.bf16.mxu0 0
      %532 = vmatpush2.bf16.msra.mxu0 %v418
      %533 = vmatprep.subr.bf16.mxu0 0
      %534 = vmatpush2.bf16.msra.mxu0 %v417
      %535 = vmatprep.subr.bf16.mxu0 0
      %536 = vmatpush2.bf16.msra.mxu0 %v416
      %537 = vmatprep.mubr.bf16.mxu0 %v250
      %538 = vmatmul.mubr.bf16.gmra.mxu0 %v249
      %v539 = vpop.f32.mrf.mxu0
      %v540 = vadd.f32 %v499, %v539
      %v541 = vpop.f32.mrf.mxu0
      %v542 = vpop.f32.mrf.mxu0
      %v543 = vadd.f32 %v502, %v542
      %v544 = vpop.f32.mrf.mxu0
      %545 = vdwg.mxu0
      %546 = vmatprep.subr.bf16.mxu0 0
      %547 = vmatpush1.bf16.msra.mxu0 0
      %548 = vmatprep.subr.bf16.mxu0 0
      %549 = vmatpush1.bf16.msra.mxu0 0
      %550 = vmatprep.subr.bf16.mxu0 0
      %551 = vmatpush1.bf16.msra.mxu0 0
      %552 = vmatprep.subr.bf16.mxu0 0
      %553 = vmatpush1.bf16.msra.mxu0 0
      %554 = vmatprep.subr.bf16.mxu0 0
      %555 = vmatpush1.bf16.msra.mxu0 0
      %556 = vmatprep.subr.bf16.mxu0 0
      %557 = vmatpush1.bf16.msra.mxu0 0
      %558 = vmatprep.subr.bf16.mxu0 0
      %559 = vmatpush1.bf16.msra.mxu0 %v425
      %560 = vmatprep.subr.bf16.mxu0 0
      %561 = vmatpush1.bf16.msra.mxu0 %v424
      %562 = vmatprep.subr.bf16.mxu0 0
      %563 = vmatpush2.bf16.msra.mxu0 0
      %564 = vmatprep.subr.bf16.mxu0 0
      %565 = vmatpush2.bf16.msra.mxu0 0
      %566 = vmatprep.subr.bf16.mxu0 0
      %567 = vmatpush2.bf16.msra.mxu0 0
      %568 = vmatprep.subr.bf16.mxu0 0
      %569 = vmatpush2.bf16.msra.mxu0 0
      %570 = vmatprep.subr.bf16.mxu0 0
      %571 = vmatpush2.bf16.msra.mxu0 0
      %572 = vmatprep.subr.bf16.mxu0 0
      %573 = vmatpush2.bf16.msra.mxu0 0
      %574 = vmatprep.subr.bf16.mxu0 0
      %575 = vmatpush2.bf16.msra.mxu0 0
      %576 = vmatprep.subr.bf16.mxu0 0
      %577 = vmatpush2.bf16.msra.mxu0 0
      %578 = vmatprep.mubr.bf16.mxu0 0
      %579 = vmatmul.mubr.bf16.gmra.mxu0 %v462
      %v580 = vpop.f32.mrf.mxu0
      %v581 = vadd.f32 %v540, %v580
      %v582 = vpop.f32.mrf.mxu0
      %v583 = vpop.f32.mrf.mxu0
      %v584 = vadd.f32 %v543, %v583
      %v585 = vpop.f32.mrf.mxu0
      %586 = vdwg.mxu0
      %587 = vst.msk [vmem:[%s148] sm:$0xff] %vm460, %v581
      %588 = vst.msk [vmem:[%s148 + $0x8] sm:$0xff] %vm460, %v584
      %s589 = smul.u32 2, %s13
      %p590 = scmp.lt.s32.totalorder %s589, 3
      %s591 = scalar_select %p590, %s589, 3
      %s592 = smul.addr %s591, 8
      %s593 = scalar_lea.vmem %s2, %s592
      // Predicated region
      $region29: #{_lambda_.44} parent=27 // pred_check
        %p594 = pneg %p78
      $region30: #{_lambda_.44} parent=27 // pred_check_branch
        %596 = sbr.rel (%p594) target = $region32
      $region31: #{_lambda_.44} parent=27 // pred_region
        %s597 = smul.u32 2, %s13
      $region32: #{_lambda_.44} parent=27 // pred_fallthru
        _
    $region28: #{_lambda_.44} parent=5 // pred_fallthru
      _
    %p598 = scmp.le.s32.totalorder 2, %s8
    // Predicated region
    $region33: #{_lambda_.44} parent=5 // pred_check
      %p599 = pneg %p598
    $region34: #{_lambda_.44} parent=5 // pred_check_branch
      %601 = sbr.rel (%p599) target = $region36
    $region35: #{_lambda_.44} parent=5 // pred_region
      %s602 = ssub.s32 %s8, 2
      // Predicated region
      $region37: #{_lambda_.44} parent=35 // pred_check
        %p603 = pneg %p84
      $region38: #{_lambda_.44} parent=35 // pred_check_branch
        %605 = sbr.rel (%p603) target = $region40
      $region39: #{_lambda_.44} parent=35 // pred_region
        %s606 = smul.u32 2, %s14
        %p607 = scmp.lt.s32.totalorder %s606, 3
        %s608 = scalar_select %p607, %s606, 3
        %s609 = smul.addr %s608, 8
        %s610 = scalar_lea.vmem %s2, %s609
      $region40: #{_lambda_.44} parent=35 // pred_fallthru
        _
    $region36: #{_lambda_.44} parent=5 // pred_fallthru
      _
  $region6: #{_lambda_.44} parent=0 // loop_footer
    %s12 = sadd.s32 1, %s8
  $region7: #{_lambda_.44} parent=0 // loop_footer_branch
    %7 = sbr.rel target = $region3
  $region8: #{_lambda_.44} parent=0 // loop_exit
    _

// kernel: _lambda_.39
$region0: #{_lambda_.39}
  #allocation0 [shape = 'u32[]', space=smem, size = 0x4, offset = 0x4, fixed_abs, tag = 'smem constant byte address 0x4 - core index']
  #allocation1 [shape = 'u32[144,128]{1,0:T(1,128)}', space=vmem, size = 0x12000, scoped, tag = 'internal scratch']
  %s0 = inlined_call_operand.vmem [shape: bf16[128,24], index: 0, kind: input, shape index: {}]
  %s1 = inlined_call_operand.vmem [shape: bf16[24,16], index: 1, kind: input, shape index: {}]
  %s2 = inlined_call_operand.vmem [shape: f32[128,16], index: 2, kind: output, shape index: {}]
  %s3 = sld [smem:[#allocation0]]
  $region41: #{_lambda_.39} parent=0
    _
  %s5 = ssub.s32 1, %s3
  %s6 = scalar_select 0, %s5, %s3
  loop: start=0, step=1, limit=4
  $region2: #{_lambda_.39} parent=0 // loop_pre_header
    _
  $region3: #{_lambda_.39} parent=0 // loop_header
    %s8 = sphi 0, %s12
    %p9 = scmp.ge.s32.totalorder %s8, 4
    %s18 = sphi 0, %s20
    %s21 = sphi 0, %s18
    %s22 = sphi 0, %s21
    %s38 = sphi 0, %s22
    %s42 = sphi 0, %s42
    %s44 = sphi 0, %s42
    %s45 = sphi 0, %s44
    %s59 = sphi 0, %s45
    %s65 = sphi 0, %s67
    %s68 = sphi 0, %s65
    %s69 = sphi 0, %s68
    %s85 = sphi 0, %s69
  $region4: #{_lambda_.39} parent=0 // loop_header_branch
    %11 = sbr.rel (%p9) target = $region8
  $region5: #{_lambda_.39} parent=0 // loop_body
    %s13 = ssub.s32 %s8, 1
    %s14 = ssub.s32 %s8, 2
    %s15 = sadd.s32 %s8, 1
    %s16 = ssub.s32 %s8, %s15
    %p17 = scmp.eq.s32.totalorder %s16, 0
    %s19 = sadd.s32 %s18, 1
    %s20 = scalar_select %p17, %s18, %s19
    %p23 = pneg %p17
    %p24 = scmp.eq.s32.totalorder %s8, 1
    %p25 = por %p23, %p24
    %p26 = scmp.ne.s32.totalorder %s18, %s21
    %p27 = scmp.eq.s32.totalorder %s8, 0
    %p28 = por %p26, %p27
    %p29 = scmp.ne.s32.totalorder %s18, %s21
    %p30 = scmp.eq.s32.totalorder %s13, 1
    %p31 = por %p29, %p30
    %p32 = scmp.ne.s32.totalorder %s21, %s22
    %p33 = scmp.eq.s32.totalorder %s13, 0
    %p34 = por %p32, %p33
    %p35 = scmp.ne.s32.totalorder %s21, %s22
    %p36 = scmp.eq.s32.totalorder %s14, 1
    %p37 = por %p35, %p36
    %p39 = scmp.ne.s32.totalorder %s22, %s38
    %p40 = scmp.eq.s32.totalorder %s14, 0
    %p41 = por %p39, %p40
    %s43 = sadd.s32 %s42, 1
    %p46 = scmp.eq.s32.totalorder %s8, 1
    %p47 = scmp.ne.s32.totalorder %s42, %s44
    %p48 = scmp.eq.s32.totalorder %s8, 0
    %p49 = por %p47, %p48
    %p50 = scmp.ne.s32.totalorder %s42, %s44
    %p51 = scmp.eq.s32.totalorder %s13, 1
    %p52 = por %p50, %p51
    %p53 = scmp.ne.s32.totalorder %s44, %s45
    %p54 = scmp.eq.s32.totalorder %s13, 0
    %p55 = por %p53, %p54
    %p56 = scmp.ne.s32.totalorder %s44, %s45
    %p57 = scmp.eq.s32.totalorder %s14, 1
    %p58 = por %p56, %p57
    %p60 = scmp.ne.s32.totalorder %s45, %s59
    %p61 = scmp.eq.s32.totalorder %s14, 0
    %p62 = por %p60, %p61
    %s63 = ssub.s32 %s8, %s15
    %p64 = scmp.eq.s32.totalorder %s63, 0
    %s66 = sadd.s32 %s65, 1
    %s67 = scalar_select %p64, %s65, %s66
    %p70 = pneg %p64
    %p71 = scmp.eq.s32.totalorder %s8, 1
    %p72 = por %p70, %p71
    %p73 = scmp.ne.s32.totalorder %s65, %s68
    %p74 = scmp.eq.s32.totalorder %s8, 0
    %p75 = por %p73, %p74
    %p76 = scmp.ne.s32.totalorder %s65, %s68
    %p77 = scmp.eq.s32.totalorder %s13, 1
    %p78 = por %p76, %p77
    %p79 = scmp.ne.s32.totalorder %s68, %s69
    %p80 = scmp.eq.s32.totalorder %s13, 0
    %p81 = por %p79, %p80
    %p82 = scmp.ne.s32.totalorder %s68, %s69
    %p83 = scmp.eq.s32.totalorder %s14, 1
    %p84 = por %p82, %p83
    %p86 = scmp.ne.s32.totalorder %s69, %s85
    %p87 = scmp.eq.s32.totalorder %s14, 0
    %p88 = por %p86, %p87
    %p89 = scmp.le.s32.totalorder 1, %s8
    %p90 = scmp.lt.s32.totalorder %s8, 3
    %p91 = pnand %p89, %p90
    %p92 = pneg %p91
    // Predicated region
    $region9: #{_lambda_.39} parent=5 // pred_check
      _
    $region10: #{_lambda_.39} parent=5 // pred_check_branch
      %94 = sbr.rel (%p91) target = $region12
    $region11: #{_lambda_.39} parent=5 // pred_region
      %s95 = ssub.s32 %s8, 1
      // Predicated region
      $region13: #{_lambda_.39} parent=11 // pred_check
        %p96 = pneg %p55
      $region14: #{_lambda_.39} parent=11 // pred_check_branch
        %98 = sbr.rel (%p96) target = $region16
      $region15: #{_lambda_.39} parent=11 // pred_region
        _
      $region16: #{_lambda_.39} parent=11 // pred_fallthru
        _
    $region12: #{_lambda_.39} parent=5 // pred_fallthru
      _
    %p99 = scmp.lt.s32.totalorder %s8, 2
    // Predicated region
    $region17: #{_lambda_.39} parent=5 // pred_check
      %p100 = pneg %p99
    $region18: #{_lambda_.39} parent=5 // pred_check_branch
      %102 = sbr.rel (%p100) target = $region20
    $region19: #{_lambda_.39} parent=5 // pred_region
      // Predicated region
      $region21: #{_lambda_.39} parent=19 // pred_check
        %p103 = pneg %p28
      $region22: #{_lambda_.39} parent=19 // pred_check_branch
        %105 = sbr.rel (%p103) target = $region24
      $region23: #{_lambda_.39} parent=19 // pred_region
        %s106 = smul.u32 8, %s8
        %p107 = scmp.lt.s32.totalorder %s106, 15
        %s108 = scalar_select %p107, %s106, 15
        %s109 = smul.addr %s108, 4
        %s110 = scalar_lea.vmem %s0, %s109
        %s111 = smul.u32 8, %s8
      $region24: #{_lambda_.39} parent=19 // pred_fallthru
        _
    $region20: #{_lambda_.39} parent=5 // pred_fallthru
      _
    %p112 = scmp.le.s32.totalorder 1, %s8
    %p113 = scmp.lt.s32.totalorder %s8, 3
    %p114 = pnand %p112, %p113
    %p115 = pneg %p114
    // Predicated region
    $region25: #{_lambda_.39} parent=5 // pred_check
      _
    $region26: #{_lambda_.39} parent=5 // pred_check_branch
      %117 = sbr.rel (%p114) target = $region28
    $region27: #{_lambda_.39} parent=5 // pred_region
      %s118 = ssub.s32 %s8, 1
      %s119 = smul.u32 8, %s13
      %p120 = scmp.lt.s32.totalorder %s119, 15
      %s121 = scalar_select %p120, %s119, 15
      %s122 = smul.addr %s121, 4
      %s123 = scalar_lea.vmem %s0, %s122
      %p124 = pneg %p34
      %p125 = pneg %p31
      %p126 = pneg %p55
      %p127 = pneg %p52
      %p128 = pneg %p81
      %p129 = pneg %p78
      %s130 = smul.u32 8, %s13
      %p131 = scmp.lt.s32.totalorder %s130, 15
      %s132 = scalar_select %p131, %s130, 15
      %s133 = smul.addr %s132, 8
      %s134 = scalar_lea.vmem %s2, %s133
      %s135 = smul.u32 8, %s13
      %p136 = scmp.lt.s32.totalorder %s135, 15
      %s137 = scalar_select %p136, %s135, 15
      %s138 = smul.addr %s137, 4
      %s139 = scalar_lea.vmem %s0, %s138
      %s140 = smul.u32 8, %s13
      %s141 = smul.u32 8, %s13
      %p142 = scmp.lt.s32.totalorder %s141, 15
      %s143 = scalar_select %p142, %s141, 15
      %s144 = smul.addr %s143, 8
      %s145 = scalar_lea.vmem %s2, %s144
      %s146 = smul.u32 8, %s13
      %v148 = vld [vmem:[%s139] sm:$0xf]
      %v149 = vld [vmem:[%s139 + $0x4] sm:$0xf]
      %v150 = vld [vmem:[%s139 + $0x8] sm:$0xf]
      %v151 = vld [vmem:[%s139 + $0xc] sm:$0xf]
      %v152 = vld [vmem:[%s139 + $0x10] sm:$0xf]
      %v153 = vld [vmem:[%s139 + $0x14] sm:$0xf]
      %v154 = vld [vmem:[%s139 + $0x18] sm:$0xf]
      %v155 = vld [vmem:[%s139 + $0x1c] sm:$0xf]
      %v156 = vmax.bf16 %v148, 0
      %v157 = vmax.bf16 %v149, 0
      %v158 = vmax.bf16 %v150, 0
      %v159 = vmax.bf16 %v151, 0
      %v160 = vmax.bf16 %v152, 0
      %v161 = vmax.bf16 %v153, 0
      %v162 = vmax.bf16 %v154, 0
      %v163 = vmax.bf16 %v155, 0
      %v164 = vld [vmem:[%s1] sm:$0xf]
      %v165 = vld [vmem:[%s1 + $0x4] sm:$0xf]
      %v166 = vld [vmem:[%s1 + $0x8] sm:$0xf]
      %v175 = vunpack.c.l.b16 %v156
      %v176 = vunpack.c.l.b16 %v157
      %v177 = vunpack.c.l.b16 %v158
      %v178 = vunpack.c.l.b16 %v159
      %v179 = vunpack.c.l.b16 %v160
      %v180 = vunpack.c.l.b16 %v161
      %v181 = vunpack.c.l.b16 %v162
      %v182 = vunpack.c.l.b16 %v163
      %v183 = vpack.c.b16 %v176, %v175
      %v184 = vpack.c.b16 %v178, %v177
      %v185 = vpack.c.b16 %v180, %v179
      %v186 = vpack.c.b16 %v182, %v181
      %v190 = vunpack.c.l.b16 %v164
      %v191 = vunpack.c.l.b16 %v165
      %v192 = vunpack.c.l.b16 %v166
      %v193 = vpack.c.b16 %v191, %v190
      %v194 = vpack.c.b16 %v192, %v192
      %vm196 = vcmask 195584
      %v198 = vsel %vm196, %v183, 0
      %v201 = vsel %vm196, %v184, 0
      %v204 = vsel %vm196, %v185, 0
      %v207 = vsel %vm196, %v186, 0
      %vm209 = vcmask 1043456
      %v211 = vsel %vm209, %v194, 0
      %213 = vmatprep.subr.bf16.mxu0 0
      %214 = vmatpush1.bf16.msra.mxu0 0
      %215 = vmatprep.subr.bf16.mxu0 0
      %216 = vmatpush1.bf16.msra.mxu0 0
      %217 = vmatprep.subr.bf16.mxu0 0
      %218 = vmatpush1.bf16.msra.mxu0 0
      %219 = vmatprep.subr.bf16.mxu0 0
      %220 = vmatpush1.bf16.msra.mxu0 0
      %221 = vmatprep.subr.bf16.mxu0 0
      %222 = vmatpush1.bf16.msra.mxu0 0
      %223 = vmatprep.subr.bf16.mxu0 0
      %224 = vmatpush1.bf16.msra.mxu0 0
      %225 = vmatprep.subr.bf16.mxu0 0
      %226 = vmatpush1.bf16.msra.mxu0 %v211
      %227 = vmatprep.subr.bf16.mxu0 0
      %228 = vmatpush1.bf16.msra.mxu0 %v193
      %229 = vmatprep.subr.bf16.mxu0 0
      %230 = vmatpush2.bf16.msra.mxu0 0
      %231 = vmatprep.subr.bf16.mxu0 0
      %232 = vmatpush2.bf16.msra.mxu0 0
      %233 = vmatprep.subr.bf16.mxu0 0
      %234 = vmatpush2.bf16.msra.mxu0 0
      %235 = vmatprep.subr.bf16.mxu0 0
      %236 = vmatpush2.bf16.msra.mxu0 0
      %237 = vmatprep.subr.bf16.mxu0 0
      %238 = vmatpush2.bf16.msra.mxu0 0
      %239 = vmatprep.subr.bf16.mxu0 0
      %240 = vmatpush2.bf16.msra.mxu0 0
      %241 = vmatprep.subr.bf16.mxu0 0
      %242 = vmatpush2.bf16.msra.mxu0 0
      %243 = vmatprep.subr.bf16.mxu0 0
      %244 = vmatpush2.bf16.msra.mxu0 0
      %245 = vmatprep.mubr.bf16.mxu0 0
      %246 = vmatmul.mubr.bf16.gmra.mxu0 %v198
      %v247 = vpop.f32.mrf.mxu0
      %v248 = vadd.f32 0.0, %v247
      %v249 = vpop.f32.mrf.mxu0
      %v250 = vpop.f32.mrf.mxu0
      %v251 = vadd.f32 0.0, %v250
      %v252 = vpop.f32.mrf.mxu0
      %253 = vmatprep.mubr.bf16.mxu0 0
      %254 = vmatmul.mubr.bf16.gmra.mxu0 %v201
      %v255 = vpop.f32.mrf.mxu0
      %v256 = vadd.f32 0.0, %v255
      %v257 = vpop.f32.mrf.mxu0
      %v258 = vpop.f32.mrf.mxu0
      %v259 = vadd.f32 0.0, %v258
      %v260 = vpop.f32.mrf.mxu0
      %261 = vmatprep.mubr.bf16.mxu0 0
      %262 = vmatmul.mubr.bf16.gmra.mxu0 %v204
      %v263 = vpop.f32.mrf.mxu0
      %v264 = vadd.f32 0.0, %v263
      %v265 = vpop.f32.mrf.mxu0
      %v266 = vpop.f32.mrf.mxu0
      %v267 = vadd.f32 0.0, %v266
      %v268 = vpop.f32.mrf.mxu0
      %269 = vmatprep.mubr.bf16.mxu0 0
      %270 = vmatmul.mubr.bf16.gmra.mxu0 %v207
      %v271 = vpop.f32.mrf.mxu0
      %v272 = vadd.f32 0.0, %v271
      %v273 = vpop.f32.mrf.mxu0
      %v274 = vpop.f32.mrf.mxu0
      %v275 = vadd.f32 0.0, %v274
      %v276 = vpop.f32.mrf.mxu0
      %277 = vdwg.mxu0
      %vm278 = vcmask 130048
      %279 = vst.msk [vmem:[%s145] sm:$0xff] %vm278, %v248
      %280 = vst.msk [vmem:[%s145 + $0x8] sm:$0xff] %vm278, %v251
      %281 = vst.msk [vmem:[%s145 + $0x10] sm:$0xff] %vm278, %v256
      %282 = vst.msk [vmem:[%s145 + $0x18] sm:$0xff] %vm278, %v259
      %283 = vst.msk [vmem:[%s145 + $0x20] sm:$0xff] %vm278, %v264
      %284 = vst.msk [vmem:[%s145 + $0x28] sm:$0xff] %vm278, %v267
      %285 = vst.msk [vmem:[%s145 + $0x30] sm:$0xff] %vm278, %v272
      %286 = vst.msk [vmem:[%s145 + $0x38] sm:$0xff] %vm278, %v275
      %s287 = smul.u32 8, %s13
      %p288 = scmp.lt.s32.totalorder %s287, 15
      %s289 = scalar_select %p288, %s287, 15
      %s290 = smul.addr %s289, 8
      %s291 = scalar_lea.vmem %s2, %s290
      // Predicated region
      $region29: #{_lambda_.39} parent=27 // pred_check
        %p292 = pneg %p78
      $region30: #{_lambda_.39} parent=27 // pred_check_branch
        %294 = sbr.rel (%p292) target = $region32
      $region31: #{_lambda_.39} parent=27 // pred_region
        %s295 = smul.u32 8, %s13
      $region32: #{_lambda_.39} parent=27 // pred_fallthru
        _
    $region28: #{_lambda_.39} parent=5 // pred_fallthru
      _
    %p296 = scmp.le.s32.totalorder 2, %s8
    // Predicated region
    $region33: #{_lambda_.39} parent=5 // pred_check
      %p297 = pneg %p296
    $region34: #{_lambda_.39} parent=5 // pred_check_branch
      %299 = sbr.rel (%p297) target = $region36
    $region35: #{_lambda_.39} parent=5 // pred_region
      %s300 = ssub.s32 %s8, 2
      // Predicated region
      $region37: #{_lambda_.39} parent=35 // pred_check
        %p301 = pneg %p84
      $region38: #{_lambda_.39} parent=35 // pred_check_branch
        %303 = sbr.rel (%p301) target = $region40
      $region39: #{_lambda_.39} parent=35 // pred_region
        %s304 = smul.u32 8, %s14
        %p305 = scmp.lt.s32.totalorder %s304, 15
        %s306 = scalar_select %p305, %s304, 15
        %s307 = smul.addr %s306, 8
        %s308 = scalar_lea.vmem %s2, %s307
      $region40: #{_lambda_.39} parent=35 // pred_fallthru
        _
    $region36: #{_lambda_.39} parent=5 // pred_fallthru
      _
  $region6: #{_lambda_.39} parent=0 // loop_footer
    %s12 = sadd.s32 1, %s8
  $region7: #{_lambda_.39} parent=0 // loop_footer_branch
    %7 = sbr.rel target = $region3
  $region8: #{_lambda_.39} parent=0 // loop_exit
    _

// kernel: _lambda_.45
$region0: #{_lambda_.45}
  #allocation0 [shape = 'u32[]', space=smem, size = 0x4, offset = 0x4, fixed_abs, tag = 'smem constant byte address 0x4 - core index']
  #allocation1 [shape = 'u32[144,128]{1,0:T(1,128)}', space=vmem, size = 0x12000, scoped, tag = 'internal scratch']
  %s0 = inlined_call_operand.vmem [shape: bf16[32,648], index: 0, kind: input, shape index: {}]
  %s1 = inlined_call_operand.vmem [shape: bf16[648,32], index: 1, kind: input, shape index: {}]
  %s2 = inlined_call_operand.vmem [shape: f32[32,32], index: 2, kind: output, shape index: {}]
  %s3 = sld [smem:[#allocation0]]
  $region41: #{_lambda_.45} parent=0
    _
  %s5 = ssub.s32 1, %s3
  %s6 = scalar_select 0, %s5, %s3
  loop: start=0, step=1, limit=4
  $region2: #{_lambda_.45} parent=0 // loop_pre_header
    _
  $region3: #{_lambda_.45} parent=0 // loop_header
    %s8 = sphi 0, %s12
    %p9 = scmp.ge.s32.totalorder %s8, 4
    %s18 = sphi 0, %s20
    %s21 = sphi 0, %s18
    %s22 = sphi 0, %s21
    %s38 = sphi 0, %s22
    %s42 = sphi 0, %s42
    %s44 = sphi 0, %s42
    %s45 = sphi 0, %s44
    %s59 = sphi 0, %s45
    %s65 = sphi 0, %s67
    %s68 = sphi 0, %s65
    %s69 = sphi 0, %s68
    %s85 = sphi 0, %s69
  $region4: #{_lambda_.45} parent=0 // loop_header_branch
    %11 = sbr.rel (%p9) target = $region8
  $region5: #{_lambda_.45} parent=0 // loop_body
    %s13 = ssub.s32 %s8, 1
    %s14 = ssub.s32 %s8, 2
    %s15 = sadd.s32 %s8, 1
    %s16 = ssub.s32 %s8, %s15
    %p17 = scmp.eq.s32.totalorder %s16, 0
    %s19 = sadd.s32 %s18, 1
    %s20 = scalar_select %p17, %s18, %s19
    %p23 = pneg %p17
    %p24 = scmp.eq.s32.totalorder %s8, 1
    %p25 = por %p23, %p24
    %p26 = scmp.ne.s32.totalorder %s18, %s21
    %p27 = scmp.eq.s32.totalorder %s8, 0
    %p28 = por %p26, %p27
    %p29 = scmp.ne.s32.totalorder %s18, %s21
    %p30 = scmp.eq.s32.totalorder %s13, 1
    %p31 = por %p29, %p30
    %p32 = scmp.ne.s32.totalorder %s21, %s22
    %p33 = scmp.eq.s32.totalorder %s13, 0
    %p34 = por %p32, %p33
    %p35 = scmp.ne.s32.totalorder %s21, %s22
    %p36 = scmp.eq.s32.totalorder %s14, 1
    %p37 = por %p35, %p36
    %p39 = scmp.ne.s32.totalorder %s22, %s38
    %p40 = scmp.eq.s32.totalorder %s14, 0
    %p41 = por %p39, %p40
    %s43 = sadd.s32 %s42, 1
    %p46 = scmp.eq.s32.totalorder %s8, 1
    %p47 = scmp.ne.s32.totalorder %s42, %s44
    %p48 = scmp.eq.s32.totalorder %s8, 0
    %p49 = por %p47, %p48
    %p50 = scmp.ne.s32.totalorder %s42, %s44
    %p51 = scmp.eq.s32.totalorder %s13, 1
    %p52 = por %p50, %p51
    %p53 = scmp.ne.s32.totalorder %s44, %s45
    %p54 = scmp.eq.s32.totalorder %s13, 0
    %p55 = por %p53, %p54
    %p56 = scmp.ne.s32.totalorder %s44, %s45
    %p57 = scmp.eq.s32.totalorder %s14, 1
    %p58 = por %p56, %p57
    %p60 = scmp.ne.s32.totalorder %s45, %s59
    %p61 = scmp.eq.s32.totalorder %s14, 0
    %p62 = por %p60, %p61
    %s63 = ssub.s32 %s8, %s15
    %p64 = scmp.eq.s32.totalorder %s63, 0
    %s66 = sadd.s32 %s65, 1
    %s67 = scalar_select %p64, %s65, %s66
    %p70 = pneg %p64
    %p71 = scmp.eq.s32.totalorder %s8, 1
    %p72 = por %p70, %p71
    %p73 = scmp.ne.s32.totalorder %s65, %s68
    %p74 = scmp.eq.s32.totalorder %s8, 0
    %p75 = por %p73, %p74
    %p76 = scmp.ne.s32.totalorder %s65, %s68
    %p77 = scmp.eq.s32.totalorder %s13, 1
    %p78 = por %p76, %p77
    %p79 = scmp.ne.s32.totalorder %s68, %s69
    %p80 = scmp.eq.s32.totalorder %s13, 0
    %p81 = por %p79, %p80
    %p82 = scmp.ne.s32.totalorder %s68, %s69
    %p83 = scmp.eq.s32.totalorder %s14, 1
    %p84 = por %p82, %p83
    %p86 = scmp.ne.s32.totalorder %s69, %s85
    %p87 = scmp.eq.s32.totalorder %s14, 0
    %p88 = por %p86, %p87
    %p89 = scmp.le.s32.totalorder 1, %s8
    %p90 = scmp.lt.s32.totalorder %s8, 3
    %p91 = pnand %p89, %p90
    %p92 = pneg %p91
    // Predicated region
    $region9: #{_lambda_.45} parent=5 // pred_check
      _
    $region10: #{_lambda_.45} parent=5 // pred_check_branch
      %94 = sbr.rel (%p91) target = $region12
    $region11: #{_lambda_.45} parent=5 // pred_region
      %s95 = ssub.s32 %s8, 1
      // Predicated region
      $region13: #{_lambda_.45} parent=11 // pred_check
        %p96 = pneg %p55
      $region14: #{_lambda_.45} parent=11 // pred_check_branch
        %98 = sbr.rel (%p96) target = $region16
      $region15: #{_lambda_.45} parent=11 // pred_region
        _
      $region16: #{_lambda_.45} parent=11 // pred_fallthru
        _
    $region12: #{_lambda_.45} parent=5 // pred_fallthru
      _
    %p99 = scmp.lt.s32.totalorder %s8, 2
    // Predicated region
    $region17: #{_lambda_.45} parent=5 // pred_check
      %p100 = pneg %p99
    $region18: #{_lambda_.45} parent=5 // pred_check_branch
      %102 = sbr.rel (%p100) target = $region20
    $region19: #{_lambda_.45} parent=5 // pred_region
      // Predicated region
      $region21: #{_lambda_.45} parent=19 // pred_check
        %p103 = pneg %p28
      $region22: #{_lambda_.45} parent=19 // pred_check_branch
        %105 = sbr.rel (%p103) target = $region24
      $region23: #{_lambda_.45} parent=19 // pred_region
        %s106 = smul.u32 2, %s8
        %p107 = scmp.lt.s32.totalorder %s106, 3
        %s108 = scalar_select %p107, %s106, 3
        %s109 = smul.addr %s108, 6
        %s110 = smul.addr %s109, 4
        %s111 = scalar_lea.vmem %s0, %s110
        %s112 = smul.u32 2, %s8
      $region24: #{_lambda_.45} parent=19 // pred_fallthru
        _
    $region20: #{_lambda_.45} parent=5 // pred_fallthru
      _
    %p113 = scmp.le.s32.totalorder 1, %s8
    %p114 = scmp.lt.s32.totalorder %s8, 3
    %p115 = pnand %p113, %p114
    %p116 = pneg %p115
    // Predicated region
    $region25: #{_lambda_.45} parent=5 // pred_check
      _
    $region26: #{_lambda_.45} parent=5 // pred_check_branch
      %118 = sbr.rel (%p115) target = $region28
    $region27: #{_lambda_.45} parent=5 // pred_region
      %s119 = ssub.s32 %s8, 1
      %s120 = smul.u32 2, %s13
      %p121 = scmp.lt.s32.totalorder %s120, 3
      %s122 = scalar_select %p121, %s120, 3
      %s123 = smul.addr %s122, 6
      %s124 = smul.addr %s123, 4
      %s125 = scalar_lea.vmem %s0, %s124
      %p126 = pneg %p34
      %p127 = pneg %p31
      %p128 = pneg %p55
      %p129 = pneg %p52
      %p130 = pneg %p81
      %p131 = pneg %p78
      %s132 = smul.u32 2, %s13
      %p133 = scmp.lt.s32.totalorder %s132, 3
      %s134 = scalar_select %p133, %s132, 3
      %s135 = smul.addr %s134, 8
      %s136 = scalar_lea.vmem %s2, %s135
      %s137 = smul.u32 2, %s13
      %p138 = scmp.lt.s32.totalorder %s137, 3
      %s139 = scalar_select %p138, %s137, 3
      %s140 = smul.addr %s139, 6
      %s141 = smul.addr %s140, 4
      %s142 = scalar_lea.vmem %s0, %s141
      %s143 = smul.u32 2, %s13
      %s144 = smul.u32 2, %s13
      %p145 = scmp.lt.s32.totalorder %s144, 3
      %s146 = scalar_select %p145, %s144, 3
      %s147 = smul.addr %s146, 8
      %s148 = scalar_lea.vmem %s2, %s147
      %s149 = smul.u32 2, %s13
      %v151 = vld [vmem:[%s142] sm:$0xff]
      %v152 = vld [vmem:[%s142 + $0x8] sm:$0xff]
      %v153 = vld [vmem:[%s142 + $0x10] sm:$0xff]
      %v154 = vld [vmem:[%s142 + $0x18] sm:$0xff]
      %v155 = vld [vmem:[%s142 + $0x20] sm:$0xff]
      %v156 = vld [vmem:[%s142 + $0x28] sm:$0xff]
      %v157 = vmax.bf16 %v151, 0
      %v158 = vmax.bf16 %v152, 0
      %v159 = vmax.bf16 %v153, 0
      %v160 = vmax.bf16 %v154, 0
      %v161 = vmax.bf16 %v155, 0
      %v162 = vmax.bf16 %v156, 0
      %v163 = vld [vmem:[%s1] sm:$0xf]
      %v164 = vld [vmem:[%s1 + $0x4] sm:$0xf]
      %v165 = vld [vmem:[%s1 + $0x8] sm:$0xf]
      %v166 = vld [vmem:[%s1 + $0xc] sm:$0xf]
      %v167 = vld [vmem:[%s1 + $0x10] sm:$0xf]
      %v168 = vld [vmem:[%s1 + $0x14] sm:$0xf]
      %v169 = vld [vmem:[%s1 + $0x18] sm:$0xf]
      %v170 = vld [vmem:[%s1 + $0x1c] sm:$0xf]
      %v171 = vld [vmem:[%s1 + $0x20] sm:$0xf]
      %v172 = vld [vmem:[%s1 + $0x24] sm:$0xf]
      %v173 = vld [vmem:[%s1 + $0x28] sm:$0xf]
      %v174 = vld [vmem:[%s1 + $0x2c] sm:$0xf]
      %v175 = vld [vmem:[%s1 + $0x30] sm:$0xf]
      %v176 = vld [vmem:[%s1 + $0x34] sm:$0xf]
      %v177 = vld [vmem:[%s1 + $0x38] sm:$0xf]
      %v178 = vld [vmem:[%s1 + $0x3c] sm:$0xf]
      %v179 = vld [vmem:[%s1 + $0x40] sm:$0xf]
      %v180 = vld [vmem:[%s1 + $0x44] sm:$0xf]
      %v181 = vld [vmem:[%s1 + $0x48] sm:$0xf]
      %v182 = vld [vmem:[%s1 + $0x4c] sm:$0xf]
      %v183 = vld [vmem:[%s1 + $0x50] sm:$0xf]
      %v184 = vld [vmem:[%s1 + $0x54] sm:$0xf]
      %v185 = vld [vmem:[%s1 + $0x58] sm:$0xf]
      %v186 = vld [vmem:[%s1 + $0x5c] sm:$0xf]
      %v187 = vld [vmem:[%s1 + $0x60] sm:$0xf]
      %v188 = vld [vmem:[%s1 + $0x64] sm:$0xf]
      %v189 = vld [vmem:[%s1 + $0x68] sm:$0xf]
      %v190 = vld [vmem:[%s1 + $0x6c] sm:$0xf]
      %v191 = vld [vmem:[%s1 + $0x70] sm:$0xf]
      %v192 = vld [vmem:[%s1 + $0x74] sm:$0xf]
      %v193 = vld [vmem:[%s1 + $0x78] sm:$0xf]
      %v194 = vld [vmem:[%s1 + $0x7c] sm:$0xf]
      %v195 = vld [vmem:[%s1 + $0x80] sm:$0xf]
      %v196 = vld [vmem:[%s1 + $0x84] sm:$0xf]
      %v197 = vld [vmem:[%s1 + $0x88] sm:$0xf]
      %v198 = vld [vmem:[%s1 + $0x8c] sm:$0xf]
      %v199 = vld [vmem:[%s1 + $0x90] sm:$0xf]
      %v200 = vld [vmem:[%s1 + $0x94] sm:$0xf]
      %v201 = vld [vmem:[%s1 + $0x98] sm:$0xf]
      %v202 = vld [vmem:[%s1 + $0x9c] sm:$0xf]
      %v203 = vld [vmem:[%s1 + $0xa0] sm:$0xf]
      %v204 = vld [vmem:[%s1 + $0xa4] sm:$0xf]
      %v205 = vld [vmem:[%s1 + $0xa8] sm:$0xf]
      %v206 = vld [vmem:[%s1 + $0xac] sm:$0xf]
      %v207 = vld [vmem:[%s1 + $0xb0] sm:$0xf]
      %v208 = vld [vmem:[%s1 + $0xb4] sm:$0xf]
      %v209 = vld [vmem:[%s1 + $0xb8] sm:$0xf]
      %v210 = vld [vmem:[%s1 + $0xbc] sm:$0xf]
      %v211 = vld [vmem:[%s1 + $0xc0] sm:$0xf]
      %v212 = vld [vmem:[%s1 + $0xc4] sm:$0xf]
      %v213 = vld [vmem:[%s1 + $0xc8] sm:$0xf]
      %v214 = vld [vmem:[%s1 + $0xcc] sm:$0xf]
      %v215 = vld [vmem:[%s1 + $0xd0] sm:$0xf]
      %v216 = vld [vmem:[%s1 + $0xd4] sm:$0xf]
      %v217 = vld [vmem:[%s1 + $0xd8] sm:$0xf]
      %v218 = vld [vmem:[%s1 + $0xdc] sm:$0xf]
      %v219 = vld [vmem:[%s1 + $0xe0] sm:$0xf]
      %v220 = vld [vmem:[%s1 + $0xe4] sm:$0xf]
      %v221 = vld [vmem:[%s1 + $0xe8] sm:$0xf]
      %v222 = vld [vmem:[%s1 + $0xec] sm:$0xf]
      %v223 = vld [vmem:[%s1 + $0xf0] sm:$0xf]
      %v224 = vld [vmem:[%s1 + $0xf4] sm:$0xf]
      %v225 = vld [vmem:[%s1 + $0xf8] sm:$0xf]
      %v226 = vld [vmem:[%s1 + $0xfc] sm:$0xf]
      %v227 = vld [vmem:[%s1 + $0x100] sm:$0xf]
      %v228 = vld [vmem:[%s1 + $0x104] sm:$0xf]
      %v229 = vld [vmem:[%s1 + $0x108] sm:$0xf]
      %v230 = vld [vmem:[%s1 + $0x10c] sm:$0xf]
      %v231 = vld [vmem:[%s1 + $0x110] sm:$0xf]
      %v232 = vld [vmem:[%s1 + $0x114] sm:$0xf]
      %v233 = vld [vmem:[%s1 + $0x118] sm:$0xf]
      %v234 = vld [vmem:[%s1 + $0x11c] sm:$0xf]
      %v235 = vld [vmem:[%s1 + $0x120] sm:$0xf]
      %v236 = vld [vmem:[%s1 + $0x124] sm:$0xf]
      %v237 = vld [vmem:[%s1 + $0x128] sm:$0xf]
      %v238 = vld [vmem:[%s1 + $0x12c] sm:$0xf]
      %v239 = vld [vmem:[%s1 + $0x130] sm:$0xf]
      %v240 = vld [vmem:[%s1 + $0x134] sm:$0xf]
      %v241 = vld [vmem:[%s1 + $0x138] sm:$0xf]
      %v242 = vld [vmem:[%s1 + $0x13c] sm:$0xf]
      %v243 = vld [vmem:[%s1 + $0x140] sm:$0xf]
      %v250 = vunpack.c.l.b16 %v157
      %v251 = vunpack.c.h.b16 %v157
      %v252 = vunpack.c.l.b16 %v158
      %v253 = vunpack.c.h.b16 %v158
      %v254 = vunpack.c.l.b16 %v159
      %v255 = vunpack.c.h.b16 %v159
      %v256 = vunpack.c.l.b16 %v160
      %v257 = vunpack.c.h.b16 %v160
      %v258 = vunpack.c.l.b16 %v161
      %v259 = vunpack.c.h.b16 %v161
      %v260 = vunpack.c.l.b16 %v162
      %v261 = vunpack.c.h.b16 %v162
      %v262 = vpack.c.b16 %v256, %v250
      %v263 = vpack.c.b16 %v257, %v251
      %v264 = vpack.c.b16 %v258, %v252
      %v265 = vpack.c.b16 %v259, %v253
      %v266 = vpack.c.b16 %v260, %v254
      %v267 = vpack.c.b16 %v261, %v255
      %v354 = vunpack.c.l.b16 %v163
      %v355 = vunpack.c.l.b16 %v164
      %v356 = vunpack.c.l.b16 %v165
      %v357 = vunpack.c.l.b16 %v166
      %v358 = vunpack.c.l.b16 %v167
      %v359 = vunpack.c.l.b16 %v168
      %v360 = vunpack.c.l.b16 %v169
      %v361 = vunpack.c.l.b16 %v170
      %v362 = vunpack.c.l.b16 %v171
      %v363 = vunpack.c.l.b16 %v172
      %v364 = vunpack.c.l.b16 %v173
      %v365 = vunpack.c.l.b16 %v174
      %v366 = vunpack.c.l.b16 %v175
      %v367 = vunpack.c.l.b16 %v176
      %v368 = vunpack.c.l.b16 %v177
      %v369 = vunpack.c.l.b16 %v178
      %v370 = vunpack.c.l.b16 %v179
      %v371 = vunpack.c.l.b16 %v180
      %v372 = vunpack.c.l.b16 %v181
      %v373 = vunpack.c.l.b16 %v182
      %v374 = vunpack.c.l.b16 %v183
      %v375 = vunpack.c.l.b16 %v184
      %v376 = vunpack.c.l.b16 %v185
      %v377 = vunpack.c.l.b16 %v186
      %v378 = vunpack.c.l.b16 %v187
      %v379 = vunpack.c.l.b16 %v188
      %v380 = vunpack.c.l.b16 %v189
      %v381 = vunpack.c.l.b16 %v190
      %v382 = vunpack.c.l.b16 %v191
      %v383 = vunpack.c.l.b16 %v192
      %v384 = vunpack.c.l.b16 %v193
      %v385 = vunpack.c.l.b16 %v194
      %v386 = vunpack.c.l.b16 %v195
      %v387 = vunpack.c.l.b16 %v196
      %v388 = vunpack.c.l.b16 %v197
      %v389 = vunpack.c.l.b16 %v198
      %v390 = vunpack.c.l.b16 %v199
      %v391 = vunpack.c.l.b16 %v200
      %v392 = vunpack.c.l.b16 %v201
      %v393 = vunpack.c.l.b16 %v202
      %v394 = vunpack.c.l.b16 %v203
      %v395 = vunpack.c.l.b16 %v204
      %v396 = vunpack.c.l.b16 %v205
      %v397 = vunpack.c.l.b16 %v206
      %v398 = vunpack.c.l.b16 %v207
      %v399 = vunpack.c.l.b16 %v208
      %v400 = vunpack.c.l.b16 %v209
      %v401 = vunpack.c.l.b16 %v210
      %v402 = vunpack.c.l.b16 %v211
      %v403 = vunpack.c.l.b16 %v212
      %v404 = vunpack.c.l.b16 %v213
      %v405 = vunpack.c.l.b16 %v214
      %v406 = vunpack.c.l.b16 %v215
      %v407 = vunpack.c.l.b16 %v216
      %v408 = vunpack.c.l.b16 %v217
      %v409 = vunpack.c.l.b16 %v218
      %v410 = vunpack.c.l.b16 %v219
      %v411 = vunpack.c.l.b16 %v220
      %v412 = vunpack.c.l.b16 %v221
      %v413 = vunpack.c.l.b16 %v222
      %v414 = vunpack.c.l.b16 %v223
      %v415 = vunpack.c.l.b16 %v224
      %v416 = vunpack.c.l.b16 %v225
      %v417 = vunpack.c.l.b16 %v226
      %v418 = vunpack.c.l.b16 %v227
      %v419 = vunpack.c.l.b16 %v228
      %v420 = vunpack.c.l.b16 %v229
      %v421 = vunpack.c.l.b16 %v230
      %v422 = vunpack.c.l.b16 %v231
      %v423 = vunpack.c.l.b16 %v232
      %v424 = vunpack.c.l.b16 %v233
      %v425 = vunpack.c.l.b16 %v234
      %v426 = vunpack.c.l.b16 %v235
      %v427 = vunpack.c.l.b16 %v236
      %v428 = vunpack.c.l.b16 %v237
      %v429 = vunpack.c.l.b16 %v238
      %v430 = vunpack.c.l.b16 %v239
      %v431 = vunpack.c.l.b16 %v240
      %v432 = vunpack.c.l.b16 %v241
      %v433 = vunpack.c.l.b16 %v242
      %v434 = vunpack.c.l.b16 %v243
      %v435 = vpack.c.b16 %v355, %v354
      %v436 = vpack.c.b16 %v357, %v356
      %v437 = vpack.c.b16 %v359, %v358
      %v438 = vpack.c.b16 %v361, %v360
      %v439 = vpack.c.b16 %v363, %v362
      %v440 = vpack.c.b16 %v365, %v364
      %v441 = vpack.c.b16 %v367, %v366
      %v442 = vpack.c.b16 %v369, %v368
      %v443 = vpack.c.b16 %v371, %v370
      %v444 = vpack.c.b16 %v373, %v372
      %v445 = vpack.c.b16 %v375, %v374
      %v446 = vpack.c.b16 %v377, %v376
      %v447 = vpack.c.b16 %v379, %v378
      %v448 = vpack.c.b16 %v381, %v380
      %v449 = vpack.c.b16 %v383, %v382
      %v450 = vpack.c.b16 %v385, %v384
      %v451 = vpack.c.b16 %v387, %v386
      %v452 = vpack.c.b16 %v389, %v388
      %v453 = vpack.c.b16 %v391, %v390
      %v454 = vpack.c.b16 %v393, %v392
      %v455 = vpack.c.b16 %v395, %v394
      %v456 = vpack.c.b16 %v397, %v396
      %v457 = vpack.c.b16 %v399, %v398
      %v458 = vpack.c.b16 %v401, %v400
      %v459 = vpack.c.b16 %v403, %v402
      %v460 = vpack.c.b16 %v405, %v404
      %v461 = vpack.c.b16 %v407, %v406
      %v462 = vpack.c.b16 %v409, %v408
      %v463 = vpack.c.b16 %v411, %v410
      %v464 = vpack.c.b16 %v413, %v412
      %v465 = vpack.c.b16 %v415, %v414
      %v466 = vpack.c.b16 %v417, %v416
      %v467 = vpack.c.b16 %v419, %v418
      %v468 = vpack.c.b16 %v421, %v420
      %v469 = vpack.c.b16 %v423, %v422
      %v470 = vpack.c.b16 %v425, %v424
      %v471 = vpack.c.b16 %v427, %v426
      %v472 = vpack.c.b16 %v429, %v428
      %v473 = vpack.c.b16 %v431, %v430
      %v474 = vpack.c.b16 %v433, %v432
      %v475 = vpack.c.b16 %v434, %v434
      %vm516 = vcmask 64512
      %v518 = vsel %vm516, %v267, 0
      %vm520 = vcmask 1043456
      %v522 = vsel %vm520, %v475, 0
      %524 = vmatprep.subr.bf16.mxu0 0
      %525 = vmatpush1.bf16.msra.mxu0 %v442
      %526 = vmatprep.subr.bf16.mxu0 0
      %527 = vmatpush1.bf16.msra.mxu0 %v441
      %528 = vmatprep.subr.bf16.mxu0 0
      %529 = vmatpush1.bf16.msra.mxu0 %v440
      %530 = vmatprep.subr.bf16.mxu0 0
      %531 = vmatpush1.bf16.msra.mxu0 %v439
      %532 = vmatprep.subr.bf16.mxu0 0
      %533 = vmatpush1.bf16.msra.mxu0 %v438
      %534 = vmatprep.subr.bf16.mxu0 0
      %535 = vmatpush1.bf16.msra.mxu0 %v437
      %536 = vmatprep.subr.bf16.mxu0 0
      %537 = vmatpush1.bf16.msra.mxu0 %v436
      %538 = vmatprep.subr.bf16.mxu0 0
      %539 = vmatpush1.bf16.msra.mxu0 %v435
      %540 = vmatprep.subr.bf16.mxu0 0
      %541 = vmatpush2.bf16.msra.mxu0 %v450
      %542 = vmatprep.subr.bf16.mxu0 0
      %543 = vmatpush2.bf16.msra.mxu0 %v449
      %544 = vmatprep.subr.bf16.mxu0 0
      %545 = vmatpush2.bf16.msra.mxu0 %v448
      %546 = vmatprep.subr.bf16.mxu0 0
      %547 = vmatpush2.bf16.msra.mxu0 %v447
      %548 = vmatprep.subr.bf16.mxu0 0
      %549 = vmatpush2.bf16.msra.mxu0 %v446
      %550 = vmatprep.subr.bf16.mxu0 0
      %551 = vmatpush2.bf16.msra.mxu0 %v445
      %552 = vmatprep.subr.bf16.mxu0 0
      %553 = vmatpush2.bf16.msra.mxu0 %v444
      %554 = vmatprep.subr.bf16.mxu0 0
      %555 = vmatpush2.bf16.msra.mxu0 %v443
      %556 = vmatprep.mubr.bf16.mxu0 %v263
      %557 = vmatmul.mubr.bf16.gmra.mxu0 %v262
      %v558 = vpop.f32.mrf.mxu0
      %v559 = vadd.f32 0.0, %v558
      %v560 = vpop.f32.mrf.mxu0
      %v561 = vpop.f32.mrf.mxu0
      %v562 = vadd.f32 0.0, %v561
      %v563 = vpop.f32.mrf.mxu0
      %564 = vdwg.mxu0
      %565 = vmatprep.subr.bf16.mxu0 0
      %566 = vmatpush1.bf16.msra.mxu0 %v458
      %567 = vmatprep.subr.bf16.mxu0 0
      %568 = vmatpush1.bf16.msra.mxu0 %v457
      %569 = vmatprep.subr.bf16.mxu0 0
      %570 = vmatpush1.bf16.msra.mxu0 %v456
      %571 = vmatprep.subr.bf16.mxu0 0
      %572 = vmatpush1.bf16.msra.mxu0 %v455
      %573 = vmatprep.subr.bf16.mxu0 0
      %574 = vmatpush1.bf16.msra.mxu0 %v454
      %575 = vmatprep.subr.bf16.mxu0 0
      %576 = vmatpush1.bf16.msra.mxu0 %v453
      %577 = vmatprep.subr.bf16.mxu0 0
      %578 = vmatpush1.bf16.msra.mxu0 %v452
      %579 = vmatprep.subr.bf16.mxu0 0
      %580 = vmatpush1.bf16.msra.mxu0 %v451
      %581 = vmatprep.subr.bf16.mxu0 0
      %582 = vmatpush2.bf16.msra.mxu0 %v466
      %583 = vmatprep.subr.bf16.mxu0 0
      %584 = vmatpush2.bf16.msra.mxu0 %v465
      %585 = vmatprep.subr.bf16.mxu0 0
      %586 = vmatpush2.bf16.msra.mxu0 %v464
      %587 = vmatprep.subr.bf16.mxu0 0
      %588 = vmatpush2.bf16.msra.mxu0 %v463
      %589 = vmatprep.subr.bf16.mxu0 0
      %590 = vmatpush2.bf16.msra.mxu0 %v462
      %591 = vmatprep.subr.bf16.mxu0 0
      %592 = vmatpush2.bf16.msra.mxu0 %v461
      %593 = vmatprep.subr.bf16.mxu0 0
      %594 = vmatpush2.bf16.msra.mxu0 %v460
      %595 = vmatprep.subr.bf16.mxu0 0
      %596 = vmatpush2.bf16.msra.mxu0 %v459
      %597 = vmatprep.mubr.bf16.mxu0 %v265
      %598 = vmatmul.mubr.bf16.gmra.mxu0 %v264
      %v599 = vpop.f32.mrf.mxu0
      %v600 = vadd.f32 %v559, %v599
      %v601 = vpop.f32.mrf.mxu0
      %v602 = vpop.f32.mrf.mxu0
      %v603 = vadd.f32 %v562, %v602
      %v604 = vpop.f32.mrf.mxu0
      %605 = vdwg.mxu0
      %606 = vmatprep.subr.bf16.mxu0 0
      %607 = vmatpush1.bf16.msra.mxu0 %v474
      %608 = vmatprep.subr.bf16.mxu0 0
      %609 = vmatpush1.bf16.msra.mxu0 %v473
      %610 = vmatprep.subr.bf16.mxu0 0
      %611 = vmatpush1.bf16.msra.mxu0 %v472
      %612 = vmatprep.subr.bf16.mxu0 0
      %613 = vmatpush1.bf16.msra.mxu0 %v471
      %614 = vmatprep.subr.bf16.mxu0 0
      %615 = vmatpush1.bf16.msra.mxu0 %v470
      %616 = vmatprep.subr.bf16.mxu0 0
      %617 = vmatpush1.bf16.msra.mxu0 %v469
      %618 = vmatprep.subr.bf16.mxu0 0
      %619 = vmatpush1.bf16.msra.mxu0 %v468
      %620 = vmatprep.subr.bf16.mxu0 0
      %621 = vmatpush1.bf16.msra.mxu0 %v467
      %622 = vmatprep.subr.bf16.mxu0 0
      %623 = vmatpush2.bf16.msra.mxu0 0
      %624 = vmatprep.subr.bf16.mxu0 0
      %625 = vmatpush2.bf16.msra.mxu0 0
      %626 = vmatprep.subr.bf16.mxu0 0
      %627 = vmatpush2.bf16.msra.mxu0 0
      %628 = vmatprep.subr.bf16.mxu0 0
      %629 = vmatpush2.bf16.msra.mxu0 0
      %630 = vmatprep.subr.bf16.mxu0 0
      %631 = vmatpush2.bf16.msra.mxu0 0
      %632 = vmatprep.subr.bf16.mxu0 0
      %633 = vmatpush2.bf16.msra.mxu0 0
      %634 = vmatprep.subr.bf16.mxu0 0
      %635 = vmatpush2.bf16.msra.mxu0 0
      %636 = vmatprep.subr.bf16.mxu0 0
      %637 = vmatpush2.bf16.msra.mxu0 %v522
      %638 = vmatprep.mubr.bf16.mxu0 %v518
      %639 = vmatmul.mubr.bf16.gmra.mxu0 %v266
      %v640 = vpop.f32.mrf.mxu0
      %v641 = vadd.f32 %v600, %v640
      %v642 = vpop.f32.mrf.mxu0
      %v643 = vpop.f32.mrf.mxu0
      %v644 = vadd.f32 %v603, %v643
      %v645 = vpop.f32.mrf.mxu0
      %646 = vdwg.mxu0
      %vm647 = vcmask 261120
      %648 = vst.msk [vmem:[%s148] sm:$0xff] %vm647, %v641
      %649 = vst.msk [vmem:[%s148 + $0x8] sm:$0xff] %vm647, %v644
      %s650 = smul.u32 2, %s13
      %p651 = scmp.lt.s32.totalorder %s650, 3
      %s652 = scalar_select %p651, %s650, 3
      %s653 = smul.addr %s652, 8
      %s654 = scalar_lea.vmem %s2, %s653
      // Predicated region
      $region29: #{_lambda_.45} parent=27 // pred_check
        %p655 = pneg %p78
      $region30: #{_lambda_.45} parent=27 // pred_check_branch
        %657 = sbr.rel (%p655) target = $region32
      $region31: #{_lambda_.45} parent=27 // pred_region
        %s658 = smul.u32 2, %s13
      $region32: #{_lambda_.45} parent=27 // pred_fallthru
        _
    $region28: #{_lambda_.45} parent=5 // pred_fallthru
      _
    %p659 = scmp.le.s32.totalorder 2, %s8
    // Predicated region
    $region33: #{_lambda_.45} parent=5 // pred_check
      %p660 = pneg %p659
    $region34: #{_lambda_.45} parent=5 // pred_check_branch
      %662 = sbr.rel (%p660) target = $region36
    $region35: #{_lambda_.45} parent=5 // pred_region
      %s663 = ssub.s32 %s8, 2
      // Predicated region
      $region37: #{_lambda_.45} parent=35 // pred_check
        %p664 = pneg %p84
      $region38: #{_lambda_.45} parent=35 // pred_check_branch
        %666 = sbr.rel (%p664) target = $region40
      $region39: #{_lambda_.45} parent=35 // pred_region
        %s667 = smul.u32 2, %s14
        %p668 = scmp.lt.s32.totalorder %s667, 3
        %s669 = scalar_select %p668, %s667, 3
        %s670 = smul.addr %s669, 8
        %s671 = scalar_lea.vmem %s2, %s670
      $region40: #{_lambda_.45} parent=35 // pred_fallthru
        _
    $region36: #{_lambda_.45} parent=5 // pred_fallthru
      _
  $region6: #{_lambda_.45} parent=0 // loop_footer
    %s12 = sadd.s32 1, %s8
  $region7: #{_lambda_.45} parent=0 // loop_footer_branch
    %7 = sbr.rel target = $region3
  $region8: #{_lambda_.45} parent=0 // loop_exit
    _

// kernel: _lambda_.46
$region0: #{_lambda_.46}
  #allocation0 [shape = 'u32[]', space=smem, size = 0x4, offset = 0x4, fixed_abs, tag = 'smem constant byte address 0x4 - core index']
  #allocation1 [shape = 'u32[144,128]{1,0:T(1,128)}', space=vmem, size = 0x12000, scoped, tag = 'internal scratch']
  %s0 = inlined_call_operand.vmem [shape: bf16[32,272], index: 0, kind: input, shape index: {}]
  %s1 = inlined_call_operand.vmem [shape: bf16[272,16], index: 1, kind: input, shape index: {}]
  %s2 = inlined_call_operand.vmem [shape: f32[32,16], index: 2, kind: output, shape index: {}]
  %s3 = sld [smem:[#allocation0]]
  $region41: #{_lambda_.46} parent=0
    _
  %s5 = ssub.s32 1, %s3
  %s6 = scalar_select 0, %s5, %s3
  loop: start=0, step=1, limit=4
  $region2: #{_lambda_.46} parent=0 // loop_pre_header
    _
  $region3: #{_lambda_.46} parent=0 // loop_header
    %s8 = sphi 0, %s12
    %p9 = scmp.ge.s32.totalorder %s8, 4
    %s18 = sphi 0, %s20
    %s21 = sphi 0, %s18
    %s22 = sphi 0, %s21
    %s38 = sphi 0, %s22
    %s42 = sphi 0, %s42
    %s44 = sphi 0, %s42
    %s45 = sphi 0, %s44
    %s59 = sphi 0, %s45
    %s65 = sphi 0, %s67
    %s68 = sphi 0, %s65
    %s69 = sphi 0, %s68
    %s85 = sphi 0, %s69
  $region4: #{_lambda_.46} parent=0 // loop_header_branch
    %11 = sbr.rel (%p9) target = $region8
  $region5: #{_lambda_.46} parent=0 // loop_body
    %s13 = ssub.s32 %s8, 1
    %s14 = ssub.s32 %s8, 2
    %s15 = sadd.s32 %s8, 1
    %s16 = ssub.s32 %s8, %s15
    %p17 = scmp.eq.s32.totalorder %s16, 0
    %s19 = sadd.s32 %s18, 1
    %s20 = scalar_select %p17, %s18, %s19
    %p23 = pneg %p17
    %p24 = scmp.eq.s32.totalorder %s8, 1
    %p25 = por %p23, %p24
    %p26 = scmp.ne.s32.totalorder %s18, %s21
    %p27 = scmp.eq.s32.totalorder %s8, 0
    %p28 = por %p26, %p27
    %p29 = scmp.ne.s32.totalorder %s18, %s21
    %p30 = scmp.eq.s32.totalorder %s13, 1
    %p31 = por %p29, %p30
    %p32 = scmp.ne.s32.totalorder %s21, %s22
    %p33 = scmp.eq.s32.totalorder %s13, 0
    %p34 = por %p32, %p33
    %p35 = scmp.ne.s32.totalorder %s21, %s22
    %p36 = scmp.eq.s32.totalorder %s14, 1
    %p37 = por %p35, %p36
    %p39 = scmp.ne.s32.totalorder %s22, %s38
    %p40 = scmp.eq.s32.totalorder %s14, 0
    %p41 = por %p39, %p40
    %s43 = sadd.s32 %s42, 1
    %p46 = scmp.eq.s32.totalorder %s8, 1
    %p47 = scmp.ne.s32.totalorder %s42, %s44
    %p48 = scmp.eq.s32.totalorder %s8, 0
    %p49 = por %p47, %p48
    %p50 = scmp.ne.s32.totalorder %s42, %s44
    %p51 = scmp.eq.s32.totalorder %s13, 1
    %p52 = por %p50, %p51
    %p53 = scmp.ne.s32.totalorder %s44, %s45
    %p54 = scmp.eq.s32.totalorder %s13, 0
    %p55 = por %p53, %p54
    %p56 = scmp.ne.s32.totalorder %s44, %s45
    %p57 = scmp.eq.s32.totalorder %s14, 1
    %p58 = por %p56, %p57
    %p60 = scmp.ne.s32.totalorder %s45, %s59
    %p61 = scmp.eq.s32.totalorder %s14, 0
    %p62 = por %p60, %p61
    %s63 = ssub.s32 %s8, %s15
    %p64 = scmp.eq.s32.totalorder %s63, 0
    %s66 = sadd.s32 %s65, 1
    %s67 = scalar_select %p64, %s65, %s66
    %p70 = pneg %p64
    %p71 = scmp.eq.s32.totalorder %s8, 1
    %p72 = por %p70, %p71
    %p73 = scmp.ne.s32.totalorder %s65, %s68
    %p74 = scmp.eq.s32.totalorder %s8, 0
    %p75 = por %p73, %p74
    %p76 = scmp.ne.s32.totalorder %s65, %s68
    %p77 = scmp.eq.s32.totalorder %s13, 1
    %p78 = por %p76, %p77
    %p79 = scmp.ne.s32.totalorder %s68, %s69
    %p80 = scmp.eq.s32.totalorder %s13, 0
    %p81 = por %p79, %p80
    %p82 = scmp.ne.s32.totalorder %s68, %s69
    %p83 = scmp.eq.s32.totalorder %s14, 1
    %p84 = por %p82, %p83
    %p86 = scmp.ne.s32.totalorder %s69, %s85
    %p87 = scmp.eq.s32.totalorder %s14, 0
    %p88 = por %p86, %p87
    %p89 = scmp.le.s32.totalorder 1, %s8
    %p90 = scmp.lt.s32.totalorder %s8, 3
    %p91 = pnand %p89, %p90
    %p92 = pneg %p91
    // Predicated region
    $region9: #{_lambda_.46} parent=5 // pred_check
      _
    $region10: #{_lambda_.46} parent=5 // pred_check_branch
      %94 = sbr.rel (%p91) target = $region12
    $region11: #{_lambda_.46} parent=5 // pred_region
      %s95 = ssub.s32 %s8, 1
      // Predicated region
      $region13: #{_lambda_.46} parent=11 // pred_check
        %p96 = pneg %p55
      $region14: #{_lambda_.46} parent=11 // pred_check_branch
        %98 = sbr.rel (%p96) target = $region16
      $region15: #{_lambda_.46} parent=11 // pred_region
        _
      $region16: #{_lambda_.46} parent=11 // pred_fallthru
        _
    $region12: #{_lambda_.46} parent=5 // pred_fallthru
      _
    %p99 = scmp.lt.s32.totalorder %s8, 2
    // Predicated region
    $region17: #{_lambda_.46} parent=5 // pred_check
      %p100 = pneg %p99
    $region18: #{_lambda_.46} parent=5 // pred_check_branch
      %102 = sbr.rel (%p100) target = $region20
    $region19: #{_lambda_.46} parent=5 // pred_region
      // Predicated region
      $region21: #{_lambda_.46} parent=19 // pred_check
        %p103 = pneg %p28
      $region22: #{_lambda_.46} parent=19 // pred_check_branch
        %105 = sbr.rel (%p103) target = $region24
      $region23: #{_lambda_.46} parent=19 // pred_region
        %s106 = smul.u32 2, %s8
        %p107 = scmp.lt.s32.totalorder %s106, 3
        %s108 = scalar_select %p107, %s106, 3
        %s109 = smul.addr %s108, 3
        %s110 = smul.addr %s109, 4
        %s111 = scalar_lea.vmem %s0, %s110
        %s112 = smul.u32 2, %s8
      $region24: #{_lambda_.46} parent=19 // pred_fallthru
        _
    $region20: #{_lambda_.46} parent=5 // pred_fallthru
      _
    %p113 = scmp.le.s32.totalorder 1, %s8
    %p114 = scmp.lt.s32.totalorder %s8, 3
    %p115 = pnand %p113, %p114
    %p116 = pneg %p115
    // Predicated region
    $region25: #{_lambda_.46} parent=5 // pred_check
      _
    $region26: #{_lambda_.46} parent=5 // pred_check_branch
      %118 = sbr.rel (%p115) target = $region28
    $region27: #{_lambda_.46} parent=5 // pred_region
      %s119 = ssub.s32 %s8, 1
      %s120 = smul.u32 2, %s13
      %p121 = scmp.lt.s32.totalorder %s120, 3
      %s122 = scalar_select %p121, %s120, 3
      %s123 = smul.addr %s122, 3
      %s124 = smul.addr %s123, 4
      %s125 = scalar_lea.vmem %s0, %s124
      %p126 = pneg %p34
      %p127 = pneg %p31
      %p128 = pneg %p55
      %p129 = pneg %p52
      %p130 = pneg %p81
      %p131 = pneg %p78
      %s132 = smul.u32 2, %s13
      %p133 = scmp.lt.s32.totalorder %s132, 3
      %s134 = scalar_select %p133, %s132, 3
      %s135 = smul.addr %s134, 8
      %s136 = scalar_lea.vmem %s2, %s135
      %s137 = smul.u32 2, %s13
      %p138 = scmp.lt.s32.totalorder %s137, 3
      %s139 = scalar_select %p138, %s137, 3
      %s140 = smul.addr %s139, 3
      %s141 = smul.addr %s140, 4
      %s142 = scalar_lea.vmem %s0, %s141
      %s143 = smul.u32 2, %s13
      %s144 = smul.u32 2, %s13
      %p145 = scmp.lt.s32.totalorder %s144, 3
      %s146 = scalar_select %p145, %s144, 3
      %s147 = smul.addr %s146, 8
      %s148 = scalar_lea.vmem %s2, %s147
      %s149 = smul.u32 2, %s13
      %v151 = vld [vmem:[%s142] sm:$0xff]
      %v152 = vld [vmem:[%s142 + $0x8] sm:$0xf]
      %v153 = vld [vmem:[%s142 + $0xc] sm:$0xff]
      %v154 = vld [vmem:[%s142 + $0x14] sm:$0xf]
      %v155 = vmax.bf16 %v151, 0
      %v156 = vmax.bf16 %v152, 0
      %v157 = vmax.bf16 %v153, 0
      %v158 = vmax.bf16 %v154, 0
      %v159 = vld [vmem:[%s1] sm:$0xf]
      %v160 = vld [vmem:[%s1 + $0x4] sm:$0xf]
      %v161 = vld [vmem:[%s1 + $0x8] sm:$0xf]
      %v162 = vld [vmem:[%s1 + $0xc] sm:$0xf]
      %v163 = vld [vmem:[%s1 + $0x10] sm:$0xf]
      %v164 = vld [vmem:[%s1 + $0x14] sm:$0xf]
      %v165 = vld [vmem:[%s1 + $0x18] sm:$0xf]
      %v166 = vld [vmem:[%s1 + $0x1c] sm:$0xf]
      %v167 = vld [vmem:[%s1 + $0x20] sm:$0xf]
      %v168 = vld [vmem:[%s1 + $0x24] sm:$0xf]
      %v169 = vld [vmem:[%s1 + $0x28] sm:$0xf]
      %v170 = vld [vmem:[%s1 + $0x2c] sm:$0xf]
      %v171 = vld [vmem:[%s1 + $0x30] sm:$0xf]
      %v172 = vld [vmem:[%s1 + $0x34] sm:$0xf]
      %v173 = vld [vmem:[%s1 + $0x38] sm:$0xf]
      %v174 = vld [vmem:[%s1 + $0x3c] sm:$0xf]
      %v175 = vld [vmem:[%s1 + $0x40] sm:$0xf]
      %v176 = vld [vmem:[%s1 + $0x44] sm:$0xf]
      %v177 = vld [vmem:[%s1 + $0x48] sm:$0xf]
      %v178 = vld [vmem:[%s1 + $0x4c] sm:$0xf]
      %v179 = vld [vmem:[%s1 + $0x50] sm:$0xf]
      %v180 = vld [vmem:[%s1 + $0x54] sm:$0xf]
      %v181 = vld [vmem:[%s1 + $0x58] sm:$0xf]
      %v182 = vld [vmem:[%s1 + $0x5c] sm:$0xf]
      %v183 = vld [vmem:[%s1 + $0x60] sm:$0xf]
      %v184 = vld [vmem:[%s1 + $0x64] sm:$0xf]
      %v185 = vld [vmem:[%s1 + $0x68] sm:$0xf]
      %v186 = vld [vmem:[%s1 + $0x6c] sm:$0xf]
      %v187 = vld [vmem:[%s1 + $0x70] sm:$0xf]
      %v188 = vld [vmem:[%s1 + $0x74] sm:$0xf]
      %v189 = vld [vmem:[%s1 + $0x78] sm:$0xf]
      %v190 = vld [vmem:[%s1 + $0x7c] sm:$0xf]
      %v191 = vld [vmem:[%s1 + $0x80] sm:$0xf]
      %v192 = vld [vmem:[%s1 + $0x84] sm:$0xf]
      %v197 = vunpack.c.l.b16 %v155
      %v198 = vunpack.c.h.b16 %v155
      %v199 = vunpack.c.l.b16 %v156
      %v200 = vunpack.c.l.b16 %v157
      %v201 = vunpack.c.h.b16 %v157
      %v202 = vunpack.c.l.b16 %v158
      %v203 = vpack.c.b16 %v200, %v197
      %v204 = vpack.c.b16 %v201, %v198
      %v205 = vpack.c.b16 %v202, %v199
      %v242 = vunpack.c.l.b16 %v159
      %v243 = vunpack.c.l.b16 %v160
      %v244 = vunpack.c.l.b16 %v161
      %v245 = vunpack.c.l.b16 %v162
      %v246 = vunpack.c.l.b16 %v163
      %v247 = vunpack.c.l.b16 %v164
      %v248 = vunpack.c.l.b16 %v165
      %v249 = vunpack.c.l.b16 %v166
      %v250 = vunpack.c.l.b16 %v167
      %v251 = vunpack.c.l.b16 %v168
      %v252 = vunpack.c.l.b16 %v169
      %v253 = vunpack.c.l.b16 %v170
      %v254 = vunpack.c.l.b16 %v171
      %v255 = vunpack.c.l.b16 %v172
      %v256 = vunpack.c.l.b16 %v173
      %v257 = vunpack.c.l.b16 %v174
      %v258 = vunpack.c.l.b16 %v175
      %v259 = vunpack.c.l.b16 %v176
      %v260 = vunpack.c.l.b16 %v177
      %v261 = vunpack.c.l.b16 %v178
      %v262 = vunpack.c.l.b16 %v179
      %v263 = vunpack.c.l.b16 %v180
      %v264 = vunpack.c.l.b16 %v181
      %v265 = vunpack.c.l.b16 %v182
      %v266 = vunpack.c.l.b16 %v183
      %v267 = vunpack.c.l.b16 %v184
      %v268 = vunpack.c.l.b16 %v185
      %v269 = vunpack.c.l.b16 %v186
      %v270 = vunpack.c.l.b16 %v187
      %v271 = vunpack.c.l.b16 %v188
      %v272 = vunpack.c.l.b16 %v189
      %v273 = vunpack.c.l.b16 %v190
      %v274 = vunpack.c.l.b16 %v191
      %v275 = vunpack.c.l.b16 %v192
      %v276 = vpack.c.b16 %v243, %v242
      %v277 = vpack.c.b16 %v245, %v244
      %v278 = vpack.c.b16 %v247, %v246
      %v279 = vpack.c.b16 %v249, %v248
      %v280 = vpack.c.b16 %v251, %v250
      %v281 = vpack.c.b16 %v253, %v252
      %v282 = vpack.c.b16 %v255, %v254
      %v283 = vpack.c.b16 %v257, %v256
      %v284 = vpack.c.b16 %v259, %v258
      %v285 = vpack.c.b16 %v261, %v260
      %v286 = vpack.c.b16 %v263, %v262
      %v287 = vpack.c.b16 %v265, %v264
      %v288 = vpack.c.b16 %v267, %v266
      %v289 = vpack.c.b16 %v269, %v268
      %v290 = vpack.c.b16 %v271, %v270
      %v291 = vpack.c.b16 %v273, %v272
      %v292 = vpack.c.b16 %v275, %v274
      %vm310 = vcmask 130048
      %v312 = vsel %vm310, %v205, 0
      %314 = vmatprep.subr.bf16.mxu0 0
      %315 = vmatpush1.bf16.msra.mxu0 %v283
      %316 = vmatprep.subr.bf16.mxu0 0
      %317 = vmatpush1.bf16.msra.mxu0 %v282
      %318 = vmatprep.subr.bf16.mxu0 0
      %319 = vmatpush1.bf16.msra.mxu0 %v281
      %320 = vmatprep.subr.bf16.mxu0 0
      %321 = vmatpush1.bf16.msra.mxu0 %v280
      %322 = vmatprep.subr.bf16.mxu0 0
      %323 = vmatpush1.bf16.msra.mxu0 %v279
      %324 = vmatprep.subr.bf16.mxu0 0
      %325 = vmatpush1.bf16.msra.mxu0 %v278
      %326 = vmatprep.subr.bf16.mxu0 0
      %327 = vmatpush1.bf16.msra.mxu0 %v277
      %328 = vmatprep.subr.bf16.mxu0 0
      %329 = vmatpush1.bf16.msra.mxu0 %v276
      %330 = vmatprep.subr.bf16.mxu0 0
      %331 = vmatpush2.bf16.msra.mxu0 %v291
      %332 = vmatprep.subr.bf16.mxu0 0
      %333 = vmatpush2.bf16.msra.mxu0 %v290
      %334 = vmatprep.subr.bf16.mxu0 0
      %335 = vmatpush2.bf16.msra.mxu0 %v289
      %336 = vmatprep.subr.bf16.mxu0 0
      %337 = vmatpush2.bf16.msra.mxu0 %v288
      %338 = vmatprep.subr.bf16.mxu0 0
      %339 = vmatpush2.bf16.msra.mxu0 %v287
      %340 = vmatprep.subr.bf16.mxu0 0
      %341 = vmatpush2.bf16.msra.mxu0 %v286
      %342 = vmatprep.subr.bf16.mxu0 0
      %343 = vmatpush2.bf16.msra.mxu0 %v285
      %344 = vmatprep.subr.bf16.mxu0 0
      %345 = vmatpush2.bf16.msra.mxu0 %v284
      %346 = vmatprep.mubr.bf16.mxu0 %v204
      %347 = vmatmul.mubr.bf16.gmra.mxu0 %v203
      %v348 = vpop.f32.mrf.mxu0
      %v349 = vadd.f32 0.0, %v348
      %v350 = vpop.f32.mrf.mxu0
      %v351 = vpop.f32.mrf.mxu0
      %v352 = vadd.f32 0.0, %v351
      %v353 = vpop.f32.mrf.mxu0
      %354 = vdwg.mxu0
      %355 = vmatprep.subr.bf16.mxu0 0
      %356 = vmatpush1.bf16.msra.mxu0 0
      %357 = vmatprep.subr.bf16.mxu0 0
      %358 = vmatpush1.bf16.msra.mxu0 0
      %359 = vmatprep.subr.bf16.mxu0 0
      %360 = vmatpush1.bf16.msra.mxu0 0
      %361 = vmatprep.subr.bf16.mxu0 0
      %362 = vmatpush1.bf16.msra.mxu0 0
      %363 = vmatprep.subr.bf16.mxu0 0
      %364 = vmatpush1.bf16.msra.mxu0 0
      %365 = vmatprep.subr.bf16.mxu0 0
      %366 = vmatpush1.bf16.msra.mxu0 0
      %367 = vmatprep.subr.bf16.mxu0 0
      %368 = vmatpush1.bf16.msra.mxu0 0
      %369 = vmatprep.subr.bf16.mxu0 0
      %370 = vmatpush1.bf16.msra.mxu0 %v292
      %371 = vmatprep.subr.bf16.mxu0 0
      %372 = vmatpush2.bf16.msra.mxu0 0
      %373 = vmatprep.subr.bf16.mxu0 0
      %374 = vmatpush2.bf16.msra.mxu0 0
      %375 = vmatprep.subr.bf16.mxu0 0
      %376 = vmatpush2.bf16.msra.mxu0 0
      %377 = vmatprep.subr.bf16.mxu0 0
      %378 = vmatpush2.bf16.msra.mxu0 0
      %379 = vmatprep.subr.bf16.mxu0 0
      %380 = vmatpush2.bf16.msra.mxu0 0
      %381 = vmatprep.subr.bf16.mxu0 0
      %382 = vmatpush2.bf16.msra.mxu0 0
      %383 = vmatprep.subr.bf16.mxu0 0
      %384 = vmatpush2.bf16.msra.mxu0 0
      %385 = vmatprep.subr.bf16.mxu0 0
      %386 = vmatpush2.bf16.msra.mxu0 0
      %387 = vmatprep.mubr.bf16.mxu0 0
      %388 = vmatmul.mubr.bf16.gmra.mxu0 %v312
      %v389 = vpop.f32.mrf.mxu0
      %v390 = vadd.f32 %v349, %v389
      %v391 = vpop.f32.mrf.mxu0
      %v392 = vpop.f32.mrf.mxu0
      %v393 = vadd.f32 %v352, %v392
      %v394 = vpop.f32.mrf.mxu0
      %395 = vdwg.mxu0
      %396 = vst.msk [vmem:[%s148] sm:$0xff] %vm310, %v390
      %397 = vst.msk [vmem:[%s148 + $0x8] sm:$0xff] %vm310, %v393
      %s398 = smul.u32 2, %s13
      %p399 = scmp.lt.s32.totalorder %s398, 3
      %s400 = scalar_select %p399, %s398, 3
      %s401 = smul.addr %s400, 8
      %s402 = scalar_lea.vmem %s2, %s401
      // Predicated region
      $region29: #{_lambda_.46} parent=27 // pred_check
        %p403 = pneg %p78
      $region30: #{_lambda_.46} parent=27 // pred_check_branch
        %405 = sbr.rel (%p403) target = $region32
      $region31: #{_lambda_.46} parent=27 // pred_region
        %s406 = smul.u32 2, %s13
      $region32: #{_lambda_.46} parent=27 // pred_fallthru
        _
    $region28: #{_lambda_.46} parent=5 // pred_fallthru
      _
    %p407 = scmp.le.s32.totalorder 2, %s8
    // Predicated region
    $region33: #{_lambda_.46} parent=5 // pred_check
      %p408 = pneg %p407
    $region34: #{_lambda_.46} parent=5 // pred_check_branch
      %410 = sbr.rel (%p408) target = $region36
    $region35: #{_lambda_.46} parent=5 // pred_region
      %s411 = ssub.s32 %s8, 2
      // Predicated region
      $region37: #{_lambda_.46} parent=35 // pred_check
        %p412 = pneg %p84
      $region38: #{_lambda_.46} parent=35 // pred_check_branch
        %414 = sbr.rel (%p412) target = $region40
      $region39: #{_lambda_.46} parent=35 // pred_region
        %s415 = smul.u32 2, %s14
        %p416 = scmp.lt.s32.totalorder %s415, 3
        %s417 = scalar_select %p416, %s415, 3
        %s418 = smul.addr %s417, 8
        %s419 = scalar_lea.vmem %s2, %s418
      $region40: #{_lambda_.46} parent=35 // pred_fallthru
        _
    $region36: #{_lambda_.46} parent=5 // pred_fallthru
      _
  $region6: #{_lambda_.46} parent=0 // loop_footer
    %s12 = sadd.s32 1, %s8
  $region7: #{_lambda_.46} parent=0 // loop_footer_branch
    %7 = sbr.rel target = $region3
  $region8: #{_lambda_.46} parent=0 // loop_exit
    _

// kernel: _lambda_.48
$region0: #{_lambda_.48}
  #allocation0 [shape = 'u32[]', space=smem, size = 0x4, offset = 0x4, fixed_abs, tag = 'smem constant byte address 0x4 - core index']
  #allocation1 [shape = 'u32[144,128]{1,0:T(1,128)}', space=vmem, size = 0x12000, scoped, tag = 'internal scratch']
  %s0 = inlined_call_operand.vmem [shape: bf16[32,32], index: 0, kind: input, shape index: {}]
  %s1 = inlined_call_operand.vmem [shape: bf16[32,32], index: 1, kind: input, shape index: {}]
  %s2 = inlined_call_operand.vmem [shape: f32[32,32], index: 2, kind: output, shape index: {}]
  %s3 = sld [smem:[#allocation0]]
  $region41: #{_lambda_.48} parent=0
    _
  %s5 = ssub.s32 1, %s3
  %s6 = scalar_select 0, %s5, %s3
  loop: start=0, step=1, limit=4
  $region2: #{_lambda_.48} parent=0 // loop_pre_header
    _
  $region3: #{_lambda_.48} parent=0 // loop_header
    %s8 = sphi 0, %s12
    %p9 = scmp.ge.s32.totalorder %s8, 4
    %s18 = sphi 0, %s20
    %s21 = sphi 0, %s18
    %s22 = sphi 0, %s21
    %s38 = sphi 0, %s22
    %s42 = sphi 0, %s42
    %s44 = sphi 0, %s42
    %s45 = sphi 0, %s44
    %s59 = sphi 0, %s45
    %s65 = sphi 0, %s67
    %s68 = sphi 0, %s65
    %s69 = sphi 0, %s68
    %s85 = sphi 0, %s69
  $region4: #{_lambda_.48} parent=0 // loop_header_branch
    %11 = sbr.rel (%p9) target = $region8
  $region5: #{_lambda_.48} parent=0 // loop_body
    %s13 = ssub.s32 %s8, 1
    %s14 = ssub.s32 %s8, 2
    %s15 = sadd.s32 %s8, 1
    %s16 = ssub.s32 %s8, %s15
    %p17 = scmp.eq.s32.totalorder %s16, 0
    %s19 = sadd.s32 %s18, 1
    %s20 = scalar_select %p17, %s18, %s19
    %p23 = pneg %p17
    %p24 = scmp.eq.s32.totalorder %s8, 1
    %p25 = por %p23, %p24
    %p26 = scmp.ne.s32.totalorder %s18, %s21
    %p27 = scmp.eq.s32.totalorder %s8, 0
    %p28 = por %p26, %p27
    %p29 = scmp.ne.s32.totalorder %s18, %s21
    %p30 = scmp.eq.s32.totalorder %s13, 1
    %p31 = por %p29, %p30
    %p32 = scmp.ne.s32.totalorder %s21, %s22
    %p33 = scmp.eq.s32.totalorder %s13, 0
    %p34 = por %p32, %p33
    %p35 = scmp.ne.s32.totalorder %s21, %s22
    %p36 = scmp.eq.s32.totalorder %s14, 1
    %p37 = por %p35, %p36
    %p39 = scmp.ne.s32.totalorder %s22, %s38
    %p40 = scmp.eq.s32.totalorder %s14, 0
    %p41 = por %p39, %p40
    %s43 = sadd.s32 %s42, 1
    %p46 = scmp.eq.s32.totalorder %s8, 1
    %p47 = scmp.ne.s32.totalorder %s42, %s44
    %p48 = scmp.eq.s32.totalorder %s8, 0
    %p49 = por %p47, %p48
    %p50 = scmp.ne.s32.totalorder %s42, %s44
    %p51 = scmp.eq.s32.totalorder %s13, 1
    %p52 = por %p50, %p51
    %p53 = scmp.ne.s32.totalorder %s44, %s45
    %p54 = scmp.eq.s32.totalorder %s13, 0
    %p55 = por %p53, %p54
    %p56 = scmp.ne.s32.totalorder %s44, %s45
    %p57 = scmp.eq.s32.totalorder %s14, 1
    %p58 = por %p56, %p57
    %p60 = scmp.ne.s32.totalorder %s45, %s59
    %p61 = scmp.eq.s32.totalorder %s14, 0
    %p62 = por %p60, %p61
    %s63 = ssub.s32 %s8, %s15
    %p64 = scmp.eq.s32.totalorder %s63, 0
    %s66 = sadd.s32 %s65, 1
    %s67 = scalar_select %p64, %s65, %s66
    %p70 = pneg %p64
    %p71 = scmp.eq.s32.totalorder %s8, 1
    %p72 = por %p70, %p71
    %p73 = scmp.ne.s32.totalorder %s65, %s68
    %p74 = scmp.eq.s32.totalorder %s8, 0
    %p75 = por %p73, %p74
    %p76 = scmp.ne.s32.totalorder %s65, %s68
    %p77 = scmp.eq.s32.totalorder %s13, 1
    %p78 = por %p76, %p77
    %p79 = scmp.ne.s32.totalorder %s68, %s69
    %p80 = scmp.eq.s32.totalorder %s13, 0
    %p81 = por %p79, %p80
    %p82 = scmp.ne.s32.totalorder %s68, %s69
    %p83 = scmp.eq.s32.totalorder %s14, 1
    %p84 = por %p82, %p83
    %p86 = scmp.ne.s32.totalorder %s69, %s85
    %p87 = scmp.eq.s32.totalorder %s14, 0
    %p88 = por %p86, %p87
    %p89 = scmp.le.s32.totalorder 1, %s8
    %p90 = scmp.lt.s32.totalorder %s8, 3
    %p91 = pnand %p89, %p90
    %p92 = pneg %p91
    // Predicated region
    $region9: #{_lambda_.48} parent=5 // pred_check
      _
    $region10: #{_lambda_.48} parent=5 // pred_check_branch
      %94 = sbr.rel (%p91) target = $region12
    $region11: #{_lambda_.48} parent=5 // pred_region
      %s95 = ssub.s32 %s8, 1
      // Predicated region
      $region13: #{_lambda_.48} parent=11 // pred_check
        %p96 = pneg %p55
      $region14: #{_lambda_.48} parent=11 // pred_check_branch
        %98 = sbr.rel (%p96) target = $region16
      $region15: #{_lambda_.48} parent=11 // pred_region
        _
      $region16: #{_lambda_.48} parent=11 // pred_fallthru
        _
    $region12: #{_lambda_.48} parent=5 // pred_fallthru
      _
    %p99 = scmp.lt.s32.totalorder %s8, 2
    // Predicated region
    $region17: #{_lambda_.48} parent=5 // pred_check
      %p100 = pneg %p99
    $region18: #{_lambda_.48} parent=5 // pred_check_branch
      %102 = sbr.rel (%p100) target = $region20
    $region19: #{_lambda_.48} parent=5 // pred_region
      // Predicated region
      $region21: #{_lambda_.48} parent=19 // pred_check
        %p103 = pneg %p28
      $region22: #{_lambda_.48} parent=19 // pred_check_branch
        %105 = sbr.rel (%p103) target = $region24
      $region23: #{_lambda_.48} parent=19 // pred_region
        %s106 = smul.u32 2, %s8
        %p107 = scmp.lt.s32.totalorder %s106, 3
        %s108 = scalar_select %p107, %s106, 3
        %s109 = smul.addr %s108, 4
        %s110 = scalar_lea.vmem %s0, %s109
        %s111 = smul.u32 2, %s8
      $region24: #{_lambda_.48} parent=19 // pred_fallthru
        _
    $region20: #{_lambda_.48} parent=5 // pred_fallthru
      _
    %p112 = scmp.le.s32.totalorder 1, %s8
    %p113 = scmp.lt.s32.totalorder %s8, 3
    %p114 = pnand %p112, %p113
    %p115 = pneg %p114
    // Predicated region
    $region25: #{_lambda_.48} parent=5 // pred_check
      _
    $region26: #{_lambda_.48} parent=5 // pred_check_branch
      %117 = sbr.rel (%p114) target = $region28
    $region27: #{_lambda_.48} parent=5 // pred_region
      %s118 = ssub.s32 %s8, 1
      %s119 = smul.u32 2, %s13
      %p120 = scmp.lt.s32.totalorder %s119, 3
      %s121 = scalar_select %p120, %s119, 3
      %s122 = smul.addr %s121, 4
      %s123 = scalar_lea.vmem %s0, %s122
      %p124 = pneg %p34
      %p125 = pneg %p31
      %p126 = pneg %p55
      %p127 = pneg %p52
      %p128 = pneg %p81
      %p129 = pneg %p78
      %s130 = smul.u32 2, %s13
      %p131 = scmp.lt.s32.totalorder %s130, 3
      %s132 = scalar_select %p131, %s130, 3
      %s133 = smul.addr %s132, 8
      %s134 = scalar_lea.vmem %s2, %s133
      %s135 = smul.u32 2, %s13
      %p136 = scmp.lt.s32.totalorder %s135, 3
      %s137 = scalar_select %p136, %s135, 3
      %s138 = smul.addr %s137, 4
      %s139 = scalar_lea.vmem %s0, %s138
      %s140 = smul.u32 2, %s13
      %s141 = smul.u32 2, %s13
      %p142 = scmp.lt.s32.totalorder %s141, 3
      %s143 = scalar_select %p142, %s141, 3
      %s144 = smul.addr %s143, 8
      %s145 = scalar_lea.vmem %s2, %s144
      %s146 = smul.u32 2, %s13
      %v148 = vld [vmem:[%s139] sm:$0xf]
      %v149 = vld [vmem:[%s139 + $0x4] sm:$0xf]
      %v150 = vmax.bf16 %v148, 0
      %v151 = vmax.bf16 %v149, 0
      %v152 = vld [vmem:[%s1] sm:$0xf]
      %v153 = vld [vmem:[%s1 + $0x4] sm:$0xf]
      %v154 = vld [vmem:[%s1 + $0x8] sm:$0xf]
      %v155 = vld [vmem:[%s1 + $0xc] sm:$0xf]
      %v158 = vunpack.c.l.b16 %v150
      %v159 = vunpack.c.l.b16 %v151
      %v160 = vpack.c.b16 %v159, %v158
      %v165 = vunpack.c.l.b16 %v152
      %v166 = vunpack.c.l.b16 %v153
      %v167 = vunpack.c.l.b16 %v154
      %v168 = vunpack.c.l.b16 %v155
      %v169 = vpack.c.b16 %v166, %v165
      %v170 = vpack.c.b16 %v168, %v167
      %vm173 = vcmask 261120
      %v175 = vsel %vm173, %v160, 0
      %177 = vmatprep.subr.bf16.mxu0 0
      %178 = vmatpush1.bf16.msra.mxu0 0
      %179 = vmatprep.subr.bf16.mxu0 0
      %180 = vmatpush1.bf16.msra.mxu0 0
      %181 = vmatprep.subr.bf16.mxu0 0
      %182 = vmatpush1.bf16.msra.mxu0 0
      %183 = vmatprep.subr.bf16.mxu0 0
      %184 = vmatpush1.bf16.msra.mxu0 0
      %185 = vmatprep.subr.bf16.mxu0 0
      %186 = vmatpush1.bf16.msra.mxu0 0
      %187 = vmatprep.subr.bf16.mxu0 0
      %188 = vmatpush1.bf16.msra.mxu0 0
      %189 = vmatprep.subr.bf16.mxu0 0
      %190 = vmatpush1.bf16.msra.mxu0 %v170
      %191 = vmatprep.subr.bf16.mxu0 0
      %192 = vmatpush1.bf16.msra.mxu0 %v169
      %193 = vmatprep.subr.bf16.mxu0 0
      %194 = vmatpush2.bf16.msra.mxu0 0
      %195 = vmatprep.subr.bf16.mxu0 0
      %196 = vmatpush2.bf16.msra.mxu0 0
      %197 = vmatprep.subr.bf16.mxu0 0
      %198 = vmatpush2.bf16.msra.mxu0 0
      %199 = vmatprep.subr.bf16.mxu0 0
      %200 = vmatpush2.bf16.msra.mxu0 0
      %201 = vmatprep.subr.bf16.mxu0 0
      %202 = vmatpush2.bf16.msra.mxu0 0
      %203 = vmatprep.subr.bf16.mxu0 0
      %204 = vmatpush2.bf16.msra.mxu0 0
      %205 = vmatprep.subr.bf16.mxu0 0
      %206 = vmatpush2.bf16.msra.mxu0 0
      %207 = vmatprep.subr.bf16.mxu0 0
      %208 = vmatpush2.bf16.msra.mxu0 0
      %209 = vmatprep.mubr.bf16.mxu0 0
      %210 = vmatmul.mubr.bf16.gmra.mxu0 %v175
      %v211 = vpop.f32.mrf.mxu0
      %v212 = vadd.f32 0.0, %v211
      %v213 = vpop.f32.mrf.mxu0
      %v214 = vpop.f32.mrf.mxu0
      %v215 = vadd.f32 0.0, %v214
      %v216 = vpop.f32.mrf.mxu0
      %217 = vdwg.mxu0
      %218 = vst.msk [vmem:[%s145] sm:$0xff] %vm173, %v212
      %219 = vst.msk [vmem:[%s145 + $0x8] sm:$0xff] %vm173, %v215
      %s220 = smul.u32 2, %s13
      %p221 = scmp.lt.s32.totalorder %s220, 3
      %s222 = scalar_select %p221, %s220, 3
      %s223 = smul.addr %s222, 8
      %s224 = scalar_lea.vmem %s2, %s223
      // Predicated region
      $region29: #{_lambda_.48} parent=27 // pred_check
        %p225 = pneg %p78
      $region30: #{_lambda_.48} parent=27 // pred_check_branch
        %227 = sbr.rel (%p225) target = $region32
      $region31: #{_lambda_.48} parent=27 // pred_region
        %s228 = smul.u32 2, %s13
      $region32: #{_lambda_.48} parent=27 // pred_fallthru
        _
    $region28: #{_lambda_.48} parent=5 // pred_fallthru
      _
    %p229 = scmp.le.s32.totalorder 2, %s8
    // Predicated region
    $region33: #{_lambda_.48} parent=5 // pred_check
      %p230 = pneg %p229
    $region34: #{_lambda_.48} parent=5 // pred_check_branch
      %232 = sbr.rel (%p230) target = $region36
    $region35: #{_lambda_.48} parent=5 // pred_region
      %s233 = ssub.s32 %s8, 2
      // Predicated region
      $region37: #{_lambda_.48} parent=35 // pred_check
        %p234 = pneg %p84
      $region38: #{_lambda_.48} parent=35 // pred_check_branch
        %236 = sbr.rel (%p234) target = $region40
      $region39: #{_lambda_.48} parent=35 // pred_region
        %s237 = smul.u32 2, %s14
        %p238 = scmp.lt.s32.totalorder %s237, 3
        %s239 = scalar_select %p238, %s237, 3
        %s240 = smul.addr %s239, 8
        %s241 = scalar_lea.vmem %s2, %s240
      $region40: #{_lambda_.48} parent=35 // pred_fallthru
        _
    $region36: #{_lambda_.48} parent=5 // pred_fallthru
      _
  $region6: #{_lambda_.48} parent=0 // loop_footer
    %s12 = sadd.s32 1, %s8
  $region7: #{_lambda_.48} parent=0 // loop_footer_branch
    %7 = sbr.rel target = $region3
  $region8: #{_lambda_.48} parent=0 // loop_exit
    _

// kernel: _lambda_.51
$region0: #{_lambda_.51}
  #allocation0 [shape = 'u32[]', space=smem, size = 0x4, offset = 0x4, fixed_abs, tag = 'smem constant byte address 0x4 - core index']
  #allocation1 [shape = 'u32[144,128]{1,0:T(1,128)}', space=vmem, size = 0x12000, scoped, tag = 'internal scratch']
  %s0 = inlined_call_operand.vmem [shape: bf16[8,1296], index: 0, kind: input, shape index: {}]
  %s1 = inlined_call_operand.vmem [shape: bf16[1296,160], index: 1, kind: input, shape index: {}]
  %s2 = inlined_call_operand.vmem [shape: f32[8,160], index: 2, kind: output, shape index: {}]
  %s3 = sld [smem:[#allocation0]]
  $region18: #{_lambda_.51} parent=0
    _
  %s5 = ssub.s32 1, %s3
  %s6 = scalar_select 0, %s5, %s3
  // Predicated region
  $region2: #{_lambda_.51} parent=0 // pred_check
    _
  $region3: #{_lambda_.51} parent=0 // pred_check_branch
    %8 = sbr.rel (0) target = $region5
  $region4: #{_lambda_.51} parent=0 // pred_region
    _
  $region5: #{_lambda_.51} parent=0 // pred_fallthru
    _
  // Predicated region
  $region6: #{_lambda_.51} parent=0 // pred_check
    _
  $region7: #{_lambda_.51} parent=0 // pred_check_branch
    %10 = sbr.rel (0) target = $region9
  $region8: #{_lambda_.51} parent=0 // pred_region
    _
  $region9: #{_lambda_.51} parent=0 // pred_fallthru
    _
  %v12 = vld [vmem:[%s0] sm:$0xff]
  %v13 = vld [vmem:[%s0 + $0x8] sm:$0xff]
  %v14 = vld [vmem:[%s0 + $0x10] sm:$0xff]
  %v15 = vld [vmem:[%s0 + $0x18] sm:$0xff]
  %v16 = vld [vmem:[%s0 + $0x20] sm:$0xff]
  %v17 = vld [vmem:[%s0 + $0x28] sm:$0xf]
  %v18 = vmax.bf16 %v12, 0
  %v19 = vmax.bf16 %v13, 0
  %v20 = vmax.bf16 %v14, 0
  %v21 = vmax.bf16 %v15, 0
  %v22 = vmax.bf16 %v16, 0
  %v23 = vmax.bf16 %v17, 0
  %v24 = vld [vmem:[%s1] sm:$0xff]
  %v25 = vld [vmem:[%s1 + $0x8] sm:$0xff]
  %v26 = vld [vmem:[%s1 + $0x10] sm:$0xff]
  %v27 = vld [vmem:[%s1 + $0x18] sm:$0xff]
  %v28 = vld [vmem:[%s1 + $0x20] sm:$0xff]
  %v29 = vld [vmem:[%s1 + $0x28] sm:$0xff]
  %v30 = vld [vmem:[%s1 + $0x30] sm:$0xff]
  %v31 = vld [vmem:[%s1 + $0x38] sm:$0xff]
  %v32 = vld [vmem:[%s1 + $0x40] sm:$0xff]
  %v33 = vld [vmem:[%s1 + $0x48] sm:$0xff]
  %v34 = vld [vmem:[%s1 + $0x50] sm:$0xff]
  %v35 = vld [vmem:[%s1 + $0x58] sm:$0xff]
  %v36 = vld [vmem:[%s1 + $0x60] sm:$0xff]
  %v37 = vld [vmem:[%s1 + $0x68] sm:$0xff]
  %v38 = vld [vmem:[%s1 + $0x70] sm:$0xff]
  %v39 = vld [vmem:[%s1 + $0x78] sm:$0xff]
  %v40 = vld [vmem:[%s1 + $0x80] sm:$0xff]
  %v41 = vld [vmem:[%s1 + $0x88] sm:$0xff]
  %v42 = vld [vmem:[%s1 + $0x90] sm:$0xff]
  %v43 = vld [vmem:[%s1 + $0x98] sm:$0xff]
  %v44 = vld [vmem:[%s1 + $0xa0] sm:$0xff]
  %v45 = vld [vmem:[%s1 + $0xa8] sm:$0xff]
  %v46 = vld [vmem:[%s1 + $0xb0] sm:$0xff]
  %v47 = vld [vmem:[%s1 + $0xb8] sm:$0xff]
  %v48 = vld [vmem:[%s1 + $0xc0] sm:$0xff]
  %v49 = vld [vmem:[%s1 + $0xc8] sm:$0xff]
  %v50 = vld [vmem:[%s1 + $0xd0] sm:$0xff]
  %v51 = vld [vmem:[%s1 + $0xd8] sm:$0xff]
  %v52 = vld [vmem:[%s1 + $0xe0] sm:$0xff]
  %v53 = vld [vmem:[%s1 + $0xe8] sm:$0xff]
  %v54 = vld [vmem:[%s1 + $0xf0] sm:$0xff]
  %v55 = vld [vmem:[%s1 + $0xf8] sm:$0xff]
  %v56 = vld [vmem:[%s1 + $0x100] sm:$0xff]
  %v57 = vld [vmem:[%s1 + $0x108] sm:$0xff]
  %v58 = vld [vmem:[%s1 + $0x110] sm:$0xff]
  %v59 = vld [vmem:[%s1 + $0x118] sm:$0xff]
  %v60 = vld [vmem:[%s1 + $0x120] sm:$0xff]
  %v61 = vld [vmem:[%s1 + $0x128] sm:$0xff]
  %v62 = vld [vmem:[%s1 + $0x130] sm:$0xff]
  %v63 = vld [vmem:[%s1 + $0x138] sm:$0xff]
  %v64 = vld [vmem:[%s1 + $0x140] sm:$0xff]
  %v65 = vld [vmem:[%s1 + $0x148] sm:$0xff]
  %v66 = vld [vmem:[%s1 + $0x150] sm:$0xff]
  %v67 = vld [vmem:[%s1 + $0x158] sm:$0xff]
  %v68 = vld [vmem:[%s1 + $0x160] sm:$0xff]
  %v69 = vld [vmem:[%s1 + $0x168] sm:$0xff]
  %v70 = vld [vmem:[%s1 + $0x170] sm:$0xff]
  %v71 = vld [vmem:[%s1 + $0x178] sm:$0xff]
  %v72 = vld [vmem:[%s1 + $0x180] sm:$0xff]
  %v73 = vld [vmem:[%s1 + $0x188] sm:$0xff]
  %v74 = vld [vmem:[%s1 + $0x190] sm:$0xff]
  %v75 = vld [vmem:[%s1 + $0x198] sm:$0xff]
  %v76 = vld [vmem:[%s1 + $0x1a0] sm:$0xff]
  %v77 = vld [vmem:[%s1 + $0x1a8] sm:$0xff]
  %v78 = vld [vmem:[%s1 + $0x1b0] sm:$0xff]
  %v79 = vld [vmem:[%s1 + $0x1b8] sm:$0xff]
  %v80 = vld [vmem:[%s1 + $0x1c0] sm:$0xff]
  %v81 = vld [vmem:[%s1 + $0x1c8] sm:$0xff]
  %v82 = vld [vmem:[%s1 + $0x1d0] sm:$0xff]
  %v83 = vld [vmem:[%s1 + $0x1d8] sm:$0xff]
  %v84 = vld [vmem:[%s1 + $0x1e0] sm:$0xff]
  %v85 = vld [vmem:[%s1 + $0x1e8] sm:$0xff]
  %v86 = vld [vmem:[%s1 + $0x1f0] sm:$0xff]
  %v87 = vld [vmem:[%s1 + $0x1f8] sm:$0xff]
  %v88 = vld [vmem:[%s1 + $0x200] sm:$0xff]
  %v89 = vld [vmem:[%s1 + $0x208] sm:$0xff]
  %v90 = vld [vmem:[%s1 + $0x210] sm:$0xff]
  %v91 = vld [vmem:[%s1 + $0x218] sm:$0xff]
  %v92 = vld [vmem:[%s1 + $0x220] sm:$0xff]
  %v93 = vld [vmem:[%s1 + $0x228] sm:$0xff]
  %v94 = vld [vmem:[%s1 + $0x230] sm:$0xff]
  %v95 = vld [vmem:[%s1 + $0x238] sm:$0xff]
  %v96 = vld [vmem:[%s1 + $0x240] sm:$0xff]
  %v97 = vld [vmem:[%s1 + $0x248] sm:$0xff]
  %v98 = vld [vmem:[%s1 + $0x250] sm:$0xff]
  %v99 = vld [vmem:[%s1 + $0x258] sm:$0xff]
  %v100 = vld [vmem:[%s1 + $0x260] sm:$0xff]
  %v101 = vld [vmem:[%s1 + $0x268] sm:$0xff]
  %v102 = vld [vmem:[%s1 + $0x270] sm:$0xff]
  %v103 = vld [vmem:[%s1 + $0x278] sm:$0xff]
  %v104 = vld [vmem:[%s1 + $0x280] sm:$0xff]
  %v105 = vld [vmem:[%s1 + $0x288] sm:$0xff]
  %v106 = vld [vmem:[%s1 + $0x290] sm:$0xff]
  %v107 = vld [vmem:[%s1 + $0x298] sm:$0xff]
  %v108 = vld [vmem:[%s1 + $0x2a0] sm:$0xff]
  %v109 = vld [vmem:[%s1 + $0x2a8] sm:$0xff]
  %v110 = vld [vmem:[%s1 + $0x2b0] sm:$0xff]
  %v111 = vld [vmem:[%s1 + $0x2b8] sm:$0xff]
  %v112 = vld [vmem:[%s1 + $0x2c0] sm:$0xff]
  %v113 = vld [vmem:[%s1 + $0x2c8] sm:$0xff]
  %v114 = vld [vmem:[%s1 + $0x2d0] sm:$0xff]
  %v115 = vld [vmem:[%s1 + $0x2d8] sm:$0xff]
  %v116 = vld [vmem:[%s1 + $0x2e0] sm:$0xff]
  %v117 = vld [vmem:[%s1 + $0x2e8] sm:$0xff]
  %v118 = vld [vmem:[%s1 + $0x2f0] sm:$0xff]
  %v119 = vld [vmem:[%s1 + $0x2f8] sm:$0xff]
  %v120 = vld [vmem:[%s1 + $0x300] sm:$0xff]
  %v121 = vld [vmem:[%s1 + $0x308] sm:$0xff]
  %v122 = vld [vmem:[%s1 + $0x310] sm:$0xff]
  %v123 = vld [vmem:[%s1 + $0x318] sm:$0xff]
  %v124 = vld [vmem:[%s1 + $0x320] sm:$0xff]
  %v125 = vld [vmem:[%s1 + $0x328] sm:$0xff]
  %v126 = vld [vmem:[%s1 + $0x330] sm:$0xff]
  %v127 = vld [vmem:[%s1 + $0x338] sm:$0xff]
  %v128 = vld [vmem:[%s1 + $0x340] sm:$0xff]
  %v129 = vld [vmem:[%s1 + $0x348] sm:$0xff]
  %v130 = vld [vmem:[%s1 + $0x350] sm:$0xff]
  %v131 = vld [vmem:[%s1 + $0x358] sm:$0xff]
  %v132 = vld [vmem:[%s1 + $0x360] sm:$0xff]
  %v133 = vld [vmem:[%s1 + $0x368] sm:$0xff]
  %v134 = vld [vmem:[%s1 + $0x370] sm:$0xff]
  %v135 = vld [vmem:[%s1 + $0x378] sm:$0xff]
  %v136 = vld [vmem:[%s1 + $0x380] sm:$0xff]
  %v137 = vld [vmem:[%s1 + $0x388] sm:$0xff]
  %v138 = vld [vmem:[%s1 + $0x390] sm:$0xff]
  %v139 = vld [vmem:[%s1 + $0x398] sm:$0xff]
  %v140 = vld [vmem:[%s1 + $0x3a0] sm:$0xff]
  %v141 = vld [vmem:[%s1 + $0x3a8] sm:$0xff]
  %v142 = vld [vmem:[%s1 + $0x3b0] sm:$0xff]
  %v143 = vld [vmem:[%s1 + $0x3b8] sm:$0xff]
  %v144 = vld [vmem:[%s1 + $0x3c0] sm:$0xff]
  %v145 = vld [vmem:[%s1 + $0x3c8] sm:$0xff]
  %v146 = vld [vmem:[%s1 + $0x3d0] sm:$0xff]
  %v147 = vld [vmem:[%s1 + $0x3d8] sm:$0xff]
  %v148 = vld [vmem:[%s1 + $0x3e0] sm:$0xff]
  %v149 = vld [vmem:[%s1 + $0x3e8] sm:$0xff]
  %v150 = vld [vmem:[%s1 + $0x3f0] sm:$0xff]
  %v151 = vld [vmem:[%s1 + $0x3f8] sm:$0xff]
  %v152 = vld [vmem:[%s1 + $0x400] sm:$0xff]
  %v153 = vld [vmem:[%s1 + $0x408] sm:$0xff]
  %v154 = vld [vmem:[%s1 + $0x410] sm:$0xff]
  %v155 = vld [vmem:[%s1 + $0x418] sm:$0xff]
  %v156 = vld [vmem:[%s1 + $0x420] sm:$0xff]
  %v157 = vld [vmem:[%s1 + $0x428] sm:$0xff]
  %v158 = vld [vmem:[%s1 + $0x430] sm:$0xff]
  %v159 = vld [vmem:[%s1 + $0x438] sm:$0xff]
  %v160 = vld [vmem:[%s1 + $0x440] sm:$0xff]
  %v161 = vld [vmem:[%s1 + $0x448] sm:$0xff]
  %v162 = vld [vmem:[%s1 + $0x450] sm:$0xff]
  %v163 = vld [vmem:[%s1 + $0x458] sm:$0xff]
  %v164 = vld [vmem:[%s1 + $0x460] sm:$0xff]
  %v165 = vld [vmem:[%s1 + $0x468] sm:$0xff]
  %v166 = vld [vmem:[%s1 + $0x470] sm:$0xff]
  %v167 = vld [vmem:[%s1 + $0x478] sm:$0xff]
  %v168 = vld [vmem:[%s1 + $0x480] sm:$0xff]
  %v169 = vld [vmem:[%s1 + $0x488] sm:$0xff]
  %v170 = vld [vmem:[%s1 + $0x490] sm:$0xff]
  %v171 = vld [vmem:[%s1 + $0x498] sm:$0xff]
  %v172 = vld [vmem:[%s1 + $0x4a0] sm:$0xff]
  %v173 = vld [vmem:[%s1 + $0x4a8] sm:$0xff]
  %v174 = vld [vmem:[%s1 + $0x4b0] sm:$0xff]
  %v175 = vld [vmem:[%s1 + $0x4b8] sm:$0xff]
  %v176 = vld [vmem:[%s1 + $0x4c0] sm:$0xff]
  %v177 = vld [vmem:[%s1 + $0x4c8] sm:$0xff]
  %v178 = vld [vmem:[%s1 + $0x4d0] sm:$0xff]
  %v179 = vld [vmem:[%s1 + $0x4d8] sm:$0xff]
  %v180 = vld [vmem:[%s1 + $0x4e0] sm:$0xff]
  %v181 = vld [vmem:[%s1 + $0x4e8] sm:$0xff]
  %v182 = vld [vmem:[%s1 + $0x4f0] sm:$0xff]
  %v183 = vld [vmem:[%s1 + $0x4f8] sm:$0xff]
  %v184 = vld [vmem:[%s1 + $0x500] sm:$0xff]
  %v185 = vld [vmem:[%s1 + $0x508] sm:$0xff]
  %v192 = vunpack.c.l.b16 %v18
  %v193 = vunpack.c.h.b16 %v18
  %v194 = vunpack.c.l.b16 %v19
  %v195 = vunpack.c.h.b16 %v19
  %v196 = vunpack.c.l.b16 %v20
  %v197 = vunpack.c.h.b16 %v20
  %v198 = vunpack.c.l.b16 %v21
  %v199 = vunpack.c.h.b16 %v21
  %v200 = vunpack.c.l.b16 %v22
  %v201 = vunpack.c.h.b16 %v22
  %v202 = vunpack.c.l.b16 %v23
  %v203 = vpack.c.b16 %v192, %v192
  %v204 = vpack.c.b16 %v193, %v193
  %v205 = vpack.c.b16 %v194, %v194
  %v206 = vpack.c.b16 %v195, %v195
  %v207 = vpack.c.b16 %v196, %v196
  %v208 = vpack.c.b16 %v197, %v197
  %v209 = vpack.c.b16 %v198, %v198
  %v210 = vpack.c.b16 %v199, %v199
  %v211 = vpack.c.b16 %v200, %v200
  %v212 = vpack.c.b16 %v201, %v201
  %v213 = vpack.c.b16 %v202, %v202
  %v386 = vunpack.c.l.b16 %v24
  %v387 = vunpack.c.h.b16 %v24
  %v388 = vunpack.c.l.b16 %v25
  %v389 = vunpack.c.h.b16 %v25
  %v390 = vunpack.c.l.b16 %v26
  %v391 = vunpack.c.h.b16 %v26
  %v392 = vunpack.c.l.b16 %v27
  %v393 = vunpack.c.h.b16 %v27
  %v394 = vunpack.c.l.b16 %v28
  %v395 = vunpack.c.h.b16 %v28
  %v396 = vunpack.c.l.b16 %v29
  %v397 = vunpack.c.h.b16 %v29
  %v398 = vunpack.c.l.b16 %v30
  %v399 = vunpack.c.h.b16 %v30
  %v400 = vunpack.c.l.b16 %v31
  %v401 = vunpack.c.h.b16 %v31
  %v402 = vunpack.c.l.b16 %v32
  %v403 = vunpack.c.h.b16 %v32
  %v404 = vunpack.c.l.b16 %v33
  %v405 = vunpack.c.h.b16 %v33
  %v406 = vunpack.c.l.b16 %v34
  %v407 = vunpack.c.h.b16 %v34
  %v408 = vunpack.c.l.b16 %v35
  %v409 = vunpack.c.h.b16 %v35
  %v410 = vunpack.c.l.b16 %v36
  %v411 = vunpack.c.h.b16 %v36
  %v412 = vunpack.c.l.b16 %v37
  %v413 = vunpack.c.h.b16 %v37
  %v414 = vunpack.c.l.b16 %v38
  %v415 = vunpack.c.h.b16 %v38
  %v416 = vunpack.c.l.b16 %v39
  %v417 = vunpack.c.h.b16 %v39
  %v418 = vunpack.c.l.b16 %v40
  %v419 = vunpack.c.h.b16 %v40
  %v420 = vunpack.c.l.b16 %v41
  %v421 = vunpack.c.h.b16 %v41
  %v422 = vunpack.c.l.b16 %v42
  %v423 = vunpack.c.h.b16 %v42
  %v424 = vunpack.c.l.b16 %v43
  %v425 = vunpack.c.h.b16 %v43
  %v426 = vunpack.c.l.b16 %v44
  %v427 = vunpack.c.h.b16 %v44
  %v428 = vunpack.c.l.b16 %v45
  %v429 = vunpack.c.h.b16 %v45
  %v430 = vunpack.c.l.b16 %v46
  %v431 = vunpack.c.h.b16 %v46
  %v432 = vunpack.c.l.b16 %v47
  %v433 = vunpack.c.h.b16 %v47
  %v434 = vunpack.c.l.b16 %v48
  %v435 = vunpack.c.h.b16 %v48
  %v436 = vunpack.c.l.b16 %v49
  %v437 = vunpack.c.h.b16 %v49
  %v438 = vunpack.c.l.b16 %v50
  %v439 = vunpack.c.h.b16 %v50
  %v440 = vunpack.c.l.b16 %v51
  %v441 = vunpack.c.h.b16 %v51
  %v442 = vunpack.c.l.b16 %v52
  %v443 = vunpack.c.h.b16 %v52
  %v444 = vunpack.c.l.b16 %v53
  %v445 = vunpack.c.h.b16 %v53
  %v446 = vunpack.c.l.b16 %v54
  %v447 = vunpack.c.h.b16 %v54
  %v448 = vunpack.c.l.b16 %v55
  %v449 = vunpack.c.h.b16 %v55
  %v450 = vunpack.c.l.b16 %v56
  %v451 = vunpack.c.h.b16 %v56
  %v452 = vunpack.c.l.b16 %v57
  %v453 = vunpack.c.h.b16 %v57
  %v454 = vunpack.c.l.b16 %v58
  %v455 = vunpack.c.h.b16 %v58
  %v456 = vunpack.c.l.b16 %v59
  %v457 = vunpack.c.h.b16 %v59
  %v458 = vunpack.c.l.b16 %v60
  %v459 = vunpack.c.h.b16 %v60
  %v460 = vunpack.c.l.b16 %v61
  %v461 = vunpack.c.h.b16 %v61
  %v462 = vunpack.c.l.b16 %v62
  %v463 = vunpack.c.h.b16 %v62
  %v464 = vunpack.c.l.b16 %v63
  %v465 = vunpack.c.h.b16 %v63
  %v466 = vunpack.c.l.b16 %v64
  %v467 = vunpack.c.h.b16 %v64
  %v468 = vunpack.c.l.b16 %v65
  %v469 = vunpack.c.h.b16 %v65
  %v470 = vunpack.c.l.b16 %v66
  %v471 = vunpack.c.h.b16 %v66
  %v472 = vunpack.c.l.b16 %v67
  %v473 = vunpack.c.h.b16 %v67
  %v474 = vunpack.c.l.b16 %v68
  %v475 = vunpack.c.h.b16 %v68
  %v476 = vunpack.c.l.b16 %v69
  %v477 = vunpack.c.h.b16 %v69
  %v478 = vunpack.c.l.b16 %v70
  %v479 = vunpack.c.h.b16 %v70
  %v480 = vunpack.c.l.b16 %v71
  %v481 = vunpack.c.h.b16 %v71
  %v482 = vunpack.c.l.b16 %v72
  %v483 = vunpack.c.h.b16 %v72
  %v484 = vunpack.c.l.b16 %v73
  %v485 = vunpack.c.h.b16 %v73
  %v486 = vunpack.c.l.b16 %v74
  %v487 = vunpack.c.h.b16 %v74
  %v488 = vunpack.c.l.b16 %v75
  %v489 = vunpack.c.h.b16 %v75
  %v490 = vunpack.c.l.b16 %v76
  %v491 = vunpack.c.h.b16 %v76
  %v492 = vunpack.c.l.b16 %v77
  %v493 = vunpack.c.h.b16 %v77
  %v494 = vunpack.c.l.b16 %v78
  %v495 = vunpack.c.h.b16 %v78
  %v496 = vunpack.c.l.b16 %v79
  %v497 = vunpack.c.h.b16 %v79
  %v498 = vunpack.c.l.b16 %v80
  %v499 = vunpack.c.h.b16 %v80
  %v500 = vunpack.c.l.b16 %v81
  %v501 = vunpack.c.h.b16 %v81
  %v502 = vunpack.c.l.b16 %v82
  %v503 = vunpack.c.h.b16 %v82
  %v504 = vunpack.c.l.b16 %v83
  %v505 = vunpack.c.h.b16 %v83
  %v506 = vunpack.c.l.b16 %v84
  %v507 = vunpack.c.h.b16 %v84
  %v508 = vunpack.c.l.b16 %v85
  %v509 = vunpack.c.h.b16 %v85
  %v510 = vunpack.c.l.b16 %v86
  %v511 = vunpack.c.h.b16 %v86
  %v512 = vunpack.c.l.b16 %v87
  %v513 = vunpack.c.h.b16 %v87
  %v514 = vunpack.c.l.b16 %v88
  %v515 = vunpack.c.h.b16 %v88
  %v516 = vunpack.c.l.b16 %v89
  %v517 = vunpack.c.h.b16 %v89
  %v518 = vunpack.c.l.b16 %v90
  %v519 = vunpack.c.h.b16 %v90
  %v520 = vunpack.c.l.b16 %v91
  %v521 = vunpack.c.h.b16 %v91
  %v522 = vunpack.c.l.b16 %v92
  %v523 = vunpack.c.h.b16 %v92
  %v524 = vunpack.c.l.b16 %v93
  %v525 = vunpack.c.h.b16 %v93
  %v526 = vunpack.c.l.b16 %v94
  %v527 = vunpack.c.h.b16 %v94
  %v528 = vunpack.c.l.b16 %v95
  %v529 = vunpack.c.h.b16 %v95
  %v530 = vunpack.c.l.b16 %v96
  %v531 = vunpack.c.h.b16 %v96
  %v532 = vunpack.c.l.b16 %v97
  %v533 = vunpack.c.h.b16 %v97
  %v534 = vunpack.c.l.b16 %v98
  %v535 = vunpack.c.h.b16 %v98
  %v536 = vunpack.c.l.b16 %v99
  %v537 = vunpack.c.h.b16 %v99
  %v538 = vunpack.c.l.b16 %v100
  %v539 = vunpack.c.h.b16 %v100
  %v540 = vunpack.c.l.b16 %v101
  %v541 = vunpack.c.h.b16 %v101
  %v542 = vunpack.c.l.b16 %v102
  %v543 = vunpack.c.h.b16 %v102
  %v544 = vunpack.c.l.b16 %v103
  %v545 = vunpack.c.h.b16 %v103
  %v546 = vunpack.c.l.b16 %v104
  %v547 = vunpack.c.h.b16 %v104
  %v548 = vunpack.c.l.b16 %v105
  %v549 = vunpack.c.h.b16 %v105
  %v550 = vunpack.c.l.b16 %v106
  %v551 = vunpack.c.h.b16 %v106
  %v552 = vunpack.c.l.b16 %v107
  %v553 = vunpack.c.h.b16 %v107
  %v554 = vunpack.c.l.b16 %v108
  %v555 = vunpack.c.h.b16 %v108
  %v556 = vunpack.c.l.b16 %v109
  %v557 = vunpack.c.h.b16 %v109
  %v558 = vunpack.c.l.b16 %v110
  %v559 = vunpack.c.h.b16 %v110
  %v560 = vunpack.c.l.b16 %v111
  %v561 = vunpack.c.h.b16 %v111
  %v562 = vunpack.c.l.b16 %v112
  %v563 = vunpack.c.h.b16 %v112
  %v564 = vunpack.c.l.b16 %v113
  %v565 = vunpack.c.h.b16 %v113
  %v566 = vunpack.c.l.b16 %v114
  %v567 = vunpack.c.h.b16 %v114
  %v568 = vunpack.c.l.b16 %v115
  %v569 = vunpack.c.h.b16 %v115
  %v570 = vunpack.c.l.b16 %v116
  %v571 = vunpack.c.h.b16 %v116
  %v572 = vunpack.c.l.b16 %v117
  %v573 = vunpack.c.h.b16 %v117
  %v574 = vunpack.c.l.b16 %v118
  %v575 = vunpack.c.h.b16 %v118
  %v576 = vunpack.c.l.b16 %v119
  %v577 = vunpack.c.h.b16 %v119
  %v578 = vunpack.c.l.b16 %v120
  %v579 = vunpack.c.h.b16 %v120
  %v580 = vunpack.c.l.b16 %v121
  %v581 = vunpack.c.h.b16 %v121
  %v582 = vunpack.c.l.b16 %v122
  %v583 = vunpack.c.h.b16 %v122
  %v584 = vunpack.c.l.b16 %v123
  %v585 = vunpack.c.h.b16 %v123
  %v586 = vunpack.c.l.b16 %v124
  %v587 = vunpack.c.h.b16 %v124
  %v588 = vunpack.c.l.b16 %v125
  %v589 = vunpack.c.h.b16 %v125
  %v590 = vunpack.c.l.b16 %v126
  %v591 = vunpack.c.h.b16 %v126
  %v592 = vunpack.c.l.b16 %v127
  %v593 = vunpack.c.h.b16 %v127
  %v594 = vunpack.c.l.b16 %v128
  %v595 = vunpack.c.h.b16 %v128
  %v596 = vunpack.c.l.b16 %v129
  %v597 = vunpack.c.h.b16 %v129
  %v598 = vunpack.c.l.b16 %v130
  %v599 = vunpack.c.h.b16 %v130
  %v600 = vunpack.c.l.b16 %v131
  %v601 = vunpack.c.h.b16 %v131
  %v602 = vunpack.c.l.b16 %v132
  %v603 = vunpack.c.h.b16 %v132
  %v604 = vunpack.c.l.b16 %v133
  %v605 = vunpack.c.h.b16 %v133
  %v606 = vunpack.c.l.b16 %v134
  %v607 = vunpack.c.h.b16 %v134
  %v608 = vunpack.c.l.b16 %v135
  %v609 = vunpack.c.h.b16 %v135
  %v610 = vunpack.c.l.b16 %v136
  %v611 = vunpack.c.h.b16 %v136
  %v612 = vunpack.c.l.b16 %v137
  %v613 = vunpack.c.h.b16 %v137
  %v614 = vunpack.c.l.b16 %v138
  %v615 = vunpack.c.h.b16 %v138
  %v616 = vunpack.c.l.b16 %v139
  %v617 = vunpack.c.h.b16 %v139
  %v618 = vunpack.c.l.b16 %v140
  %v619 = vunpack.c.h.b16 %v140
  %v620 = vunpack.c.l.b16 %v141
  %v621 = vunpack.c.h.b16 %v141
  %v622 = vunpack.c.l.b16 %v142
  %v623 = vunpack.c.h.b16 %v142
  %v624 = vunpack.c.l.b16 %v143
  %v625 = vunpack.c.h.b16 %v143
  %v626 = vunpack.c.l.b16 %v144
  %v627 = vunpack.c.h.b16 %v144
  %v628 = vunpack.c.l.b16 %v145
  %v629 = vunpack.c.h.b16 %v145
  %v630 = vunpack.c.l.b16 %v146
  %v631 = vunpack.c.h.b16 %v146
  %v632 = vunpack.c.l.b16 %v147
  %v633 = vunpack.c.h.b16 %v147
  %v634 = vunpack.c.l.b16 %v148
  %v635 = vunpack.c.h.b16 %v148
  %v636 = vunpack.c.l.b16 %v149
  %v637 = vunpack.c.h.b16 %v149
  %v638 = vunpack.c.l.b16 %v150
  %v639 = vunpack.c.h.b16 %v150
  %v640 = vunpack.c.l.b16 %v151
  %v641 = vunpack.c.h.b16 %v151
  %v642 = vunpack.c.l.b16 %v152
  %v643 = vunpack.c.h.b16 %v152
  %v644 = vunpack.c.l.b16 %v153
  %v645 = vunpack.c.h.b16 %v153
  %v646 = vunpack.c.l.b16 %v154
  %v647 = vunpack.c.h.b16 %v154
  %v648 = vunpack.c.l.b16 %v155
  %v649 = vunpack.c.h.b16 %v155
  %v650 = vunpack.c.l.b16 %v156
  %v651 = vunpack.c.h.b16 %v156
  %v652 = vunpack.c.l.b16 %v157
  %v653 = vunpack.c.h.b16 %v157
  %v654 = vunpack.c.l.b16 %v158
  %v655 = vunpack.c.h.b16 %v158
  %v656 = vunpack.c.l.b16 %v159
  %v657 = vunpack.c.h.b16 %v159
  %v658 = vunpack.c.l.b16 %v160
  %v659 = vunpack.c.h.b16 %v160
  %v660 = vunpack.c.l.b16 %v161
  %v661 = vunpack.c.h.b16 %v161
  %v662 = vunpack.c.l.b16 %v162
  %v663 = vunpack.c.h.b16 %v162
  %v664 = vunpack.c.l.b16 %v163
  %v665 = vunpack.c.h.b16 %v163
  %v666 = vunpack.c.l.b16 %v164
  %v667 = vunpack.c.h.b16 %v164
  %v668 = vunpack.c.l.b16 %v165
  %v669 = vunpack.c.h.b16 %v165
  %v670 = vunpack.c.l.b16 %v166
  %v671 = vunpack.c.h.b16 %v166
  %v672 = vunpack.c.l.b16 %v167
  %v673 = vunpack.c.h.b16 %v167
  %v674 = vunpack.c.l.b16 %v168
  %v675 = vunpack.c.h.b16 %v168
  %v676 = vunpack.c.l.b16 %v169
  %v677 = vunpack.c.h.b16 %v169
  %v678 = vunpack.c.l.b16 %v170
  %v679 = vunpack.c.h.b16 %v170
  %v680 = vunpack.c.l.b16 %v171
  %v681 = vunpack.c.h.b16 %v171
  %v682 = vunpack.c.l.b16 %v172
  %v683 = vunpack.c.h.b16 %v172
  %v684 = vunpack.c.l.b16 %v173
  %v685 = vunpack.c.h.b16 %v173
  %v686 = vunpack.c.l.b16 %v174
  %v687 = vunpack.c.h.b16 %v174
  %v688 = vunpack.c.l.b16 %v175
  %v689 = vunpack.c.h.b16 %v175
  %v690 = vunpack.c.l.b16 %v176
  %v691 = vunpack.c.h.b16 %v176
  %v692 = vunpack.c.l.b16 %v177
  %v693 = vunpack.c.h.b16 %v177
  %v694 = vunpack.c.l.b16 %v178
  %v695 = vunpack.c.h.b16 %v178
  %v696 = vunpack.c.l.b16 %v179
  %v697 = vunpack.c.h.b16 %v179
  %v698 = vunpack.c.l.b16 %v180
  %v699 = vunpack.c.h.b16 %v180
  %v700 = vunpack.c.l.b16 %v181
  %v701 = vunpack.c.h.b16 %v181
  %v702 = vunpack.c.l.b16 %v182
  %v703 = vunpack.c.h.b16 %v182
  %v704 = vunpack.c.l.b16 %v183
  %v705 = vunpack.c.h.b16 %v183
  %v706 = vunpack.c.l.b16 %v184
  %v707 = vunpack.c.h.b16 %v184
  %v708 = vunpack.c.l.b16 %v185
  %v709 = vunpack.c.h.b16 %v185
  %v710 = vpack.c.b16 %v388, %v386
  %v711 = vpack.c.b16 %v389, %v387
  %v712 = vpack.c.b16 %v392, %v390
  %v713 = vpack.c.b16 %v393, %v391
  %v714 = vpack.c.b16 %v396, %v394
  %v715 = vpack.c.b16 %v397, %v395
  %v716 = vpack.c.b16 %v400, %v398
  %v717 = vpack.c.b16 %v401, %v399
  %v718 = vpack.c.b16 %v404, %v402
  %v719 = vpack.c.b16 %v405, %v403
  %v720 = vpack.c.b16 %v408, %v406
  %v721 = vpack.c.b16 %v409, %v407
  %v722 = vpack.c.b16 %v412, %v410
  %v723 = vpack.c.b16 %v413, %v411
  %v724 = vpack.c.b16 %v416, %v414
  %v725 = vpack.c.b16 %v417, %v415
  %v726 = vpack.c.b16 %v420, %v418
  %v727 = vpack.c.b16 %v421, %v419
  %v728 = vpack.c.b16 %v424, %v422
  %v729 = vpack.c.b16 %v425, %v423
  %v730 = vpack.c.b16 %v428, %v426
  %v731 = vpack.c.b16 %v429, %v427
  %v732 = vpack.c.b16 %v432, %v430
  %v733 = vpack.c.b16 %v433, %v431
  %v734 = vpack.c.b16 %v436, %v434
  %v735 = vpack.c.b16 %v437, %v435
  %v736 = vpack.c.b16 %v440, %v438
  %v737 = vpack.c.b16 %v441, %v439
  %v738 = vpack.c.b16 %v444, %v442
  %v739 = vpack.c.b16 %v445, %v443
  %v740 = vpack.c.b16 %v448, %v446
  %v741 = vpack.c.b16 %v449, %v447
  %v742 = vpack.c.b16 %v452, %v450
  %v743 = vpack.c.b16 %v453, %v451
  %v744 = vpack.c.b16 %v456, %v454
  %v745 = vpack.c.b16 %v457, %v455
  %v746 = vpack.c.b16 %v460, %v458
  %v747 = vpack.c.b16 %v461, %v459
  %v748 = vpack.c.b16 %v464, %v462
  %v749 = vpack.c.b16 %v465, %v463
  %v750 = vpack.c.b16 %v468, %v466
  %v751 = vpack.c.b16 %v469, %v467
  %v752 = vpack.c.b16 %v472, %v470
  %v753 = vpack.c.b16 %v473, %v471
  %v754 = vpack.c.b16 %v476, %v474
  %v755 = vpack.c.b16 %v477, %v475
  %v756 = vpack.c.b16 %v480, %v478
  %v757 = vpack.c.b16 %v481, %v479
  %v758 = vpack.c.b16 %v484, %v482
  %v759 = vpack.c.b16 %v485, %v483
  %v760 = vpack.c.b16 %v488, %v486
  %v761 = vpack.c.b16 %v489, %v487
  %v762 = vpack.c.b16 %v492, %v490
  %v763 = vpack.c.b16 %v493, %v491
  %v764 = vpack.c.b16 %v496, %v494
  %v765 = vpack.c.b16 %v497, %v495
  %v766 = vpack.c.b16 %v500, %v498
  %v767 = vpack.c.b16 %v501, %v499
  %v768 = vpack.c.b16 %v504, %v502
  %v769 = vpack.c.b16 %v505, %v503
  %v770 = vpack.c.b16 %v508, %v506
  %v771 = vpack.c.b16 %v509, %v507
  %v772 = vpack.c.b16 %v512, %v510
  %v773 = vpack.c.b16 %v513, %v511
  %v774 = vpack.c.b16 %v516, %v514
  %v775 = vpack.c.b16 %v517, %v515
  %v776 = vpack.c.b16 %v520, %v518
  %v777 = vpack.c.b16 %v521, %v519
  %v778 = vpack.c.b16 %v524, %v522
  %v779 = vpack.c.b16 %v525, %v523
  %v780 = vpack.c.b16 %v528, %v526
  %v781 = vpack.c.b16 %v529, %v527
  %v782 = vpack.c.b16 %v532, %v530
  %v783 = vpack.c.b16 %v533, %v531
  %v784 = vpack.c.b16 %v536, %v534
  %v785 = vpack.c.b16 %v537, %v535
  %v786 = vpack.c.b16 %v540, %v538
  %v787 = vpack.c.b16 %v541, %v539
  %v788 = vpack.c.b16 %v544, %v542
  %v789 = vpack.c.b16 %v545, %v543
  %v790 = vpack.c.b16 %v548, %v546
  %v791 = vpack.c.b16 %v549, %v547
  %v792 = vpack.c.b16 %v552, %v550
  %v793 = vpack.c.b16 %v553, %v551
  %v794 = vpack.c.b16 %v556, %v554
  %v795 = vpack.c.b16 %v557, %v555
  %v796 = vpack.c.b16 %v560, %v558
  %v797 = vpack.c.b16 %v561, %v559
  %v798 = vpack.c.b16 %v564, %v562
  %v799 = vpack.c.b16 %v565, %v563
  %v800 = vpack.c.b16 %v568, %v566
  %v801 = vpack.c.b16 %v569, %v567
  %v802 = vpack.c.b16 %v572, %v570
  %v803 = vpack.c.b16 %v573, %v571
  %v804 = vpack.c.b16 %v576, %v574
  %v805 = vpack.c.b16 %v577, %v575
  %v806 = vpack.c.b16 %v580, %v578
  %v807 = vpack.c.b16 %v581, %v579
  %v808 = vpack.c.b16 %v584, %v582
  %v809 = vpack.c.b16 %v585, %v583
  %v810 = vpack.c.b16 %v588, %v586
  %v811 = vpack.c.b16 %v589, %v587
  %v812 = vpack.c.b16 %v592, %v590
  %v813 = vpack.c.b16 %v593, %v591
  %v814 = vpack.c.b16 %v596, %v594
  %v815 = vpack.c.b16 %v597, %v595
  %v816 = vpack.c.b16 %v600, %v598
  %v817 = vpack.c.b16 %v601, %v599
  %v818 = vpack.c.b16 %v604, %v602
  %v819 = vpack.c.b16 %v605, %v603
  %v820 = vpack.c.b16 %v608, %v606
  %v821 = vpack.c.b16 %v609, %v607
  %v822 = vpack.c.b16 %v612, %v610
  %v823 = vpack.c.b16 %v613, %v611
  %v824 = vpack.c.b16 %v616, %v614
  %v825 = vpack.c.b16 %v617, %v615
  %v826 = vpack.c.b16 %v620, %v618
  %v827 = vpack.c.b16 %v621, %v619
  %v828 = vpack.c.b16 %v624, %v622
  %v829 = vpack.c.b16 %v625, %v623
  %v830 = vpack.c.b16 %v628, %v626
  %v831 = vpack.c.b16 %v629, %v627
  %v832 = vpack.c.b16 %v632, %v630
  %v833 = vpack.c.b16 %v633, %v631
  %v834 = vpack.c.b16 %v636, %v634
  %v835 = vpack.c.b16 %v637, %v635
  %v836 = vpack.c.b16 %v640, %v638
  %v837 = vpack.c.b16 %v641, %v639
  %v838 = vpack.c.b16 %v644, %v642
  %v839 = vpack.c.b16 %v645, %v643
  %v840 = vpack.c.b16 %v648, %v646
  %v841 = vpack.c.b16 %v649, %v647
  %v842 = vpack.c.b16 %v652, %v650
  %v843 = vpack.c.b16 %v653, %v651
  %v844 = vpack.c.b16 %v656, %v654
  %v845 = vpack.c.b16 %v657, %v655
  %v846 = vpack.c.b16 %v660, %v658
  %v847 = vpack.c.b16 %v661, %v659
  %v848 = vpack.c.b16 %v664, %v662
  %v849 = vpack.c.b16 %v665, %v663
  %v850 = vpack.c.b16 %v668, %v666
  %v851 = vpack.c.b16 %v669, %v667
  %v852 = vpack.c.b16 %v672, %v670
  %v853 = vpack.c.b16 %v673, %v671
  %v854 = vpack.c.b16 %v676, %v674
  %v855 = vpack.c.b16 %v677, %v675
  %v856 = vpack.c.b16 %v680, %v678
  %v857 = vpack.c.b16 %v681, %v679
  %v858 = vpack.c.b16 %v684, %v682
  %v859 = vpack.c.b16 %v685, %v683
  %v860 = vpack.c.b16 %v688, %v686
  %v861 = vpack.c.b16 %v689, %v687
  %v862 = vpack.c.b16 %v692, %v690
  %v863 = vpack.c.b16 %v693, %v691
  %v864 = vpack.c.b16 %v696, %v694
  %v865 = vpack.c.b16 %v697, %v695
  %v866 = vpack.c.b16 %v700, %v698
  %v867 = vpack.c.b16 %v701, %v699
  %v868 = vpack.c.b16 %v704, %v702
  %v869 = vpack.c.b16 %v705, %v703
  %v870 = vpack.c.b16 %v708, %v706
  %v871 = vpack.c.b16 %v709, %v707
  %vm1034 = vcmask 130048
  %v1036 = vsel %vm1034, %v213, 0
  %1038 = vmatprep.subr.bf16.mxu0 %v725
  %1039 = vmatpush1.bf16.msra.mxu0 %v724
  %1040 = vmatprep.subr.bf16.mxu0 %v723
  %1041 = vmatpush1.bf16.msra.mxu0 %v722
  %1042 = vmatprep.subr.bf16.mxu0 %v721
  %1043 = vmatpush1.bf16.msra.mxu0 %v720
  %1044 = vmatprep.subr.bf16.mxu0 %v719
  %1045 = vmatpush1.bf16.msra.mxu0 %v718
  %1046 = vmatprep.subr.bf16.mxu0 %v717
  %1047 = vmatpush1.bf16.msra.mxu0 %v716
  %1048 = vmatprep.subr.bf16.mxu0 %v715
  %1049 = vmatpush1.bf16.msra.mxu0 %v714
  %1050 = vmatprep.subr.bf16.mxu0 %v713
  %1051 = vmatpush1.bf16.msra.mxu0 %v712
  %1052 = vmatprep.subr.bf16.mxu0 %v711
  %1053 = vmatpush1.bf16.msra.mxu0 %v710
  %1054 = vmatprep.subr.bf16.mxu0 %v741
  %1055 = vmatpush2.bf16.msra.mxu0 %v740
  %1056 = vmatprep.subr.bf16.mxu0 %v739
  %1057 = vmatpush2.bf16.msra.mxu0 %v738
  %1058 = vmatprep.subr.bf16.mxu0 %v737
  %1059 = vmatpush2.bf16.msra.mxu0 %v736
  %1060 = vmatprep.subr.bf16.mxu0 %v735
  %1061 = vmatpush2.bf16.msra.mxu0 %v734
  %1062 = vmatprep.subr.bf16.mxu0 %v733
  %1063 = vmatpush2.bf16.msra.mxu0 %v732
  %1064 = vmatprep.subr.bf16.mxu0 %v731
  %1065 = vmatpush2.bf16.msra.mxu0 %v730
  %1066 = vmatprep.subr.bf16.mxu0 %v729
  %1067 = vmatpush2.bf16.msra.mxu0 %v728
  %1068 = vmatprep.subr.bf16.mxu0 %v727
  %1069 = vmatpush2.bf16.msra.mxu0 %v726
  %1070 = vmatprep.mubr.bf16.mxu0 %v204
  %1071 = vmatmul.mubr.bf16.gmra.mxu0 %v203
  %v1072 = vpop.f32.mrf.mxu0
  %v1073 = vadd.f32 0.0, %v1072
  %v1074 = vpop.f32.mrf.mxu0
  %v1075 = vadd.f32 0.0, %v1074
  %v1076 = vpop.f32.mrf.mxu0
  %v1077 = vpop.f32.mrf.mxu0
  %1078 = vdwg.mxu0
  %1079 = vmatprep.subr.bf16.mxu0 %v757
  %1080 = vmatpush1.bf16.msra.mxu0 %v756
  %1081 = vmatprep.subr.bf16.mxu0 %v755
  %1082 = vmatpush1.bf16.msra.mxu0 %v754
  %1083 = vmatprep.subr.bf16.mxu0 %v753
  %1084 = vmatpush1.bf16.msra.mxu0 %v752
  %1085 = vmatprep.subr.bf16.mxu0 %v751
  %1086 = vmatpush1.bf16.msra.mxu0 %v750
  %1087 = vmatprep.subr.bf16.mxu0 %v749
  %1088 = vmatpush1.bf16.msra.mxu0 %v748
  %1089 = vmatprep.subr.bf16.mxu0 %v747
  %1090 = vmatpush1.bf16.msra.mxu0 %v746
  %1091 = vmatprep.subr.bf16.mxu0 %v745
  %1092 = vmatpush1.bf16.msra.mxu0 %v744
  %1093 = vmatprep.subr.bf16.mxu0 %v743
  %1094 = vmatpush1.bf16.msra.mxu0 %v742
  %1095 = vmatprep.subr.bf16.mxu0 %v773
  %1096 = vmatpush2.bf16.msra.mxu0 %v772
  %1097 = vmatprep.subr.bf16.mxu0 %v771
  %1098 = vmatpush2.bf16.msra.mxu0 %v770
  %1099 = vmatprep.subr.bf16.mxu0 %v769
  %1100 = vmatpush2.bf16.msra.mxu0 %v768
  %1101 = vmatprep.subr.bf16.mxu0 %v767
  %1102 = vmatpush2.bf16.msra.mxu0 %v766
  %1103 = vmatprep.subr.bf16.mxu0 %v765
  %1104 = vmatpush2.bf16.msra.mxu0 %v764
  %1105 = vmatprep.subr.bf16.mxu0 %v763
  %1106 = vmatpush2.bf16.msra.mxu0 %v762
  %1107 = vmatprep.subr.bf16.mxu0 %v761
  %1108 = vmatpush2.bf16.msra.mxu0 %v760
  %1109 = vmatprep.subr.bf16.mxu0 %v759
  %1110 = vmatpush2.bf16.msra.mxu0 %v758
  %1111 = vmatprep.mubr.bf16.mxu0 %v206
  %1112 = vmatmul.mubr.bf16.gmra.mxu0 %v205
  %v1113 = vpop.f32.mrf.mxu0
  %v1114 = vadd.f32 %v1073, %v1113
  %v1115 = vpop.f32.mrf.mxu0
  %v1116 = vadd.f32 %v1075, %v1115
  %v1117 = vpop.f32.mrf.mxu0
  %v1118 = vpop.f32.mrf.mxu0
  %1119 = vdwg.mxu0
  %1120 = vmatprep.subr.bf16.mxu0 %v789
  %1121 = vmatpush1.bf16.msra.mxu0 %v788
  %1122 = vmatprep.subr.bf16.mxu0 %v787
  %1123 = vmatpush1.bf16.msra.mxu0 %v786
  %1124 = vmatprep.subr.bf16.mxu0 %v785
  %1125 = vmatpush1.bf16.msra.mxu0 %v784
  %1126 = vmatprep.subr.bf16.mxu0 %v783
  %1127 = vmatpush1.bf16.msra.mxu0 %v782
  %1128 = vmatprep.subr.bf16.mxu0 %v781
  %1129 = vmatpush1.bf16.msra.mxu0 %v780
  %1130 = vmatprep.subr.bf16.mxu0 %v779
  %1131 = vmatpush1.bf16.msra.mxu0 %v778
  %1132 = vmatprep.subr.bf16.mxu0 %v777
  %1133 = vmatpush1.bf16.msra.mxu0 %v776
  %1134 = vmatprep.subr.bf16.mxu0 %v775
  %1135 = vmatpush1.bf16.msra.mxu0 %v774
  %1136 = vmatprep.subr.bf16.mxu0 %v805
  %1137 = vmatpush2.bf16.msra.mxu0 %v804
  %1138 = vmatprep.subr.bf16.mxu0 %v803
  %1139 = vmatpush2.bf16.msra.mxu0 %v802
  %1140 = vmatprep.subr.bf16.mxu0 %v801
  %1141 = vmatpush2.bf16.msra.mxu0 %v800
  %1142 = vmatprep.subr.bf16.mxu0 %v799
  %1143 = vmatpush2.bf16.msra.mxu0 %v798
  %1144 = vmatprep.subr.bf16.mxu0 %v797
  %1145 = vmatpush2.bf16.msra.mxu0 %v796
  %1146 = vmatprep.subr.bf16.mxu0 %v795
  %1147 = vmatpush2.bf16.msra.mxu0 %v794
  %1148 = vmatprep.subr.bf16.mxu0 %v793
  %1149 = vmatpush2.bf16.msra.mxu0 %v792
  %1150 = vmatprep.subr.bf16.mxu0 %v791
  %1151 = vmatpush2.bf16.msra.mxu0 %v790
  %1152 = vmatprep.mubr.bf16.mxu0 %v208
  %1153 = vmatmul.mubr.bf16.gmra.mxu0 %v207
  %v1154 = vpop.f32.mrf.mxu0
  %v1155 = vadd.f32 %v1114, %v1154
  %v1156 = vpop.f32.mrf.mxu0
  %v1157 = vadd.f32 %v1116, %v1156
  %v1158 = vpop.f32.mrf.mxu0
  %v1159 = vpop.f32.mrf.mxu0
  %1160 = vdwg.mxu0
  %1161 = vmatprep.subr.bf16.mxu0 %v821
  %1162 = vmatpush1.bf16.msra.mxu0 %v820
  %1163 = vmatprep.subr.bf16.mxu0 %v819
  %1164 = vmatpush1.bf16.msra.mxu0 %v818
  %1165 = vmatprep.subr.bf16.mxu0 %v817
  %1166 = vmatpush1.bf16.msra.mxu0 %v816
  %1167 = vmatprep.subr.bf16.mxu0 %v815
  %1168 = vmatpush1.bf16.msra.mxu0 %v814
  %1169 = vmatprep.subr.bf16.mxu0 %v813
  %1170 = vmatpush1.bf16.msra.mxu0 %v812
  %1171 = vmatprep.subr.bf16.mxu0 %v811
  %1172 = vmatpush1.bf16.msra.mxu0 %v810
  %1173 = vmatprep.subr.bf16.mxu0 %v809
  %1174 = vmatpush1.bf16.msra.mxu0 %v808
  %1175 = vmatprep.subr.bf16.mxu0 %v807
  %1176 = vmatpush1.bf16.msra.mxu0 %v806
  %1177 = vmatprep.subr.bf16.mxu0 %v837
  %1178 = vmatpush2.bf16.msra.mxu0 %v836
  %1179 = vmatprep.subr.bf16.mxu0 %v835
  %1180 = vmatpush2.bf16.msra.mxu0 %v834
  %1181 = vmatprep.subr.bf16.mxu0 %v833
  %1182 = vmatpush2.bf16.msra.mxu0 %v832
  %1183 = vmatprep.subr.bf16.mxu0 %v831
  %1184 = vmatpush2.bf16.msra.mxu0 %v830
  %1185 = vmatprep.subr.bf16.mxu0 %v829
  %1186 = vmatpush2.bf16.msra.mxu0 %v828
  %1187 = vmatprep.subr.bf16.mxu0 %v827
  %1188 = vmatpush2.bf16.msra.mxu0 %v826
  %1189 = vmatprep.subr.bf16.mxu0 %v825
  %1190 = vmatpush2.bf16.msra.mxu0 %v824
  %1191 = vmatprep.subr.bf16.mxu0 %v823
  %1192 = vmatpush2.bf16.msra.mxu0 %v822
  %1193 = vmatprep.mubr.bf16.mxu0 %v210
  %1194 = vmatmul.mubr.bf16.gmra.mxu0 %v209
  %v1195 = vpop.f32.mrf.mxu0
  %v1196 = vadd.f32 %v1155, %v1195
  %v1197 = vpop.f32.mrf.mxu0
  %v1198 = vadd.f32 %v1157, %v1197
  %v1199 = vpop.f32.mrf.mxu0
  %v1200 = vpop.f32.mrf.mxu0
  %1201 = vdwg.mxu0
  %1202 = vmatprep.subr.bf16.mxu0 %v853
  %1203 = vmatpush1.bf16.msra.mxu0 %v852
  %1204 = vmatprep.subr.bf16.mxu0 %v851
  %1205 = vmatpush1.bf16.msra.mxu0 %v850
  %1206 = vmatprep.subr.bf16.mxu0 %v849
  %1207 = vmatpush1.bf16.msra.mxu0 %v848
  %1208 = vmatprep.subr.bf16.mxu0 %v847
  %1209 = vmatpush1.bf16.msra.mxu0 %v846
  %1210 = vmatprep.subr.bf16.mxu0 %v845
  %1211 = vmatpush1.bf16.msra.mxu0 %v844
  %1212 = vmatprep.subr.bf16.mxu0 %v843
  %1213 = vmatpush1.bf16.msra.mxu0 %v842
  %1214 = vmatprep.subr.bf16.mxu0 %v841
  %1215 = vmatpush1.bf16.msra.mxu0 %v840
  %1216 = vmatprep.subr.bf16.mxu0 %v839
  %1217 = vmatpush1.bf16.msra.mxu0 %v838
  %1218 = vmatprep.subr.bf16.mxu0 %v869
  %1219 = vmatpush2.bf16.msra.mxu0 %v868
  %1220 = vmatprep.subr.bf16.mxu0 %v867
  %1221 = vmatpush2.bf16.msra.mxu0 %v866
  %1222 = vmatprep.subr.bf16.mxu0 %v865
  %1223 = vmatpush2.bf16.msra.mxu0 %v864
  %1224 = vmatprep.subr.bf16.mxu0 %v863
  %1225 = vmatpush2.bf16.msra.mxu0 %v862
  %1226 = vmatprep.subr.bf16.mxu0 %v861
  %1227 = vmatpush2.bf16.msra.mxu0 %v860
  %1228 = vmatprep.subr.bf16.mxu0 %v859
  %1229 = vmatpush2.bf16.msra.mxu0 %v858
  %1230 = vmatprep.subr.bf16.mxu0 %v857
  %1231 = vmatpush2.bf16.msra.mxu0 %v856
  %1232 = vmatprep.subr.bf16.mxu0 %v855
  %1233 = vmatpush2.bf16.msra.mxu0 %v854
  %1234 = vmatprep.mubr.bf16.mxu0 %v212
  %1235 = vmatmul.mubr.bf16.gmra.mxu0 %v211
  %v1236 = vpop.f32.mrf.mxu0
  %v1237 = vadd.f32 %v1196, %v1236
  %v1238 = vpop.f32.mrf.mxu0
  %v1239 = vadd.f32 %v1198, %v1238
  %v1240 = vpop.f32.mrf.mxu0
  %v1241 = vpop.f32.mrf.mxu0
  %1242 = vdwg.mxu0
  %1243 = vmatprep.subr.bf16.mxu0 0
  %1244 = vmatpush1.bf16.msra.mxu0 0
  %1245 = vmatprep.subr.bf16.mxu0 0
  %1246 = vmatpush1.bf16.msra.mxu0 0
  %1247 = vmatprep.subr.bf16.mxu0 0
  %1248 = vmatpush1.bf16.msra.mxu0 0
  %1249 = vmatprep.subr.bf16.mxu0 0
  %1250 = vmatpush1.bf16.msra.mxu0 0
  %1251 = vmatprep.subr.bf16.mxu0 0
  %1252 = vmatpush1.bf16.msra.mxu0 0
  %1253 = vmatprep.subr.bf16.mxu0 0
  %1254 = vmatpush1.bf16.msra.mxu0 0
  %1255 = vmatprep.subr.bf16.mxu0 0
  %1256 = vmatpush1.bf16.msra.mxu0 0
  %1257 = vmatprep.subr.bf16.mxu0 %v871
  %1258 = vmatpush1.bf16.msra.mxu0 %v870
  %1259 = vmatprep.subr.bf16.mxu0 0
  %1260 = vmatpush2.bf16.msra.mxu0 0
  %1261 = vmatprep.subr.bf16.mxu0 0
  %1262 = vmatpush2.bf16.msra.mxu0 0
  %1263 = vmatprep.subr.bf16.mxu0 0
  %1264 = vmatpush2.bf16.msra.mxu0 0
  %1265 = vmatprep.subr.bf16.mxu0 0
  %1266 = vmatpush2.bf16.msra.mxu0 0
  %1267 = vmatprep.subr.bf16.mxu0 0
  %1268 = vmatpush2.bf16.msra.mxu0 0
  %1269 = vmatprep.subr.bf16.mxu0 0
  %1270 = vmatpush2.bf16.msra.mxu0 0
  %1271 = vmatprep.subr.bf16.mxu0 0
  %1272 = vmatpush2.bf16.msra.mxu0 0
  %1273 = vmatprep.subr.bf16.mxu0 0
  %1274 = vmatpush2.bf16.msra.mxu0 0
  %1275 = vmatprep.mubr.bf16.mxu0 0
  %1276 = vmatmul.mubr.bf16.gmra.mxu0 %v1036
  %v1277 = vpop.f32.mrf.mxu0
  %v1278 = vadd.f32 %v1237, %v1277
  %v1279 = vpop.f32.mrf.mxu0
  %v1280 = vadd.f32 %v1239, %v1279
  %v1281 = vpop.f32.mrf.mxu0
  %v1282 = vpop.f32.mrf.mxu0
  %1283 = vdwg.mxu0
  %1284 = vst [vmem:[%s2] sm:$0xff] %v1278
  %vm1285 = vcmask 261120
  %1286 = vst.msk [vmem:[%s2 + $0x8] sm:$0xff] %vm1285, %v1280
  // Predicated region
  $region10: #{_lambda_.51} parent=0 // pred_check
    _
  $region11: #{_lambda_.51} parent=0 // pred_check_branch
    %1288 = sbr.rel (0) target = $region13
  $region12: #{_lambda_.51} parent=0 // pred_region
    _
  $region13: #{_lambda_.51} parent=0 // pred_fallthru
    _
  // Predicated region
  $region14: #{_lambda_.51} parent=0 // pred_check
    _
  $region15: #{_lambda_.51} parent=0 // pred_check_branch
    %1290 = sbr.rel (0) target = $region17
  $region16: #{_lambda_.51} parent=0 // pred_region
    _
  $region17: #{_lambda_.51} parent=0 // pred_fallthru
    _

// kernel: _lambda_.52
$region0: #{_lambda_.52}
  #allocation0 [shape = 'u32[]', space=smem, size = 0x4, offset = 0x4, fixed_abs, tag = 'smem constant byte address 0x4 - core index']
  #allocation1 [shape = 'u32[144,128]{1,0:T(1,128)}', space=vmem, size = 0x12000, scoped, tag = 'internal scratch']
  %s0 = inlined_call_operand.vmem [shape: bf16[8,1088], index: 0, kind: input, shape index: {}]
  %s1 = inlined_call_operand.vmem [shape: bf16[1088,64], index: 1, kind: input, shape index: {}]
  %s2 = inlined_call_operand.vmem [shape: f32[8,64], index: 2, kind: output, shape index: {}]
  %s3 = sld [smem:[#allocation0]]
  $region18: #{_lambda_.52} parent=0
    _
  %s5 = ssub.s32 1, %s3
  %s6 = scalar_select 0, %s5, %s3
  // Predicated region
  $region2: #{_lambda_.52} parent=0 // pred_check
    _
  $region3: #{_lambda_.52} parent=0 // pred_check_branch
    %8 = sbr.rel (0) target = $region5
  $region4: #{_lambda_.52} parent=0 // pred_region
    _
  $region5: #{_lambda_.52} parent=0 // pred_fallthru
    _
  // Predicated region
  $region6: #{_lambda_.52} parent=0 // pred_check
    _
  $region7: #{_lambda_.52} parent=0 // pred_check_branch
    %10 = sbr.rel (0) target = $region9
  $region8: #{_lambda_.52} parent=0 // pred_region
    _
  $region9: #{_lambda_.52} parent=0 // pred_fallthru
    _
  %v12 = vld [vmem:[%s0] sm:$0xff]
  %v13 = vld [vmem:[%s0 + $0x8] sm:$0xff]
  %v14 = vld [vmem:[%s0 + $0x10] sm:$0xff]
  %v15 = vld [vmem:[%s0 + $0x18] sm:$0xff]
  %v16 = vld [vmem:[%s0 + $0x20] sm:$0xf]
  %v17 = vmax.bf16 %v12, 0
  %v18 = vmax.bf16 %v13, 0
  %v19 = vmax.bf16 %v14, 0
  %v20 = vmax.bf16 %v15, 0
  %v21 = vmax.bf16 %v16, 0
  %v22 = vld [vmem:[%s1] sm:$0xf]
  %v23 = vld [vmem:[%s1 + $0x4] sm:$0xf]
  %v24 = vld [vmem:[%s1 + $0x8] sm:$0xf]
  %v25 = vld [vmem:[%s1 + $0xc] sm:$0xf]
  %v26 = vld [vmem:[%s1 + $0x10] sm:$0xf]
  %v27 = vld [vmem:[%s1 + $0x14] sm:$0xf]
  %v28 = vld [vmem:[%s1 + $0x18] sm:$0xf]
  %v29 = vld [vmem:[%s1 + $0x1c] sm:$0xf]
  %v30 = vld [vmem:[%s1 + $0x20] sm:$0xf]
  %v31 = vld [vmem:[%s1 + $0x24] sm:$0xf]
  %v32 = vld [vmem:[%s1 + $0x28] sm:$0xf]
  %v33 = vld [vmem:[%s1 + $0x2c] sm:$0xf]
  %v34 = vld [vmem:[%s1 + $0x30] sm:$0xf]
  %v35 = vld [vmem:[%s1 + $0x34] sm:$0xf]
  %v36 = vld [vmem:[%s1 + $0x38] sm:$0xf]
  %v37 = vld [vmem:[%s1 + $0x3c] sm:$0xf]
  %v38 = vld [vmem:[%s1 + $0x40] sm:$0xf]
  %v39 = vld [vmem:[%s1 + $0x44] sm:$0xf]
  %v40 = vld [vmem:[%s1 + $0x48] sm:$0xf]
  %v41 = vld [vmem:[%s1 + $0x4c] sm:$0xf]
  %v42 = vld [vmem:[%s1 + $0x50] sm:$0xf]
  %v43 = vld [vmem:[%s1 + $0x54] sm:$0xf]
  %v44 = vld [vmem:[%s1 + $0x58] sm:$0xf]
  %v45 = vld [vmem:[%s1 + $0x5c] sm:$0xf]
  %v46 = vld [vmem:[%s1 + $0x60] sm:$0xf]
  %v47 = vld [vmem:[%s1 + $0x64] sm:$0xf]
  %v48 = vld [vmem:[%s1 + $0x68] sm:$0xf]
  %v49 = vld [vmem:[%s1 + $0x6c] sm:$0xf]
  %v50 = vld [vmem:[%s1 + $0x70] sm:$0xf]
  %v51 = vld [vmem:[%s1 + $0x74] sm:$0xf]
  %v52 = vld [vmem:[%s1 + $0x78] sm:$0xf]
  %v53 = vld [vmem:[%s1 + $0x7c] sm:$0xf]
  %v54 = vld [vmem:[%s1 + $0x80] sm:$0xf]
  %v55 = vld [vmem:[%s1 + $0x84] sm:$0xf]
  %v56 = vld [vmem:[%s1 + $0x88] sm:$0xf]
  %v57 = vld [vmem:[%s1 + $0x8c] sm:$0xf]
  %v58 = vld [vmem:[%s1 + $0x90] sm:$0xf]
  %v59 = vld [vmem:[%s1 + $0x94] sm:$0xf]
  %v60 = vld [vmem:[%s1 + $0x98] sm:$0xf]
  %v61 = vld [vmem:[%s1 + $0x9c] sm:$0xf]
  %v62 = vld [vmem:[%s1 + $0xa0] sm:$0xf]
  %v63 = vld [vmem:[%s1 + $0xa4] sm:$0xf]
  %v64 = vld [vmem:[%s1 + $0xa8] sm:$0xf]
  %v65 = vld [vmem:[%s1 + $0xac] sm:$0xf]
  %v66 = vld [vmem:[%s1 + $0xb0] sm:$0xf]
  %v67 = vld [vmem:[%s1 + $0xb4] sm:$0xf]
  %v68 = vld [vmem:[%s1 + $0xb8] sm:$0xf]
  %v69 = vld [vmem:[%s1 + $0xbc] sm:$0xf]
  %v70 = vld [vmem:[%s1 + $0xc0] sm:$0xf]
  %v71 = vld [vmem:[%s1 + $0xc4] sm:$0xf]
  %v72 = vld [vmem:[%s1 + $0xc8] sm:$0xf]
  %v73 = vld [vmem:[%s1 + $0xcc] sm:$0xf]
  %v74 = vld [vmem:[%s1 + $0xd0] sm:$0xf]
  %v75 = vld [vmem:[%s1 + $0xd4] sm:$0xf]
  %v76 = vld [vmem:[%s1 + $0xd8] sm:$0xf]
  %v77 = vld [vmem:[%s1 + $0xdc] sm:$0xf]
  %v78 = vld [vmem:[%s1 + $0xe0] sm:$0xf]
  %v79 = vld [vmem:[%s1 + $0xe4] sm:$0xf]
  %v80 = vld [vmem:[%s1 + $0xe8] sm:$0xf]
  %v81 = vld [vmem:[%s1 + $0xec] sm:$0xf]
  %v82 = vld [vmem:[%s1 + $0xf0] sm:$0xf]
  %v83 = vld [vmem:[%s1 + $0xf4] sm:$0xf]
  %v84 = vld [vmem:[%s1 + $0xf8] sm:$0xf]
  %v85 = vld [vmem:[%s1 + $0xfc] sm:$0xf]
  %v86 = vld [vmem:[%s1 + $0x100] sm:$0xf]
  %v87 = vld [vmem:[%s1 + $0x104] sm:$0xf]
  %v88 = vld [vmem:[%s1 + $0x108] sm:$0xf]
  %v89 = vld [vmem:[%s1 + $0x10c] sm:$0xf]
  %v90 = vld [vmem:[%s1 + $0x110] sm:$0xf]
  %v91 = vld [vmem:[%s1 + $0x114] sm:$0xf]
  %v92 = vld [vmem:[%s1 + $0x118] sm:$0xf]
  %v93 = vld [vmem:[%s1 + $0x11c] sm:$0xf]
  %v94 = vld [vmem:[%s1 + $0x120] sm:$0xf]
  %v95 = vld [vmem:[%s1 + $0x124] sm:$0xf]
  %v96 = vld [vmem:[%s1 + $0x128] sm:$0xf]
  %v97 = vld [vmem:[%s1 + $0x12c] sm:$0xf]
  %v98 = vld [vmem:[%s1 + $0x130] sm:$0xf]
  %v99 = vld [vmem:[%s1 + $0x134] sm:$0xf]
  %v100 = vld [vmem:[%s1 + $0x138] sm:$0xf]
  %v101 = vld [vmem:[%s1 + $0x13c] sm:$0xf]
  %v102 = vld [vmem:[%s1 + $0x140] sm:$0xf]
  %v103 = vld [vmem:[%s1 + $0x144] sm:$0xf]
  %v104 = vld [vmem:[%s1 + $0x148] sm:$0xf]
  %v105 = vld [vmem:[%s1 + $0x14c] sm:$0xf]
  %v106 = vld [vmem:[%s1 + $0x150] sm:$0xf]
  %v107 = vld [vmem:[%s1 + $0x154] sm:$0xf]
  %v108 = vld [vmem:[%s1 + $0x158] sm:$0xf]
  %v109 = vld [vmem:[%s1 + $0x15c] sm:$0xf]
  %v110 = vld [vmem:[%s1 + $0x160] sm:$0xf]
  %v111 = vld [vmem:[%s1 + $0x164] sm:$0xf]
  %v112 = vld [vmem:[%s1 + $0x168] sm:$0xf]
  %v113 = vld [vmem:[%s1 + $0x16c] sm:$0xf]
  %v114 = vld [vmem:[%s1 + $0x170] sm:$0xf]
  %v115 = vld [vmem:[%s1 + $0x174] sm:$0xf]
  %v116 = vld [vmem:[%s1 + $0x178] sm:$0xf]
  %v117 = vld [vmem:[%s1 + $0x17c] sm:$0xf]
  %v118 = vld [vmem:[%s1 + $0x180] sm:$0xf]
  %v119 = vld [vmem:[%s1 + $0x184] sm:$0xf]
  %v120 = vld [vmem:[%s1 + $0x188] sm:$0xf]
  %v121 = vld [vmem:[%s1 + $0x18c] sm:$0xf]
  %v122 = vld [vmem:[%s1 + $0x190] sm:$0xf]
  %v123 = vld [vmem:[%s1 + $0x194] sm:$0xf]
  %v124 = vld [vmem:[%s1 + $0x198] sm:$0xf]
  %v125 = vld [vmem:[%s1 + $0x19c] sm:$0xf]
  %v126 = vld [vmem:[%s1 + $0x1a0] sm:$0xf]
  %v127 = vld [vmem:[%s1 + $0x1a4] sm:$0xf]
  %v128 = vld [vmem:[%s1 + $0x1a8] sm:$0xf]
  %v129 = vld [vmem:[%s1 + $0x1ac] sm:$0xf]
  %v130 = vld [vmem:[%s1 + $0x1b0] sm:$0xf]
  %v131 = vld [vmem:[%s1 + $0x1b4] sm:$0xf]
  %v132 = vld [vmem:[%s1 + $0x1b8] sm:$0xf]
  %v133 = vld [vmem:[%s1 + $0x1bc] sm:$0xf]
  %v134 = vld [vmem:[%s1 + $0x1c0] sm:$0xf]
  %v135 = vld [vmem:[%s1 + $0x1c4] sm:$0xf]
  %v136 = vld [vmem:[%s1 + $0x1c8] sm:$0xf]
  %v137 = vld [vmem:[%s1 + $0x1cc] sm:$0xf]
  %v138 = vld [vmem:[%s1 + $0x1d0] sm:$0xf]
  %v139 = vld [vmem:[%s1 + $0x1d4] sm:$0xf]
  %v140 = vld [vmem:[%s1 + $0x1d8] sm:$0xf]
  %v141 = vld [vmem:[%s1 + $0x1dc] sm:$0xf]
  %v142 = vld [vmem:[%s1 + $0x1e0] sm:$0xf]
  %v143 = vld [vmem:[%s1 + $0x1e4] sm:$0xf]
  %v144 = vld [vmem:[%s1 + $0x1e8] sm:$0xf]
  %v145 = vld [vmem:[%s1 + $0x1ec] sm:$0xf]
  %v146 = vld [vmem:[%s1 + $0x1f0] sm:$0xf]
  %v147 = vld [vmem:[%s1 + $0x1f4] sm:$0xf]
  %v148 = vld [vmem:[%s1 + $0x1f8] sm:$0xf]
  %v149 = vld [vmem:[%s1 + $0x1fc] sm:$0xf]
  %v150 = vld [vmem:[%s1 + $0x200] sm:$0xf]
  %v151 = vld [vmem:[%s1 + $0x204] sm:$0xf]
  %v152 = vld [vmem:[%s1 + $0x208] sm:$0xf]
  %v153 = vld [vmem:[%s1 + $0x20c] sm:$0xf]
  %v154 = vld [vmem:[%s1 + $0x210] sm:$0xf]
  %v155 = vld [vmem:[%s1 + $0x214] sm:$0xf]
  %v156 = vld [vmem:[%s1 + $0x218] sm:$0xf]
  %v157 = vld [vmem:[%s1 + $0x21c] sm:$0xf]
  %v163 = vunpack.c.l.b16 %v17
  %v164 = vunpack.c.h.b16 %v17
  %v165 = vunpack.c.l.b16 %v18
  %v166 = vunpack.c.h.b16 %v18
  %v167 = vunpack.c.l.b16 %v19
  %v168 = vunpack.c.h.b16 %v19
  %v169 = vunpack.c.l.b16 %v20
  %v170 = vunpack.c.h.b16 %v20
  %v171 = vunpack.c.l.b16 %v21
  %v172 = vpack.c.b16 %v163, %v163
  %v173 = vpack.c.b16 %v164, %v164
  %v174 = vpack.c.b16 %v165, %v165
  %v175 = vpack.c.b16 %v166, %v166
  %v176 = vpack.c.b16 %v167, %v167
  %v177 = vpack.c.b16 %v168, %v168
  %v178 = vpack.c.b16 %v169, %v169
  %v179 = vpack.c.b16 %v170, %v170
  %v180 = vpack.c.b16 %v171, %v171
  %v325 = vunpack.c.l.b16 %v22
  %v326 = vunpack.c.l.b16 %v23
  %v327 = vunpack.c.l.b16 %v24
  %v328 = vunpack.c.l.b16 %v25
  %v329 = vunpack.c.l.b16 %v26
  %v330 = vunpack.c.l.b16 %v27
  %v331 = vunpack.c.l.b16 %v28
  %v332 = vunpack.c.l.b16 %v29
  %v333 = vunpack.c.l.b16 %v30
  %v334 = vunpack.c.l.b16 %v31
  %v335 = vunpack.c.l.b16 %v32
  %v336 = vunpack.c.l.b16 %v33
  %v337 = vunpack.c.l.b16 %v34
  %v338 = vunpack.c.l.b16 %v35
  %v339 = vunpack.c.l.b16 %v36
  %v340 = vunpack.c.l.b16 %v37
  %v341 = vunpack.c.l.b16 %v38
  %v342 = vunpack.c.l.b16 %v39
  %v343 = vunpack.c.l.b16 %v40
  %v344 = vunpack.c.l.b16 %v41
  %v345 = vunpack.c.l.b16 %v42
  %v346 = vunpack.c.l.b16 %v43
  %v347 = vunpack.c.l.b16 %v44
  %v348 = vunpack.c.l.b16 %v45
  %v349 = vunpack.c.l.b16 %v46
  %v350 = vunpack.c.l.b16 %v47
  %v351 = vunpack.c.l.b16 %v48
  %v352 = vunpack.c.l.b16 %v49
  %v353 = vunpack.c.l.b16 %v50
  %v354 = vunpack.c.l.b16 %v51
  %v355 = vunpack.c.l.b16 %v52
  %v356 = vunpack.c.l.b16 %v53
  %v357 = vunpack.c.l.b16 %v54
  %v358 = vunpack.c.l.b16 %v55
  %v359 = vunpack.c.l.b16 %v56
  %v360 = vunpack.c.l.b16 %v57
  %v361 = vunpack.c.l.b16 %v58
  %v362 = vunpack.c.l.b16 %v59
  %v363 = vunpack.c.l.b16 %v60
  %v364 = vunpack.c.l.b16 %v61
  %v365 = vunpack.c.l.b16 %v62
  %v366 = vunpack.c.l.b16 %v63
  %v367 = vunpack.c.l.b16 %v64
  %v368 = vunpack.c.l.b16 %v65
  %v369 = vunpack.c.l.b16 %v66
  %v370 = vunpack.c.l.b16 %v67
  %v371 = vunpack.c.l.b16 %v68
  %v372 = vunpack.c.l.b16 %v69
  %v373 = vunpack.c.l.b16 %v70
  %v374 = vunpack.c.l.b16 %v71
  %v375 = vunpack.c.l.b16 %v72
  %v376 = vunpack.c.l.b16 %v73
  %v377 = vunpack.c.l.b16 %v74
  %v378 = vunpack.c.l.b16 %v75
  %v379 = vunpack.c.l.b16 %v76
  %v380 = vunpack.c.l.b16 %v77
  %v381 = vunpack.c.l.b16 %v78
  %v382 = vunpack.c.l.b16 %v79
  %v383 = vunpack.c.l.b16 %v80
  %v384 = vunpack.c.l.b16 %v81
  %v385 = vunpack.c.l.b16 %v82
  %v386 = vunpack.c.l.b16 %v83
  %v387 = vunpack.c.l.b16 %v84
  %v388 = vunpack.c.l.b16 %v85
  %v389 = vunpack.c.l.b16 %v86
  %v390 = vunpack.c.l.b16 %v87
  %v391 = vunpack.c.l.b16 %v88
  %v392 = vunpack.c.l.b16 %v89
  %v393 = vunpack.c.l.b16 %v90
  %v394 = vunpack.c.l.b16 %v91
  %v395 = vunpack.c.l.b16 %v92
  %v396 = vunpack.c.l.b16 %v93
  %v397 = vunpack.c.l.b16 %v94
  %v398 = vunpack.c.l.b16 %v95
  %v399 = vunpack.c.l.b16 %v96
  %v400 = vunpack.c.l.b16 %v97
  %v401 = vunpack.c.l.b16 %v98
  %v402 = vunpack.c.l.b16 %v99
  %v403 = vunpack.c.l.b16 %v100
  %v404 = vunpack.c.l.b16 %v101
  %v405 = vunpack.c.l.b16 %v102
  %v406 = vunpack.c.l.b16 %v103
  %v407 = vunpack.c.l.b16 %v104
  %v408 = vunpack.c.l.b16 %v105
  %v409 = vunpack.c.l.b16 %v106
  %v410 = vunpack.c.l.b16 %v107
  %v411 = vunpack.c.l.b16 %v108
  %v412 = vunpack.c.l.b16 %v109
  %v413 = vunpack.c.l.b16 %v110
  %v414 = vunpack.c.l.b16 %v111
  %v415 = vunpack.c.l.b16 %v112
  %v416 = vunpack.c.l.b16 %v113
  %v417 = vunpack.c.l.b16 %v114
  %v418 = vunpack.c.l.b16 %v115
  %v419 = vunpack.c.l.b16 %v116
  %v420 = vunpack.c.l.b16 %v117
  %v421 = vunpack.c.l.b16 %v118
  %v422 = vunpack.c.l.b16 %v119
  %v423 = vunpack.c.l.b16 %v120
  %v424 = vunpack.c.l.b16 %v121
  %v425 = vunpack.c.l.b16 %v122
  %v426 = vunpack.c.l.b16 %v123
  %v427 = vunpack.c.l.b16 %v124
  %v428 = vunpack.c.l.b16 %v125
  %v429 = vunpack.c.l.b16 %v126
  %v430 = vunpack.c.l.b16 %v127
  %v431 = vunpack.c.l.b16 %v128
  %v432 = vunpack.c.l.b16 %v129
  %v433 = vunpack.c.l.b16 %v130
  %v434 = vunpack.c.l.b16 %v131
  %v435 = vunpack.c.l.b16 %v132
  %v436 = vunpack.c.l.b16 %v133
  %v437 = vunpack.c.l.b16 %v134
  %v438 = vunpack.c.l.b16 %v135
  %v439 = vunpack.c.l.b16 %v136
  %v440 = vunpack.c.l.b16 %v137
  %v441 = vunpack.c.l.b16 %v138
  %v442 = vunpack.c.l.b16 %v139
  %v443 = vunpack.c.l.b16 %v140
  %v444 = vunpack.c.l.b16 %v141
  %v445 = vunpack.c.l.b16 %v142
  %v446 = vunpack.c.l.b16 %v143
  %v447 = vunpack.c.l.b16 %v144
  %v448 = vunpack.c.l.b16 %v145
  %v449 = vunpack.c.l.b16 %v146
  %v450 = vunpack.c.l.b16 %v147
  %v451 = vunpack.c.l.b16 %v148
  %v452 = vunpack.c.l.b16 %v149
  %v453 = vunpack.c.l.b16 %v150
  %v454 = vunpack.c.l.b16 %v151
  %v455 = vunpack.c.l.b16 %v152
  %v456 = vunpack.c.l.b16 %v153
  %v457 = vunpack.c.l.b16 %v154
  %v458 = vunpack.c.l.b16 %v155
  %v459 = vunpack.c.l.b16 %v156
  %v460 = vunpack.c.l.b16 %v157
  %v461 = vpack.c.b16 %v326, %v325
  %v462 = vpack.c.b16 %v328, %v327
  %v463 = vpack.c.b16 %v330, %v329
  %v464 = vpack.c.b16 %v332, %v331
  %v465 = vpack.c.b16 %v334, %v333
  %v466 = vpack.c.b16 %v336, %v335
  %v467 = vpack.c.b16 %v338, %v337
  %v468 = vpack.c.b16 %v340, %v339
  %v469 = vpack.c.b16 %v342, %v341
  %v470 = vpack.c.b16 %v344, %v343
  %v471 = vpack.c.b16 %v346, %v345
  %v472 = vpack.c.b16 %v348, %v347
  %v473 = vpack.c.b16 %v350, %v349
  %v474 = vpack.c.b16 %v352, %v351
  %v475 = vpack.c.b16 %v354, %v353
  %v476 = vpack.c.b16 %v356, %v355
  %v477 = vpack.c.b16 %v358, %v357
  %v478 = vpack.c.b16 %v360, %v359
  %v479 = vpack.c.b16 %v362, %v361
  %v480 = vpack.c.b16 %v364, %v363
  %v481 = vpack.c.b16 %v366, %v365
  %v482 = vpack.c.b16 %v368, %v367
  %v483 = vpack.c.b16 %v370, %v369
  %v484 = vpack.c.b16 %v372, %v371
  %v485 = vpack.c.b16 %v374, %v373
  %v486 = vpack.c.b16 %v376, %v375
  %v487 = vpack.c.b16 %v378, %v377
  %v488 = vpack.c.b16 %v380, %v379
  %v489 = vpack.c.b16 %v382, %v381
  %v490 = vpack.c.b16 %v384, %v383
  %v491 = vpack.c.b16 %v386, %v385
  %v492 = vpack.c.b16 %v388, %v387
  %v493 = vpack.c.b16 %v390, %v389
  %v494 = vpack.c.b16 %v392, %v391
  %v495 = vpack.c.b16 %v394, %v393
  %v496 = vpack.c.b16 %v396, %v395
  %v497 = vpack.c.b16 %v398, %v397
  %v498 = vpack.c.b16 %v400, %v399
  %v499 = vpack.c.b16 %v402, %v401
  %v500 = vpack.c.b16 %v404, %v403
  %v501 = vpack.c.b16 %v406, %v405
  %v502 = vpack.c.b16 %v408, %v407
  %v503 = vpack.c.b16 %v410, %v409
  %v504 = vpack.c.b16 %v412, %v411
  %v505 = vpack.c.b16 %v414, %v413
  %v506 = vpack.c.b16 %v416, %v415
  %v507 = vpack.c.b16 %v418, %v417
  %v508 = vpack.c.b16 %v420, %v419
  %v509 = vpack.c.b16 %v422, %v421
  %v510 = vpack.c.b16 %v424, %v423
  %v511 = vpack.c.b16 %v426, %v425
  %v512 = vpack.c.b16 %v428, %v427
  %v513 = vpack.c.b16 %v430, %v429
  %v514 = vpack.c.b16 %v432, %v431
  %v515 = vpack.c.b16 %v434, %v433
  %v516 = vpack.c.b16 %v436, %v435
  %v517 = vpack.c.b16 %v438, %v437
  %v518 = vpack.c.b16 %v440, %v439
  %v519 = vpack.c.b16 %v442, %v441
  %v520 = vpack.c.b16 %v444, %v443
  %v521 = vpack.c.b16 %v446, %v445
  %v522 = vpack.c.b16 %v448, %v447
  %v523 = vpack.c.b16 %v450, %v449
  %v524 = vpack.c.b16 %v452, %v451
  %v525 = vpack.c.b16 %v454, %v453
  %v526 = vpack.c.b16 %v456, %v455
  %v527 = vpack.c.b16 %v458, %v457
  %v528 = vpack.c.b16 %v460, %v459
  %vm597 = vcmask 523264
  %v599 = vsel %vm597, %v180, 0
  %601 = vmatprep.subr.bf16.mxu0 0
  %602 = vmatpush1.bf16.msra.mxu0 %v468
  %603 = vmatprep.subr.bf16.mxu0 0
  %604 = vmatpush1.bf16.msra.mxu0 %v467
  %605 = vmatprep.subr.bf16.mxu0 0
  %606 = vmatpush1.bf16.msra.mxu0 %v466
  %607 = vmatprep.subr.bf16.mxu0 0
  %608 = vmatpush1.bf16.msra.mxu0 %v465
  %609 = vmatprep.subr.bf16.mxu0 0
  %610 = vmatpush1.bf16.msra.mxu0 %v464
  %611 = vmatprep.subr.bf16.mxu0 0
  %612 = vmatpush1.bf16.msra.mxu0 %v463
  %613 = vmatprep.subr.bf16.mxu0 0
  %614 = vmatpush1.bf16.msra.mxu0 %v462
  %615 = vmatprep.subr.bf16.mxu0 0
  %616 = vmatpush1.bf16.msra.mxu0 %v461
  %617 = vmatprep.subr.bf16.mxu0 0
  %618 = vmatpush2.bf16.msra.mxu0 %v476
  %619 = vmatprep.subr.bf16.mxu0 0
  %620 = vmatpush2.bf16.msra.mxu0 %v475
  %621 = vmatprep.subr.bf16.mxu0 0
  %622 = vmatpush2.bf16.msra.mxu0 %v474
  %623 = vmatprep.subr.bf16.mxu0 0
  %624 = vmatpush2.bf16.msra.mxu0 %v473
  %625 = vmatprep.subr.bf16.mxu0 0
  %626 = vmatpush2.bf16.msra.mxu0 %v472
  %627 = vmatprep.subr.bf16.mxu0 0
  %628 = vmatpush2.bf16.msra.mxu0 %v471
  %629 = vmatprep.subr.bf16.mxu0 0
  %630 = vmatpush2.bf16.msra.mxu0 %v470
  %631 = vmatprep.subr.bf16.mxu0 0
  %632 = vmatpush2.bf16.msra.mxu0 %v469
  %633 = vmatprep.mubr.bf16.mxu0 %v173
  %634 = vmatmul.mubr.bf16.gmra.mxu0 %v172
  %v635 = vpop.f32.mrf.mxu0
  %v636 = vadd.f32 0.0, %v635
  %v637 = vpop.f32.mrf.mxu0
  %v638 = vpop.f32.mrf.mxu0
  %v639 = vpop.f32.mrf.mxu0
  %640 = vdwg.mxu0
  %641 = vmatprep.subr.bf16.mxu0 0
  %642 = vmatpush1.bf16.msra.mxu0 %v484
  %643 = vmatprep.subr.bf16.mxu0 0
  %644 = vmatpush1.bf16.msra.mxu0 %v483
  %645 = vmatprep.subr.bf16.mxu0 0
  %646 = vmatpush1.bf16.msra.mxu0 %v482
  %647 = vmatprep.subr.bf16.mxu0 0
  %648 = vmatpush1.bf16.msra.mxu0 %v481
  %649 = vmatprep.subr.bf16.mxu0 0
  %650 = vmatpush1.bf16.msra.mxu0 %v480
  %651 = vmatprep.subr.bf16.mxu0 0
  %652 = vmatpush1.bf16.msra.mxu0 %v479
  %653 = vmatprep.subr.bf16.mxu0 0
  %654 = vmatpush1.bf16.msra.mxu0 %v478
  %655 = vmatprep.subr.bf16.mxu0 0
  %656 = vmatpush1.bf16.msra.mxu0 %v477
  %657 = vmatprep.subr.bf16.mxu0 0
  %658 = vmatpush2.bf16.msra.mxu0 %v492
  %659 = vmatprep.subr.bf16.mxu0 0
  %660 = vmatpush2.bf16.msra.mxu0 %v491
  %661 = vmatprep.subr.bf16.mxu0 0
  %662 = vmatpush2.bf16.msra.mxu0 %v490
  %663 = vmatprep.subr.bf16.mxu0 0
  %664 = vmatpush2.bf16.msra.mxu0 %v489
  %665 = vmatprep.subr.bf16.mxu0 0
  %666 = vmatpush2.bf16.msra.mxu0 %v488
  %667 = vmatprep.subr.bf16.mxu0 0
  %668 = vmatpush2.bf16.msra.mxu0 %v487
  %669 = vmatprep.subr.bf16.mxu0 0
  %670 = vmatpush2.bf16.msra.mxu0 %v486
  %671 = vmatprep.subr.bf16.mxu0 0
  %672 = vmatpush2.bf16.msra.mxu0 %v485
  %673 = vmatprep.mubr.bf16.mxu0 %v175
  %674 = vmatmul.mubr.bf16.gmra.mxu0 %v174
  %v675 = vpop.f32.mrf.mxu0
  %v676 = vadd.f32 %v636, %v675
  %v677 = vpop.f32.mrf.mxu0
  %v678 = vpop.f32.mrf.mxu0
  %v679 = vpop.f32.mrf.mxu0
  %680 = vdwg.mxu0
  %681 = vmatprep.subr.bf16.mxu0 0
  %682 = vmatpush1.bf16.msra.mxu0 %v500
  %683 = vmatprep.subr.bf16.mxu0 0
  %684 = vmatpush1.bf16.msra.mxu0 %v499
  %685 = vmatprep.subr.bf16.mxu0 0
  %686 = vmatpush1.bf16.msra.mxu0 %v498
  %687 = vmatprep.subr.bf16.mxu0 0
  %688 = vmatpush1.bf16.msra.mxu0 %v497
  %689 = vmatprep.subr.bf16.mxu0 0
  %690 = vmatpush1.bf16.msra.mxu0 %v496
  %691 = vmatprep.subr.bf16.mxu0 0
  %692 = vmatpush1.bf16.msra.mxu0 %v495
  %693 = vmatprep.subr.bf16.mxu0 0
  %694 = vmatpush1.bf16.msra.mxu0 %v494
  %695 = vmatprep.subr.bf16.mxu0 0
  %696 = vmatpush1.bf16.msra.mxu0 %v493
  %697 = vmatprep.subr.bf16.mxu0 0
  %698 = vmatpush2.bf16.msra.mxu0 %v508
  %699 = vmatprep.subr.bf16.mxu0 0
  %700 = vmatpush2.bf16.msra.mxu0 %v507
  %701 = vmatprep.subr.bf16.mxu0 0
  %702 = vmatpush2.bf16.msra.mxu0 %v506
  %703 = vmatprep.subr.bf16.mxu0 0
  %704 = vmatpush2.bf16.msra.mxu0 %v505
  %705 = vmatprep.subr.bf16.mxu0 0
  %706 = vmatpush2.bf16.msra.mxu0 %v504
  %707 = vmatprep.subr.bf16.mxu0 0
  %708 = vmatpush2.bf16.msra.mxu0 %v503
  %709 = vmatprep.subr.bf16.mxu0 0
  %710 = vmatpush2.bf16.msra.mxu0 %v502
  %711 = vmatprep.subr.bf16.mxu0 0
  %712 = vmatpush2.bf16.msra.mxu0 %v501
  %713 = vmatprep.mubr.bf16.mxu0 %v177
  %714 = vmatmul.mubr.bf16.gmra.mxu0 %v176
  %v715 = vpop.f32.mrf.mxu0
  %v716 = vadd.f32 %v676, %v715
  %v717 = vpop.f32.mrf.mxu0
  %v718 = vpop.f32.mrf.mxu0
  %v719 = vpop.f32.mrf.mxu0
  %720 = vdwg.mxu0
  %721 = vmatprep.subr.bf16.mxu0 0
  %722 = vmatpush1.bf16.msra.mxu0 %v516
  %723 = vmatprep.subr.bf16.mxu0 0
  %724 = vmatpush1.bf16.msra.mxu0 %v515
  %725 = vmatprep.subr.bf16.mxu0 0
  %726 = vmatpush1.bf16.msra.mxu0 %v514
  %727 = vmatprep.subr.bf16.mxu0 0
  %728 = vmatpush1.bf16.msra.mxu0 %v513
  %729 = vmatprep.subr.bf16.mxu0 0
  %730 = vmatpush1.bf16.msra.mxu0 %v512
  %731 = vmatprep.subr.bf16.mxu0 0
  %732 = vmatpush1.bf16.msra.mxu0 %v511
  %733 = vmatprep.subr.bf16.mxu0 0
  %734 = vmatpush1.bf16.msra.mxu0 %v510
  %735 = vmatprep.subr.bf16.mxu0 0
  %736 = vmatpush1.bf16.msra.mxu0 %v509
  %737 = vmatprep.subr.bf16.mxu0 0
  %738 = vmatpush2.bf16.msra.mxu0 %v524
  %739 = vmatprep.subr.bf16.mxu0 0
  %740 = vmatpush2.bf16.msra.mxu0 %v523
  %741 = vmatprep.subr.bf16.mxu0 0
  %742 = vmatpush2.bf16.msra.mxu0 %v522
  %743 = vmatprep.subr.bf16.mxu0 0
  %744 = vmatpush2.bf16.msra.mxu0 %v521
  %745 = vmatprep.subr.bf16.mxu0 0
  %746 = vmatpush2.bf16.msra.mxu0 %v520
  %747 = vmatprep.subr.bf16.mxu0 0
  %748 = vmatpush2.bf16.msra.mxu0 %v519
  %749 = vmatprep.subr.bf16.mxu0 0
  %750 = vmatpush2.bf16.msra.mxu0 %v518
  %751 = vmatprep.subr.bf16.mxu0 0
  %752 = vmatpush2.bf16.msra.mxu0 %v517
  %753 = vmatprep.mubr.bf16.mxu0 %v179
  %754 = vmatmul.mubr.bf16.gmra.mxu0 %v178
  %v755 = vpop.f32.mrf.mxu0
  %v756 = vadd.f32 %v716, %v755
  %v757 = vpop.f32.mrf.mxu0
  %v758 = vpop.f32.mrf.mxu0
  %v759 = vpop.f32.mrf.mxu0
  %760 = vdwg.mxu0
  %761 = vmatprep.subr.bf16.mxu0 0
  %762 = vmatpush1.bf16.msra.mxu0 0
  %763 = vmatprep.subr.bf16.mxu0 0
  %764 = vmatpush1.bf16.msra.mxu0 0
  %765 = vmatprep.subr.bf16.mxu0 0
  %766 = vmatpush1.bf16.msra.mxu0 0
  %767 = vmatprep.subr.bf16.mxu0 0
  %768 = vmatpush1.bf16.msra.mxu0 0
  %769 = vmatprep.subr.bf16.mxu0 0
  %770 = vmatpush1.bf16.msra.mxu0 %v528
  %771 = vmatprep.subr.bf16.mxu0 0
  %772 = vmatpush1.bf16.msra.mxu0 %v527
  %773 = vmatprep.subr.bf16.mxu0 0
  %774 = vmatpush1.bf16.msra.mxu0 %v526
  %775 = vmatprep.subr.bf16.mxu0 0
  %776 = vmatpush1.bf16.msra.mxu0 %v525
  %777 = vmatprep.subr.bf16.mxu0 0
  %778 = vmatpush2.bf16.msra.mxu0 0
  %779 = vmatprep.subr.bf16.mxu0 0
  %780 = vmatpush2.bf16.msra.mxu0 0
  %781 = vmatprep.subr.bf16.mxu0 0
  %782 = vmatpush2.bf16.msra.mxu0 0
  %783 = vmatprep.subr.bf16.mxu0 0
  %784 = vmatpush2.bf16.msra.mxu0 0
  %785 = vmatprep.subr.bf16.mxu0 0
  %786 = vmatpush2.bf16.msra.mxu0 0
  %787 = vmatprep.subr.bf16.mxu0 0
  %788 = vmatpush2.bf16.msra.mxu0 0
  %789 = vmatprep.subr.bf16.mxu0 0
  %790 = vmatpush2.bf16.msra.mxu0 0
  %791 = vmatprep.subr.bf16.mxu0 0
  %792 = vmatpush2.bf16.msra.mxu0 0
  %793 = vmatprep.mubr.bf16.mxu0 0
  %794 = vmatmul.mubr.bf16.gmra.mxu0 %v599
  %v795 = vpop.f32.mrf.mxu0
  %v796 = vadd.f32 %v756, %v795
  %v797 = vpop.f32.mrf.mxu0
  %v798 = vpop.f32.mrf.mxu0
  %v799 = vpop.f32.mrf.mxu0
  %800 = vdwg.mxu0
  %801 = vst.msk [vmem:[%s2] sm:$0xff] %vm597, %v796
  // Predicated region
  $region10: #{_lambda_.52} parent=0 // pred_check
    _
  $region11: #{_lambda_.52} parent=0 // pred_check_branch
    %803 = sbr.rel (0) target = $region13
  $region12: #{_lambda_.52} parent=0 // pred_region
    _
  $region13: #{_lambda_.52} parent=0 // pred_fallthru
    _
  // Predicated region
  $region14: #{_lambda_.52} parent=0 // pred_check
    _
  $region15: #{_lambda_.52} parent=0 // pred_check_branch
    %805 = sbr.rel (0) target = $region17
  $region16: #{_lambda_.52} parent=0 // pred_region
    _
  $region17: #{_lambda_.52} parent=0 // pred_fallthru
    _

// kernel: _lambda_.53
$region0: #{_lambda_.53}
  #allocation0 [shape = 'u32[]', space=smem, size = 0x4, offset = 0x4, fixed_abs, tag = 'smem constant byte address 0x4 - core index']
  #allocation1 [shape = 'u32[144,128]{1,0:T(1,128)}', space=vmem, size = 0x12000, scoped, tag = 'internal scratch']
  %s0 = inlined_call_operand.vmem [shape: bf16[8,1296], index: 0, kind: input, shape index: {}]
  %s1 = inlined_call_operand.vmem [shape: bf16[1296,64], index: 1, kind: input, shape index: {}]
  %s2 = inlined_call_operand.vmem [shape: f32[8,64], index: 2, kind: output, shape index: {}]
  %s3 = sld [smem:[#allocation0]]
  $region18: #{_lambda_.53} parent=0
    _
  %s5 = ssub.s32 1, %s3
  %s6 = scalar_select 0, %s5, %s3
  // Predicated region
  $region2: #{_lambda_.53} parent=0 // pred_check
    _
  $region3: #{_lambda_.53} parent=0 // pred_check_branch
    %8 = sbr.rel (0) target = $region5
  $region4: #{_lambda_.53} parent=0 // pred_region
    _
  $region5: #{_lambda_.53} parent=0 // pred_fallthru
    _
  // Predicated region
  $region6: #{_lambda_.53} parent=0 // pred_check
    _
  $region7: #{_lambda_.53} parent=0 // pred_check_branch
    %10 = sbr.rel (0) target = $region9
  $region8: #{_lambda_.53} parent=0 // pred_region
    _
  $region9: #{_lambda_.53} parent=0 // pred_fallthru
    _
  %v12 = vld [vmem:[%s0] sm:$0xff]
  %v13 = vld [vmem:[%s0 + $0x8] sm:$0xff]
  %v14 = vld [vmem:[%s0 + $0x10] sm:$0xff]
  %v15 = vld [vmem:[%s0 + $0x18] sm:$0xff]
  %v16 = vld [vmem:[%s0 + $0x20] sm:$0xff]
  %v17 = vld [vmem:[%s0 + $0x28] sm:$0xf]
  %v18 = vmax.bf16 %v12, 0
  %v19 = vmax.bf16 %v13, 0
  %v20 = vmax.bf16 %v14, 0
  %v21 = vmax.bf16 %v15, 0
  %v22 = vmax.bf16 %v16, 0
  %v23 = vmax.bf16 %v17, 0
  %v24 = vld [vmem:[%s1] sm:$0xf]
  %v25 = vld [vmem:[%s1 + $0x4] sm:$0xf]
  %v26 = vld [vmem:[%s1 + $0x8] sm:$0xf]
  %v27 = vld [vmem:[%s1 + $0xc] sm:$0xf]
  %v28 = vld [vmem:[%s1 + $0x10] sm:$0xf]
  %v29 = vld [vmem:[%s1 + $0x14] sm:$0xf]
  %v30 = vld [vmem:[%s1 + $0x18] sm:$0xf]
  %v31 = vld [vmem:[%s1 + $0x1c] sm:$0xf]
  %v32 = vld [vmem:[%s1 + $0x20] sm:$0xf]
  %v33 = vld [vmem:[%s1 + $0x24] sm:$0xf]
  %v34 = vld [vmem:[%s1 + $0x28] sm:$0xf]
  %v35 = vld [vmem:[%s1 + $0x2c] sm:$0xf]
  %v36 = vld [vmem:[%s1 + $0x30] sm:$0xf]
  %v37 = vld [vmem:[%s1 + $0x34] sm:$0xf]
  %v38 = vld [vmem:[%s1 + $0x38] sm:$0xf]
  %v39 = vld [vmem:[%s1 + $0x3c] sm:$0xf]
  %v40 = vld [vmem:[%s1 + $0x40] sm:$0xf]
  %v41 = vld [vmem:[%s1 + $0x44] sm:$0xf]
  %v42 = vld [vmem:[%s1 + $0x48] sm:$0xf]
  %v43 = vld [vmem:[%s1 + $0x4c] sm:$0xf]
  %v44 = vld [vmem:[%s1 + $0x50] sm:$0xf]
  %v45 = vld [vmem:[%s1 + $0x54] sm:$0xf]
  %v46 = vld [vmem:[%s1 + $0x58] sm:$0xf]
  %v47 = vld [vmem:[%s1 + $0x5c] sm:$0xf]
  %v48 = vld [vmem:[%s1 + $0x60] sm:$0xf]
  %v49 = vld [vmem:[%s1 + $0x64] sm:$0xf]
  %v50 = vld [vmem:[%s1 + $0x68] sm:$0xf]
  %v51 = vld [vmem:[%s1 + $0x6c] sm:$0xf]
  %v52 = vld [vmem:[%s1 + $0x70] sm:$0xf]
  %v53 = vld [vmem:[%s1 + $0x74] sm:$0xf]
  %v54 = vld [vmem:[%s1 + $0x78] sm:$0xf]
  %v55 = vld [vmem:[%s1 + $0x7c] sm:$0xf]
  %v56 = vld [vmem:[%s1 + $0x80] sm:$0xf]
  %v57 = vld [vmem:[%s1 + $0x84] sm:$0xf]
  %v58 = vld [vmem:[%s1 + $0x88] sm:$0xf]
  %v59 = vld [vmem:[%s1 + $0x8c] sm:$0xf]
  %v60 = vld [vmem:[%s1 + $0x90] sm:$0xf]
  %v61 = vld [vmem:[%s1 + $0x94] sm:$0xf]
  %v62 = vld [vmem:[%s1 + $0x98] sm:$0xf]
  %v63 = vld [vmem:[%s1 + $0x9c] sm:$0xf]
  %v64 = vld [vmem:[%s1 + $0xa0] sm:$0xf]
  %v65 = vld [vmem:[%s1 + $0xa4] sm:$0xf]
  %v66 = vld [vmem:[%s1 + $0xa8] sm:$0xf]
  %v67 = vld [vmem:[%s1 + $0xac] sm:$0xf]
  %v68 = vld [vmem:[%s1 + $0xb0] sm:$0xf]
  %v69 = vld [vmem:[%s1 + $0xb4] sm:$0xf]
  %v70 = vld [vmem:[%s1 + $0xb8] sm:$0xf]
  %v71 = vld [vmem:[%s1 + $0xbc] sm:$0xf]
  %v72 = vld [vmem:[%s1 + $0xc0] sm:$0xf]
  %v73 = vld [vmem:[%s1 + $0xc4] sm:$0xf]
  %v74 = vld [vmem:[%s1 + $0xc8] sm:$0xf]
  %v75 = vld [vmem:[%s1 + $0xcc] sm:$0xf]
  %v76 = vld [vmem:[%s1 + $0xd0] sm:$0xf]
  %v77 = vld [vmem:[%s1 + $0xd4] sm:$0xf]
  %v78 = vld [vmem:[%s1 + $0xd8] sm:$0xf]
  %v79 = vld [vmem:[%s1 + $0xdc] sm:$0xf]
  %v80 = vld [vmem:[%s1 + $0xe0] sm:$0xf]
  %v81 = vld [vmem:[%s1 + $0xe4] sm:$0xf]
  %v82 = vld [vmem:[%s1 + $0xe8] sm:$0xf]
  %v83 = vld [vmem:[%s1 + $0xec] sm:$0xf]
  %v84 = vld [vmem:[%s1 + $0xf0] sm:$0xf]
  %v85 = vld [vmem:[%s1 + $0xf4] sm:$0xf]
  %v86 = vld [vmem:[%s1 + $0xf8] sm:$0xf]
  %v87 = vld [vmem:[%s1 + $0xfc] sm:$0xf]
  %v88 = vld [vmem:[%s1 + $0x100] sm:$0xf]
  %v89 = vld [vmem:[%s1 + $0x104] sm:$0xf]
  %v90 = vld [vmem:[%s1 + $0x108] sm:$0xf]
  %v91 = vld [vmem:[%s1 + $0x10c] sm:$0xf]
  %v92 = vld [vmem:[%s1 + $0x110] sm:$0xf]
  %v93 = vld [vmem:[%s1 + $0x114] sm:$0xf]
  %v94 = vld [vmem:[%s1 + $0x118] sm:$0xf]
  %v95 = vld [vmem:[%s1 + $0x11c] sm:$0xf]
  %v96 = vld [vmem:[%s1 + $0x120] sm:$0xf]
  %v97 = vld [vmem:[%s1 + $0x124] sm:$0xf]
  %v98 = vld [vmem:[%s1 + $0x128] sm:$0xf]
  %v99 = vld [vmem:[%s1 + $0x12c] sm:$0xf]
  %v100 = vld [vmem:[%s1 + $0x130] sm:$0xf]
  %v101 = vld [vmem:[%s1 + $0x134] sm:$0xf]
  %v102 = vld [vmem:[%s1 + $0x138] sm:$0xf]
  %v103 = vld [vmem:[%s1 + $0x13c] sm:$0xf]
  %v104 = vld [vmem:[%s1 + $0x140] sm:$0xf]
  %v105 = vld [vmem:[%s1 + $0x144] sm:$0xf]
  %v106 = vld [vmem:[%s1 + $0x148] sm:$0xf]
  %v107 = vld [vmem:[%s1 + $0x14c] sm:$0xf]
  %v108 = vld [vmem:[%s1 + $0x150] sm:$0xf]
  %v109 = vld [vmem:[%s1 + $0x154] sm:$0xf]
  %v110 = vld [vmem:[%s1 + $0x158] sm:$0xf]
  %v111 = vld [vmem:[%s1 + $0x15c] sm:$0xf]
  %v112 = vld [vmem:[%s1 + $0x160] sm:$0xf]
  %v113 = vld [vmem:[%s1 + $0x164] sm:$0xf]
  %v114 = vld [vmem:[%s1 + $0x168] sm:$0xf]
  %v115 = vld [vmem:[%s1 + $0x16c] sm:$0xf]
  %v116 = vld [vmem:[%s1 + $0x170] sm:$0xf]
  %v117 = vld [vmem:[%s1 + $0x174] sm:$0xf]
  %v118 = vld [vmem:[%s1 + $0x178] sm:$0xf]
  %v119 = vld [vmem:[%s1 + $0x17c] sm:$0xf]
  %v120 = vld [vmem:[%s1 + $0x180] sm:$0xf]
  %v121 = vld [vmem:[%s1 + $0x184] sm:$0xf]
  %v122 = vld [vmem:[%s1 + $0x188] sm:$0xf]
  %v123 = vld [vmem:[%s1 + $0x18c] sm:$0xf]
  %v124 = vld [vmem:[%s1 + $0x190] sm:$0xf]
  %v125 = vld [vmem:[%s1 + $0x194] sm:$0xf]
  %v126 = vld [vmem:[%s1 + $0x198] sm:$0xf]
  %v127 = vld [vmem:[%s1 + $0x19c] sm:$0xf]
  %v128 = vld [vmem:[%s1 + $0x1a0] sm:$0xf]
  %v129 = vld [vmem:[%s1 + $0x1a4] sm:$0xf]
  %v130 = vld [vmem:[%s1 + $0x1a8] sm:$0xf]
  %v131 = vld [vmem:[%s1 + $0x1ac] sm:$0xf]
  %v132 = vld [vmem:[%s1 + $0x1b0] sm:$0xf]
  %v133 = vld [vmem:[%s1 + $0x1b4] sm:$0xf]
  %v134 = vld [vmem:[%s1 + $0x1b8] sm:$0xf]
  %v135 = vld [vmem:[%s1 + $0x1bc] sm:$0xf]
  %v136 = vld [vmem:[%s1 + $0x1c0] sm:$0xf]
  %v137 = vld [vmem:[%s1 + $0x1c4] sm:$0xf]
  %v138 = vld [vmem:[%s1 + $0x1c8] sm:$0xf]
  %v139 = vld [vmem:[%s1 + $0x1cc] sm:$0xf]
  %v140 = vld [vmem:[%s1 + $0x1d0] sm:$0xf]
  %v141 = vld [vmem:[%s1 + $0x1d4] sm:$0xf]
  %v142 = vld [vmem:[%s1 + $0x1d8] sm:$0xf]
  %v143 = vld [vmem:[%s1 + $0x1dc] sm:$0xf]
  %v144 = vld [vmem:[%s1 + $0x1e0] sm:$0xf]
  %v145 = vld [vmem:[%s1 + $0x1e4] sm:$0xf]
  %v146 = vld [vmem:[%s1 + $0x1e8] sm:$0xf]
  %v147 = vld [vmem:[%s1 + $0x1ec] sm:$0xf]
  %v148 = vld [vmem:[%s1 + $0x1f0] sm:$0xf]
  %v149 = vld [vmem:[%s1 + $0x1f4] sm:$0xf]
  %v150 = vld [vmem:[%s1 + $0x1f8] sm:$0xf]
  %v151 = vld [vmem:[%s1 + $0x1fc] sm:$0xf]
  %v152 = vld [vmem:[%s1 + $0x200] sm:$0xf]
  %v153 = vld [vmem:[%s1 + $0x204] sm:$0xf]
  %v154 = vld [vmem:[%s1 + $0x208] sm:$0xf]
  %v155 = vld [vmem:[%s1 + $0x20c] sm:$0xf]
  %v156 = vld [vmem:[%s1 + $0x210] sm:$0xf]
  %v157 = vld [vmem:[%s1 + $0x214] sm:$0xf]
  %v158 = vld [vmem:[%s1 + $0x218] sm:$0xf]
  %v159 = vld [vmem:[%s1 + $0x21c] sm:$0xf]
  %v160 = vld [vmem:[%s1 + $0x220] sm:$0xf]
  %v161 = vld [vmem:[%s1 + $0x224] sm:$0xf]
  %v162 = vld [vmem:[%s1 + $0x228] sm:$0xf]
  %v163 = vld [vmem:[%s1 + $0x22c] sm:$0xf]
  %v164 = vld [vmem:[%s1 + $0x230] sm:$0xf]
  %v165 = vld [vmem:[%s1 + $0x234] sm:$0xf]
  %v166 = vld [vmem:[%s1 + $0x238] sm:$0xf]
  %v167 = vld [vmem:[%s1 + $0x23c] sm:$0xf]
  %v168 = vld [vmem:[%s1 + $0x240] sm:$0xf]
  %v169 = vld [vmem:[%s1 + $0x244] sm:$0xf]
  %v170 = vld [vmem:[%s1 + $0x248] sm:$0xf]
  %v171 = vld [vmem:[%s1 + $0x24c] sm:$0xf]
  %v172 = vld [vmem:[%s1 + $0x250] sm:$0xf]
  %v173 = vld [vmem:[%s1 + $0x254] sm:$0xf]
  %v174 = vld [vmem:[%s1 + $0x258] sm:$0xf]
  %v175 = vld [vmem:[%s1 + $0x25c] sm:$0xf]
  %v176 = vld [vmem:[%s1 + $0x260] sm:$0xf]
  %v177 = vld [vmem:[%s1 + $0x264] sm:$0xf]
  %v178 = vld [vmem:[%s1 + $0x268] sm:$0xf]
  %v179 = vld [vmem:[%s1 + $0x26c] sm:$0xf]
  %v180 = vld [vmem:[%s1 + $0x270] sm:$0xf]
  %v181 = vld [vmem:[%s1 + $0x274] sm:$0xf]
  %v182 = vld [vmem:[%s1 + $0x278] sm:$0xf]
  %v183 = vld [vmem:[%s1 + $0x27c] sm:$0xf]
  %v184 = vld [vmem:[%s1 + $0x280] sm:$0xf]
  %v185 = vld [vmem:[%s1 + $0x284] sm:$0xf]
  %v192 = vunpack.c.l.b16 %v18
  %v193 = vunpack.c.h.b16 %v18
  %v194 = vunpack.c.l.b16 %v19
  %v195 = vunpack.c.h.b16 %v19
  %v196 = vunpack.c.l.b16 %v20
  %v197 = vunpack.c.h.b16 %v20
  %v198 = vunpack.c.l.b16 %v21
  %v199 = vunpack.c.h.b16 %v21
  %v200 = vunpack.c.l.b16 %v22
  %v201 = vunpack.c.h.b16 %v22
  %v202 = vunpack.c.l.b16 %v23
  %v203 = vpack.c.b16 %v192, %v192
  %v204 = vpack.c.b16 %v193, %v193
  %v205 = vpack.c.b16 %v194, %v194
  %v206 = vpack.c.b16 %v195, %v195
  %v207 = vpack.c.b16 %v196, %v196
  %v208 = vpack.c.b16 %v197, %v197
  %v209 = vpack.c.b16 %v198, %v198
  %v210 = vpack.c.b16 %v199, %v199
  %v211 = vpack.c.b16 %v200, %v200
  %v212 = vpack.c.b16 %v201, %v201
  %v213 = vpack.c.b16 %v202, %v202
  %v386 = vunpack.c.l.b16 %v24
  %v387 = vunpack.c.l.b16 %v25
  %v388 = vunpack.c.l.b16 %v26
  %v389 = vunpack.c.l.b16 %v27
  %v390 = vunpack.c.l.b16 %v28
  %v391 = vunpack.c.l.b16 %v29
  %v392 = vunpack.c.l.b16 %v30
  %v393 = vunpack.c.l.b16 %v31
  %v394 = vunpack.c.l.b16 %v32
  %v395 = vunpack.c.l.b16 %v33
  %v396 = vunpack.c.l.b16 %v34
  %v397 = vunpack.c.l.b16 %v35
  %v398 = vunpack.c.l.b16 %v36
  %v399 = vunpack.c.l.b16 %v37
  %v400 = vunpack.c.l.b16 %v38
  %v401 = vunpack.c.l.b16 %v39
  %v402 = vunpack.c.l.b16 %v40
  %v403 = vunpack.c.l.b16 %v41
  %v404 = vunpack.c.l.b16 %v42
  %v405 = vunpack.c.l.b16 %v43
  %v406 = vunpack.c.l.b16 %v44
  %v407 = vunpack.c.l.b16 %v45
  %v408 = vunpack.c.l.b16 %v46
  %v409 = vunpack.c.l.b16 %v47
  %v410 = vunpack.c.l.b16 %v48
  %v411 = vunpack.c.l.b16 %v49
  %v412 = vunpack.c.l.b16 %v50
  %v413 = vunpack.c.l.b16 %v51
  %v414 = vunpack.c.l.b16 %v52
  %v415 = vunpack.c.l.b16 %v53
  %v416 = vunpack.c.l.b16 %v54
  %v417 = vunpack.c.l.b16 %v55
  %v418 = vunpack.c.l.b16 %v56
  %v419 = vunpack.c.l.b16 %v57
  %v420 = vunpack.c.l.b16 %v58
  %v421 = vunpack.c.l.b16 %v59
  %v422 = vunpack.c.l.b16 %v60
  %v423 = vunpack.c.l.b16 %v61
  %v424 = vunpack.c.l.b16 %v62
  %v425 = vunpack.c.l.b16 %v63
  %v426 = vunpack.c.l.b16 %v64
  %v427 = vunpack.c.l.b16 %v65
  %v428 = vunpack.c.l.b16 %v66
  %v429 = vunpack.c.l.b16 %v67
  %v430 = vunpack.c.l.b16 %v68
  %v431 = vunpack.c.l.b16 %v69
  %v432 = vunpack.c.l.b16 %v70
  %v433 = vunpack.c.l.b16 %v71
  %v434 = vunpack.c.l.b16 %v72
  %v435 = vunpack.c.l.b16 %v73
  %v436 = vunpack.c.l.b16 %v74
  %v437 = vunpack.c.l.b16 %v75
  %v438 = vunpack.c.l.b16 %v76
  %v439 = vunpack.c.l.b16 %v77
  %v440 = vunpack.c.l.b16 %v78
  %v441 = vunpack.c.l.b16 %v79
  %v442 = vunpack.c.l.b16 %v80
  %v443 = vunpack.c.l.b16 %v81
  %v444 = vunpack.c.l.b16 %v82
  %v445 = vunpack.c.l.b16 %v83
  %v446 = vunpack.c.l.b16 %v84
  %v447 = vunpack.c.l.b16 %v85
  %v448 = vunpack.c.l.b16 %v86
  %v449 = vunpack.c.l.b16 %v87
  %v450 = vunpack.c.l.b16 %v88
  %v451 = vunpack.c.l.b16 %v89
  %v452 = vunpack.c.l.b16 %v90
  %v453 = vunpack.c.l.b16 %v91
  %v454 = vunpack.c.l.b16 %v92
  %v455 = vunpack.c.l.b16 %v93
  %v456 = vunpack.c.l.b16 %v94
  %v457 = vunpack.c.l.b16 %v95
  %v458 = vunpack.c.l.b16 %v96
  %v459 = vunpack.c.l.b16 %v97
  %v460 = vunpack.c.l.b16 %v98
  %v461 = vunpack.c.l.b16 %v99
  %v462 = vunpack.c.l.b16 %v100
  %v463 = vunpack.c.l.b16 %v101
  %v464 = vunpack.c.l.b16 %v102
  %v465 = vunpack.c.l.b16 %v103
  %v466 = vunpack.c.l.b16 %v104
  %v467 = vunpack.c.l.b16 %v105
  %v468 = vunpack.c.l.b16 %v106
  %v469 = vunpack.c.l.b16 %v107
  %v470 = vunpack.c.l.b16 %v108
  %v471 = vunpack.c.l.b16 %v109
  %v472 = vunpack.c.l.b16 %v110
  %v473 = vunpack.c.l.b16 %v111
  %v474 = vunpack.c.l.b16 %v112
  %v475 = vunpack.c.l.b16 %v113
  %v476 = vunpack.c.l.b16 %v114
  %v477 = vunpack.c.l.b16 %v115
  %v478 = vunpack.c.l.b16 %v116
  %v479 = vunpack.c.l.b16 %v117
  %v480 = vunpack.c.l.b16 %v118
  %v481 = vunpack.c.l.b16 %v119
  %v482 = vunpack.c.l.b16 %v120
  %v483 = vunpack.c.l.b16 %v121
  %v484 = vunpack.c.l.b16 %v122
  %v485 = vunpack.c.l.b16 %v123
  %v486 = vunpack.c.l.b16 %v124
  %v487 = vunpack.c.l.b16 %v125
  %v488 = vunpack.c.l.b16 %v126
  %v489 = vunpack.c.l.b16 %v127
  %v490 = vunpack.c.l.b16 %v128
  %v491 = vunpack.c.l.b16 %v129
  %v492 = vunpack.c.l.b16 %v130
  %v493 = vunpack.c.l.b16 %v131
  %v494 = vunpack.c.l.b16 %v132
  %v495 = vunpack.c.l.b16 %v133
  %v496 = vunpack.c.l.b16 %v134
  %v497 = vunpack.c.l.b16 %v135
  %v498 = vunpack.c.l.b16 %v136
  %v499 = vunpack.c.l.b16 %v137
  %v500 = vunpack.c.l.b16 %v138
  %v501 = vunpack.c.l.b16 %v139
  %v502 = vunpack.c.l.b16 %v140
  %v503 = vunpack.c.l.b16 %v141
  %v504 = vunpack.c.l.b16 %v142
  %v505 = vunpack.c.l.b16 %v143
  %v506 = vunpack.c.l.b16 %v144
  %v507 = vunpack.c.l.b16 %v145
  %v508 = vunpack.c.l.b16 %v146
  %v509 = vunpack.c.l.b16 %v147
  %v510 = vunpack.c.l.b16 %v148
  %v511 = vunpack.c.l.b16 %v149
  %v512 = vunpack.c.l.b16 %v150
  %v513 = vunpack.c.l.b16 %v151
  %v514 = vunpack.c.l.b16 %v152
  %v515 = vunpack.c.l.b16 %v153
  %v516 = vunpack.c.l.b16 %v154
  %v517 = vunpack.c.l.b16 %v155
  %v518 = vunpack.c.l.b16 %v156
  %v519 = vunpack.c.l.b16 %v157
  %v520 = vunpack.c.l.b16 %v158
  %v521 = vunpack.c.l.b16 %v159
  %v522 = vunpack.c.l.b16 %v160
  %v523 = vunpack.c.l.b16 %v161
  %v524 = vunpack.c.l.b16 %v162
  %v525 = vunpack.c.l.b16 %v163
  %v526 = vunpack.c.l.b16 %v164
  %v527 = vunpack.c.l.b16 %v165
  %v528 = vunpack.c.l.b16 %v166
  %v529 = vunpack.c.l.b16 %v167
  %v530 = vunpack.c.l.b16 %v168
  %v531 = vunpack.c.l.b16 %v169
  %v532 = vunpack.c.l.b16 %v170
  %v533 = vunpack.c.l.b16 %v171
  %v534 = vunpack.c.l.b16 %v172
  %v535 = vunpack.c.l.b16 %v173
  %v536 = vunpack.c.l.b16 %v174
  %v537 = vunpack.c.l.b16 %v175
  %v538 = vunpack.c.l.b16 %v176
  %v539 = vunpack.c.l.b16 %v177
  %v540 = vunpack.c.l.b16 %v178
  %v541 = vunpack.c.l.b16 %v179
  %v542 = vunpack.c.l.b16 %v180
  %v543 = vunpack.c.l.b16 %v181
  %v544 = vunpack.c.l.b16 %v182
  %v545 = vunpack.c.l.b16 %v183
  %v546 = vunpack.c.l.b16 %v184
  %v547 = vunpack.c.l.b16 %v185
  %v548 = vpack.c.b16 %v387, %v386
  %v549 = vpack.c.b16 %v389, %v388
  %v550 = vpack.c.b16 %v391, %v390
  %v551 = vpack.c.b16 %v393, %v392
  %v552 = vpack.c.b16 %v395, %v394
  %v553 = vpack.c.b16 %v397, %v396
  %v554 = vpack.c.b16 %v399, %v398
  %v555 = vpack.c.b16 %v401, %v400
  %v556 = vpack.c.b16 %v403, %v402
  %v557 = vpack.c.b16 %v405, %v404
  %v558 = vpack.c.b16 %v407, %v406
  %v559 = vpack.c.b16 %v409, %v408
  %v560 = vpack.c.b16 %v411, %v410
  %v561 = vpack.c.b16 %v413, %v412
  %v562 = vpack.c.b16 %v415, %v414
  %v563 = vpack.c.b16 %v417, %v416
  %v564 = vpack.c.b16 %v419, %v418
  %v565 = vpack.c.b16 %v421, %v420
  %v566 = vpack.c.b16 %v423, %v422
  %v567 = vpack.c.b16 %v425, %v424
  %v568 = vpack.c.b16 %v427, %v426
  %v569 = vpack.c.b16 %v429, %v428
  %v570 = vpack.c.b16 %v431, %v430
  %v571 = vpack.c.b16 %v433, %v432
  %v572 = vpack.c.b16 %v435, %v434
  %v573 = vpack.c.b16 %v437, %v436
  %v574 = vpack.c.b16 %v439, %v438
  %v575 = vpack.c.b16 %v441, %v440
  %v576 = vpack.c.b16 %v443, %v442
  %v577 = vpack.c.b16 %v445, %v444
  %v578 = vpack.c.b16 %v447, %v446
  %v579 = vpack.c.b16 %v449, %v448
  %v580 = vpack.c.b16 %v451, %v450
  %v581 = vpack.c.b16 %v453, %v452
  %v582 = vpack.c.b16 %v455, %v454
  %v583 = vpack.c.b16 %v457, %v456
  %v584 = vpack.c.b16 %v459, %v458
  %v585 = vpack.c.b16 %v461, %v460
  %v586 = vpack.c.b16 %v463, %v462
  %v587 = vpack.c.b16 %v465, %v464
  %v588 = vpack.c.b16 %v467, %v466
  %v589 = vpack.c.b16 %v469, %v468
  %v590 = vpack.c.b16 %v471, %v470
  %v591 = vpack.c.b16 %v473, %v472
  %v592 = vpack.c.b16 %v475, %v474
  %v593 = vpack.c.b16 %v477, %v476
  %v594 = vpack.c.b16 %v479, %v478
  %v595 = vpack.c.b16 %v481, %v480
  %v596 = vpack.c.b16 %v483, %v482
  %v597 = vpack.c.b16 %v485, %v484
  %v598 = vpack.c.b16 %v487, %v486
  %v599 = vpack.c.b16 %v489, %v488
  %v600 = vpack.c.b16 %v491, %v490
  %v601 = vpack.c.b16 %v493, %v492
  %v602 = vpack.c.b16 %v495, %v494
  %v603 = vpack.c.b16 %v497, %v496
  %v604 = vpack.c.b16 %v499, %v498
  %v605 = vpack.c.b16 %v501, %v500
  %v606 = vpack.c.b16 %v503, %v502
  %v607 = vpack.c.b16 %v505, %v504
  %v608 = vpack.c.b16 %v507, %v506
  %v609 = vpack.c.b16 %v509, %v508
  %v610 = vpack.c.b16 %v511, %v510
  %v611 = vpack.c.b16 %v513, %v512
  %v612 = vpack.c.b16 %v515, %v514
  %v613 = vpack.c.b16 %v517, %v516
  %v614 = vpack.c.b16 %v519, %v518
  %v615 = vpack.c.b16 %v521, %v520
  %v616 = vpack.c.b16 %v523, %v522
  %v617 = vpack.c.b16 %v525, %v524
  %v618 = vpack.c.b16 %v527, %v526
  %v619 = vpack.c.b16 %v529, %v528
  %v620 = vpack.c.b16 %v531, %v530
  %v621 = vpack.c.b16 %v533, %v532
  %v622 = vpack.c.b16 %v535, %v534
  %v623 = vpack.c.b16 %v537, %v536
  %v624 = vpack.c.b16 %v539, %v538
  %v625 = vpack.c.b16 %v541, %v540
  %v626 = vpack.c.b16 %v543, %v542
  %v627 = vpack.c.b16 %v545, %v544
  %v628 = vpack.c.b16 %v547, %v546
  %vm710 = vcmask 130048
  %v712 = vsel %vm710, %v213, 0
  %714 = vmatprep.subr.bf16.mxu0 0
  %715 = vmatpush1.bf16.msra.mxu0 %v555
  %716 = vmatprep.subr.bf16.mxu0 0
  %717 = vmatpush1.bf16.msra.mxu0 %v554
  %718 = vmatprep.subr.bf16.mxu0 0
  %719 = vmatpush1.bf16.msra.mxu0 %v553
  %720 = vmatprep.subr.bf16.mxu0 0
  %721 = vmatpush1.bf16.msra.mxu0 %v552
  %722 = vmatprep.subr.bf16.mxu0 0
  %723 = vmatpush1.bf16.msra.mxu0 %v551
  %724 = vmatprep.subr.bf16.mxu0 0
  %725 = vmatpush1.bf16.msra.mxu0 %v550
  %726 = vmatprep.subr.bf16.mxu0 0
  %727 = vmatpush1.bf16.msra.mxu0 %v549
  %728 = vmatprep.subr.bf16.mxu0 0
  %729 = vmatpush1.bf16.msra.mxu0 %v548
  %730 = vmatprep.subr.bf16.mxu0 0
  %731 = vmatpush2.bf16.msra.mxu0 %v563
  %732 = vmatprep.subr.bf16.mxu0 0
  %733 = vmatpush2.bf16.msra.mxu0 %v562
  %734 = vmatprep.subr.bf16.mxu0 0
  %735 = vmatpush2.bf16.msra.mxu0 %v561
  %736 = vmatprep.subr.bf16.mxu0 0
  %737 = vmatpush2.bf16.msra.mxu0 %v560
  %738 = vmatprep.subr.bf16.mxu0 0
  %739 = vmatpush2.bf16.msra.mxu0 %v559
  %740 = vmatprep.subr.bf16.mxu0 0
  %741 = vmatpush2.bf16.msra.mxu0 %v558
  %742 = vmatprep.subr.bf16.mxu0 0
  %743 = vmatpush2.bf16.msra.mxu0 %v557
  %744 = vmatprep.subr.bf16.mxu0 0
  %745 = vmatpush2.bf16.msra.mxu0 %v556
  %746 = vmatprep.mubr.bf16.mxu0 %v204
  %747 = vmatmul.mubr.bf16.gmra.mxu0 %v203
  %v748 = vpop.f32.mrf.mxu0
  %v749 = vadd.f32 0.0, %v748
  %v750 = vpop.f32.mrf.mxu0
  %v751 = vpop.f32.mrf.mxu0
  %v752 = vpop.f32.mrf.mxu0
  %753 = vdwg.mxu0
  %754 = vmatprep.subr.bf16.mxu0 0
  %755 = vmatpush1.bf16.msra.mxu0 %v571
  %756 = vmatprep.subr.bf16.mxu0 0
  %757 = vmatpush1.bf16.msra.mxu0 %v570
  %758 = vmatprep.subr.bf16.mxu0 0
  %759 = vmatpush1.bf16.msra.mxu0 %v569
  %760 = vmatprep.subr.bf16.mxu0 0
  %761 = vmatpush1.bf16.msra.mxu0 %v568
  %762 = vmatprep.subr.bf16.mxu0 0
  %763 = vmatpush1.bf16.msra.mxu0 %v567
  %764 = vmatprep.subr.bf16.mxu0 0
  %765 = vmatpush1.bf16.msra.mxu0 %v566
  %766 = vmatprep.subr.bf16.mxu0 0
  %767 = vmatpush1.bf16.msra.mxu0 %v565
  %768 = vmatprep.subr.bf16.mxu0 0
  %769 = vmatpush1.bf16.msra.mxu0 %v564
  %770 = vmatprep.subr.bf16.mxu0 0
  %771 = vmatpush2.bf16.msra.mxu0 %v579
  %772 = vmatprep.subr.bf16.mxu0 0
  %773 = vmatpush2.bf16.msra.mxu0 %v578
  %774 = vmatprep.subr.bf16.mxu0 0
  %775 = vmatpush2.bf16.msra.mxu0 %v577
  %776 = vmatprep.subr.bf16.mxu0 0
  %777 = vmatpush2.bf16.msra.mxu0 %v576
  %778 = vmatprep.subr.bf16.mxu0 0
  %779 = vmatpush2.bf16.msra.mxu0 %v575
  %780 = vmatprep.subr.bf16.mxu0 0
  %781 = vmatpush2.bf16.msra.mxu0 %v574
  %782 = vmatprep.subr.bf16.mxu0 0
  %783 = vmatpush2.bf16.msra.mxu0 %v573
  %784 = vmatprep.subr.bf16.mxu0 0
  %785 = vmatpush2.bf16.msra.mxu0 %v572
  %786 = vmatprep.mubr.bf16.mxu0 %v206
  %787 = vmatmul.mubr.bf16.gmra.mxu0 %v205
  %v788 = vpop.f32.mrf.mxu0
  %v789 = vadd.f32 %v749, %v788
  %v790 = vpop.f32.mrf.mxu0
  %v791 = vpop.f32.mrf.mxu0
  %v792 = vpop.f32.mrf.mxu0
  %793 = vdwg.mxu0
  %794 = vmatprep.subr.bf16.mxu0 0
  %795 = vmatpush1.bf16.msra.mxu0 %v587
  %796 = vmatprep.subr.bf16.mxu0 0
  %797 = vmatpush1.bf16.msra.mxu0 %v586
  %798 = vmatprep.subr.bf16.mxu0 0
  %799 = vmatpush1.bf16.msra.mxu0 %v585
  %800 = vmatprep.subr.bf16.mxu0 0
  %801 = vmatpush1.bf16.msra.mxu0 %v584
  %802 = vmatprep.subr.bf16.mxu0 0
  %803 = vmatpush1.bf16.msra.mxu0 %v583
  %804 = vmatprep.subr.bf16.mxu0 0
  %805 = vmatpush1.bf16.msra.mxu0 %v582
  %806 = vmatprep.subr.bf16.mxu0 0
  %807 = vmatpush1.bf16.msra.mxu0 %v581
  %808 = vmatprep.subr.bf16.mxu0 0
  %809 = vmatpush1.bf16.msra.mxu0 %v580
  %810 = vmatprep.subr.bf16.mxu0 0
  %811 = vmatpush2.bf16.msra.mxu0 %v595
  %812 = vmatprep.subr.bf16.mxu0 0
  %813 = vmatpush2.bf16.msra.mxu0 %v594
  %814 = vmatprep.subr.bf16.mxu0 0
  %815 = vmatpush2.bf16.msra.mxu0 %v593
  %816 = vmatprep.subr.bf16.mxu0 0
  %817 = vmatpush2.bf16.msra.mxu0 %v592
  %818 = vmatprep.subr.bf16.mxu0 0
  %819 = vmatpush2.bf16.msra.mxu0 %v591
  %820 = vmatprep.subr.bf16.mxu0 0
  %821 = vmatpush2.bf16.msra.mxu0 %v590
  %822 = vmatprep.subr.bf16.mxu0 0
  %823 = vmatpush2.bf16.msra.mxu0 %v589
  %824 = vmatprep.subr.bf16.mxu0 0
  %825 = vmatpush2.bf16.msra.mxu0 %v588
  %826 = vmatprep.mubr.bf16.mxu0 %v208
  %827 = vmatmul.mubr.bf16.gmra.mxu0 %v207
  %v828 = vpop.f32.mrf.mxu0
  %v829 = vadd.f32 %v789, %v828
  %v830 = vpop.f32.mrf.mxu0
  %v831 = vpop.f32.mrf.mxu0
  %v832 = vpop.f32.mrf.mxu0
  %833 = vdwg.mxu0
  %834 = vmatprep.subr.bf16.mxu0 0
  %835 = vmatpush1.bf16.msra.mxu0 %v603
  %836 = vmatprep.subr.bf16.mxu0 0
  %837 = vmatpush1.bf16.msra.mxu0 %v602
  %838 = vmatprep.subr.bf16.mxu0 0
  %839 = vmatpush1.bf16.msra.mxu0 %v601
  %840 = vmatprep.subr.bf16.mxu0 0
  %841 = vmatpush1.bf16.msra.mxu0 %v600
  %842 = vmatprep.subr.bf16.mxu0 0
  %843 = vmatpush1.bf16.msra.mxu0 %v599
  %844 = vmatprep.subr.bf16.mxu0 0
  %845 = vmatpush1.bf16.msra.mxu0 %v598
  %846 = vmatprep.subr.bf16.mxu0 0
  %847 = vmatpush1.bf16.msra.mxu0 %v597
  %848 = vmatprep.subr.bf16.mxu0 0
  %849 = vmatpush1.bf16.msra.mxu0 %v596
  %850 = vmatprep.subr.bf16.mxu0 0
  %851 = vmatpush2.bf16.msra.mxu0 %v611
  %852 = vmatprep.subr.bf16.mxu0 0
  %853 = vmatpush2.bf16.msra.mxu0 %v610
  %854 = vmatprep.subr.bf16.mxu0 0
  %855 = vmatpush2.bf16.msra.mxu0 %v609
  %856 = vmatprep.subr.bf16.mxu0 0
  %857 = vmatpush2.bf16.msra.mxu0 %v608
  %858 = vmatprep.subr.bf16.mxu0 0
  %859 = vmatpush2.bf16.msra.mxu0 %v607
  %860 = vmatprep.subr.bf16.mxu0 0
  %861 = vmatpush2.bf16.msra.mxu0 %v606
  %862 = vmatprep.subr.bf16.mxu0 0
  %863 = vmatpush2.bf16.msra.mxu0 %v605
  %864 = vmatprep.subr.bf16.mxu0 0
  %865 = vmatpush2.bf16.msra.mxu0 %v604
  %866 = vmatprep.mubr.bf16.mxu0 %v210
  %867 = vmatmul.mubr.bf16.gmra.mxu0 %v209
  %v868 = vpop.f32.mrf.mxu0
  %v869 = vadd.f32 %v829, %v868
  %v870 = vpop.f32.mrf.mxu0
  %v871 = vpop.f32.mrf.mxu0
  %v872 = vpop.f32.mrf.mxu0
  %873 = vdwg.mxu0
  %874 = vmatprep.subr.bf16.mxu0 0
  %875 = vmatpush1.bf16.msra.mxu0 %v619
  %876 = vmatprep.subr.bf16.mxu0 0
  %877 = vmatpush1.bf16.msra.mxu0 %v618
  %878 = vmatprep.subr.bf16.mxu0 0
  %879 = vmatpush1.bf16.msra.mxu0 %v617
  %880 = vmatprep.subr.bf16.mxu0 0
  %881 = vmatpush1.bf16.msra.mxu0 %v616
  %882 = vmatprep.subr.bf16.mxu0 0
  %883 = vmatpush1.bf16.msra.mxu0 %v615
  %884 = vmatprep.subr.bf16.mxu0 0
  %885 = vmatpush1.bf16.msra.mxu0 %v614
  %886 = vmatprep.subr.bf16.mxu0 0
  %887 = vmatpush1.bf16.msra.mxu0 %v613
  %888 = vmatprep.subr.bf16.mxu0 0
  %889 = vmatpush1.bf16.msra.mxu0 %v612
  %890 = vmatprep.subr.bf16.mxu0 0
  %891 = vmatpush2.bf16.msra.mxu0 %v627
  %892 = vmatprep.subr.bf16.mxu0 0
  %893 = vmatpush2.bf16.msra.mxu0 %v626
  %894 = vmatprep.subr.bf16.mxu0 0
  %895 = vmatpush2.bf16.msra.mxu0 %v625
  %896 = vmatprep.subr.bf16.mxu0 0
  %897 = vmatpush2.bf16.msra.mxu0 %v624
  %898 = vmatprep.subr.bf16.mxu0 0
  %899 = vmatpush2.bf16.msra.mxu0 %v623
  %900 = vmatprep.subr.bf16.mxu0 0
  %901 = vmatpush2.bf16.msra.mxu0 %v622
  %902 = vmatprep.subr.bf16.mxu0 0
  %903 = vmatpush2.bf16.msra.mxu0 %v621
  %904 = vmatprep.subr.bf16.mxu0 0
  %905 = vmatpush2.bf16.msra.mxu0 %v620
  %906 = vmatprep.mubr.bf16.mxu0 %v212
  %907 = vmatmul.mubr.bf16.gmra.mxu0 %v211
  %v908 = vpop.f32.mrf.mxu0
  %v909 = vadd.f32 %v869, %v908
  %v910 = vpop.f32.mrf.mxu0
  %v911 = vpop.f32.mrf.mxu0
  %v912 = vpop.f32.mrf.mxu0
  %913 = vdwg.mxu0
  %914 = vmatprep.subr.bf16.mxu0 0
  %915 = vmatpush1.bf16.msra.mxu0 0
  %916 = vmatprep.subr.bf16.mxu0 0
  %917 = vmatpush1.bf16.msra.mxu0 0
  %918 = vmatprep.subr.bf16.mxu0 0
  %919 = vmatpush1.bf16.msra.mxu0 0
  %920 = vmatprep.subr.bf16.mxu0 0
  %921 = vmatpush1.bf16.msra.mxu0 0
  %922 = vmatprep.subr.bf16.mxu0 0
  %923 = vmatpush1.bf16.msra.mxu0 0
  %924 = vmatprep.subr.bf16.mxu0 0
  %925 = vmatpush1.bf16.msra.mxu0 0
  %926 = vmatprep.subr.bf16.mxu0 0
  %927 = vmatpush1.bf16.msra.mxu0 0
  %928 = vmatprep.subr.bf16.mxu0 0
  %929 = vmatpush1.bf16.msra.mxu0 %v628
  %930 = vmatprep.subr.bf16.mxu0 0
  %931 = vmatpush2.bf16.msra.mxu0 0
  %932 = vmatprep.subr.bf16.mxu0 0
  %933 = vmatpush2.bf16.msra.mxu0 0
  %934 = vmatprep.subr.bf16.mxu0 0
  %935 = vmatpush2.bf16.msra.mxu0 0
  %936 = vmatprep.subr.bf16.mxu0 0
  %937 = vmatpush2.bf16.msra.mxu0 0
  %938 = vmatprep.subr.bf16.mxu0 0
  %939 = vmatpush2.bf16.msra.mxu0 0
  %940 = vmatprep.subr.bf16.mxu0 0
  %941 = vmatpush2.bf16.msra.mxu0 0
  %942 = vmatprep.subr.bf16.mxu0 0
  %943 = vmatpush2.bf16.msra.mxu0 0
  %944 = vmatprep.subr.bf16.mxu0 0
  %945 = vmatpush2.bf16.msra.mxu0 0
  %946 = vmatprep.mubr.bf16.mxu0 0
  %947 = vmatmul.mubr.bf16.gmra.mxu0 %v712
  %v948 = vpop.f32.mrf.mxu0
  %v949 = vadd.f32 %v909, %v948
  %v950 = vpop.f32.mrf.mxu0
  %v951 = vpop.f32.mrf.mxu0
  %v952 = vpop.f32.mrf.mxu0
  %953 = vdwg.mxu0
  %vm954 = vcmask 523264
  %955 = vst.msk [vmem:[%s2] sm:$0xff] %vm954, %v949
  // Predicated region
  $region10: #{_lambda_.53} parent=0 // pred_check
    _
  $region11: #{_lambda_.53} parent=0 // pred_check_branch
    %957 = sbr.rel (0) target = $region13
  $region12: #{_lambda_.53} parent=0 // pred_region
    _
  $region13: #{_lambda_.53} parent=0 // pred_fallthru
    _
  // Predicated region
  $region14: #{_lambda_.53} parent=0 // pred_check
    _
  $region15: #{_lambda_.53} parent=0 // pred_check_branch
    %959 = sbr.rel (0) target = $region17
  $region16: #{_lambda_.53} parent=0 // pred_region
    _
  $region17: #{_lambda_.53} parent=0 // pred_fallthru
    _

// kernel: _lambda_.54
$region0: #{_lambda_.54}
  #allocation0 [shape = 'u32[]', space=smem, size = 0x4, offset = 0x4, fixed_abs, tag = 'smem constant byte address 0x4 - core index']
  #allocation1 [shape = 'u32[144,128]{1,0:T(1,128)}', space=vmem, size = 0x12000, scoped, tag = 'internal scratch']
  %s0 = inlined_call_operand.vmem [shape: bf16[8,544], index: 0, kind: input, shape index: {}]
  %s1 = inlined_call_operand.vmem [shape: bf16[544,32], index: 1, kind: input, shape index: {}]
  %s2 = inlined_call_operand.vmem [shape: f32[8,32], index: 2, kind: output, shape index: {}]
  %s3 = sld [smem:[#allocation0]]
  $region18: #{_lambda_.54} parent=0
    _
  %s5 = ssub.s32 1, %s3
  %s6 = scalar_select 0, %s5, %s3
  // Predicated region
  $region2: #{_lambda_.54} parent=0 // pred_check
    _
  $region3: #{_lambda_.54} parent=0 // pred_check_branch
    %8 = sbr.rel (0) target = $region5
  $region4: #{_lambda_.54} parent=0 // pred_region
    _
  $region5: #{_lambda_.54} parent=0 // pred_fallthru
    _
  // Predicated region
  $region6: #{_lambda_.54} parent=0 // pred_check
    _
  $region7: #{_lambda_.54} parent=0 // pred_check_branch
    %10 = sbr.rel (0) target = $region9
  $region8: #{_lambda_.54} parent=0 // pred_region
    _
  $region9: #{_lambda_.54} parent=0 // pred_fallthru
    _
  %v12 = vld [vmem:[%s0] sm:$0xff]
  %v13 = vld [vmem:[%s0 + $0x8] sm:$0xff]
  %v14 = vld [vmem:[%s0 + $0x10] sm:$0xf]
  %v15 = vmax.bf16 %v12, 0
  %v16 = vmax.bf16 %v13, 0
  %v17 = vmax.bf16 %v14, 0
  %v18 = vld [vmem:[%s1] sm:$0xf]
  %v19 = vld [vmem:[%s1 + $0x4] sm:$0xf]
  %v20 = vld [vmem:[%s1 + $0x8] sm:$0xf]
  %v21 = vld [vmem:[%s1 + $0xc] sm:$0xf]
  %v22 = vld [vmem:[%s1 + $0x10] sm:$0xf]
  %v23 = vld [vmem:[%s1 + $0x14] sm:$0xf]
  %v24 = vld [vmem:[%s1 + $0x18] sm:$0xf]
  %v25 = vld [vmem:[%s1 + $0x1c] sm:$0xf]
  %v26 = vld [vmem:[%s1 + $0x20] sm:$0xf]
  %v27 = vld [vmem:[%s1 + $0x24] sm:$0xf]
  %v28 = vld [vmem:[%s1 + $0x28] sm:$0xf]
  %v29 = vld [vmem:[%s1 + $0x2c] sm:$0xf]
  %v30 = vld [vmem:[%s1 + $0x30] sm:$0xf]
  %v31 = vld [vmem:[%s1 + $0x34] sm:$0xf]
  %v32 = vld [vmem:[%s1 + $0x38] sm:$0xf]
  %v33 = vld [vmem:[%s1 + $0x3c] sm:$0xf]
  %v34 = vld [vmem:[%s1 + $0x40] sm:$0xf]
  %v35 = vld [vmem:[%s1 + $0x44] sm:$0xf]
  %v36 = vld [vmem:[%s1 + $0x48] sm:$0xf]
  %v37 = vld [vmem:[%s1 + $0x4c] sm:$0xf]
  %v38 = vld [vmem:[%s1 + $0x50] sm:$0xf]
  %v39 = vld [vmem:[%s1 + $0x54] sm:$0xf]
  %v40 = vld [vmem:[%s1 + $0x58] sm:$0xf]
  %v41 = vld [vmem:[%s1 + $0x5c] sm:$0xf]
  %v42 = vld [vmem:[%s1 + $0x60] sm:$0xf]
  %v43 = vld [vmem:[%s1 + $0x64] sm:$0xf]
  %v44 = vld [vmem:[%s1 + $0x68] sm:$0xf]
  %v45 = vld [vmem:[%s1 + $0x6c] sm:$0xf]
  %v46 = vld [vmem:[%s1 + $0x70] sm:$0xf]
  %v47 = vld [vmem:[%s1 + $0x74] sm:$0xf]
  %v48 = vld [vmem:[%s1 + $0x78] sm:$0xf]
  %v49 = vld [vmem:[%s1 + $0x7c] sm:$0xf]
  %v50 = vld [vmem:[%s1 + $0x80] sm:$0xf]
  %v51 = vld [vmem:[%s1 + $0x84] sm:$0xf]
  %v52 = vld [vmem:[%s1 + $0x88] sm:$0xf]
  %v53 = vld [vmem:[%s1 + $0x8c] sm:$0xf]
  %v54 = vld [vmem:[%s1 + $0x90] sm:$0xf]
  %v55 = vld [vmem:[%s1 + $0x94] sm:$0xf]
  %v56 = vld [vmem:[%s1 + $0x98] sm:$0xf]
  %v57 = vld [vmem:[%s1 + $0x9c] sm:$0xf]
  %v58 = vld [vmem:[%s1 + $0xa0] sm:$0xf]
  %v59 = vld [vmem:[%s1 + $0xa4] sm:$0xf]
  %v60 = vld [vmem:[%s1 + $0xa8] sm:$0xf]
  %v61 = vld [vmem:[%s1 + $0xac] sm:$0xf]
  %v62 = vld [vmem:[%s1 + $0xb0] sm:$0xf]
  %v63 = vld [vmem:[%s1 + $0xb4] sm:$0xf]
  %v64 = vld [vmem:[%s1 + $0xb8] sm:$0xf]
  %v65 = vld [vmem:[%s1 + $0xbc] sm:$0xf]
  %v66 = vld [vmem:[%s1 + $0xc0] sm:$0xf]
  %v67 = vld [vmem:[%s1 + $0xc4] sm:$0xf]
  %v68 = vld [vmem:[%s1 + $0xc8] sm:$0xf]
  %v69 = vld [vmem:[%s1 + $0xcc] sm:$0xf]
  %v70 = vld [vmem:[%s1 + $0xd0] sm:$0xf]
  %v71 = vld [vmem:[%s1 + $0xd4] sm:$0xf]
  %v72 = vld [vmem:[%s1 + $0xd8] sm:$0xf]
  %v73 = vld [vmem:[%s1 + $0xdc] sm:$0xf]
  %v74 = vld [vmem:[%s1 + $0xe0] sm:$0xf]
  %v75 = vld [vmem:[%s1 + $0xe4] sm:$0xf]
  %v76 = vld [vmem:[%s1 + $0xe8] sm:$0xf]
  %v77 = vld [vmem:[%s1 + $0xec] sm:$0xf]
  %v78 = vld [vmem:[%s1 + $0xf0] sm:$0xf]
  %v79 = vld [vmem:[%s1 + $0xf4] sm:$0xf]
  %v80 = vld [vmem:[%s1 + $0xf8] sm:$0xf]
  %v81 = vld [vmem:[%s1 + $0xfc] sm:$0xf]
  %v82 = vld [vmem:[%s1 + $0x100] sm:$0xf]
  %v83 = vld [vmem:[%s1 + $0x104] sm:$0xf]
  %v84 = vld [vmem:[%s1 + $0x108] sm:$0xf]
  %v85 = vld [vmem:[%s1 + $0x10c] sm:$0xf]
  %v89 = vunpack.c.l.b16 %v15
  %v90 = vunpack.c.h.b16 %v15
  %v91 = vunpack.c.l.b16 %v16
  %v92 = vunpack.c.h.b16 %v16
  %v93 = vunpack.c.l.b16 %v17
  %v94 = vpack.c.b16 %v89, %v89
  %v95 = vpack.c.b16 %v90, %v90
  %v96 = vpack.c.b16 %v91, %v91
  %v97 = vpack.c.b16 %v92, %v92
  %v98 = vpack.c.b16 %v93, %v93
  %v171 = vunpack.c.l.b16 %v18
  %v172 = vunpack.c.l.b16 %v19
  %v173 = vunpack.c.l.b16 %v20
  %v174 = vunpack.c.l.b16 %v21
  %v175 = vunpack.c.l.b16 %v22
  %v176 = vunpack.c.l.b16 %v23
  %v177 = vunpack.c.l.b16 %v24
  %v178 = vunpack.c.l.b16 %v25
  %v179 = vunpack.c.l.b16 %v26
  %v180 = vunpack.c.l.b16 %v27
  %v181 = vunpack.c.l.b16 %v28
  %v182 = vunpack.c.l.b16 %v29
  %v183 = vunpack.c.l.b16 %v30
  %v184 = vunpack.c.l.b16 %v31
  %v185 = vunpack.c.l.b16 %v32
  %v186 = vunpack.c.l.b16 %v33
  %v187 = vunpack.c.l.b16 %v34
  %v188 = vunpack.c.l.b16 %v35
  %v189 = vunpack.c.l.b16 %v36
  %v190 = vunpack.c.l.b16 %v37
  %v191 = vunpack.c.l.b16 %v38
  %v192 = vunpack.c.l.b16 %v39
  %v193 = vunpack.c.l.b16 %v40
  %v194 = vunpack.c.l.b16 %v41
  %v195 = vunpack.c.l.b16 %v42
  %v196 = vunpack.c.l.b16 %v43
  %v197 = vunpack.c.l.b16 %v44
  %v198 = vunpack.c.l.b16 %v45
  %v199 = vunpack.c.l.b16 %v46
  %v200 = vunpack.c.l.b16 %v47
  %v201 = vunpack.c.l.b16 %v48
  %v202 = vunpack.c.l.b16 %v49
  %v203 = vunpack.c.l.b16 %v50
  %v204 = vunpack.c.l.b16 %v51
  %v205 = vunpack.c.l.b16 %v52
  %v206 = vunpack.c.l.b16 %v53
  %v207 = vunpack.c.l.b16 %v54
  %v208 = vunpack.c.l.b16 %v55
  %v209 = vunpack.c.l.b16 %v56
  %v210 = vunpack.c.l.b16 %v57
  %v211 = vunpack.c.l.b16 %v58
  %v212 = vunpack.c.l.b16 %v59
  %v213 = vunpack.c.l.b16 %v60
  %v214 = vunpack.c.l.b16 %v61
  %v215 = vunpack.c.l.b16 %v62
  %v216 = vunpack.c.l.b16 %v63
  %v217 = vunpack.c.l.b16 %v64
  %v218 = vunpack.c.l.b16 %v65
  %v219 = vunpack.c.l.b16 %v66
  %v220 = vunpack.c.l.b16 %v67
  %v221 = vunpack.c.l.b16 %v68
  %v222 = vunpack.c.l.b16 %v69
  %v223 = vunpack.c.l.b16 %v70
  %v224 = vunpack.c.l.b16 %v71
  %v225 = vunpack.c.l.b16 %v72
  %v226 = vunpack.c.l.b16 %v73
  %v227 = vunpack.c.l.b16 %v74
  %v228 = vunpack.c.l.b16 %v75
  %v229 = vunpack.c.l.b16 %v76
  %v230 = vunpack.c.l.b16 %v77
  %v231 = vunpack.c.l.b16 %v78
  %v232 = vunpack.c.l.b16 %v79
  %v233 = vunpack.c.l.b16 %v80
  %v234 = vunpack.c.l.b16 %v81
  %v235 = vunpack.c.l.b16 %v82
  %v236 = vunpack.c.l.b16 %v83
  %v237 = vunpack.c.l.b16 %v84
  %v238 = vunpack.c.l.b16 %v85
  %v239 = vpack.c.b16 %v172, %v171
  %v240 = vpack.c.b16 %v174, %v173
  %v241 = vpack.c.b16 %v176, %v175
  %v242 = vpack.c.b16 %v178, %v177
  %v243 = vpack.c.b16 %v180, %v179
  %v244 = vpack.c.b16 %v182, %v181
  %v245 = vpack.c.b16 %v184, %v183
  %v246 = vpack.c.b16 %v186, %v185
  %v247 = vpack.c.b16 %v188, %v187
  %v248 = vpack.c.b16 %v190, %v189
  %v249 = vpack.c.b16 %v192, %v191
  %v250 = vpack.c.b16 %v194, %v193
  %v251 = vpack.c.b16 %v196, %v195
  %v252 = vpack.c.b16 %v198, %v197
  %v253 = vpack.c.b16 %v200, %v199
  %v254 = vpack.c.b16 %v202, %v201
  %v255 = vpack.c.b16 %v204, %v203
  %v256 = vpack.c.b16 %v206, %v205
  %v257 = vpack.c.b16 %v208, %v207
  %v258 = vpack.c.b16 %v210, %v209
  %v259 = vpack.c.b16 %v212, %v211
  %v260 = vpack.c.b16 %v214, %v213
  %v261 = vpack.c.b16 %v216, %v215
  %v262 = vpack.c.b16 %v218, %v217
  %v263 = vpack.c.b16 %v220, %v219
  %v264 = vpack.c.b16 %v222, %v221
  %v265 = vpack.c.b16 %v224, %v223
  %v266 = vpack.c.b16 %v226, %v225
  %v267 = vpack.c.b16 %v228, %v227
  %v268 = vpack.c.b16 %v230, %v229
  %v269 = vpack.c.b16 %v232, %v231
  %v270 = vpack.c.b16 %v234, %v233
  %v271 = vpack.c.b16 %v236, %v235
  %v272 = vpack.c.b16 %v238, %v237
  %vm307 = vcmask 261120
  %v309 = vsel %vm307, %v98, 0
  %311 = vmatprep.subr.bf16.mxu0 0
  %312 = vmatpush1.bf16.msra.mxu0 %v246
  %313 = vmatprep.subr.bf16.mxu0 0
  %314 = vmatpush1.bf16.msra.mxu0 %v245
  %315 = vmatprep.subr.bf16.mxu0 0
  %316 = vmatpush1.bf16.msra.mxu0 %v244
  %317 = vmatprep.subr.bf16.mxu0 0
  %318 = vmatpush1.bf16.msra.mxu0 %v243
  %319 = vmatprep.subr.bf16.mxu0 0
  %320 = vmatpush1.bf16.msra.mxu0 %v242
  %321 = vmatprep.subr.bf16.mxu0 0
  %322 = vmatpush1.bf16.msra.mxu0 %v241
  %323 = vmatprep.subr.bf16.mxu0 0
  %324 = vmatpush1.bf16.msra.mxu0 %v240
  %325 = vmatprep.subr.bf16.mxu0 0
  %326 = vmatpush1.bf16.msra.mxu0 %v239
  %327 = vmatprep.subr.bf16.mxu0 0
  %328 = vmatpush2.bf16.msra.mxu0 %v254
  %329 = vmatprep.subr.bf16.mxu0 0
  %330 = vmatpush2.bf16.msra.mxu0 %v253
  %331 = vmatprep.subr.bf16.mxu0 0
  %332 = vmatpush2.bf16.msra.mxu0 %v252
  %333 = vmatprep.subr.bf16.mxu0 0
  %334 = vmatpush2.bf16.msra.mxu0 %v251
  %335 = vmatprep.subr.bf16.mxu0 0
  %336 = vmatpush2.bf16.msra.mxu0 %v250
  %337 = vmatprep.subr.bf16.mxu0 0
  %338 = vmatpush2.bf16.msra.mxu0 %v249
  %339 = vmatprep.subr.bf16.mxu0 0
  %340 = vmatpush2.bf16.msra.mxu0 %v248
  %341 = vmatprep.subr.bf16.mxu0 0
  %342 = vmatpush2.bf16.msra.mxu0 %v247
  %343 = vmatprep.mubr.bf16.mxu0 %v95
  %344 = vmatmul.mubr.bf16.gmra.mxu0 %v94
  %v345 = vpop.f32.mrf.mxu0
  %v346 = vadd.f32 0.0, %v345
  %v347 = vpop.f32.mrf.mxu0
  %v348 = vpop.f32.mrf.mxu0
  %v349 = vpop.f32.mrf.mxu0
  %350 = vdwg.mxu0
  %351 = vmatprep.subr.bf16.mxu0 0
  %352 = vmatpush1.bf16.msra.mxu0 %v262
  %353 = vmatprep.subr.bf16.mxu0 0
  %354 = vmatpush1.bf16.msra.mxu0 %v261
  %355 = vmatprep.subr.bf16.mxu0 0
  %356 = vmatpush1.bf16.msra.mxu0 %v260
  %357 = vmatprep.subr.bf16.mxu0 0
  %358 = vmatpush1.bf16.msra.mxu0 %v259
  %359 = vmatprep.subr.bf16.mxu0 0
  %360 = vmatpush1.bf16.msra.mxu0 %v258
  %361 = vmatprep.subr.bf16.mxu0 0
  %362 = vmatpush1.bf16.msra.mxu0 %v257
  %363 = vmatprep.subr.bf16.mxu0 0
  %364 = vmatpush1.bf16.msra.mxu0 %v256
  %365 = vmatprep.subr.bf16.mxu0 0
  %366 = vmatpush1.bf16.msra.mxu0 %v255
  %367 = vmatprep.subr.bf16.mxu0 0
  %368 = vmatpush2.bf16.msra.mxu0 %v270
  %369 = vmatprep.subr.bf16.mxu0 0
  %370 = vmatpush2.bf16.msra.mxu0 %v269
  %371 = vmatprep.subr.bf16.mxu0 0
  %372 = vmatpush2.bf16.msra.mxu0 %v268
  %373 = vmatprep.subr.bf16.mxu0 0
  %374 = vmatpush2.bf16.msra.mxu0 %v267
  %375 = vmatprep.subr.bf16.mxu0 0
  %376 = vmatpush2.bf16.msra.mxu0 %v266
  %377 = vmatprep.subr.bf16.mxu0 0
  %378 = vmatpush2.bf16.msra.mxu0 %v265
  %379 = vmatprep.subr.bf16.mxu0 0
  %380 = vmatpush2.bf16.msra.mxu0 %v264
  %381 = vmatprep.subr.bf16.mxu0 0
  %382 = vmatpush2.bf16.msra.mxu0 %v263
  %383 = vmatprep.mubr.bf16.mxu0 %v97
  %384 = vmatmul.mubr.bf16.gmra.mxu0 %v96
  %v385 = vpop.f32.mrf.mxu0
  %v386 = vadd.f32 %v346, %v385
  %v387 = vpop.f32.mrf.mxu0
  %v388 = vpop.f32.mrf.mxu0
  %v389 = vpop.f32.mrf.mxu0
  %390 = vdwg.mxu0
  %391 = vmatprep.subr.bf16.mxu0 0
  %392 = vmatpush1.bf16.msra.mxu0 0
  %393 = vmatprep.subr.bf16.mxu0 0
  %394 = vmatpush1.bf16.msra.mxu0 0
  %395 = vmatprep.subr.bf16.mxu0 0
  %396 = vmatpush1.bf16.msra.mxu0 0
  %397 = vmatprep.subr.bf16.mxu0 0
  %398 = vmatpush1.bf16.msra.mxu0 0
  %399 = vmatprep.subr.bf16.mxu0 0
  %400 = vmatpush1.bf16.msra.mxu0 0
  %401 = vmatprep.subr.bf16.mxu0 0
  %402 = vmatpush1.bf16.msra.mxu0 0
  %403 = vmatprep.subr.bf16.mxu0 0
  %404 = vmatpush1.bf16.msra.mxu0 %v272
  %405 = vmatprep.subr.bf16.mxu0 0
  %406 = vmatpush1.bf16.msra.mxu0 %v271
  %407 = vmatprep.subr.bf16.mxu0 0
  %408 = vmatpush2.bf16.msra.mxu0 0
  %409 = vmatprep.subr.bf16.mxu0 0
  %410 = vmatpush2.bf16.msra.mxu0 0
  %411 = vmatprep.subr.bf16.mxu0 0
  %412 = vmatpush2.bf16.msra.mxu0 0
  %413 = vmatprep.subr.bf16.mxu0 0
  %414 = vmatpush2.bf16.msra.mxu0 0
  %415 = vmatprep.subr.bf16.mxu0 0
  %416 = vmatpush2.bf16.msra.mxu0 0
  %417 = vmatprep.subr.bf16.mxu0 0
  %418 = vmatpush2.bf16.msra.mxu0 0
  %419 = vmatprep.subr.bf16.mxu0 0
  %420 = vmatpush2.bf16.msra.mxu0 0
  %421 = vmatprep.subr.bf16.mxu0 0
  %422 = vmatpush2.bf16.msra.mxu0 0
  %423 = vmatprep.mubr.bf16.mxu0 0
  %424 = vmatmul.mubr.bf16.gmra.mxu0 %v309
  %v425 = vpop.f32.mrf.mxu0
  %v426 = vadd.f32 %v386, %v425
  %v427 = vpop.f32.mrf.mxu0
  %v428 = vpop.f32.mrf.mxu0
  %v429 = vpop.f32.mrf.mxu0
  %430 = vdwg.mxu0
  %431 = vst.msk [vmem:[%s2] sm:$0xff] %vm307, %v426
  // Predicated region
  $region10: #{_lambda_.54} parent=0 // pred_check
    _
  $region11: #{_lambda_.54} parent=0 // pred_check_branch
    %433 = sbr.rel (0) target = $region13
  $region12: #{_lambda_.54} parent=0 // pred_region
    _
  $region13: #{_lambda_.54} parent=0 // pred_fallthru
    _
  // Predicated region
  $region14: #{_lambda_.54} parent=0 // pred_check
    _
  $region15: #{_lambda_.54} parent=0 // pred_check_branch
    %435 = sbr.rel (0) target = $region17
  $region16: #{_lambda_.54} parent=0 // pred_region
    _
  $region17: #{_lambda_.54} parent=0 // pred_fallthru
    _

// kernel: _lambda_.55
$region0: #{_lambda_.55}
  #allocation0 [shape = 'u32[]', space=smem, size = 0x4, offset = 0x4, fixed_abs, tag = 'smem constant byte address 0x4 - core index']
  #allocation1 [shape = 'u32[144,128]{1,0:T(1,128)}', space=vmem, size = 0x12000, scoped, tag = 'internal scratch']
  %s0 = inlined_call_operand.vmem [shape: bf16[2,64], index: 0, kind: input, shape index: {}]
  %s1 = inlined_call_operand.vmem [shape: bf16[64,10], index: 1, kind: input, shape index: {}]
  %s2 = inlined_call_operand.vmem [shape: f32[2,10], index: 2, kind: output, shape index: {}]
  %s3 = sld [smem:[#allocation0]]
  $region18: #{_lambda_.55} parent=0
    _
  %s5 = ssub.s32 1, %s3
  %s6 = scalar_select 0, %s5, %s3
  // Predicated region
  $region2: #{_lambda_.55} parent=0 // pred_check
    _
  $region3: #{_lambda_.55} parent=0 // pred_check_branch
    %8 = sbr.rel (0) target = $region5
  $region4: #{_lambda_.55} parent=0 // pred_region
    _
  $region5: #{_lambda_.55} parent=0 // pred_fallthru
    _
  // Predicated region
  $region6: #{_lambda_.55} parent=0 // pred_check
    _
  $region7: #{_lambda_.55} parent=0 // pred_check_branch
    %10 = sbr.rel (0) target = $region9
  $region8: #{_lambda_.55} parent=0 // pred_region
    _
  $region9: #{_lambda_.55} parent=0 // pred_fallthru
    _
  %v12 = vld [vmem:[%s0] sm:$0x1]
  %v13 = vld [vmem:[%s1] sm:$0xf]
  %v14 = vld [vmem:[%s1 + $0x4] sm:$0xf]
  %v15 = vld [vmem:[%s1 + $0x8] sm:$0xf]
  %v16 = vld [vmem:[%s1 + $0xc] sm:$0xf]
  %v17 = vld [vmem:[%s1 + $0x10] sm:$0xf]
  %v18 = vld [vmem:[%s1 + $0x14] sm:$0xf]
  %v19 = vld [vmem:[%s1 + $0x18] sm:$0xf]
  %v20 = vld [vmem:[%s1 + $0x1c] sm:$0xf]
  %v29 = vunpack.c.l.b16 %v13
  %v30 = vunpack.c.l.b16 %v14
  %v31 = vunpack.c.l.b16 %v15
  %v32 = vunpack.c.l.b16 %v16
  %v33 = vunpack.c.l.b16 %v17
  %v34 = vunpack.c.l.b16 %v18
  %v35 = vunpack.c.l.b16 %v19
  %v36 = vunpack.c.l.b16 %v20
  %v37 = vpack.c.b16 %v30, %v29
  %v38 = vpack.c.b16 %v32, %v31
  %v39 = vpack.c.b16 %v34, %v33
  %v40 = vpack.c.b16 %v36, %v35
  %vm45 = vcmask 523264
  %v47 = vsel %vm45, %v12, 0
  %49 = vmatprep.subr.bf16.mxu0 0
  %50 = vmatpush1.bf16.msra.mxu0 0
  %51 = vmatprep.subr.bf16.mxu0 0
  %52 = vmatpush1.bf16.msra.mxu0 0
  %53 = vmatprep.subr.bf16.mxu0 0
  %54 = vmatpush1.bf16.msra.mxu0 0
  %55 = vmatprep.subr.bf16.mxu0 0
  %56 = vmatpush1.bf16.msra.mxu0 0
  %57 = vmatprep.subr.bf16.mxu0 0
  %58 = vmatpush1.bf16.msra.mxu0 %v40
  %59 = vmatprep.subr.bf16.mxu0 0
  %60 = vmatpush1.bf16.msra.mxu0 %v39
  %61 = vmatprep.subr.bf16.mxu0 0
  %62 = vmatpush1.bf16.msra.mxu0 %v38
  %63 = vmatprep.subr.bf16.mxu0 0
  %64 = vmatpush1.bf16.msra.mxu0 %v37
  %65 = vmatprep.subr.bf16.mxu0 0
  %66 = vmatpush2.bf16.msra.mxu0 0
  %67 = vmatprep.subr.bf16.mxu0 0
  %68 = vmatpush2.bf16.msra.mxu0 0
  %69 = vmatprep.subr.bf16.mxu0 0
  %70 = vmatpush2.bf16.msra.mxu0 0
  %71 = vmatprep.subr.bf16.mxu0 0
  %72 = vmatpush2.bf16.msra.mxu0 0
  %73 = vmatprep.subr.bf16.mxu0 0
  %74 = vmatpush2.bf16.msra.mxu0 0
  %75 = vmatprep.subr.bf16.mxu0 0
  %76 = vmatpush2.bf16.msra.mxu0 0
  %77 = vmatprep.subr.bf16.mxu0 0
  %78 = vmatpush2.bf16.msra.mxu0 0
  %79 = vmatprep.subr.bf16.mxu0 0
  %80 = vmatpush2.bf16.msra.mxu0 0
  %81 = vmatprep.mubr.bf16.mxu0 0
  %82 = vmatmul.mubr.bf16.gmra.mxu0 %v47
  %v83 = vpop.f32.mrf.mxu0
  %v84 = vadd.f32 0.0, %v83
  %v85 = vpop.f32.mrf.mxu0
  %v86 = vpop.f32.mrf.mxu0
  %v87 = vpop.f32.mrf.mxu0
  %88 = vdwg.mxu0
  %vm89 = vcmask 74752
  %90 = vst.msk [vmem:[%s2] sm:$0x3] %vm89, %v84
  // Predicated region
  $region10: #{_lambda_.55} parent=0 // pred_check
    _
  $region11: #{_lambda_.55} parent=0 // pred_check_branch
    %92 = sbr.rel (0) target = $region13
  $region12: #{_lambda_.55} parent=0 // pred_region
    _
  $region13: #{_lambda_.55} parent=0 // pred_fallthru
    _
  // Predicated region
  $region14: #{_lambda_.55} parent=0 // pred_check
    _
  $region15: #{_lambda_.55} parent=0 // pred_check_branch
    %94 = sbr.rel (0) target = $region17
  $region16: #{_lambda_.55} parent=0 // pred_region
    _
  $region17: #{_lambda_.55} parent=0 // pred_fallthru
    _

</llo_original>
